<compile_context>
chip_gen: v7x
topology: tpu7x:2x2x1
jax: 0.10.0
libtpu: 0.0.40
codegen_flags: <defaults>
</compile_context>

<pallas_src>
import functools
import math

import jax
import jax.numpy as jnp
from jax import lax
from jax.experimental import pallas as pl
from jax.experimental.pallas import tpu as pltpu


def _vmem_limit_bytes(blocks, headroom_bytes):
    """Per-step VMEM estimate: double-buffered blocks + headroom for temporaries."""
    total = 0
    for shape, dtype in blocks:
        total += math.prod(shape) * jnp.dtype(dtype).itemsize
    return int(min(48 * 1024 * 1024, 2 * total + headroom_bytes))


def _pick_batch_block(n):
    """Largest batch block in {1,2,4} that still leaves >=2 grid steps (megacore)."""
    best = 1
    for bb in (2, 4):
        if n % bb == 0 and n // bb >= 2:
            best = bb
    return best


# ---------------------------------------------------------------------------
# Fused conv trunk: conv1+ReLU, conv2+ReLU, pool, conv3+ReLU, conv4+ReLU, pool.
# One pallas_call; all intermediates stay in VMEM / vregs.
# ---------------------------------------------------------------------------
def _pad_halo(x):
    """Zero halo of 1 around H and W of a (B, H, W, C) value, built in-register."""
    B, H, W, C = x.shape
    zw = jnp.zeros((B, H, 1, C), x.dtype)
    x = jnp.concatenate([zw, x, zw], axis=2)
    zh = jnp.zeros((B, 1, W + 2, C), x.dtype)
    return jnp.concatenate([zh, x, zh], axis=1)


def _conv3x3_relu(x, w_ref, b_ref):
    """3x3 'same' conv + bias + ReLU as ONE MXU dot (K packed over the 9 taps)."""
    B, H, W, Cin = x.shape
    Cout = w_ref.shape[-1]
    xp = _pad_halo(x)
    # Tap-major / channel-minor im2col: column (dy*3+dx)*Cin + c matches the
    # (9*Cin, Cout) weight packing done in init_params.
    taps = [xp[:, dy:dy + H, dx:dx + W, :] for dy in range(3) for dx in range(3)]
    lhs = jnp.concatenate(taps, axis=-1).reshape(B * H * W, 9 * Cin)
    acc = jnp.dot(lhs, w_ref[...], preferred_element_type=jnp.float32)
    acc = acc + b_ref[...]                       # bias add + ReLU in f32
    return jnp.maximum(acc, 0.0).reshape(B, H, W, Cout)


def _max_pool_2x2(y):
    B, H, W, C = y.shape
    y = jnp.max(y.reshape(B, H, W // 2, 2, C), axis=3)
    y = jnp.max(y.reshape(B, H // 2, 2, W // 2, C), axis=2)
    return y


def _conv_trunk_kernel(x_ref, w1_ref, b1_ref, w2_ref, b2_ref,
                       w3_ref, b3_ref, w4_ref, b4_ref, o_ref):
    bf16 = jnp.bfloat16
    y = _conv3x3_relu(x_ref[...], w1_ref, b1_ref)             # f32 (B,H,W,32)
    y = _conv3x3_relu(y.astype(bf16), w2_ref, b2_ref)          # f32 (B,H,W,64)
    y = _max_pool_2x2(y)                                       # f32 (B,H/2,W/2,64)
    y = _conv3x3_relu(y.astype(bf16), w3_ref, b3_ref)          # f32 (B,H/2,W/2,128)
    y = _conv3x3_relu(y.astype(bf16), w4_ref, b4_ref)          # f32 (B,H/2,W/2,128)
    y = _max_pool_2x2(y)                                       # f32 (B,H/4,W/4,128)
    o_ref[...] = y.astype(o_ref.dtype)                         # lane-dense (128) store


def conv_trunk(x_nhwc, params, *, out_dtype=jnp.bfloat16):
    n, h, w, c0 = x_nhwc.shape
    assert h % 4 == 0 and w % 4 == 0, (h, w)
    c4 = params["conv4_w"].shape[-1]
    ho, wo = h // 4, w // 4
    bb = _pick_batch_block(n)

    x = x_nhwc.astype(jnp.bfloat16)
    args = (x,
            params["conv1_w"], params["conv1_b"],
            params["conv2_w"], params["conv2_b"],
            params["conv3_w"], params["conv3_b"],
            params["conv4_w"], params["conv4_b"])

    in_specs = [pl.BlockSpec((bb, h, w, c0), lambda i: (i, 0, 0, 0))]
    blocks = [((bb, h, w, c0), jnp.bfloat16)]
    for a in args[1:]:                          # weights / biases: whole array resident
        in_specs.append(pl.BlockSpec(a.shape, lambda i: (0, 0)))
        blocks.append((a.shape, a.dtype))
    blocks.append(((bb, ho, wo, c4), out_dtype))

    return pl.pallas_call(
        _conv_trunk_kernel,
        out_shape=jax.ShapeDtypeStruct((n, ho, wo, c4), out_dtype),
        grid_spec=pltpu.PrefetchScalarGridSpec(
            num_scalar_prefetch=0,
            grid=(n // bb,),
            in_specs=in_specs,
            out_specs=pl.BlockSpec((bb, ho, wo, c4), lambda i: (i, 0, 0, 0)),
        ),
        compiler_params=pltpu.CompilerParams(
            dimension_semantics=("parallel",),
            vmem_limit_bytes=_vmem_limit_bytes(blocks, 16 * 1024 * 1024),
        ),
    )(*args)


# ---------------------------------------------------------------------------
# Fused FC head: fc1+ReLU -> fc2+ReLU -> fc3 in one pallas_call.
# fc1's weight is streamed over a K grid axis (DMA overlaps the MXU dots).
# ---------------------------------------------------------------------------
def _fc_fused_kernel(x_ref, w1_ref, b1_ref, w2_ref, b2_ref, w3_ref, b3_ref,
                     o_ref, acc_ref):
    f32 = jnp.float32
    k = pl.program_id(0)

    @pl.when(k == 0)
    def _():
        acc_ref[...] = jnp.zeros_like(acc_ref)

    # fc1 partial product for this K tile.
    acc_ref[...] += jnp.dot(x_ref[...], w1_ref[...], preferred_element_type=f32)

    @pl.when(k == pl.num_programs(0) - 1)
    def _():
        h1 = jnp.maximum(acc_ref[...] + b1_ref[...], 0.0).astype(w2_ref.dtype)
        h2 = jnp.dot(h1, w2_ref[...], preferred_element_type=f32) + b2_ref[...]
        h2 = jnp.maximum(h2, 0.0).astype(w3_ref.dtype)
        o_ref[...] = (jnp.dot(h2, w3_ref[...], preferred_element_type=f32)
                      + b3_ref[...]).astype(o_ref.dtype)


def fc_fused(x, w1, b1, w2, b2, w3, b3):
    m, K = x.shape
    n1, n2, n3p = w1.shape[1], w2.shape[1], w3.shape[1]
    # Pad rows to a full f32 sublane; extra rows are sliced off afterwards.
    m_pad = max(8, -(-m // 8) * 8)
    if m_pad != m:
        x = jnp.pad(x, ((0, m_pad - m), (0, 0)))
    x = x.astype(jnp.bfloat16)

    tk = next((t for t in (512, 256, 128) if K % t == 0), K)
    nk = K // tk

    blocks = [((m_pad, tk), jnp.bfloat16), ((tk, n1), w1.dtype), ((1, n1), jnp.float32),
              ((n1, n2), w2.dtype), ((1, n2), jnp.float32),
              ((n2, n3p), w3.dtype), ((1, n3p), jnp.float32),
              ((m_pad, n3p), jnp.float32), ((m_pad, n1), jnp.float32)]

    out = pl.pallas_call(
        _fc_fused_kernel,
        out_shape=jax.ShapeDtypeStruct((m_pad, n3p), jnp.float32),
        grid_spec=pltpu.PrefetchScalarGridSpec(
            num_scalar_prefetch=0,
            grid=(nk,),
            in_specs=[
                pl.BlockSpec((m_pad, tk), lambda k: (0, k)),
                pl.BlockSpec((tk, n1), lambda k: (k, 0)),
                pl.BlockSpec((1, n1), lambda k: (0, 0)),
                pl.BlockSpec((n1, n2), lambda k: (0, 0)),
                pl.BlockSpec((1, n2), lambda k: (0, 0)),
                pl.BlockSpec((n2, n3p), lambda k: (0, 0)),
                pl.BlockSpec((1, n3p), lambda k: (0, 0)),
            ],
            out_specs=pl.BlockSpec((m_pad, n3p), lambda k: (0, 0)),
            scratch_shapes=[pltpu.VMEM((m_pad, n1), jnp.float32)],
        ),
        compiler_params=pltpu.CompilerParams(
            dimension_semantics=("arbitrary",),
            vmem_limit_bytes=_vmem_limit_bytes(blocks, 8 * 1024 * 1024),
        ),
    )(x, w1, b1, w2, b2, w3, b3)
    return out[:m]


# ---------------------------------------------------------------------------
# Parameters (synthetic, matching the nn.Module __init__ shapes) + reference copy.
# ---------------------------------------------------------------------------
def init_params(key, n_channels, res_x, res_y, n_classes, *, weight_dtype=jnp.bfloat16):
    f32 = jnp.float32
    assert res_x % 4 == 0 and res_y % 4 == 0, (res_x, res_y)

    def conv_init(k, cin, cout):
        k1, k2 = jax.random.split(k)
        w = jax.random.normal(k1, (cout, cin, 3, 3), f32) / jnp.sqrt(cin * 9.0)
        b = jax.random.normal(k2, (cout,), f32) * 0.01
        # (O, I, 3, 3) -> (ky, kx, I, O) -> (9*I, O); row = (ky*3+kx)*I + i, which
        # matches the tap-major / channel-minor im2col concat in the kernel.
        w_packed = jnp.transpose(w, (2, 3, 1, 0)).reshape(9 * cin, cout)
        return w, b, w_packed.astype(weight_dtype)

    def linear_init(k, fin, fout):
        k1, k2 = jax.random.split(k)
        w = jax.random.normal(k1, (fin, fout), f32) / jnp.sqrt(float(fin))
        b = jax.random.normal(k2, (fout,), f32) * 0.01
        return w, b

    keys = jax.random.split(key, 7)
    params, ref = {}, {}

    chans = [n_channels, 32, 64, 128, 128]
    for idx in range(4):
        w_raw, b, w_packed = conv_init(keys[idx], chans[idx], chans[idx + 1])
        params[f"conv{idx + 1}_w"] = w_packed
        params[f"conv{idx + 1}_b"] = b.reshape(1, -1)            # f32, added in-kernel
        ref[f"conv{idx + 1}_w"] = w_raw.astype(weight_dtype).astype(f32)  # same numerics
        ref[f"conv{idx + 1}_b"] = b

    hh, ww, cc = res_x // 4, res_y // 4, 128
    lin_in = cc * hh * ww          # == dummy-input probe in the PyTorch __init__

    # fc1 consumes PyTorch's NCHW flatten; permute its rows once so the kernels'
    # NHWC flatten feeds it directly (no runtime transpose).
    w_fc1, b_fc1 = linear_init(keys[4], lin_in, 1024)
    hi, wi, ci = jnp.meshgrid(jnp.arange(hh), jnp.arange(ww), jnp.arange(cc),
                              indexing="ij")
    nchw_rows = (ci * (hh * ww) + hi * ww + wi).reshape(-1)
    params["fc1_w"] = w_fc1[nchw_rows, :].astype(weight_dtype)
    params["fc1_b"] = b_fc1.reshape(1, -1)
    ref["fc1_w"] = w_fc1.astype(weight_dtype).astype(f32)
    ref["fc1_b"] = b_fc1

    w_fc2, b_fc2 = linear_init(keys[5], 1024, 512)
    params["fc2_w"] = w_fc2.astype(weight_dtype)
    params["fc2_b"] = b_fc2.reshape(1, -1)
    ref["fc2_w"] = w_fc2.astype(weight_dtype).astype(f32)
    ref["fc2_b"] = b_fc2

    # fc3: zero-pad the class dim to a multiple of 128 lanes for dense stores.
    n3_pad = -(-n_classes // 128) * 128
    w_fc3, b_fc3 = linear_init(keys[6], 512, n_classes)
    params["fc3_w"] = jnp.pad(w_fc3, ((0, 0), (0, n3_pad - n_classes))).astype(weight_dtype)
    params["fc3_b"] = jnp.pad(b_fc3, (0, n3_pad - n_classes)).reshape(1, -1)
    ref["fc3_w"] = w_fc3.astype(weight_dtype).astype(f32)
    ref["fc3_b"] = b_fc3
    return params, ref


# ---------------------------------------------------------------------------
# Forward pass (matches CNNClassification.forward).
# ---------------------------------------------------------------------------
def cnn_classification_forward(params, x_nchw, *, n_classes):
    n = x_nchw.shape[0]
    x = jnp.transpose(x_nchw, (0, 2, 3, 1))          # NCHW -> NHWC (channels -> lanes)
    feat = conv_trunk(x, params)                     # (n, H/4, W/4, 128) bf16
    flat = feat.reshape(n, -1)                       # NHWC flatten (fc1 rows pre-permuted)
    logits = fc_fused(flat, params["fc1_w"], params["fc1_b"],
                      params["fc2_w"], params["fc2_b"],
                      params["fc3_w"], params["fc3_b"])
    return logits[:, :n_classes]


# Pure-JAX reference with the same bf16 rounding points (correctness check only).
def reference_forward(ref, x_nchw):
    f32, bf16 = jnp.float32, jnp.bfloat16
    rnd = lambda a: a.astype(bf16).astype(f32)

    def conv(y, w, b):
        y = lax.conv_general_dilated(rnd(y), w, (1, 1), "SAME",
                                     dimension_numbers=("NCHW", "OIHW", "NCHW"))
        return jnp.maximum(y + b.reshape(1, -1, 1, 1), 0.0)

    def pool(y):
        return lax.reduce_window(y, -jnp.inf, lax.max, (1, 1, 2, 2), (1, 1, 2, 2), "VALID")

    y = pool(conv(conv(x_nchw, ref["conv1_w"], ref["conv1_b"]),
                  ref["conv2_w"], ref["conv2_b"]))
    y = pool(conv(conv(y, ref["conv3_w"], ref["conv3_b"]),
                  ref["conv4_w"], ref["conv4_b"]))
    y = y.reshape(y.shape[0], -1)                    # NCHW flatten, like nn.Flatten
    h = jnp.maximum(rnd(y) @ ref["fc1_w"] + ref["fc1_b"], 0.0)
    h = jnp.maximum(rnd(h) @ ref["fc2_w"] + ref["fc2_b"], 0.0)
    return rnd(h) @ ref["fc3_w"] + ref["fc3_b"]


if __name__ == "__main__":
    key = jax.random.PRNGKey(0)
    kp, kx = jax.random.split(key)

    batch, n_channels, res_x, res_y = 2, 4, 16, 16
    classes = list(range(10))          # image_shape=(4,16,16), 10 classes

    params, ref_params = init_params(kp, n_channels, res_x, res_y, len(classes))
    x = jax.random.normal(kx, (batch, n_channels, res_x, res_y), jnp.float32)

    fwd = jax.jit(functools.partial(cnn_classification_forward, n_classes=len(classes)))
    out = jax.block_until_ready(fwd(params, x))

    assert out.shape == (batch, len(classes)), out.shape
    assert out.dtype == jnp.float32

    expected = reference_forward(ref_params, x)
    assert jnp.allclose(out, expected, atol=3e-2, rtol=3e-2), (
        float(jnp.max(jnp.abs(out - expected))))

    print("KERNEL_OK")
</pallas_src>

<mosaic_0001>
module attributes {stable_mosaic.version = 11 : i64} {
  func.func @_fc_fused_kernel(%arg0: i32, %arg1: memref<8x512xbf16, #tpu.memory_space<vmem>>, %arg2: memref<512x1024xbf16, #tpu.memory_space<vmem>>, %arg3: memref<1x1024xf32, #tpu.memory_space<vmem>>, %arg4: memref<1024x512xbf16, #tpu.memory_space<vmem>>, %arg5: memref<1x512xf32, #tpu.memory_space<vmem>>, %arg6: memref<512x128xbf16, #tpu.memory_space<vmem>>, %arg7: memref<1x128xf32, #tpu.memory_space<vmem>>, %arg8: memref<8x128xf32, #tpu.memory_space<vmem>>, %arg9: memref<8x1024xf32, #tpu.memory_space<vmem>>) attributes {dimension_semantics = [#tpu.dimension_semantics<arbitrary>], iteration_bounds = array<i64: 4>, scalar_prefetch = 0 : i64, scratch_operands = 1 : i64, tpu.core_type = #tpu.core_type<tc>, window_params = [{transform_indices = @transform_0, window_bounds = array<i64: 8, 512>}, {transform_indices = @transform_1, window_bounds = array<i64: 512, 1024>}, {pipeline_mode = #tpu.pipeline_mode<synchronous>, transform_indices = @transform_2, window_bounds = array<i64: 1, 1024>}, {pipeline_mode = #tpu.pipeline_mode<synchronous>, transform_indices = @transform_3, window_bounds = array<i64: 1024, 512>}, {pipeline_mode = #tpu.pipeline_mode<synchronous>, transform_indices = @transform_4, window_bounds = array<i64: 1, 512>}, {pipeline_mode = #tpu.pipeline_mode<synchronous>, transform_indices = @transform_5, window_bounds = array<i64: 512, 128>}, {pipeline_mode = #tpu.pipeline_mode<synchronous>, transform_indices = @transform_6, window_bounds = array<i64: 1, 128>}, {pipeline_mode = #tpu.pipeline_mode<synchronous>, transform_indices = @transform_7, window_bounds = array<i64: 8, 128>}]} {
    %c0_i32 = arith.constant 0 : i32
    %0 = arith.cmpi eq, %arg0, %c0_i32 : i32
    %1 = arith.extui %0 : i1 to i32
    %c0_i32_0 = arith.constant 0 : i32
    %2 = arith.cmpi ne, %1, %c0_i32_0 : i32
    scf.if %2 {
      %cst_9 = arith.constant 0.000000e+00 : f32
      %12 = vector.broadcast %cst_9 : f32 to vector<8x1024xf32>
      %c0_10 = arith.constant 0 : index
      %c0_11 = arith.constant 0 : index
      %13 = vector.load %arg9[%c0_10, %c0_11] : memref<8x1024xf32, #tpu.memory_space<vmem>>, vector<8x1024xf32>
      tpu.vector_store %arg9[%c0_10, %c0_11], %12 {strides = array<i32>} : memref<8x1024xf32, #tpu.memory_space<vmem>>, vector<8x1024xf32>,
    } else {
    }
    %c0 = arith.constant 0 : index
    %c0_1 = arith.constant 0 : index
    %3 = vector.load %arg9[%c0, %c0_1] : memref<8x1024xf32, #tpu.memory_space<vmem>>, vector<8x1024xf32>
    %c0_2 = arith.constant 0 : index
    %c0_3 = arith.constant 0 : index
    %4 = vector.load %arg1[%c0_2, %c0_3] : memref<8x512xbf16, #tpu.memory_space<vmem>>, vector<8x512xbf16>
    %c0_4 = arith.constant 0 : index
    %c0_5 = arith.constant 0 : index
    %5 = vector.load %arg2[%c0_4, %c0_5] : memref<512x1024xbf16, #tpu.memory_space<vmem>>, vector<512x1024xbf16>
    %cst = arith.constant dense<0.000000e+00> : vector<8x1024xf32>
    %6 = tpu.matmul %4, %5, %cst {dimension_numbers = #tpu.dot_dimension_numbers<[1], [0], [0], [1], [0, 0, 1, 1], [], []>} : vector<8x512xbf16>, vector<512x1024xbf16>, vector<8x1024xf32> -> vector<8x1024xf32>
    %7 = arith.addf %3, %6 : vector<8x1024xf32>
    %c0_6 = arith.constant 0 : index
    %c0_7 = arith.constant 0 : index
    %8 = vector.load %arg9[%c0_6, %c0_7] : memref<8x1024xf32, #tpu.memory_space<vmem>>, vector<8x1024xf32>
    tpu.vector_store %arg9[%c0_6, %c0_7], %7 {strides = array<i32>} : memref<8x1024xf32, #tpu.memory_space<vmem>>, vector<8x1024xf32>,
    %c3_i32 = arith.constant 3 : i32
    %9 = arith.cmpi eq, %arg0, %c3_i32 : i32
    %10 = arith.extui %9 : i1 to i32
    %c0_i32_8 = arith.constant 0 : i32
    %11 = arith.cmpi ne, %10, %c0_i32_8 : i32
    scf.if %11 {
      %c0_9 = arith.constant 0 : index
      %c0_10 = arith.constant 0 : index
      %12 = vector.load %arg9[%c0_9, %c0_10] : memref<8x1024xf32, #tpu.memory_space<vmem>>, vector<8x1024xf32>
      %c0_11 = arith.constant 0 : index
      %c0_12 = arith.constant 0 : index
      %13 = vector.load %arg3[%c0_11, %c0_12] : memref<1x1024xf32, #tpu.memory_space<vmem>>, vector<1x1024xf32>
      %14 = vector.broadcast %13 : vector<1x1024xf32> to vector<8x1024xf32>
      %15 = arith.addf %12, %14 : vector<8x1024xf32>
      %cst_13 = arith.constant 0.000000e+00 : f32
      %16 = vector.broadcast %cst_13 : f32 to vector<8x1024xf32>
      %17 = arith.maximumf %15, %16 : vector<8x1024xf32>
      %18 = arith.truncf %17 : vector<8x1024xf32> to vector<8x1024xbf16>
      %c0_14 = arith.constant 0 : index
      %c0_15 = arith.constant 0 : index
      %19 = vector.load %arg4[%c0_14, %c0_15] : memref<1024x512xbf16, #tpu.memory_space<vmem>>, vector<1024x512xbf16>
      %cst_16 = arith.constant dense<0.000000e+00> : vector<8x512xf32>
      %20 = tpu.matmul %18, %19, %cst_16 {dimension_numbers = #tpu.dot_dimension_numbers<[1], [0], [0], [1], [0, 0, 1, 1], [], []>} : vector<8x1024xbf16>, vector<1024x512xbf16>, vector<8x512xf32> -> vector<8x512xf32>
      %c0_17 = arith.constant 0 : index
      %c0_18 = arith.constant 0 : index
      %21 = vector.load %arg5[%c0_17, %c0_18] : memref<1x512xf32, #tpu.memory_space<vmem>>, vector<1x512xf32>
      %22 = vector.broadcast %21 : vector<1x512xf32> to vector<8x512xf32>
      %23 = arith.addf %20, %22 : vector<8x512xf32>
      %cst_19 = arith.constant 0.000000e+00 : f32
      %24 = vector.broadcast %cst_19 : f32 to vector<8x512xf32>
      %25 = arith.maximumf %23, %24 : vector<8x512xf32>
      %26 = arith.truncf %25 : vector<8x512xf32> to vector<8x512xbf16>
      %c0_20 = arith.constant 0 : index
      %c0_21 = arith.constant 0 : index
      %27 = vector.load %arg6[%c0_20, %c0_21] : memref<512x128xbf16, #tpu.memory_space<vmem>>, vector<512x128xbf16>
      %cst_22 = arith.constant dense<0.000000e+00> : vector<8x128xf32>
      %28 = tpu.matmul %26, %27, %cst_22 {dimension_numbers = #tpu.dot_dimension_numbers<[1], [0], [0], [1], [0, 0, 1, 1], [], []>} : vector<8x512xbf16>, vector<512x128xbf16>, vector<8x128xf32> -> vector<8x128xf32>
      %c0_23 = arith.constant 0 : index
      %c0_24 = arith.constant 0 : index
      %29 = vector.load %arg7[%c0_23, %c0_24] : memref<1x128xf32, #tpu.memory_space<vmem>>, vector<1x128xf32>
      %30 = vector.broadcast %29 : vector<1x128xf32> to vector<8x128xf32>
      %31 = arith.addf %28, %30 : vector<8x128xf32>
      %c0_25 = arith.constant 0 : index
      %c0_26 = arith.constant 0 : index
      %32 = vector.load %arg8[%c0_25, %c0_26] : memref<8x128xf32, #tpu.memory_space<vmem>>, vector<8x128xf32>
      tpu.vector_store %arg8[%c0_25, %c0_26], %31 {strides = array<i32>} : memref<8x128xf32, #tpu.memory_space<vmem>>, vector<8x128xf32>,
    } else {
    }
    return
  }
  func.func @transform_0(%arg0: i32) -> (i32, i32) {
    %c0_i32 = arith.constant 0 : i32
    %c0_i32_0 = arith.constant 0 : i32
    return %c0_i32, %arg0 : i32, i32
  }
  func.func @transform_1(%arg0: i32) -> (i32, i32) {
    %c0_i32 = arith.constant 0 : i32
    %c0_i32_0 = arith.constant 0 : i32
    return %arg0, %c0_i32 : i32, i32
  }
  func.func @transform_2(%arg0: i32) -> (i32, i32) {
    %c0_i32 = arith.constant 0 : i32
    %c0_i32_0 = arith.constant 0 : i32
    %c0_i32_1 = arith.constant 0 : i32
    return %c0_i32, %c0_i32_0 : i32, i32
  }
  func.func @transform_3(%arg0: i32) -> (i32, i32) {
    %c0_i32 = arith.constant 0 : i32
    %c0_i32_0 = arith.constant 0 : i32
    %c0_i32_1 = arith.constant 0 : i32
    return %c0_i32, %c0_i32_0 : i32, i32
  }
  func.func @transform_4(%arg0: i32) -> (i32, i32) {
    %c0_i32 = arith.constant 0 : i32
    %c0_i32_0 = arith.constant 0 : i32
    %c0_i32_1 = arith.constant 0 : i32
    return %c0_i32, %c0_i32_0 : i32, i32
  }
  func.func @transform_5(%arg0: i32) -> (i32, i32) {
    %c0_i32 = arith.constant 0 : i32
    %c0_i32_0 = arith.constant 0 : i32
    %c0_i32_1 = arith.constant 0 : i32
    return %c0_i32, %c0_i32_0 : i32, i32
  }
  func.func @transform_6(%arg0: i32) -> (i32, i32) {
    %c0_i32 = arith.constant 0 : i32
    %c0_i32_0 = arith.constant 0 : i32
    %c0_i32_1 = arith.constant 0 : i32
    return %c0_i32, %c0_i32_0 : i32, i32
  }
  func.func @transform_7(%arg0: i32) -> (i32, i32) {
    %c0_i32 = arith.constant 0 : i32
    %c0_i32_0 = arith.constant 0 : i32
    %c0_i32_1 = arith.constant 0 : i32
    return %c0_i32, %c0_i32_0 : i32, i32
  }
}

module attributes {stable_mosaic.version = 11 : i64} {
  func.func @_conv_trunk_kernel(%arg0: i32, %arg1: memref<1x16x16x4xbf16, #tpu.memory_space<vmem>>, %arg2: memref<36x32xbf16, #tpu.memory_space<vmem>>, %arg3: memref<1x32xf32, #tpu.memory_space<vmem>>, %arg4: memref<288x64xbf16, #tpu.memory_space<vmem>>, %arg5: memref<1x64xf32, #tpu.memory_space<vmem>>, %arg6: memref<576x128xbf16, #tpu.memory_space<vmem>>, %arg7: memref<1x128xf32, #tpu.memory_space<vmem>>, %arg8: memref<1152x128xbf16, #tpu.memory_space<vmem>>, %arg9: memref<1x128xf32, #tpu.memory_space<vmem>>, %arg10: memref<1x4x4x128xbf16, #tpu.memory_space<vmem>>) attributes {dimension_semantics = [#tpu.dimension_semantics<parallel>], iteration_bounds = array<i64: 2>, scalar_prefetch = 0 : i64, scratch_operands = 0 : i64, tpu.core_type = #tpu.core_type<tc>, window_params = [{transform_indices = @transform_0, window_bounds = array<i64: 1, 16, 16, 4>}, {pipeline_mode = #tpu.pipeline_mode<synchronous>, transform_indices = @transform_1, window_bounds = array<i64: 36, 32>}, {pipeline_mode = #tpu.pipeline_mode<synchronous>, transform_indices = @transform_2, window_bounds = array<i64: 1, 32>}, {pipeline_mode = #tpu.pipeline_mode<synchronous>, transform_indices = @transform_3, window_bounds = array<i64: 288, 64>}, {pipeline_mode = #tpu.pipeline_mode<synchronous>, transform_indices = @transform_4, window_bounds = array<i64: 1, 64>}, {pipeline_mode = #tpu.pipeline_mode<synchronous>, transform_indices = @transform_5, window_bounds = array<i64: 576, 128>}, {pipeline_mode = #tpu.pipeline_mode<synchronous>, transform_indices = @transform_6, window_bounds = array<i64: 1, 128>}, {pipeline_mode = #tpu.pipeline_mode<synchronous>, transform_indices = @transform_7, window_bounds = array<i64: 1152, 128>}, {pipeline_mode = #tpu.pipeline_mode<synchronous>, transform_indices = @transform_8, window_bounds = array<i64: 1, 128>}, {transform_indices = @transform_9, window_bounds = array<i64: 1, 4, 4, 128>}]} {
    %c0 = arith.constant 0 : index
    %c0_0 = arith.constant 0 : index
    %c0_1 = arith.constant 0 : index
    %c0_2 = arith.constant 0 : index
    %0 = vector.load %arg1[%c0, %c0_0, %c0_1, %c0_2] : memref<1x16x16x4xbf16, #tpu.memory_space<vmem>>, vector<1x16x16x4xbf16>
    %cst = arith.constant 0.000000e+00 : bf16
    %1 = vector.broadcast %cst : bf16 to vector<1x16x1x4xbf16>
    %2 = tpu.concatenate %1, %0, %1 in 2 : vector<1x16x1x4xbf16>, vector<1x16x16x4xbf16>, vector<1x16x1x4xbf16> -> vector<1x16x18x4xbf16>
    %cst_3 = arith.constant 0.000000e+00 : bf16
    %3 = vector.broadcast %cst_3 : bf16 to vector<1x1x18x4xbf16>
    %4 = tpu.concatenate %3, %2, %3 in 1 : vector<1x1x18x4xbf16>, vector<1x16x18x4xbf16>, vector<1x1x18x4xbf16> -> vector<1x18x18x4xbf16>
    %5 = vector.extract_strided_slice %4 {offsets = [0, 0, 0, 0], sizes = [1, 16, 16, 4], strides = [1, 1, 1, 1]} : vector<1x18x18x4xbf16> to vector<1x16x16x4xbf16>
    %6 = vector.extract_strided_slice %4 {offsets = [0, 0, 1, 0], sizes = [1, 16, 16, 4], strides = [1, 1, 1, 1]} : vector<1x18x18x4xbf16> to vector<1x16x16x4xbf16>
    %7 = vector.extract_strided_slice %4 {offsets = [0, 0, 2, 0], sizes = [1, 16, 16, 4], strides = [1, 1, 1, 1]} : vector<1x18x18x4xbf16> to vector<1x16x16x4xbf16>
    %8 = vector.extract_strided_slice %4 {offsets = [0, 1, 0, 0], sizes = [1, 16, 16, 4], strides = [1, 1, 1, 1]} : vector<1x18x18x4xbf16> to vector<1x16x16x4xbf16>
    %9 = vector.extract_strided_slice %4 {offsets = [0, 1, 1, 0], sizes = [1, 16, 16, 4], strides = [1, 1, 1, 1]} : vector<1x18x18x4xbf16> to vector<1x16x16x4xbf16>
    %10 = vector.extract_strided_slice %4 {offsets = [0, 1, 2, 0], sizes = [1, 16, 16, 4], strides = [1, 1, 1, 1]} : vector<1x18x18x4xbf16> to vector<1x16x16x4xbf16>
    %11 = vector.extract_strided_slice %4 {offsets = [0, 2, 0, 0], sizes = [1, 16, 16, 4], strides = [1, 1, 1, 1]} : vector<1x18x18x4xbf16> to vector<1x16x16x4xbf16>
    %12 = vector.extract_strided_slice %4 {offsets = [0, 2, 1, 0], sizes = [1, 16, 16, 4], strides = [1, 1, 1, 1]} : vector<1x18x18x4xbf16> to vector<1x16x16x4xbf16>
    %13 = vector.extract_strided_slice %4 {offsets = [0, 2, 2, 0], sizes = [1, 16, 16, 4], strides = [1, 1, 1, 1]} : vector<1x18x18x4xbf16> to vector<1x16x16x4xbf16>
    %14 = tpu.concatenate %5, %6, %7, %8, %9, %10, %11, %12, %13 in 3 : vector<1x16x16x4xbf16>, vector<1x16x16x4xbf16>, vector<1x16x16x4xbf16>, vector<1x16x16x4xbf16>, vector<1x16x16x4xbf16>, vector<1x16x16x4xbf16>, vector<1x16x16x4xbf16>, vector<1x16x16x4xbf16>, vector<1x16x16x4xbf16> -> vector<1x16x16x36xbf16>
    %15 = vector.shape_cast %14 : vector<1x16x16x36xbf16> to vector<256x36xbf16>
    %c0_4 = arith.constant 0 : index
    %c0_5 = arith.constant 0 : index
    %16 = vector.load %arg2[%c0_4, %c0_5] : memref<36x32xbf16, #tpu.memory_space<vmem>>, vector<36x32xbf16>
    %cst_6 = arith.constant dense<0.000000e+00> : vector<256x32xf32>
    %17 = tpu.matmul %15, %16, %cst_6 {dimension_numbers = #tpu.dot_dimension_numbers<[1], [0], [0], [1], [0, 0, 1, 1], [], []>} : vector<256x36xbf16>, vector<36x32xbf16>, vector<256x32xf32> -> vector<256x32xf32>
    %c0_7 = arith.constant 0 : index
    %c0_8 = arith.constant 0 : index
    %18 = vector.load %arg3[%c0_7, %c0_8] : memref<1x32xf32, #tpu.memory_space<vmem>>, vector<1x32xf32>
    %19 = vector.broadcast %18 : vector<1x32xf32> to vector<256x32xf32>
    %20 = arith.addf %17, %19 : vector<256x32xf32>
    %cst_9 = arith.constant 0.000000e+00 : f32
    %21 = vector.broadcast %cst_9 : f32 to vector<256x32xf32>
    %22 = arith.maximumf %20, %21 : vector<256x32xf32>
    %23 = vector.shape_cast %22 : vector<256x32xf32> to vector<1x16x16x32xf32>
    %24 = arith.truncf %23 : vector<1x16x16x32xf32> to vector<1x16x16x32xbf16>
    %cst_10 = arith.constant 0.000000e+00 : bf16
    %25 = vector.broadcast %cst_10 : bf16 to vector<1x16x1x32xbf16>
    %26 = tpu.concatenate %25, %24, %25 in 2 : vector<1x16x1x32xbf16>, vector<1x16x16x32xbf16>, vector<1x16x1x32xbf16> -> vector<1x16x18x32xbf16>
    %cst_11 = arith.constant 0.000000e+00 : bf16
    %27 = vector.broadcast %cst_11 : bf16 to vector<1x1x18x32xbf16>
    %28 = tpu.concatenate %27, %26, %27 in 1 : vector<1x1x18x32xbf16>, vector<1x16x18x32xbf16>, vector<1x1x18x32xbf16> -> vector<1x18x18x32xbf16>
    %29 = vector.extract_strided_slice %28 {offsets = [0, 0, 0, 0], sizes = [1, 16, 16, 32], strides = [1, 1, 1, 1]} : vector<1x18x18x32xbf16> to vector<1x16x16x32xbf16>
    %30 = vector.extract_strided_slice %28 {offsets = [0, 0, 1, 0], sizes = [1, 16, 16, 32], strides = [1, 1, 1, 1]} : vector<1x18x18x32xbf16> to vector<1x16x16x32xbf16>
    %31 = vector.extract_strided_slice %28 {offsets = [0, 0, 2, 0], sizes = [1, 16, 16, 32], strides = [1, 1, 1, 1]} : vector<1x18x18x32xbf16> to vector<1x16x16x32xbf16>
    %32 = vector.extract_strided_slice %28 {offsets = [0, 1, 0, 0], sizes = [1, 16, 16, 32], strides = [1, 1, 1, 1]} : vector<1x18x18x32xbf16> to vector<1x16x16x32xbf16>
    %33 = vector.extract_strided_slice %28 {offsets = [0, 1, 1, 0], sizes = [1, 16, 16, 32], strides = [1, 1, 1, 1]} : vector<1x18x18x32xbf16> to vector<1x16x16x32xbf16>
    %34 = vector.extract_strided_slice %28 {offsets = [0, 1, 2, 0], sizes = [1, 16, 16, 32], strides = [1, 1, 1, 1]} : vector<1x18x18x32xbf16> to vector<1x16x16x32xbf16>
    %35 = vector.extract_strided_slice %28 {offsets = [0, 2, 0, 0], sizes = [1, 16, 16, 32], strides = [1, 1, 1, 1]} : vector<1x18x18x32xbf16> to vector<1x16x16x32xbf16>
    %36 = vector.extract_strided_slice %28 {offsets = [0, 2, 1, 0], sizes = [1, 16, 16, 32], strides = [1, 1, 1, 1]} : vector<1x18x18x32xbf16> to vector<1x16x16x32xbf16>
    %37 = vector.extract_strided_slice %28 {offsets = [0, 2, 2, 0], sizes = [1, 16, 16, 32], strides = [1, 1, 1, 1]} : vector<1x18x18x32xbf16> to vector<1x16x16x32xbf16>
    %38 = tpu.concatenate %29, %30, %31, %32, %33, %34, %35, %36, %37 in 3 : vector<1x16x16x32xbf16>, vector<1x16x16x32xbf16>, vector<1x16x16x32xbf16>, vector<1x16x16x32xbf16>, vector<1x16x16x32xbf16>, vector<1x16x16x32xbf16>, vector<1x16x16x32xbf16>, vector<1x16x16x32xbf16>, vector<1x16x16x32xbf16> -> vector<1x16x16x288xbf16>
    %39 = vector.shape_cast %38 : vector<1x16x16x288xbf16> to vector<256x288xbf16>
    %c0_12 = arith.constant 0 : index
    %c0_13 = arith.constant 0 : index
    %40 = vector.load %arg4[%c0_12, %c0_13] : memref<288x64xbf16, #tpu.memory_space<vmem>>, vector<288x64xbf16>
    %cst_14 = arith.constant dense<0.000000e+00> : vector<256x64xf32>
    %41 = tpu.matmul %39, %40, %cst_14 {dimension_numbers = #tpu.dot_dimension_numbers<[1], [0], [0], [1], [0, 0, 1, 1], [], []>} : vector<256x288xbf16>, vector<288x64xbf16>, vector<256x64xf32> -> vector<256x64xf32>
    %c0_15 = arith.constant 0 : index
    %c0_16 = arith.constant 0 : index
    %42 = vector.load %arg5[%c0_15, %c0_16] : memref<1x64xf32, #tpu.memory_space<vmem>>, vector<1x64xf32>
    %43 = vector.broadcast %42 : vector<1x64xf32> to vector<256x64xf32>
    %44 = arith.addf %41, %43 : vector<256x64xf32>
    %cst_17 = arith.constant 0.000000e+00 : f32
    %45 = vector.broadcast %cst_17 : f32 to vector<256x64xf32>
    %46 = arith.maximumf %44, %45 : vector<256x64xf32>
    %47 = vector.shape_cast %46 : vector<256x64xf32> to vector<1x16x16x64xf32>
    %48 = vector.shape_cast %47 : vector<1x16x16x64xf32> to vector<1x16x8x2x64xf32>
    %cst_18 = arith.constant dense<0xFF800000> : vector<1x16x8x64xf32>
    %49 = vector.multi_reduction <maximumf>, %48, %cst_18 [3] : vector<1x16x8x2x64xf32> to vector<1x16x8x64xf32>
    %50 = vector.shape_cast %49 : vector<1x16x8x64xf32> to vector<1x8x2x8x64xf32>
    %cst_19 = arith.constant dense<0xFF800000> : vector<1x8x8x64xf32>
    %51 = vector.multi_reduction <maximumf>, %50, %cst_19 [2] : vector<1x8x2x8x64xf32> to vector<1x8x8x64xf32>
    %52 = arith.truncf %51 : vector<1x8x8x64xf32> to vector<1x8x8x64xbf16>
    %cst_20 = arith.constant 0.000000e+00 : bf16
    %53 = vector.broadcast %cst_20 : bf16 to vector<1x8x1x64xbf16>
    %54 = tpu.concatenate %53, %52, %53 in 2 : vector<1x8x1x64xbf16>, vector<1x8x8x64xbf16>, vector<1x8x1x64xbf16> -> vector<1x8x10x64xbf16>
    %cst_21 = arith.constant 0.000000e+00 : bf16
    %55 = vector.broadcast %cst_21 : bf16 to vector<1x1x10x64xbf16>
    %56 = tpu.concatenate %55, %54, %55 in 1 : vector<1x1x10x64xbf16>, vector<1x8x10x64xbf16>, vector<1x1x10x64xbf16> -> vector<1x10x10x64xbf16>
    %57 = vector.extract_strided_slice %56 {offsets = [0, 0, 0, 0], sizes = [1, 8, 8, 64], strides = [1, 1, 1, 1]} : vector<1x10x10x64xbf16> to vector<1x8x8x64xbf16>
    %58 = vector.extract_strided_slice %56 {offsets = [0, 0, 1, 0], sizes = [1, 8, 8, 64], strides = [1, 1, 1, 1]} : vector<1x10x10x64xbf16> to vector<1x8x8x64xbf16>
    %59 = vector.extract_strided_slice %56 {offsets = [0, 0, 2, 0], sizes = [1, 8, 8, 64], strides = [1, 1, 1, 1]} : vector<1x10x10x64xbf16> to vector<1x8x8x64xbf16>
    %60 = vector.extract_strided_slice %56 {offsets = [0, 1, 0, 0], sizes = [1, 8, 8, 64], strides = [1, 1, 1, 1]} : vector<1x10x10x64xbf16> to vector<1x8x8x64xbf16>
    %61 = vector.extract_strided_slice %56 {offsets = [0, 1, 1, 0], sizes = [1, 8, 8, 64], strides = [1, 1, 1, 1]} : vector<1x10x10x64xbf16> to vector<1x8x8x64xbf16>
    %62 = vector.extract_strided_slice %56 {offsets = [0, 1, 2, 0], sizes = [1, 8, 8, 64], strides = [1, 1, 1, 1]} : vector<1x10x10x64xbf16> to vector<1x8x8x64xbf16>
    %63 = vector.extract_strided_slice %56 {offsets = [0, 2, 0, 0], sizes = [1, 8, 8, 64], strides = [1, 1, 1, 1]} : vector<1x10x10x64xbf16> to vector<1x8x8x64xbf16>
    %64 = vector.extract_strided_slice %56 {offsets = [0, 2, 1, 0], sizes = [1, 8, 8, 64], strides = [1, 1, 1, 1]} : vector<1x10x10x64xbf16> to vector<1x8x8x64xbf16>
    %65 = vector.extract_strided_slice %56 {offsets = [0, 2, 2, 0], sizes = [1, 8, 8, 64], strides = [1, 1, 1, 1]} : vector<1x10x10x64xbf16> to vector<1x8x8x64xbf16>
    %66 = tpu.concatenate %57, %58, %59, %60, %61, %62, %63, %64, %65 in 3 : vector<1x8x8x64xbf16>, vector<1x8x8x64xbf16>, vector<1x8x8x64xbf16>, vector<1x8x8x64xbf16>, vector<1x8x8x64xbf16>, vector<1x8x8x64xbf16>, vector<1x8x8x64xbf16>, vector<1x8x8x64xbf16>, vector<1x8x8x64xbf16> -> vector<1x8x8x576xbf16>
    %67 = vector.shape_cast %66 : vector<1x8x8x576xbf16> to vector<64x576xbf16>
    %c0_22 = arith.constant 0 : index
    %c0_23 = arith.constant 0 : index
    %68 = vector.load %arg6[%c0_22, %c0_23] : memref<576x128xbf16, #tpu.memory_space<vmem>>, vector<576x128xbf16>
    %cst_24 = arith.constant dense<0.000000e+00> : vector<64x128xf32>
    %69 = tpu.matmul %67, %68, %cst_24 {dimension_numbers = #tpu.dot_dimension_numbers<[1], [0], [0], [1], [0, 0, 1, 1], [], []>} : vector<64x576xbf16>, vector<576x128xbf16>, vector<64x128xf32> -> vector<64x128xf32>
    %c0_25 = arith.constant 0 : index
    %c0_26 = arith.constant 0 : index
    %70 = vector.load %arg7[%c0_25, %c0_26] : memref<1x128xf32, #tpu.memory_space<vmem>>, vector<1x128xf32>
    %71 = vector.broadcast %70 : vector<1x128xf32> to vector<64x128xf32>
    %72 = arith.addf %69, %71 : vector<64x128xf32>
    %cst_27 = arith.constant 0.000000e+00 : f32
    %73 = vector.broadcast %cst_27 : f32 to vector<64x128xf32>
    %74 = arith.maximumf %72, %73 : vector<64x128xf32>
    %75 = vector.shape_cast %74 : vector<64x128xf32> to vector<1x8x8x128xf32>
    %76 = arith.truncf %75 : vector<1x8x8x128xf32> to vector<1x8x8x128xbf16>
    %cst_28 = arith.constant 0.000000e+00 : bf16
    %77 = vector.broadcast %cst_28 : bf16 to vector<1x8x1x128xbf16>
    %78 = tpu.concatenate %77, %76, %77 in 2 : vector<1x8x1x128xbf16>, vector<1x8x8x128xbf16>, vector<1x8x1x128xbf16> -> vector<1x8x10x128xbf16>
    %cst_29 = arith.constant 0.000000e+00 : bf16
    %79 = vector.broadcast %cst_29 : bf16 to vector<1x1x10x128xbf16>
    %80 = tpu.concatenate %79, %78, %79 in 1 : vector<1x1x10x128xbf16>, vector<1x8x10x128xbf16>, vector<1x1x10x128xbf16> -> vector<1x10x10x128xbf16>
    %81 = vector.extract_strided_slice %80 {offsets = [0, 0, 0, 0], sizes = [1, 8, 8, 128], strides = [1, 1, 1, 1]} : vector<1x10x10x128xbf16> to vector<1x8x8x128xbf16>
    %82 = vector.extract_strided_slice %80 {offsets = [0, 0, 1, 0], sizes = [1, 8, 8, 128], strides = [1, 1, 1, 1]} : vector<1x10x10x128xbf16> to vector<1x8x8x128xbf16>
    %83 = vector.extract_strided_slice %80 {offsets = [0, 0, 2, 0], sizes = [1, 8, 8, 128], strides = [1, 1, 1, 1]} : vector<1x10x10x128xbf16> to vector<1x8x8x128xbf16>
    %84 = vector.extract_strided_slice %80 {offsets = [0, 1, 0, 0], sizes = [1, 8, 8, 128], strides = [1, 1, 1, 1]} : vector<1x10x10x128xbf16> to vector<1x8x8x128xbf16>
    %85 = vector.extract_strided_slice %80 {offsets = [0, 1, 1, 0], sizes = [1, 8, 8, 128], strides = [1, 1, 1, 1]} : vector<1x10x10x128xbf16> to vector<1x8x8x128xbf16>
    %86 = vector.extract_strided_slice %80 {offsets = [0, 1, 2, 0], sizes = [1, 8, 8, 128], strides = [1, 1, 1, 1]} : vector<1x10x10x128xbf16> to vector<1x8x8x128xbf16>
    %87 = vector.extract_strided_slice %80 {offsets = [0, 2, 0, 0], sizes = [1, 8, 8, 128], strides = [1, 1, 1, 1]} : vector<1x10x10x128xbf16> to vector<1x8x8x128xbf16>
    %88 = vector.extract_strided_slice %80 {offsets = [0, 2, 1, 0], sizes = [1, 8, 8, 128], strides = [1, 1, 1, 1]} : vector<1x10x10x128xbf16> to vector<1x8x8x128xbf16>
    %89 = vector.extract_strided_slice %80 {offsets = [0, 2, 2, 0], sizes = [1, 8, 8, 128], strides = [1, 1, 1, 1]} : vector<1x10x10x128xbf16> to vector<1x8x8x128xbf16>
    %90 = tpu.concatenate %81, %82, %83, %84, %85, %86, %87, %88, %89 in 3 : vector<1x8x8x128xbf16>, vector<1x8x8x128xbf16>, vector<1x8x8x128xbf16>, vector<1x8x8x128xbf16>, vector<1x8x8x128xbf16>, vector<1x8x8x128xbf16>, vector<1x8x8x128xbf16>, vector<1x8x8x128xbf16>, vector<1x8x8x128xbf16> -> vector<1x8x8x1152xbf16>
    %91 = vector.shape_cast %90 : vector<1x8x8x1152xbf16> to vector<64x1152xbf16>
    %c0_30 = arith.constant 0 : index
    %c0_31 = arith.constant 0 : index
    %92 = vector.load %arg8[%c0_30, %c0_31] : memref<1152x128xbf16, #tpu.memory_space<vmem>>, vector<1152x128xbf16>
    %cst_32 = arith.constant dense<0.000000e+00> : vector<64x128xf32>
    %93 = tpu.matmul %91, %92, %cst_32 {dimension_numbers = #tpu.dot_dimension_numbers<[1], [0], [0], [1], [0, 0, 1, 1], [], []>} : vector<64x1152xbf16>, vector<1152x128xbf16>, vector<64x128xf32> -> vector<64x128xf32>
    %c0_33 = arith.constant 0 : index
    %c0_34 = arith.constant 0 : index
    %94 = vector.load %arg9[%c0_33, %c0_34] : memref<1x128xf32, #tpu.memory_space<vmem>>, vector<1x128xf32>
    %95 = vector.broadcast %94 : vector<1x128xf32> to vector<64x128xf32>
    %96 = arith.addf %93, %95 : vector<64x128xf32>
    %cst_35 = arith.constant 0.000000e+00 : f32
    %97 = vector.broadcast %cst_35 : f32 to vector<64x128xf32>
    %98 = arith.maximumf %96, %97 : vector<64x128xf32>
    %99 = vector.shape_cast %98 : vector<64x128xf32> to vector<1x8x8x128xf32>
    %100 = vector.shape_cast %99 : vector<1x8x8x128xf32> to vector<1x8x4x2x128xf32>
    %cst_36 = arith.constant dense<0xFF800000> : vector<1x8x4x128xf32>
    %101 = vector.multi_reduction <maximumf>, %100, %cst_36 [3] : vector<1x8x4x2x128xf32> to vector<1x8x4x128xf32>
    %102 = vector.shape_cast %101 : vector<1x8x4x128xf32> to vector<1x4x2x4x128xf32>
    %cst_37 = arith.constant dense<0xFF800000> : vector<1x4x4x128xf32>
    %103 = vector.multi_reduction <maximumf>, %102, %cst_37 [2] : vector<1x4x2x4x128xf32> to vector<1x4x4x128xf32>
    %104 = arith.truncf %103 : vector<1x4x4x128xf32> to vector<1x4x4x128xbf16>
    %c0_38 = arith.constant 0 : index
    %c0_39 = arith.constant 0 : index
    %c0_40 = arith.constant 0 : index
    %c0_41 = arith.constant 0 : index
    %105 = vector.load %arg10[%c0_38, %c0_39, %c0_40, %c0_41] : memref<1x4x4x128xbf16, #tpu.memory_space<vmem>>, vector<1x4x4x128xbf16>
    tpu.vector_store %arg10[%c0_38, %c0_39, %c0_40, %c0_41], %104 {strides = array<i32>} : memref<1x4x4x128xbf16, #tpu.memory_space<vmem>>, vector<1x4x4x128xbf16>,
    return
  }
  func.func @transform_0(%arg0: i32) -> (i32, i32, i32, i32) {
    %c0_i32 = arith.constant 0 : i32
    %c0_i32_0 = arith.constant 0 : i32
    %c0_i32_1 = arith.constant 0 : i32
    %c0_i32_2 = arith.constant 0 : i32
    return %arg0, %c0_i32, %c0_i32_0, %c0_i32_1 : i32, i32, i32, i32
  }
  func.func @transform_1(%arg0: i32) -> (i32, i32) {
    %c0_i32 = arith.constant 0 : i32
    %c0_i32_0 = arith.constant 0 : i32
    %c0_i32_1 = arith.constant 0 : i32
    return %c0_i32, %c0_i32_0 : i32, i32
  }
  func.func @transform_2(%arg0: i32) -> (i32, i32) {
    %c0_i32 = arith.constant 0 : i32
    %c0_i32_0 = arith.constant 0 : i32
    %c0_i32_1 = arith.constant 0 : i32
    return %c0_i32, %c0_i32_0 : i32, i32
  }
  func.func @transform_3(%arg0: i32) -> (i32, i32) {
    %c0_i32 = arith.constant 0 : i32
    %c0_i32_0 = arith.constant 0 : i32
    %c0_i32_1 = arith.constant 0 : i32
    return %c0_i32, %c0_i32_0 : i32, i32
  }
  func.func @transform_4(%arg0: i32) -> (i32, i32) {
    %c0_i32 = arith.constant 0 : i32
    %c0_i32_0 = arith.constant 0 : i32
    %c0_i32_1 = arith.constant 0 : i32
    return %c0_i32, %c0_i32_0 : i32, i32
  }
  func.func @transform_5(%arg0: i32) -> (i32, i32) {
    %c0_i32 = arith.constant 0 : i32
    %c0_i32_0 = arith.constant 0 : i32
    %c0_i32_1 = arith.constant 0 : i32
    return %c0_i32, %c0_i32_0 : i32, i32
  }
  func.func @transform_6(%arg0: i32) -> (i32, i32) {
    %c0_i32 = arith.constant 0 : i32
    %c0_i32_0 = arith.constant 0 : i32
    %c0_i32_1 = arith.constant 0 : i32
    return %c0_i32, %c0_i32_0 : i32, i32
  }
  func.func @transform_7(%arg0: i32) -> (i32, i32) {
    %c0_i32 = arith.constant 0 : i32
    %c0_i32_0 = arith.constant 0 : i32
    %c0_i32_1 = arith.constant 0 : i32
    return %c0_i32, %c0_i32_0 : i32, i32
  }
  func.func @transform_8(%arg0: i32) -> (i32, i32) {
    %c0_i32 = arith.constant 0 : i32
    %c0_i32_0 = arith.constant 0 : i32
    %c0_i32_1 = arith.constant 0 : i32
    return %c0_i32, %c0_i32_0 : i32, i32
  }
  func.func @transform_9(%arg0: i32) -> (i32, i32, i32, i32) {
    %c0_i32 = arith.constant 0 : i32
    %c0_i32_0 = arith.constant 0 : i32
    %c0_i32_1 = arith.constant 0 : i32
    %c0_i32_2 = arith.constant 0 : i32
    return %arg0, %c0_i32, %c0_i32_0, %c0_i32_1 : i32, i32, i32, i32
  }
}

</mosaic_0001>

<llo_original>
// kernel: cnn_classification_forward.3
$region0: #{cnn_classification_forward.3}
  #allocation0 [shape = 'u32[]', space=smem, size = 0x4, offset = 0x4, fixed_abs, tag = 'smem constant byte address 0x4 - core index']
  #allocation1 [shape = 'u32[144,128]{1,0:T(1,128)}', space=vmem, size = 0x12000, scoped, tag = 'internal scratch']
  #allocation2 [shape = 'f32[8,1024]{1,0:T(8,128)}', space=vmem, size = 0x8000, scoped, tag = 'scratch operand']
  %s0 = inlined_call_operand.vmem [shape: bf16[8,2048], index: 0, kind: input, shape index: {}]
  %s1 = inlined_call_operand.hbm [shape: bf16[2048,1024], index: 1, kind: input, shape index: {}]
  %s2 = inlined_call_operand.hbm [shape: f32[1,1024], index: 2, kind: input, shape index: {}]
  %s3 = inlined_call_operand.hbm [shape: bf16[1024,512], index: 3, kind: input, shape index: {}]
  %s4 = inlined_call_operand.hbm [shape: f32[1,512], index: 4, kind: input, shape index: {}]
  %s5 = inlined_call_operand.hbm [shape: bf16[512,128], index: 5, kind: input, shape index: {}]
  %s6 = inlined_call_operand.hbm [shape: f32[1,128], index: 6, kind: input, shape index: {}]
  %s7 = inlined_call_operand.vmem [shape: f32[8,128], index: 7, kind: output, shape index: {}]
  %s8 = sld [smem:[#allocation0]]
  $region93: #{cnn_classification_forward.3} parent=0
    _
  %s10 = ssub.s32 1, %s8
  %s11 = scalar_select 0, %s10, %s8
  $region1: #{cnn_classification_forward.3} parent=0
    #allocation3 [shape = 'u8[2097152]{0}', space=vmem, size = 0x200000, scoped, tag = 'input window, operand 1']
    #allocation4 [shape = 's32[2]{0}', space=sflag, size = 0x8, scoped, tag = 'scoped memory for cnn_classification_forward.3']
    #allocation5 [shape = 'u8[4096]{0}', space=vmem, size = 0x1000, scoped, tag = 'input window, operand 2, single buffered']
    #allocation6 [shape = 's32[1]{0}', space=sflag, size = 0x4, scoped, tag = 'scoped memory for cnn_classification_forward.3']
    #allocation7 [shape = 'u8[1048576]{0}', space=vmem, size = 0x100000, scoped, tag = 'input window, operand 3, single buffered']
    #allocation8 [shape = 'u8[2048]{0}', space=vmem, size = 0x800, scoped, tag = 'input window, operand 4, single buffered']
    #allocation9 [shape = 's32[1]{0}', space=sflag, size = 0x4, scoped, tag = 'scoped memory for cnn_classification_forward.3']
    #allocation10 [shape = 'u8[131072]{0}', space=vmem, size = 0x20000, scoped, tag = 'input window, operand 5, single buffered']
    #allocation11 [shape = 'u8[512]{0}', space=vmem, size = 0x400, scoped, tag = 'input window, operand 6, single buffered']
    #allocation12 [shape = 's32[1]{0}', space=sflag, size = 0x4, scoped, tag = 'scoped memory for cnn_classification_forward.3']
    %12 = vsyncpa [#allocation4], 0
    %s13 = scalar_lea.sflag [#allocation4], 1
    %14 = vsyncpa %s13, 0
    %15 = vsyncpa [#allocation6], 0
    %16 = vsyncpa [#allocation9], 0
    %17 = vsyncpa [#allocation12], 0
    loop: start=0, step=1, limit=6
    $region2: #{cnn_classification_forward.3} parent=1 // loop_pre_header
      _
    $region3: #{cnn_classification_forward.3} parent=1 // loop_header
      %s19 = sphi 0, %s23
      %p20 = scmp.ge.s32.totalorder %s19, 6
      %s29 = sphi 0, %s31
      %s32 = sphi 0, %s29
      %s33 = sphi 0, %s32
      %s49 = sphi 0, %s33
      %s55 = sphi 0, %s57
      %s58 = sphi 0, %s55
      %s59 = sphi 0, %s58
      %s75 = sphi 0, %s59
      %s79 = sphi 0, %s79
      %s81 = sphi 0, %s79
      %s82 = sphi 0, %s81
      %s96 = sphi 0, %s82
      %s100 = sphi 0, %s100
      %s102 = sphi 0, %s100
      %s103 = sphi 0, %s102
      %s117 = sphi 0, %s103
      %s121 = sphi 0, %s121
      %s123 = sphi 0, %s121
      %s124 = sphi 0, %s123
      %s138 = sphi 0, %s124
      %s142 = sphi 0, %s142
      %s144 = sphi 0, %s142
      %s145 = sphi 0, %s144
      %s159 = sphi 0, %s145
      %s163 = sphi 0, %s163
      %s165 = sphi 0, %s163
      %s166 = sphi 0, %s165
      %s180 = sphi 0, %s166
      %s184 = sphi 0, %s184
      %s186 = sphi 0, %s184
      %s187 = sphi 0, %s186
      %s201 = sphi 0, %s187
    $region4: #{cnn_classification_forward.3} parent=1 // loop_header_branch
      %22 = sbr.rel (%p20) target = $region8
    $region5: #{cnn_classification_forward.3} parent=1 // loop_body
      %s24 = ssub.s32 %s19, 1
      %s25 = ssub.s32 %s19, 2
      %s26 = sadd.s32 %s19, 1
      %s27 = ssub.s32 %s19, %s26
      %p28 = scmp.eq.s32.totalorder %s27, 0
      %s30 = sadd.s32 %s29, 1
      %s31 = scalar_select %p28, %s29, %s30
      %p34 = pneg %p28
      %p35 = scmp.eq.s32.totalorder %s19, 3
      %p36 = por %p34, %p35
      %p37 = scmp.ne.s32.totalorder %s29, %s32
      %p38 = scmp.eq.s32.totalorder %s19, 0
      %p39 = por %p37, %p38
      %p40 = scmp.ne.s32.totalorder %s29, %s32
      %p41 = scmp.eq.s32.totalorder %s24, 3
      %p42 = por %p40, %p41
      %p43 = scmp.ne.s32.totalorder %s32, %s33
      %p44 = scmp.eq.s32.totalorder %s24, 0
      %p45 = por %p43, %p44
      %p46 = scmp.ne.s32.totalorder %s32, %s33
      %p47 = scmp.eq.s32.totalorder %s25, 3
      %p48 = por %p46, %p47
      %p50 = scmp.ne.s32.totalorder %s33, %s49
      %p51 = scmp.eq.s32.totalorder %s25, 0
      %p52 = por %p50, %p51
      %s53 = ssub.s32 %s19, %s26
      %p54 = scmp.eq.s32.totalorder %s53, 0
      %s56 = sadd.s32 %s55, 1
      %s57 = scalar_select %p54, %s55, %s56
      %p60 = pneg %p54
      %p61 = scmp.eq.s32.totalorder %s19, 3
      %p62 = por %p60, %p61
      %p63 = scmp.ne.s32.totalorder %s55, %s58
      %p64 = scmp.eq.s32.totalorder %s19, 0
      %p65 = por %p63, %p64
      %p66 = scmp.ne.s32.totalorder %s55, %s58
      %p67 = scmp.eq.s32.totalorder %s24, 3
      %p68 = por %p66, %p67
      %p69 = scmp.ne.s32.totalorder %s58, %s59
      %p70 = scmp.eq.s32.totalorder %s24, 0
      %p71 = por %p69, %p70
      %p72 = scmp.ne.s32.totalorder %s58, %s59
      %p73 = scmp.eq.s32.totalorder %s25, 3
      %p74 = por %p72, %p73
      %p76 = scmp.ne.s32.totalorder %s59, %s75
      %p77 = scmp.eq.s32.totalorder %s25, 0
      %p78 = por %p76, %p77
      %s80 = sadd.s32 %s79, 1
      %p83 = scmp.eq.s32.totalorder %s19, 3
      %p84 = scmp.ne.s32.totalorder %s79, %s81
      %p85 = scmp.eq.s32.totalorder %s19, 0
      %p86 = por %p84, %p85
      %p87 = scmp.ne.s32.totalorder %s79, %s81
      %p88 = scmp.eq.s32.totalorder %s24, 3
      %p89 = por %p87, %p88
      %p90 = scmp.ne.s32.totalorder %s81, %s82
      %p91 = scmp.eq.s32.totalorder %s24, 0
      %p92 = por %p90, %p91
      %p93 = scmp.ne.s32.totalorder %s81, %s82
      %p94 = scmp.eq.s32.totalorder %s25, 3
      %p95 = por %p93, %p94
      %p97 = scmp.ne.s32.totalorder %s82, %s96
      %p98 = scmp.eq.s32.totalorder %s25, 0
      %p99 = por %p97, %p98
      %s101 = sadd.s32 %s100, 1
      %p104 = scmp.eq.s32.totalorder %s19, 3
      %p105 = scmp.ne.s32.totalorder %s100, %s102
      %p106 = scmp.eq.s32.totalorder %s19, 0
      %p107 = por %p105, %p106
      %p108 = scmp.ne.s32.totalorder %s100, %s102
      %p109 = scmp.eq.s32.totalorder %s24, 3
      %p110 = por %p108, %p109
      %p111 = scmp.ne.s32.totalorder %s102, %s103
      %p112 = scmp.eq.s32.totalorder %s24, 0
      %p113 = por %p111, %p112
      %p114 = scmp.ne.s32.totalorder %s102, %s103
      %p115 = scmp.eq.s32.totalorder %s25, 3
      %p116 = por %p114, %p115
      %p118 = scmp.ne.s32.totalorder %s103, %s117
      %p119 = scmp.eq.s32.totalorder %s25, 0
      %p120 = por %p118, %p119
      %s122 = sadd.s32 %s121, 1
      %p125 = scmp.eq.s32.totalorder %s19, 3
      %p126 = scmp.ne.s32.totalorder %s121, %s123
      %p127 = scmp.eq.s32.totalorder %s19, 0
      %p128 = por %p126, %p127
      %p129 = scmp.ne.s32.totalorder %s121, %s123
      %p130 = scmp.eq.s32.totalorder %s24, 3
      %p131 = por %p129, %p130
      %p132 = scmp.ne.s32.totalorder %s123, %s124
      %p133 = scmp.eq.s32.totalorder %s24, 0
      %p134 = por %p132, %p133
      %p135 = scmp.ne.s32.totalorder %s123, %s124
      %p136 = scmp.eq.s32.totalorder %s25, 3
      %p137 = por %p135, %p136
      %p139 = scmp.ne.s32.totalorder %s124, %s138
      %p140 = scmp.eq.s32.totalorder %s25, 0
      %p141 = por %p139, %p140
      %s143 = sadd.s32 %s142, 1
      %p146 = scmp.eq.s32.totalorder %s19, 3
      %p147 = scmp.ne.s32.totalorder %s142, %s144
      %p148 = scmp.eq.s32.totalorder %s19, 0
      %p149 = por %p147, %p148
      %p150 = scmp.ne.s32.totalorder %s142, %s144
      %p151 = scmp.eq.s32.totalorder %s24, 3
      %p152 = por %p150, %p151
      %p153 = scmp.ne.s32.totalorder %s144, %s145
      %p154 = scmp.eq.s32.totalorder %s24, 0
      %p155 = por %p153, %p154
      %p156 = scmp.ne.s32.totalorder %s144, %s145
      %p157 = scmp.eq.s32.totalorder %s25, 3
      %p158 = por %p156, %p157
      %p160 = scmp.ne.s32.totalorder %s145, %s159
      %p161 = scmp.eq.s32.totalorder %s25, 0
      %p162 = por %p160, %p161
      %s164 = sadd.s32 %s163, 1
      %p167 = scmp.eq.s32.totalorder %s19, 3
      %p168 = scmp.ne.s32.totalorder %s163, %s165
      %p169 = scmp.eq.s32.totalorder %s19, 0
      %p170 = por %p168, %p169
      %p171 = scmp.ne.s32.totalorder %s163, %s165
      %p172 = scmp.eq.s32.totalorder %s24, 3
      %p173 = por %p171, %p172
      %p174 = scmp.ne.s32.totalorder %s165, %s166
      %p175 = scmp.eq.s32.totalorder %s24, 0
      %p176 = por %p174, %p175
      %p177 = scmp.ne.s32.totalorder %s165, %s166
      %p178 = scmp.eq.s32.totalorder %s25, 3
      %p179 = por %p177, %p178
      %p181 = scmp.ne.s32.totalorder %s166, %s180
      %p182 = scmp.eq.s32.totalorder %s25, 0
      %p183 = por %p181, %p182
      %s185 = sadd.s32 %s184, 1
      %p188 = scmp.eq.s32.totalorder %s19, 3
      %p189 = scmp.ne.s32.totalorder %s184, %s186
      %p190 = scmp.eq.s32.totalorder %s19, 0
      %p191 = por %p189, %p190
      %p192 = scmp.ne.s32.totalorder %s184, %s186
      %p193 = scmp.eq.s32.totalorder %s24, 3
      %p194 = por %p192, %p193
      %p195 = scmp.ne.s32.totalorder %s186, %s187
      %p196 = scmp.eq.s32.totalorder %s24, 0
      %p197 = por %p195, %p196
      %p198 = scmp.ne.s32.totalorder %s186, %s187
      %p199 = scmp.eq.s32.totalorder %s25, 3
      %p200 = por %p198, %p199
      %p202 = scmp.ne.s32.totalorder %s187, %s201
      %p203 = scmp.eq.s32.totalorder %s25, 0
      %p204 = por %p202, %p203
      %p205 = scmp.le.s32.totalorder 1, %s19
      %p206 = scmp.lt.s32.totalorder %s19, 5
      %p207 = pnand %p205, %p206
      %p208 = pneg %p207
      // Predicated region
      $region9: #{cnn_classification_forward.3} parent=5 // pred_check
        _
      $region10: #{cnn_classification_forward.3} parent=5 // pred_check_branch
        %210 = sbr.rel (%p207) target = $region12
      $region11: #{cnn_classification_forward.3} parent=5 // pred_region
        %s211 = ssub.s32 %s19, 1
        // Predicated region
        $region13: #{cnn_classification_forward.3} parent=11 // pred_check
          %p212 = pneg %p92
        $region14: #{cnn_classification_forward.3} parent=11 // pred_check_branch
          %214 = sbr.rel (%p212) target = $region16
        $region15: #{cnn_classification_forward.3} parent=11 // pred_region
          %s216 = ssub.s32 128, 128
          %217 = vsyncadd [#allocation6], %s216
          %s219 = sshll.u32 [#allocation5], 4
          %s220 = int_to_ptr.vmem [resolvable:$true] %s219
          %222 = dma.hbm_to_vmem [thread:$0]  %s2, 128, %s220, [#allocation6]
        $region16: #{cnn_classification_forward.3} parent=11 // pred_fallthru
          _
        // Predicated region
        $region17: #{cnn_classification_forward.3} parent=11 // pred_check
          %p223 = pneg %p113
        $region18: #{cnn_classification_forward.3} parent=11 // pred_check_branch
          %225 = sbr.rel (%p223) target = $region20
        $region19: #{cnn_classification_forward.3} parent=11 // pred_region
          %s227 = ssub.s32 32768, 32768
          %228 = vsyncadd [#allocation6], %s227
          %s229 = sshll.u32 [#allocation7], 4
          %s230 = int_to_ptr.vmem [resolvable:$true] %s229
          %235 = dma.hbm_to_vmem [thread:$0]  %s3, 32768, %s230, [#allocation6], 256, 256, 16
        $region20: #{cnn_classification_forward.3} parent=11 // pred_fallthru
          _
        // Predicated region
        $region21: #{cnn_classification_forward.3} parent=11 // pred_check
          %p236 = pneg %p134
        $region22: #{cnn_classification_forward.3} parent=11 // pred_check_branch
          %238 = sbr.rel (%p236) target = $region24
        $region23: #{cnn_classification_forward.3} parent=11 // pred_region
          %s240 = ssub.s32 64, 64
          %241 = vsyncadd [#allocation9], %s240
          %s243 = sshll.u32 [#allocation8], 4
          %s244 = int_to_ptr.vmem [resolvable:$true] %s243
          %246 = dma.hbm_to_vmem [thread:$0]  %s4, 64, %s244, [#allocation9]
        $region24: #{cnn_classification_forward.3} parent=11 // pred_fallthru
          _
        // Predicated region
        $region25: #{cnn_classification_forward.3} parent=11 // pred_check
          %p247 = pneg %p155
        $region26: #{cnn_classification_forward.3} parent=11 // pred_check_branch
          %249 = sbr.rel (%p247) target = $region28
        $region27: #{cnn_classification_forward.3} parent=11 // pred_region
          %s251 = ssub.s32 4096, 4096
          %252 = vsyncadd [#allocation9], %s251
          %s253 = sshll.u32 [#allocation10], 4
          %s254 = int_to_ptr.vmem [resolvable:$true] %s253
          %259 = dma.hbm_to_vmem [thread:$0]  %s5, 4096, %s254, [#allocation9], 64, 64, 4
        $region28: #{cnn_classification_forward.3} parent=11 // pred_fallthru
          _
        // Predicated region
        $region29: #{cnn_classification_forward.3} parent=11 // pred_check
          %p260 = pneg %p176
        $region30: #{cnn_classification_forward.3} parent=11 // pred_check_branch
          %262 = sbr.rel (%p260) target = $region32
        $region31: #{cnn_classification_forward.3} parent=11 // pred_region
          %s264 = ssub.s32 16, 16
          %265 = vsyncadd [#allocation12], %s264
          %s267 = sshll.u32 [#allocation11], 4
          %s268 = int_to_ptr.vmem [resolvable:$true] %s267
          %270 = dma.hbm_to_vmem [thread:$0]  %s6, 16, %s268, [#allocation12]
        $region32: #{cnn_classification_forward.3} parent=11 // pred_fallthru
          _
      $region12: #{cnn_classification_forward.3} parent=5 // pred_fallthru
        _
      %p271 = scmp.lt.s32.totalorder %s19, 4
      // Predicated region
      $region33: #{cnn_classification_forward.3} parent=5 // pred_check
        %p272 = pneg %p271
      $region34: #{cnn_classification_forward.3} parent=5 // pred_check_branch
        %274 = sbr.rel (%p272) target = $region36
      $region35: #{cnn_classification_forward.3} parent=5 // pred_region
        // Predicated region
        $region37: #{cnn_classification_forward.3} parent=35 // pred_check
          %p275 = pneg %p39
        $region38: #{cnn_classification_forward.3} parent=35 // pred_check_branch
          %277 = sbr.rel (%p275) target = $region40
        $region39: #{cnn_classification_forward.3} parent=35 // pred_region
          %s278 = smul.u32 4, %s19
          %p279 = scmp.lt.s32.totalorder %s278, 15
          %s280 = scalar_select %p279, %s278, 15
          %s281 = smul.addr %s280, 4
          %s282 = scalar_lea.vmem %s0, %s281
          %s283 = smul.u32 4, %s19
        $region40: #{cnn_classification_forward.3} parent=35 // pred_fallthru
          _
        // Predicated region
        $region41: #{cnn_classification_forward.3} parent=35 // pred_check
          %p284 = pneg %p65
        $region42: #{cnn_classification_forward.3} parent=35 // pred_check_branch
          %286 = sbr.rel (%p284) target = $region44
        $region43: #{cnn_classification_forward.3} parent=35 // pred_region
          %s287 = sand.u32 %s55, 1
          %s288 = scalar_lea.sflag [#allocation4], %s287
          %s289 = sand.u32 %s55, 1
          %s290 = smul.addr %s289, 2048
          %s291 = scalar_lea.vmem [#allocation3], %s290
          %s292 = smul.u32 64, %s19
          %s294 = ssub.s32 32768, 32768
          %295 = vsyncadd %s288, %s294
          %s296 = smul.addr %s292, 8
          %s297 = smul.addr %s296, 64
          %s298 = scalar_lea.hbm %s1, %s297
          %s299 = sshll.u32 %s291, 4
          %s300 = int_to_ptr.vmem [resolvable:$true] %s299
          %305 = dma.hbm_to_vmem [thread:$0]  %s298, 32768, %s300, %s288, 512, 512, 32
        $region44: #{cnn_classification_forward.3} parent=35 // pred_fallthru
          _
      $region36: #{cnn_classification_forward.3} parent=5 // pred_fallthru
        _
      %p306 = scmp.le.s32.totalorder 1, %s19
      %p307 = scmp.lt.s32.totalorder %s19, 5
      %p308 = pnand %p306, %p307
      %p309 = pneg %p308
      // Predicated region
      $region45: #{cnn_classification_forward.3} parent=5 // pred_check
        _
      $region46: #{cnn_classification_forward.3} parent=5 // pred_check_branch
        %311 = sbr.rel (%p308) target = $region48
      $region47: #{cnn_classification_forward.3} parent=5 // pred_region
        %s312 = ssub.s32 %s19, 1
        %s313 = sand.u32 %s58, 1
        %s314 = scalar_lea.sflag [#allocation4], %s313
        %s315 = sand.u32 %s58, 1
        %s316 = smul.addr %s315, 2048
        %s317 = scalar_lea.vmem [#allocation3], %s316
        // Predicated region
        $region49: #{cnn_classification_forward.3} parent=47 // pred_check
          %p318 = pneg %p71
        $region50: #{cnn_classification_forward.3} parent=47 // pred_check_branch
          %320 = sbr.rel (%p318) target = $region52
        $region51: #{cnn_classification_forward.3} parent=47 // pred_region
          %321 = dma.done %s314, 32768
        $region52: #{cnn_classification_forward.3} parent=47 // pred_fallthru
          _
        // Predicated region
        $region53: #{cnn_classification_forward.3} parent=47 // pred_check
          %p322 = pneg %p92
        $region54: #{cnn_classification_forward.3} parent=47 // pred_check_branch
          %324 = sbr.rel (%p322) target = $region56
        $region55: #{cnn_classification_forward.3} parent=47 // pred_region
          %325 = dma.done [#allocation6], 128
        $region56: #{cnn_classification_forward.3} parent=47 // pred_fallthru
          _
        // Predicated region
        $region57: #{cnn_classification_forward.3} parent=47 // pred_check
          %p326 = pneg %p113
        $region58: #{cnn_classification_forward.3} parent=47 // pred_check_branch
          %328 = sbr.rel (%p326) target = $region60
        $region59: #{cnn_classification_forward.3} parent=47 // pred_region
          %329 = dma.done [#allocation6], 32768
        $region60: #{cnn_classification_forward.3} parent=47 // pred_fallthru
          _
        // Predicated region
        $region61: #{cnn_classification_forward.3} parent=47 // pred_check
          %p330 = pneg %p134
        $region62: #{cnn_classification_forward.3} parent=47 // pred_check_branch
          %332 = sbr.rel (%p330) target = $region64
        $region63: #{cnn_classification_forward.3} parent=47 // pred_region
          %333 = dma.done [#allocation9], 64
        $region64: #{cnn_classification_forward.3} parent=47 // pred_fallthru
          _
        // Predicated region
        $region65: #{cnn_classification_forward.3} parent=47 // pred_check
          %p334 = pneg %p155
        $region66: #{cnn_classification_forward.3} parent=47 // pred_check_branch
          %336 = sbr.rel (%p334) target = $region68
        $region67: #{cnn_classification_forward.3} parent=47 // pred_region
          %337 = dma.done [#allocation9], 4096
        $region68: #{cnn_classification_forward.3} parent=47 // pred_fallthru
          _
        // Predicated region
        $region69: #{cnn_classification_forward.3} parent=47 // pred_check
          %p338 = pneg %p176
        $region70: #{cnn_classification_forward.3} parent=47 // pred_check_branch
          %340 = sbr.rel (%p338) target = $region72
        $region71: #{cnn_classification_forward.3} parent=47 // pred_region
          %341 = dma.done [#allocation12], 16
        $region72: #{cnn_classification_forward.3} parent=47 // pred_fallthru
          _
        %s342 = smul.u32 4, %s24
        %p343 = scmp.lt.s32.totalorder %s342, 15
        %s344 = scalar_select %p343, %s342, 15
        %s345 = smul.addr %s344, 4
        %s346 = scalar_lea.vmem %s0, %s345
        %p347 = pneg %p45
        %p348 = pneg %p42
        %s349 = sand.u32 %s58, 1
        %s350 = scalar_lea.sflag [#allocation4], %s349
        %s351 = sand.u32 %s58, 1
        %s352 = smul.addr %s351, 2048
        %s353 = scalar_lea.vmem [#allocation3], %s352
        %p354 = pneg %p71
        %p355 = pneg %p68
        %p356 = pneg %p92
        %p357 = pneg %p89
        %p358 = pneg %p113
        %p359 = pneg %p110
        %p360 = pneg %p134
        %p361 = pneg %p131
        %p362 = pneg %p155
        %p363 = pneg %p152
        %p364 = pneg %p176
        %p365 = pneg %p173
        %p366 = pneg %p197
        %p367 = pneg %p194
        %s368 = smul.u32 4, %s24
        %p369 = scmp.lt.s32.totalorder %s368, 15
        %s370 = scalar_select %p369, %s368, 15
        %s371 = smul.addr %s370, 4
        %s372 = scalar_lea.vmem %s0, %s371
        %s373 = smul.u32 4, %s24
        %s374 = smul.u32 64, %s24
        %p376 = scmp.eq.s32.totalorder %s24, 0
        // Predicated region
        $region73: #{cnn_classification_forward.3} parent=47 // pred_check
          %p377 = pneg %p376
        $region74: #{cnn_classification_forward.3} parent=47 // pred_check_branch
          %379 = sbr.rel (%p377) target = $region76
        $region75: #{cnn_classification_forward.3} parent=47 // pred_region
          %380 = vst [vmem:[#allocation2] sm:$0xff] 0.0
          %381 = vst [vmem:[#allocation2 + $0x8] sm:$0xff] 0.0
          %382 = vst [vmem:[#allocation2 + $0x10] sm:$0xff] 0.0
          %383 = vst [vmem:[#allocation2 + $0x18] sm:$0xff] 0.0
          %384 = vst [vmem:[#allocation2 + $0x20] sm:$0xff] 0.0
          %385 = vst [vmem:[#allocation2 + $0x28] sm:$0xff] 0.0
          %386 = vst [vmem:[#allocation2 + $0x30] sm:$0xff] 0.0
          %387 = vst [vmem:[#allocation2 + $0x38] sm:$0xff] 0.0
        $region76: #{cnn_classification_forward.3} parent=47 // pred_fallthru
          _
        %v388 = vld [vmem:[#allocation2] sm:$0xff]
        %v389 = vld [vmem:[#allocation2 + $0x8] sm:$0xff]
        %v390 = vld [vmem:[#allocation2 + $0x10] sm:$0xff]
        %v391 = vld [vmem:[#allocation2 + $0x18] sm:$0xff]
        %v392 = vld [vmem:[#allocation2 + $0x20] sm:$0xff]
        %v393 = vld [vmem:[#allocation2 + $0x28] sm:$0xff]
        %v394 = vld [vmem:[#allocation2 + $0x30] sm:$0xff]
        %v395 = vld [vmem:[#allocation2 + $0x38] sm:$0xff]
        %v396 = vld [vmem:[%s372] sm:$0xff]
        %v397 = vld [vmem:[%s372 + $0x8] sm:$0xff]
        %v398 = vld [vmem:[%s317] sm:$0xff]
        %v399 = vld [vmem:[%s317 + $0x8] sm:$0xff]
        %v400 = vld [vmem:[%s317 + $0x10] sm:$0xff]
        %v401 = vld [vmem:[%s317 + $0x18] sm:$0xff]
        %v402 = vld [vmem:[%s317 + $0x20] sm:$0xff]
        %v403 = vld [vmem:[%s317 + $0x28] sm:$0xff]
        %v404 = vld [vmem:[%s317 + $0x30] sm:$0xff]
        %v405 = vld [vmem:[%s317 + $0x38] sm:$0xff]
        %v406 = vld [vmem:[%s317 + $0x40] sm:$0xff]
        %v407 = vld [vmem:[%s317 + $0x48] sm:$0xff]
        %v408 = vld [vmem:[%s317 + $0x50] sm:$0xff]
        %v409 = vld [vmem:[%s317 + $0x58] sm:$0xff]
        %v410 = vld [vmem:[%s317 + $0x60] sm:$0xff]
        %v411 = vld [vmem:[%s317 + $0x68] sm:$0xff]
        %v412 = vld [vmem:[%s317 + $0x70] sm:$0xff]
        %v413 = vld [vmem:[%s317 + $0x78] sm:$0xff]
        %v414 = vld [vmem:[%s317 + $0x80] sm:$0xff]
        %v415 = vld [vmem:[%s317 + $0x88] sm:$0xff]
        %v416 = vld [vmem:[%s317 + $0x90] sm:$0xff]
        %v417 = vld [vmem:[%s317 + $0x98] sm:$0xff]
        %v418 = vld [vmem:[%s317 + $0xa0] sm:$0xff]
        %v419 = vld [vmem:[%s317 + $0xa8] sm:$0xff]
        %v420 = vld [vmem:[%s317 + $0xb0] sm:$0xff]
        %v421 = vld [vmem:[%s317 + $0xb8] sm:$0xff]
        %v422 = vld [vmem:[%s317 + $0xc0] sm:$0xff]
        %v423 = vld [vmem:[%s317 + $0xc8] sm:$0xff]
        %v424 = vld [vmem:[%s317 + $0xd0] sm:$0xff]
        %v425 = vld [vmem:[%s317 + $0xd8] sm:$0xff]
        %v426 = vld [vmem:[%s317 + $0xe0] sm:$0xff]
        %v427 = vld [vmem:[%s317 + $0xe8] sm:$0xff]
        %v428 = vld [vmem:[%s317 + $0xf0] sm:$0xff]
        %v429 = vld [vmem:[%s317 + $0xf8] sm:$0xff]
        %v430 = vld [vmem:[%s317 + $0x100] sm:$0xff]
        %v431 = vld [vmem:[%s317 + $0x108] sm:$0xff]
        %v432 = vld [vmem:[%s317 + $0x110] sm:$0xff]
        %v433 = vld [vmem:[%s317 + $0x118] sm:$0xff]
        %v434 = vld [vmem:[%s317 + $0x120] sm:$0xff]
        %v435 = vld [vmem:[%s317 + $0x128] sm:$0xff]
        %v436 = vld [vmem:[%s317 + $0x130] sm:$0xff]
        %v437 = vld [vmem:[%s317 + $0x138] sm:$0xff]
        %v438 = vld [vmem:[%s317 + $0x140] sm:$0xff]
        %v439 = vld [vmem:[%s317 + $0x148] sm:$0xff]
        %v440 = vld [vmem:[%s317 + $0x150] sm:$0xff]
        %v441 = vld [vmem:[%s317 + $0x158] sm:$0xff]
        %v442 = vld [vmem:[%s317 + $0x160] sm:$0xff]
        %v443 = vld [vmem:[%s317 + $0x168] sm:$0xff]
        %v444 = vld [vmem:[%s317 + $0x170] sm:$0xff]
        %v445 = vld [vmem:[%s317 + $0x178] sm:$0xff]
        %v446 = vld [vmem:[%s317 + $0x180] sm:$0xff]
        %v447 = vld [vmem:[%s317 + $0x188] sm:$0xff]
        %v448 = vld [vmem:[%s317 + $0x190] sm:$0xff]
        %v449 = vld [vmem:[%s317 + $0x198] sm:$0xff]
        %v450 = vld [vmem:[%s317 + $0x1a0] sm:$0xff]
        %v451 = vld [vmem:[%s317 + $0x1a8] sm:$0xff]
        %v452 = vld [vmem:[%s317 + $0x1b0] sm:$0xff]
        %v453 = vld [vmem:[%s317 + $0x1b8] sm:$0xff]
        %v454 = vld [vmem:[%s317 + $0x1c0] sm:$0xff]
        %v455 = vld [vmem:[%s317 + $0x1c8] sm:$0xff]
        %v456 = vld [vmem:[%s317 + $0x1d0] sm:$0xff]
        %v457 = vld [vmem:[%s317 + $0x1d8] sm:$0xff]
        %v458 = vld [vmem:[%s317 + $0x1e0] sm:$0xff]
        %v459 = vld [vmem:[%s317 + $0x1e8] sm:$0xff]
        %v460 = vld [vmem:[%s317 + $0x1f0] sm:$0xff]
        %v461 = vld [vmem:[%s317 + $0x1f8] sm:$0xff]
        %v462 = vld [vmem:[%s317 + $0x200] sm:$0xff]
        %v463 = vld [vmem:[%s317 + $0x208] sm:$0xff]
        %v464 = vld [vmem:[%s317 + $0x210] sm:$0xff]
        %v465 = vld [vmem:[%s317 + $0x218] sm:$0xff]
        %v466 = vld [vmem:[%s317 + $0x220] sm:$0xff]
        %v467 = vld [vmem:[%s317 + $0x228] sm:$0xff]
        %v468 = vld [vmem:[%s317 + $0x230] sm:$0xff]
        %v469 = vld [vmem:[%s317 + $0x238] sm:$0xff]
        %v470 = vld [vmem:[%s317 + $0x240] sm:$0xff]
        %v471 = vld [vmem:[%s317 + $0x248] sm:$0xff]
        %v472 = vld [vmem:[%s317 + $0x250] sm:$0xff]
        %v473 = vld [vmem:[%s317 + $0x258] sm:$0xff]
        %v474 = vld [vmem:[%s317 + $0x260] sm:$0xff]
        %v475 = vld [vmem:[%s317 + $0x268] sm:$0xff]
        %v476 = vld [vmem:[%s317 + $0x270] sm:$0xff]
        %v477 = vld [vmem:[%s317 + $0x278] sm:$0xff]
        %v478 = vld [vmem:[%s317 + $0x280] sm:$0xff]
        %v479 = vld [vmem:[%s317 + $0x288] sm:$0xff]
        %v480 = vld [vmem:[%s317 + $0x290] sm:$0xff]
        %v481 = vld [vmem:[%s317 + $0x298] sm:$0xff]
        %v482 = vld [vmem:[%s317 + $0x2a0] sm:$0xff]
        %v483 = vld [vmem:[%s317 + $0x2a8] sm:$0xff]
        %v484 = vld [vmem:[%s317 + $0x2b0] sm:$0xff]
        %v485 = vld [vmem:[%s317 + $0x2b8] sm:$0xff]
        %v486 = vld [vmem:[%s317 + $0x2c0] sm:$0xff]
        %v487 = vld [vmem:[%s317 + $0x2c8] sm:$0xff]
        %v488 = vld [vmem:[%s317 + $0x2d0] sm:$0xff]
        %v489 = vld [vmem:[%s317 + $0x2d8] sm:$0xff]
        %v490 = vld [vmem:[%s317 + $0x2e0] sm:$0xff]
        %v491 = vld [vmem:[%s317 + $0x2e8] sm:$0xff]
        %v492 = vld [vmem:[%s317 + $0x2f0] sm:$0xff]
        %v493 = vld [vmem:[%s317 + $0x2f8] sm:$0xff]
        %v494 = vld [vmem:[%s317 + $0x300] sm:$0xff]
        %v495 = vld [vmem:[%s317 + $0x308] sm:$0xff]
        %v496 = vld [vmem:[%s317 + $0x310] sm:$0xff]
        %v497 = vld [vmem:[%s317 + $0x318] sm:$0xff]
        %v498 = vld [vmem:[%s317 + $0x320] sm:$0xff]
        %v499 = vld [vmem:[%s317 + $0x328] sm:$0xff]
        %v500 = vld [vmem:[%s317 + $0x330] sm:$0xff]
        %v501 = vld [vmem:[%s317 + $0x338] sm:$0xff]
        %v502 = vld [vmem:[%s317 + $0x340] sm:$0xff]
        %v503 = vld [vmem:[%s317 + $0x348] sm:$0xff]
        %v504 = vld [vmem:[%s317 + $0x350] sm:$0xff]
        %v505 = vld [vmem:[%s317 + $0x358] sm:$0xff]
        %v506 = vld [vmem:[%s317 + $0x360] sm:$0xff]
        %v507 = vld [vmem:[%s317 + $0x368] sm:$0xff]
        %v508 = vld [vmem:[%s317 + $0x370] sm:$0xff]
        %v509 = vld [vmem:[%s317 + $0x378] sm:$0xff]
        %v510 = vld [vmem:[%s317 + $0x380] sm:$0xff]
        %v511 = vld [vmem:[%s317 + $0x388] sm:$0xff]
        %v512 = vld [vmem:[%s317 + $0x390] sm:$0xff]
        %v513 = vld [vmem:[%s317 + $0x398] sm:$0xff]
        %v514 = vld [vmem:[%s317 + $0x3a0] sm:$0xff]
        %v515 = vld [vmem:[%s317 + $0x3a8] sm:$0xff]
        %v516 = vld [vmem:[%s317 + $0x3b0] sm:$0xff]
        %v517 = vld [vmem:[%s317 + $0x3b8] sm:$0xff]
        %v518 = vld [vmem:[%s317 + $0x3c0] sm:$0xff]
        %v519 = vld [vmem:[%s317 + $0x3c8] sm:$0xff]
        %v520 = vld [vmem:[%s317 + $0x3d0] sm:$0xff]
        %v521 = vld [vmem:[%s317 + $0x3d8] sm:$0xff]
        %v522 = vld [vmem:[%s317 + $0x3e0] sm:$0xff]
        %v523 = vld [vmem:[%s317 + $0x3e8] sm:$0xff]
        %v524 = vld [vmem:[%s317 + $0x3f0] sm:$0xff]
        %v525 = vld [vmem:[%s317 + $0x3f8] sm:$0xff]
        %v526 = vld [vmem:[%s317 + $0x400] sm:$0xff]
        %v527 = vld [vmem:[%s317 + $0x408] sm:$0xff]
        %v528 = vld [vmem:[%s317 + $0x410] sm:$0xff]
        %v529 = vld [vmem:[%s317 + $0x418] sm:$0xff]
        %v530 = vld [vmem:[%s317 + $0x420] sm:$0xff]
        %v531 = vld [vmem:[%s317 + $0x428] sm:$0xff]
        %v532 = vld [vmem:[%s317 + $0x430] sm:$0xff]
        %v533 = vld [vmem:[%s317 + $0x438] sm:$0xff]
        %v534 = vld [vmem:[%s317 + $0x440] sm:$0xff]
        %v535 = vld [vmem:[%s317 + $0x448] sm:$0xff]
        %v536 = vld [vmem:[%s317 + $0x450] sm:$0xff]
        %v537 = vld [vmem:[%s317 + $0x458] sm:$0xff]
        %v538 = vld [vmem:[%s317 + $0x460] sm:$0xff]
        %v539 = vld [vmem:[%s317 + $0x468] sm:$0xff]
        %v540 = vld [vmem:[%s317 + $0x470] sm:$0xff]
        %v541 = vld [vmem:[%s317 + $0x478] sm:$0xff]
        %v542 = vld [vmem:[%s317 + $0x480] sm:$0xff]
        %v543 = vld [vmem:[%s317 + $0x488] sm:$0xff]
        %v544 = vld [vmem:[%s317 + $0x490] sm:$0xff]
        %v545 = vld [vmem:[%s317 + $0x498] sm:$0xff]
        %v546 = vld [vmem:[%s317 + $0x4a0] sm:$0xff]
        %v547 = vld [vmem:[%s317 + $0x4a8] sm:$0xff]
        %v548 = vld [vmem:[%s317 + $0x4b0] sm:$0xff]
        %v549 = vld [vmem:[%s317 + $0x4b8] sm:$0xff]
        %v550 = vld [vmem:[%s317 + $0x4c0] sm:$0xff]
        %v551 = vld [vmem:[%s317 + $0x4c8] sm:$0xff]
        %v552 = vld [vmem:[%s317 + $0x4d0] sm:$0xff]
        %v553 = vld [vmem:[%s317 + $0x4d8] sm:$0xff]
        %v554 = vld [vmem:[%s317 + $0x4e0] sm:$0xff]
        %v555 = vld [vmem:[%s317 + $0x4e8] sm:$0xff]
        %v556 = vld [vmem:[%s317 + $0x4f0] sm:$0xff]
        %v557 = vld [vmem:[%s317 + $0x4f8] sm:$0xff]
        %v558 = vld [vmem:[%s317 + $0x500] sm:$0xff]
        %v559 = vld [vmem:[%s317 + $0x508] sm:$0xff]
        %v560 = vld [vmem:[%s317 + $0x510] sm:$0xff]
        %v561 = vld [vmem:[%s317 + $0x518] sm:$0xff]
        %v562 = vld [vmem:[%s317 + $0x520] sm:$0xff]
        %v563 = vld [vmem:[%s317 + $0x528] sm:$0xff]
        %v564 = vld [vmem:[%s317 + $0x530] sm:$0xff]
        %v565 = vld [vmem:[%s317 + $0x538] sm:$0xff]
        %v566 = vld [vmem:[%s317 + $0x540] sm:$0xff]
        %v567 = vld [vmem:[%s317 + $0x548] sm:$0xff]
        %v568 = vld [vmem:[%s317 + $0x550] sm:$0xff]
        %v569 = vld [vmem:[%s317 + $0x558] sm:$0xff]
        %v570 = vld [vmem:[%s317 + $0x560] sm:$0xff]
        %v571 = vld [vmem:[%s317 + $0x568] sm:$0xff]
        %v572 = vld [vmem:[%s317 + $0x570] sm:$0xff]
        %v573 = vld [vmem:[%s317 + $0x578] sm:$0xff]
        %v574 = vld [vmem:[%s317 + $0x580] sm:$0xff]
        %v575 = vld [vmem:[%s317 + $0x588] sm:$0xff]
        %v576 = vld [vmem:[%s317 + $0x590] sm:$0xff]
        %v577 = vld [vmem:[%s317 + $0x598] sm:$0xff]
        %v578 = vld [vmem:[%s317 + $0x5a0] sm:$0xff]
        %v579 = vld [vmem:[%s317 + $0x5a8] sm:$0xff]
        %v580 = vld [vmem:[%s317 + $0x5b0] sm:$0xff]
        %v581 = vld [vmem:[%s317 + $0x5b8] sm:$0xff]
        %v582 = vld [vmem:[%s317 + $0x5c0] sm:$0xff]
        %v583 = vld [vmem:[%s317 + $0x5c8] sm:$0xff]
        %v584 = vld [vmem:[%s317 + $0x5d0] sm:$0xff]
        %v585 = vld [vmem:[%s317 + $0x5d8] sm:$0xff]
        %v586 = vld [vmem:[%s317 + $0x5e0] sm:$0xff]
        %v587 = vld [vmem:[%s317 + $0x5e8] sm:$0xff]
        %v588 = vld [vmem:[%s317 + $0x5f0] sm:$0xff]
        %v589 = vld [vmem:[%s317 + $0x5f8] sm:$0xff]
        %v590 = vld [vmem:[%s317 + $0x600] sm:$0xff]
        %v591 = vld [vmem:[%s317 + $0x608] sm:$0xff]
        %v592 = vld [vmem:[%s317 + $0x610] sm:$0xff]
        %v593 = vld [vmem:[%s317 + $0x618] sm:$0xff]
        %v594 = vld [vmem:[%s317 + $0x620] sm:$0xff]
        %v595 = vld [vmem:[%s317 + $0x628] sm:$0xff]
        %v596 = vld [vmem:[%s317 + $0x630] sm:$0xff]
        %v597 = vld [vmem:[%s317 + $0x638] sm:$0xff]
        %v598 = vld [vmem:[%s317 + $0x640] sm:$0xff]
        %v599 = vld [vmem:[%s317 + $0x648] sm:$0xff]
        %v600 = vld [vmem:[%s317 + $0x650] sm:$0xff]
        %v601 = vld [vmem:[%s317 + $0x658] sm:$0xff]
        %v602 = vld [vmem:[%s317 + $0x660] sm:$0xff]
        %v603 = vld [vmem:[%s317 + $0x668] sm:$0xff]
        %v604 = vld [vmem:[%s317 + $0x670] sm:$0xff]
        %v605 = vld [vmem:[%s317 + $0x678] sm:$0xff]
        %v606 = vld [vmem:[%s317 + $0x680] sm:$0xff]
        %v607 = vld [vmem:[%s317 + $0x688] sm:$0xff]
        %v608 = vld [vmem:[%s317 + $0x690] sm:$0xff]
        %v609 = vld [vmem:[%s317 + $0x698] sm:$0xff]
        %v610 = vld [vmem:[%s317 + $0x6a0] sm:$0xff]
        %v611 = vld [vmem:[%s317 + $0x6a8] sm:$0xff]
        %v612 = vld [vmem:[%s317 + $0x6b0] sm:$0xff]
        %v613 = vld [vmem:[%s317 + $0x6b8] sm:$0xff]
        %v614 = vld [vmem:[%s317 + $0x6c0] sm:$0xff]
        %v615 = vld [vmem:[%s317 + $0x6c8] sm:$0xff]
        %v616 = vld [vmem:[%s317 + $0x6d0] sm:$0xff]
        %v617 = vld [vmem:[%s317 + $0x6d8] sm:$0xff]
        %v618 = vld [vmem:[%s317 + $0x6e0] sm:$0xff]
        %v619 = vld [vmem:[%s317 + $0x6e8] sm:$0xff]
        %v620 = vld [vmem:[%s317 + $0x6f0] sm:$0xff]
        %v621 = vld [vmem:[%s317 + $0x6f8] sm:$0xff]
        %v622 = vld [vmem:[%s317 + $0x700] sm:$0xff]
        %v623 = vld [vmem:[%s317 + $0x708] sm:$0xff]
        %v624 = vld [vmem:[%s317 + $0x710] sm:$0xff]
        %v625 = vld [vmem:[%s317 + $0x718] sm:$0xff]
        %v626 = vld [vmem:[%s317 + $0x720] sm:$0xff]
        %v627 = vld [vmem:[%s317 + $0x728] sm:$0xff]
        %v628 = vld [vmem:[%s317 + $0x730] sm:$0xff]
        %v629 = vld [vmem:[%s317 + $0x738] sm:$0xff]
        %v630 = vld [vmem:[%s317 + $0x740] sm:$0xff]
        %v631 = vld [vmem:[%s317 + $0x748] sm:$0xff]
        %v632 = vld [vmem:[%s317 + $0x750] sm:$0xff]
        %v633 = vld [vmem:[%s317 + $0x758] sm:$0xff]
        %v634 = vld [vmem:[%s317 + $0x760] sm:$0xff]
        %v635 = vld [vmem:[%s317 + $0x768] sm:$0xff]
        %v636 = vld [vmem:[%s317 + $0x770] sm:$0xff]
        %v637 = vld [vmem:[%s317 + $0x778] sm:$0xff]
        %v638 = vld [vmem:[%s317 + $0x780] sm:$0xff]
        %v639 = vld [vmem:[%s317 + $0x788] sm:$0xff]
        %v640 = vld [vmem:[%s317 + $0x790] sm:$0xff]
        %v641 = vld [vmem:[%s317 + $0x798] sm:$0xff]
        %v642 = vld [vmem:[%s317 + $0x7a0] sm:$0xff]
        %v643 = vld [vmem:[%s317 + $0x7a8] sm:$0xff]
        %v644 = vld [vmem:[%s317 + $0x7b0] sm:$0xff]
        %v645 = vld [vmem:[%s317 + $0x7b8] sm:$0xff]
        %v646 = vld [vmem:[%s317 + $0x7c0] sm:$0xff]
        %v647 = vld [vmem:[%s317 + $0x7c8] sm:$0xff]
        %v648 = vld [vmem:[%s317 + $0x7d0] sm:$0xff]
        %v649 = vld [vmem:[%s317 + $0x7d8] sm:$0xff]
        %v650 = vld [vmem:[%s317 + $0x7e0] sm:$0xff]
        %v651 = vld [vmem:[%s317 + $0x7e8] sm:$0xff]
        %v652 = vld [vmem:[%s317 + $0x7f0] sm:$0xff]
        %v653 = vld [vmem:[%s317 + $0x7f8] sm:$0xff]
        %v656 = vunpack.c.l.b16 %v396
        %v657 = vunpack.c.h.b16 %v396
        %v658 = vunpack.c.l.b16 %v397
        %v659 = vunpack.c.h.b16 %v397
        %v660 = vpack.c.b16 %v656, %v656
        %v661 = vpack.c.b16 %v657, %v657
        %v662 = vpack.c.b16 %v658, %v658
        %v663 = vpack.c.b16 %v659, %v659
        %v924 = vunpack.c.l.b16 %v398
        %v925 = vunpack.c.h.b16 %v398
        %v926 = vunpack.c.l.b16 %v399
        %v927 = vunpack.c.h.b16 %v399
        %v928 = vunpack.c.l.b16 %v400
        %v929 = vunpack.c.h.b16 %v400
        %v930 = vunpack.c.l.b16 %v401
        %v931 = vunpack.c.h.b16 %v401
        %v932 = vunpack.c.l.b16 %v402
        %v933 = vunpack.c.h.b16 %v402
        %v934 = vunpack.c.l.b16 %v403
        %v935 = vunpack.c.h.b16 %v403
        %v936 = vunpack.c.l.b16 %v404
        %v937 = vunpack.c.h.b16 %v404
        %v938 = vunpack.c.l.b16 %v405
        %v939 = vunpack.c.h.b16 %v405
        %v940 = vunpack.c.l.b16 %v406
        %v941 = vunpack.c.h.b16 %v406
        %v942 = vunpack.c.l.b16 %v407
        %v943 = vunpack.c.h.b16 %v407
        %v944 = vunpack.c.l.b16 %v408
        %v945 = vunpack.c.h.b16 %v408
        %v946 = vunpack.c.l.b16 %v409
        %v947 = vunpack.c.h.b16 %v409
        %v948 = vunpack.c.l.b16 %v410
        %v949 = vunpack.c.h.b16 %v410
        %v950 = vunpack.c.l.b16 %v411
        %v951 = vunpack.c.h.b16 %v411
        %v952 = vunpack.c.l.b16 %v412
        %v953 = vunpack.c.h.b16 %v412
        %v954 = vunpack.c.l.b16 %v413
        %v955 = vunpack.c.h.b16 %v413
        %v956 = vunpack.c.l.b16 %v414
        %v957 = vunpack.c.h.b16 %v414
        %v958 = vunpack.c.l.b16 %v415
        %v959 = vunpack.c.h.b16 %v415
        %v960 = vunpack.c.l.b16 %v416
        %v961 = vunpack.c.h.b16 %v416
        %v962 = vunpack.c.l.b16 %v417
        %v963 = vunpack.c.h.b16 %v417
        %v964 = vunpack.c.l.b16 %v418
        %v965 = vunpack.c.h.b16 %v418
        %v966 = vunpack.c.l.b16 %v419
        %v967 = vunpack.c.h.b16 %v419
        %v968 = vunpack.c.l.b16 %v420
        %v969 = vunpack.c.h.b16 %v420
        %v970 = vunpack.c.l.b16 %v421
        %v971 = vunpack.c.h.b16 %v421
        %v972 = vunpack.c.l.b16 %v422
        %v973 = vunpack.c.h.b16 %v422
        %v974 = vunpack.c.l.b16 %v423
        %v975 = vunpack.c.h.b16 %v423
        %v976 = vunpack.c.l.b16 %v424
        %v977 = vunpack.c.h.b16 %v424
        %v978 = vunpack.c.l.b16 %v425
        %v979 = vunpack.c.h.b16 %v425
        %v980 = vunpack.c.l.b16 %v426
        %v981 = vunpack.c.h.b16 %v426
        %v982 = vunpack.c.l.b16 %v427
        %v983 = vunpack.c.h.b16 %v427
        %v984 = vunpack.c.l.b16 %v428
        %v985 = vunpack.c.h.b16 %v428
        %v986 = vunpack.c.l.b16 %v429
        %v987 = vunpack.c.h.b16 %v429
        %v988 = vunpack.c.l.b16 %v430
        %v989 = vunpack.c.h.b16 %v430
        %v990 = vunpack.c.l.b16 %v431
        %v991 = vunpack.c.h.b16 %v431
        %v992 = vunpack.c.l.b16 %v432
        %v993 = vunpack.c.h.b16 %v432
        %v994 = vunpack.c.l.b16 %v433
        %v995 = vunpack.c.h.b16 %v433
        %v996 = vunpack.c.l.b16 %v434
        %v997 = vunpack.c.h.b16 %v434
        %v998 = vunpack.c.l.b16 %v435
        %v999 = vunpack.c.h.b16 %v435
        %v1000 = vunpack.c.l.b16 %v436
        %v1001 = vunpack.c.h.b16 %v436
        %v1002 = vunpack.c.l.b16 %v437
        %v1003 = vunpack.c.h.b16 %v437
        %v1004 = vunpack.c.l.b16 %v438
        %v1005 = vunpack.c.h.b16 %v438
        %v1006 = vunpack.c.l.b16 %v439
        %v1007 = vunpack.c.h.b16 %v439
        %v1008 = vunpack.c.l.b16 %v440
        %v1009 = vunpack.c.h.b16 %v440
        %v1010 = vunpack.c.l.b16 %v441
        %v1011 = vunpack.c.h.b16 %v441
        %v1012 = vunpack.c.l.b16 %v442
        %v1013 = vunpack.c.h.b16 %v442
        %v1014 = vunpack.c.l.b16 %v443
        %v1015 = vunpack.c.h.b16 %v443
        %v1016 = vunpack.c.l.b16 %v444
        %v1017 = vunpack.c.h.b16 %v444
        %v1018 = vunpack.c.l.b16 %v445
        %v1019 = vunpack.c.h.b16 %v445
        %v1020 = vunpack.c.l.b16 %v446
        %v1021 = vunpack.c.h.b16 %v446
        %v1022 = vunpack.c.l.b16 %v447
        %v1023 = vunpack.c.h.b16 %v447
        %v1024 = vunpack.c.l.b16 %v448
        %v1025 = vunpack.c.h.b16 %v448
        %v1026 = vunpack.c.l.b16 %v449
        %v1027 = vunpack.c.h.b16 %v449
        %v1028 = vunpack.c.l.b16 %v450
        %v1029 = vunpack.c.h.b16 %v450
        %v1030 = vunpack.c.l.b16 %v451
        %v1031 = vunpack.c.h.b16 %v451
        %v1032 = vunpack.c.l.b16 %v452
        %v1033 = vunpack.c.h.b16 %v452
        %v1034 = vunpack.c.l.b16 %v453
        %v1035 = vunpack.c.h.b16 %v453
        %v1036 = vunpack.c.l.b16 %v454
        %v1037 = vunpack.c.h.b16 %v454
        %v1038 = vunpack.c.l.b16 %v455
        %v1039 = vunpack.c.h.b16 %v455
        %v1040 = vunpack.c.l.b16 %v456
        %v1041 = vunpack.c.h.b16 %v456
        %v1042 = vunpack.c.l.b16 %v457
        %v1043 = vunpack.c.h.b16 %v457
        %v1044 = vunpack.c.l.b16 %v458
        %v1045 = vunpack.c.h.b16 %v458
        %v1046 = vunpack.c.l.b16 %v459
        %v1047 = vunpack.c.h.b16 %v459
        %v1048 = vunpack.c.l.b16 %v460
        %v1049 = vunpack.c.h.b16 %v460
        %v1050 = vunpack.c.l.b16 %v461
        %v1051 = vunpack.c.h.b16 %v461
        %v1052 = vunpack.c.l.b16 %v462
        %v1053 = vunpack.c.h.b16 %v462
        %v1054 = vunpack.c.l.b16 %v463
        %v1055 = vunpack.c.h.b16 %v463
        %v1056 = vunpack.c.l.b16 %v464
        %v1057 = vunpack.c.h.b16 %v464
        %v1058 = vunpack.c.l.b16 %v465
        %v1059 = vunpack.c.h.b16 %v465
        %v1060 = vunpack.c.l.b16 %v466
        %v1061 = vunpack.c.h.b16 %v466
        %v1062 = vunpack.c.l.b16 %v467
        %v1063 = vunpack.c.h.b16 %v467
        %v1064 = vunpack.c.l.b16 %v468
        %v1065 = vunpack.c.h.b16 %v468
        %v1066 = vunpack.c.l.b16 %v469
        %v1067 = vunpack.c.h.b16 %v469
        %v1068 = vunpack.c.l.b16 %v470
        %v1069 = vunpack.c.h.b16 %v470
        %v1070 = vunpack.c.l.b16 %v471
        %v1071 = vunpack.c.h.b16 %v471
        %v1072 = vunpack.c.l.b16 %v472
        %v1073 = vunpack.c.h.b16 %v472
        %v1074 = vunpack.c.l.b16 %v473
        %v1075 = vunpack.c.h.b16 %v473
        %v1076 = vunpack.c.l.b16 %v474
        %v1077 = vunpack.c.h.b16 %v474
        %v1078 = vunpack.c.l.b16 %v475
        %v1079 = vunpack.c.h.b16 %v475
        %v1080 = vunpack.c.l.b16 %v476
        %v1081 = vunpack.c.h.b16 %v476
        %v1082 = vunpack.c.l.b16 %v477
        %v1083 = vunpack.c.h.b16 %v477
        %v1084 = vunpack.c.l.b16 %v478
        %v1085 = vunpack.c.h.b16 %v478
        %v1086 = vunpack.c.l.b16 %v479
        %v1087 = vunpack.c.h.b16 %v479
        %v1088 = vunpack.c.l.b16 %v480
        %v1089 = vunpack.c.h.b16 %v480
        %v1090 = vunpack.c.l.b16 %v481
        %v1091 = vunpack.c.h.b16 %v481
        %v1092 = vunpack.c.l.b16 %v482
        %v1093 = vunpack.c.h.b16 %v482
        %v1094 = vunpack.c.l.b16 %v483
        %v1095 = vunpack.c.h.b16 %v483
        %v1096 = vunpack.c.l.b16 %v484
        %v1097 = vunpack.c.h.b16 %v484
        %v1098 = vunpack.c.l.b16 %v485
        %v1099 = vunpack.c.h.b16 %v485
        %v1100 = vunpack.c.l.b16 %v486
        %v1101 = vunpack.c.h.b16 %v486
        %v1102 = vunpack.c.l.b16 %v487
        %v1103 = vunpack.c.h.b16 %v487
        %v1104 = vunpack.c.l.b16 %v488
        %v1105 = vunpack.c.h.b16 %v488
        %v1106 = vunpack.c.l.b16 %v489
        %v1107 = vunpack.c.h.b16 %v489
        %v1108 = vunpack.c.l.b16 %v490
        %v1109 = vunpack.c.h.b16 %v490
        %v1110 = vunpack.c.l.b16 %v491
        %v1111 = vunpack.c.h.b16 %v491
        %v1112 = vunpack.c.l.b16 %v492
        %v1113 = vunpack.c.h.b16 %v492
        %v1114 = vunpack.c.l.b16 %v493
        %v1115 = vunpack.c.h.b16 %v493
        %v1116 = vunpack.c.l.b16 %v494
        %v1117 = vunpack.c.h.b16 %v494
        %v1118 = vunpack.c.l.b16 %v495
        %v1119 = vunpack.c.h.b16 %v495
        %v1120 = vunpack.c.l.b16 %v496
        %v1121 = vunpack.c.h.b16 %v496
        %v1122 = vunpack.c.l.b16 %v497
        %v1123 = vunpack.c.h.b16 %v497
        %v1124 = vunpack.c.l.b16 %v498
        %v1125 = vunpack.c.h.b16 %v498
        %v1126 = vunpack.c.l.b16 %v499
        %v1127 = vunpack.c.h.b16 %v499
        %v1128 = vunpack.c.l.b16 %v500
        %v1129 = vunpack.c.h.b16 %v500
        %v1130 = vunpack.c.l.b16 %v501
        %v1131 = vunpack.c.h.b16 %v501
        %v1132 = vunpack.c.l.b16 %v502
        %v1133 = vunpack.c.h.b16 %v502
        %v1134 = vunpack.c.l.b16 %v503
        %v1135 = vunpack.c.h.b16 %v503
        %v1136 = vunpack.c.l.b16 %v504
        %v1137 = vunpack.c.h.b16 %v504
        %v1138 = vunpack.c.l.b16 %v505
        %v1139 = vunpack.c.h.b16 %v505
        %v1140 = vunpack.c.l.b16 %v506
        %v1141 = vunpack.c.h.b16 %v506
        %v1142 = vunpack.c.l.b16 %v507
        %v1143 = vunpack.c.h.b16 %v507
        %v1144 = vunpack.c.l.b16 %v508
        %v1145 = vunpack.c.h.b16 %v508
        %v1146 = vunpack.c.l.b16 %v509
        %v1147 = vunpack.c.h.b16 %v509
        %v1148 = vunpack.c.l.b16 %v510
        %v1149 = vunpack.c.h.b16 %v510
        %v1150 = vunpack.c.l.b16 %v511
        %v1151 = vunpack.c.h.b16 %v511
        %v1152 = vunpack.c.l.b16 %v512
        %v1153 = vunpack.c.h.b16 %v512
        %v1154 = vunpack.c.l.b16 %v513
        %v1155 = vunpack.c.h.b16 %v513
        %v1156 = vunpack.c.l.b16 %v514
        %v1157 = vunpack.c.h.b16 %v514
        %v1158 = vunpack.c.l.b16 %v515
        %v1159 = vunpack.c.h.b16 %v515
        %v1160 = vunpack.c.l.b16 %v516
        %v1161 = vunpack.c.h.b16 %v516
        %v1162 = vunpack.c.l.b16 %v517
        %v1163 = vunpack.c.h.b16 %v517
        %v1164 = vunpack.c.l.b16 %v518
        %v1165 = vunpack.c.h.b16 %v518
        %v1166 = vunpack.c.l.b16 %v519
        %v1167 = vunpack.c.h.b16 %v519
        %v1168 = vunpack.c.l.b16 %v520
        %v1169 = vunpack.c.h.b16 %v520
        %v1170 = vunpack.c.l.b16 %v521
        %v1171 = vunpack.c.h.b16 %v521
        %v1172 = vunpack.c.l.b16 %v522
        %v1173 = vunpack.c.h.b16 %v522
        %v1174 = vunpack.c.l.b16 %v523
        %v1175 = vunpack.c.h.b16 %v523
        %v1176 = vunpack.c.l.b16 %v524
        %v1177 = vunpack.c.h.b16 %v524
        %v1178 = vunpack.c.l.b16 %v525
        %v1179 = vunpack.c.h.b16 %v525
        %v1180 = vunpack.c.l.b16 %v526
        %v1181 = vunpack.c.h.b16 %v526
        %v1182 = vunpack.c.l.b16 %v527
        %v1183 = vunpack.c.h.b16 %v527
        %v1184 = vunpack.c.l.b16 %v528
        %v1185 = vunpack.c.h.b16 %v528
        %v1186 = vunpack.c.l.b16 %v529
        %v1187 = vunpack.c.h.b16 %v529
        %v1188 = vunpack.c.l.b16 %v530
        %v1189 = vunpack.c.h.b16 %v530
        %v1190 = vunpack.c.l.b16 %v531
        %v1191 = vunpack.c.h.b16 %v531
        %v1192 = vunpack.c.l.b16 %v532
        %v1193 = vunpack.c.h.b16 %v532
        %v1194 = vunpack.c.l.b16 %v533
        %v1195 = vunpack.c.h.b16 %v533
        %v1196 = vunpack.c.l.b16 %v534
        %v1197 = vunpack.c.h.b16 %v534
        %v1198 = vunpack.c.l.b16 %v535
        %v1199 = vunpack.c.h.b16 %v535
        %v1200 = vunpack.c.l.b16 %v536
        %v1201 = vunpack.c.h.b16 %v536
        %v1202 = vunpack.c.l.b16 %v537
        %v1203 = vunpack.c.h.b16 %v537
        %v1204 = vunpack.c.l.b16 %v538
        %v1205 = vunpack.c.h.b16 %v538
        %v1206 = vunpack.c.l.b16 %v539
        %v1207 = vunpack.c.h.b16 %v539
        %v1208 = vunpack.c.l.b16 %v540
        %v1209 = vunpack.c.h.b16 %v540
        %v1210 = vunpack.c.l.b16 %v541
        %v1211 = vunpack.c.h.b16 %v541
        %v1212 = vunpack.c.l.b16 %v542
        %v1213 = vunpack.c.h.b16 %v542
        %v1214 = vunpack.c.l.b16 %v543
        %v1215 = vunpack.c.h.b16 %v543
        %v1216 = vunpack.c.l.b16 %v544
        %v1217 = vunpack.c.h.b16 %v544
        %v1218 = vunpack.c.l.b16 %v545
        %v1219 = vunpack.c.h.b16 %v545
        %v1220 = vunpack.c.l.b16 %v546
        %v1221 = vunpack.c.h.b16 %v546
        %v1222 = vunpack.c.l.b16 %v547
        %v1223 = vunpack.c.h.b16 %v547
        %v1224 = vunpack.c.l.b16 %v548
        %v1225 = vunpack.c.h.b16 %v548
        %v1226 = vunpack.c.l.b16 %v549
        %v1227 = vunpack.c.h.b16 %v549
        %v1228 = vunpack.c.l.b16 %v550
        %v1229 = vunpack.c.h.b16 %v550
        %v1230 = vunpack.c.l.b16 %v551
        %v1231 = vunpack.c.h.b16 %v551
        %v1232 = vunpack.c.l.b16 %v552
        %v1233 = vunpack.c.h.b16 %v552
        %v1234 = vunpack.c.l.b16 %v553
        %v1235 = vunpack.c.h.b16 %v553
        %v1236 = vunpack.c.l.b16 %v554
        %v1237 = vunpack.c.h.b16 %v554
        %v1238 = vunpack.c.l.b16 %v555
        %v1239 = vunpack.c.h.b16 %v555
        %v1240 = vunpack.c.l.b16 %v556
        %v1241 = vunpack.c.h.b16 %v556
        %v1242 = vunpack.c.l.b16 %v557
        %v1243 = vunpack.c.h.b16 %v557
        %v1244 = vunpack.c.l.b16 %v558
        %v1245 = vunpack.c.h.b16 %v558
        %v1246 = vunpack.c.l.b16 %v559
        %v1247 = vunpack.c.h.b16 %v559
        %v1248 = vunpack.c.l.b16 %v560
        %v1249 = vunpack.c.h.b16 %v560
        %v1250 = vunpack.c.l.b16 %v561
        %v1251 = vunpack.c.h.b16 %v561
        %v1252 = vunpack.c.l.b16 %v562
        %v1253 = vunpack.c.h.b16 %v562
        %v1254 = vunpack.c.l.b16 %v563
        %v1255 = vunpack.c.h.b16 %v563
        %v1256 = vunpack.c.l.b16 %v564
        %v1257 = vunpack.c.h.b16 %v564
        %v1258 = vunpack.c.l.b16 %v565
        %v1259 = vunpack.c.h.b16 %v565
        %v1260 = vunpack.c.l.b16 %v566
        %v1261 = vunpack.c.h.b16 %v566
        %v1262 = vunpack.c.l.b16 %v567
        %v1263 = vunpack.c.h.b16 %v567
        %v1264 = vunpack.c.l.b16 %v568
        %v1265 = vunpack.c.h.b16 %v568
        %v1266 = vunpack.c.l.b16 %v569
        %v1267 = vunpack.c.h.b16 %v569
        %v1268 = vunpack.c.l.b16 %v570
        %v1269 = vunpack.c.h.b16 %v570
        %v1270 = vunpack.c.l.b16 %v571
        %v1271 = vunpack.c.h.b16 %v571
        %v1272 = vunpack.c.l.b16 %v572
        %v1273 = vunpack.c.h.b16 %v572
        %v1274 = vunpack.c.l.b16 %v573
        %v1275 = vunpack.c.h.b16 %v573
        %v1276 = vunpack.c.l.b16 %v574
        %v1277 = vunpack.c.h.b16 %v574
        %v1278 = vunpack.c.l.b16 %v575
        %v1279 = vunpack.c.h.b16 %v575
        %v1280 = vunpack.c.l.b16 %v576
        %v1281 = vunpack.c.h.b16 %v576
        %v1282 = vunpack.c.l.b16 %v577
        %v1283 = vunpack.c.h.b16 %v577
        %v1284 = vunpack.c.l.b16 %v578
        %v1285 = vunpack.c.h.b16 %v578
        %v1286 = vunpack.c.l.b16 %v579
        %v1287 = vunpack.c.h.b16 %v579
        %v1288 = vunpack.c.l.b16 %v580
        %v1289 = vunpack.c.h.b16 %v580
        %v1290 = vunpack.c.l.b16 %v581
        %v1291 = vunpack.c.h.b16 %v581
        %v1292 = vunpack.c.l.b16 %v582
        %v1293 = vunpack.c.h.b16 %v582
        %v1294 = vunpack.c.l.b16 %v583
        %v1295 = vunpack.c.h.b16 %v583
        %v1296 = vunpack.c.l.b16 %v584
        %v1297 = vunpack.c.h.b16 %v584
        %v1298 = vunpack.c.l.b16 %v585
        %v1299 = vunpack.c.h.b16 %v585
        %v1300 = vunpack.c.l.b16 %v586
        %v1301 = vunpack.c.h.b16 %v586
        %v1302 = vunpack.c.l.b16 %v587
        %v1303 = vunpack.c.h.b16 %v587
        %v1304 = vunpack.c.l.b16 %v588
        %v1305 = vunpack.c.h.b16 %v588
        %v1306 = vunpack.c.l.b16 %v589
        %v1307 = vunpack.c.h.b16 %v589
        %v1308 = vunpack.c.l.b16 %v590
        %v1309 = vunpack.c.h.b16 %v590
        %v1310 = vunpack.c.l.b16 %v591
        %v1311 = vunpack.c.h.b16 %v591
        %v1312 = vunpack.c.l.b16 %v592
        %v1313 = vunpack.c.h.b16 %v592
        %v1314 = vunpack.c.l.b16 %v593
        %v1315 = vunpack.c.h.b16 %v593
        %v1316 = vunpack.c.l.b16 %v594
        %v1317 = vunpack.c.h.b16 %v594
        %v1318 = vunpack.c.l.b16 %v595
        %v1319 = vunpack.c.h.b16 %v595
        %v1320 = vunpack.c.l.b16 %v596
        %v1321 = vunpack.c.h.b16 %v596
        %v1322 = vunpack.c.l.b16 %v597
        %v1323 = vunpack.c.h.b16 %v597
        %v1324 = vunpack.c.l.b16 %v598
        %v1325 = vunpack.c.h.b16 %v598
        %v1326 = vunpack.c.l.b16 %v599
        %v1327 = vunpack.c.h.b16 %v599
        %v1328 = vunpack.c.l.b16 %v600
        %v1329 = vunpack.c.h.b16 %v600
        %v1330 = vunpack.c.l.b16 %v601
        %v1331 = vunpack.c.h.b16 %v601
        %v1332 = vunpack.c.l.b16 %v602
        %v1333 = vunpack.c.h.b16 %v602
        %v1334 = vunpack.c.l.b16 %v603
        %v1335 = vunpack.c.h.b16 %v603
        %v1336 = vunpack.c.l.b16 %v604
        %v1337 = vunpack.c.h.b16 %v604
        %v1338 = vunpack.c.l.b16 %v605
        %v1339 = vunpack.c.h.b16 %v605
        %v1340 = vunpack.c.l.b16 %v606
        %v1341 = vunpack.c.h.b16 %v606
        %v1342 = vunpack.c.l.b16 %v607
        %v1343 = vunpack.c.h.b16 %v607
        %v1344 = vunpack.c.l.b16 %v608
        %v1345 = vunpack.c.h.b16 %v608
        %v1346 = vunpack.c.l.b16 %v609
        %v1347 = vunpack.c.h.b16 %v609
        %v1348 = vunpack.c.l.b16 %v610
        %v1349 = vunpack.c.h.b16 %v610
        %v1350 = vunpack.c.l.b16 %v611
        %v1351 = vunpack.c.h.b16 %v611
        %v1352 = vunpack.c.l.b16 %v612
        %v1353 = vunpack.c.h.b16 %v612
        %v1354 = vunpack.c.l.b16 %v613
        %v1355 = vunpack.c.h.b16 %v613
        %v1356 = vunpack.c.l.b16 %v614
        %v1357 = vunpack.c.h.b16 %v614
        %v1358 = vunpack.c.l.b16 %v615
        %v1359 = vunpack.c.h.b16 %v615
        %v1360 = vunpack.c.l.b16 %v616
        %v1361 = vunpack.c.h.b16 %v616
        %v1362 = vunpack.c.l.b16 %v617
        %v1363 = vunpack.c.h.b16 %v617
        %v1364 = vunpack.c.l.b16 %v618
        %v1365 = vunpack.c.h.b16 %v618
        %v1366 = vunpack.c.l.b16 %v619
        %v1367 = vunpack.c.h.b16 %v619
        %v1368 = vunpack.c.l.b16 %v620
        %v1369 = vunpack.c.h.b16 %v620
        %v1370 = vunpack.c.l.b16 %v621
        %v1371 = vunpack.c.h.b16 %v621
        %v1372 = vunpack.c.l.b16 %v622
        %v1373 = vunpack.c.h.b16 %v622
        %v1374 = vunpack.c.l.b16 %v623
        %v1375 = vunpack.c.h.b16 %v623
        %v1376 = vunpack.c.l.b16 %v624
        %v1377 = vunpack.c.h.b16 %v624
        %v1378 = vunpack.c.l.b16 %v625
        %v1379 = vunpack.c.h.b16 %v625
        %v1380 = vunpack.c.l.b16 %v626
        %v1381 = vunpack.c.h.b16 %v626
        %v1382 = vunpack.c.l.b16 %v627
        %v1383 = vunpack.c.h.b16 %v627
        %v1384 = vunpack.c.l.b16 %v628
        %v1385 = vunpack.c.h.b16 %v628
        %v1386 = vunpack.c.l.b16 %v629
        %v1387 = vunpack.c.h.b16 %v629
        %v1388 = vunpack.c.l.b16 %v630
        %v1389 = vunpack.c.h.b16 %v630
        %v1390 = vunpack.c.l.b16 %v631
        %v1391 = vunpack.c.h.b16 %v631
        %v1392 = vunpack.c.l.b16 %v632
        %v1393 = vunpack.c.h.b16 %v632
        %v1394 = vunpack.c.l.b16 %v633
        %v1395 = vunpack.c.h.b16 %v633
        %v1396 = vunpack.c.l.b16 %v634
        %v1397 = vunpack.c.h.b16 %v634
        %v1398 = vunpack.c.l.b16 %v635
        %v1399 = vunpack.c.h.b16 %v635
        %v1400 = vunpack.c.l.b16 %v636
        %v1401 = vunpack.c.h.b16 %v636
        %v1402 = vunpack.c.l.b16 %v637
        %v1403 = vunpack.c.h.b16 %v637
        %v1404 = vunpack.c.l.b16 %v638
        %v1405 = vunpack.c.h.b16 %v638
        %v1406 = vunpack.c.l.b16 %v639
        %v1407 = vunpack.c.h.b16 %v639
        %v1408 = vunpack.c.l.b16 %v640
        %v1409 = vunpack.c.h.b16 %v640
        %v1410 = vunpack.c.l.b16 %v641
        %v1411 = vunpack.c.h.b16 %v641
        %v1412 = vunpack.c.l.b16 %v642
        %v1413 = vunpack.c.h.b16 %v642
        %v1414 = vunpack.c.l.b16 %v643
        %v1415 = vunpack.c.h.b16 %v643
        %v1416 = vunpack.c.l.b16 %v644
        %v1417 = vunpack.c.h.b16 %v644
        %v1418 = vunpack.c.l.b16 %v645
        %v1419 = vunpack.c.h.b16 %v645
        %v1420 = vunpack.c.l.b16 %v646
        %v1421 = vunpack.c.h.b16 %v646
        %v1422 = vunpack.c.l.b16 %v647
        %v1423 = vunpack.c.h.b16 %v647
        %v1424 = vunpack.c.l.b16 %v648
        %v1425 = vunpack.c.h.b16 %v648
        %v1426 = vunpack.c.l.b16 %v649
        %v1427 = vunpack.c.h.b16 %v649
        %v1428 = vunpack.c.l.b16 %v650
        %v1429 = vunpack.c.h.b16 %v650
        %v1430 = vunpack.c.l.b16 %v651
        %v1431 = vunpack.c.h.b16 %v651
        %v1432 = vunpack.c.l.b16 %v652
        %v1433 = vunpack.c.h.b16 %v652
        %v1434 = vunpack.c.l.b16 %v653
        %v1435 = vunpack.c.h.b16 %v653
        %v1436 = vpack.c.b16 %v932, %v924
        %v1437 = vpack.c.b16 %v933, %v925
        %v1438 = vpack.c.b16 %v934, %v926
        %v1439 = vpack.c.b16 %v935, %v927
        %v1440 = vpack.c.b16 %v936, %v928
        %v1441 = vpack.c.b16 %v937, %v929
        %v1442 = vpack.c.b16 %v938, %v930
        %v1443 = vpack.c.b16 %v939, %v931
        %v1444 = vpack.c.b16 %v948, %v940
        %v1445 = vpack.c.b16 %v949, %v941
        %v1446 = vpack.c.b16 %v950, %v942
        %v1447 = vpack.c.b16 %v951, %v943
        %v1448 = vpack.c.b16 %v952, %v944
        %v1449 = vpack.c.b16 %v953, %v945
        %v1450 = vpack.c.b16 %v954, %v946
        %v1451 = vpack.c.b16 %v955, %v947
        %v1452 = vpack.c.b16 %v964, %v956
        %v1453 = vpack.c.b16 %v965, %v957
        %v1454 = vpack.c.b16 %v966, %v958
        %v1455 = vpack.c.b16 %v967, %v959
        %v1456 = vpack.c.b16 %v968, %v960
        %v1457 = vpack.c.b16 %v969, %v961
        %v1458 = vpack.c.b16 %v970, %v962
        %v1459 = vpack.c.b16 %v971, %v963
        %v1460 = vpack.c.b16 %v980, %v972
        %v1461 = vpack.c.b16 %v981, %v973
        %v1462 = vpack.c.b16 %v982, %v974
        %v1463 = vpack.c.b16 %v983, %v975
        %v1464 = vpack.c.b16 %v984, %v976
        %v1465 = vpack.c.b16 %v985, %v977
        %v1466 = vpack.c.b16 %v986, %v978
        %v1467 = vpack.c.b16 %v987, %v979
        %v1468 = vpack.c.b16 %v996, %v988
        %v1469 = vpack.c.b16 %v997, %v989
        %v1470 = vpack.c.b16 %v998, %v990
        %v1471 = vpack.c.b16 %v999, %v991
        %v1472 = vpack.c.b16 %v1000, %v992
        %v1473 = vpack.c.b16 %v1001, %v993
        %v1474 = vpack.c.b16 %v1002, %v994
        %v1475 = vpack.c.b16 %v1003, %v995
        %v1476 = vpack.c.b16 %v1012, %v1004
        %v1477 = vpack.c.b16 %v1013, %v1005
        %v1478 = vpack.c.b16 %v1014, %v1006
        %v1479 = vpack.c.b16 %v1015, %v1007
        %v1480 = vpack.c.b16 %v1016, %v1008
        %v1481 = vpack.c.b16 %v1017, %v1009
        %v1482 = vpack.c.b16 %v1018, %v1010
        %v1483 = vpack.c.b16 %v1019, %v1011
        %v1484 = vpack.c.b16 %v1028, %v1020
        %v1485 = vpack.c.b16 %v1029, %v1021
        %v1486 = vpack.c.b16 %v1030, %v1022
        %v1487 = vpack.c.b16 %v1031, %v1023
        %v1488 = vpack.c.b16 %v1032, %v1024
        %v1489 = vpack.c.b16 %v1033, %v1025
        %v1490 = vpack.c.b16 %v1034, %v1026
        %v1491 = vpack.c.b16 %v1035, %v1027
        %v1492 = vpack.c.b16 %v1044, %v1036
        %v1493 = vpack.c.b16 %v1045, %v1037
        %v1494 = vpack.c.b16 %v1046, %v1038
        %v1495 = vpack.c.b16 %v1047, %v1039
        %v1496 = vpack.c.b16 %v1048, %v1040
        %v1497 = vpack.c.b16 %v1049, %v1041
        %v1498 = vpack.c.b16 %v1050, %v1042
        %v1499 = vpack.c.b16 %v1051, %v1043
        %v1500 = vpack.c.b16 %v1060, %v1052
        %v1501 = vpack.c.b16 %v1061, %v1053
        %v1502 = vpack.c.b16 %v1062, %v1054
        %v1503 = vpack.c.b16 %v1063, %v1055
        %v1504 = vpack.c.b16 %v1064, %v1056
        %v1505 = vpack.c.b16 %v1065, %v1057
        %v1506 = vpack.c.b16 %v1066, %v1058
        %v1507 = vpack.c.b16 %v1067, %v1059
        %v1508 = vpack.c.b16 %v1076, %v1068
        %v1509 = vpack.c.b16 %v1077, %v1069
        %v1510 = vpack.c.b16 %v1078, %v1070
        %v1511 = vpack.c.b16 %v1079, %v1071
        %v1512 = vpack.c.b16 %v1080, %v1072
        %v1513 = vpack.c.b16 %v1081, %v1073
        %v1514 = vpack.c.b16 %v1082, %v1074
        %v1515 = vpack.c.b16 %v1083, %v1075
        %v1516 = vpack.c.b16 %v1092, %v1084
        %v1517 = vpack.c.b16 %v1093, %v1085
        %v1518 = vpack.c.b16 %v1094, %v1086
        %v1519 = vpack.c.b16 %v1095, %v1087
        %v1520 = vpack.c.b16 %v1096, %v1088
        %v1521 = vpack.c.b16 %v1097, %v1089
        %v1522 = vpack.c.b16 %v1098, %v1090
        %v1523 = vpack.c.b16 %v1099, %v1091
        %v1524 = vpack.c.b16 %v1108, %v1100
        %v1525 = vpack.c.b16 %v1109, %v1101
        %v1526 = vpack.c.b16 %v1110, %v1102
        %v1527 = vpack.c.b16 %v1111, %v1103
        %v1528 = vpack.c.b16 %v1112, %v1104
        %v1529 = vpack.c.b16 %v1113, %v1105
        %v1530 = vpack.c.b16 %v1114, %v1106
        %v1531 = vpack.c.b16 %v1115, %v1107
        %v1532 = vpack.c.b16 %v1124, %v1116
        %v1533 = vpack.c.b16 %v1125, %v1117
        %v1534 = vpack.c.b16 %v1126, %v1118
        %v1535 = vpack.c.b16 %v1127, %v1119
        %v1536 = vpack.c.b16 %v1128, %v1120
        %v1537 = vpack.c.b16 %v1129, %v1121
        %v1538 = vpack.c.b16 %v1130, %v1122
        %v1539 = vpack.c.b16 %v1131, %v1123
        %v1540 = vpack.c.b16 %v1140, %v1132
        %v1541 = vpack.c.b16 %v1141, %v1133
        %v1542 = vpack.c.b16 %v1142, %v1134
        %v1543 = vpack.c.b16 %v1143, %v1135
        %v1544 = vpack.c.b16 %v1144, %v1136
        %v1545 = vpack.c.b16 %v1145, %v1137
        %v1546 = vpack.c.b16 %v1146, %v1138
        %v1547 = vpack.c.b16 %v1147, %v1139
        %v1548 = vpack.c.b16 %v1156, %v1148
        %v1549 = vpack.c.b16 %v1157, %v1149
        %v1550 = vpack.c.b16 %v1158, %v1150
        %v1551 = vpack.c.b16 %v1159, %v1151
        %v1552 = vpack.c.b16 %v1160, %v1152
        %v1553 = vpack.c.b16 %v1161, %v1153
        %v1554 = vpack.c.b16 %v1162, %v1154
        %v1555 = vpack.c.b16 %v1163, %v1155
        %v1556 = vpack.c.b16 %v1172, %v1164
        %v1557 = vpack.c.b16 %v1173, %v1165
        %v1558 = vpack.c.b16 %v1174, %v1166
        %v1559 = vpack.c.b16 %v1175, %v1167
        %v1560 = vpack.c.b16 %v1176, %v1168
        %v1561 = vpack.c.b16 %v1177, %v1169
        %v1562 = vpack.c.b16 %v1178, %v1170
        %v1563 = vpack.c.b16 %v1179, %v1171
        %v1564 = vpack.c.b16 %v1188, %v1180
        %v1565 = vpack.c.b16 %v1189, %v1181
        %v1566 = vpack.c.b16 %v1190, %v1182
        %v1567 = vpack.c.b16 %v1191, %v1183
        %v1568 = vpack.c.b16 %v1192, %v1184
        %v1569 = vpack.c.b16 %v1193, %v1185
        %v1570 = vpack.c.b16 %v1194, %v1186
        %v1571 = vpack.c.b16 %v1195, %v1187
        %v1572 = vpack.c.b16 %v1204, %v1196
        %v1573 = vpack.c.b16 %v1205, %v1197
        %v1574 = vpack.c.b16 %v1206, %v1198
        %v1575 = vpack.c.b16 %v1207, %v1199
        %v1576 = vpack.c.b16 %v1208, %v1200
        %v1577 = vpack.c.b16 %v1209, %v1201
        %v1578 = vpack.c.b16 %v1210, %v1202
        %v1579 = vpack.c.b16 %v1211, %v1203
        %v1580 = vpack.c.b16 %v1220, %v1212
        %v1581 = vpack.c.b16 %v1221, %v1213
        %v1582 = vpack.c.b16 %v1222, %v1214
        %v1583 = vpack.c.b16 %v1223, %v1215
        %v1584 = vpack.c.b16 %v1224, %v1216
        %v1585 = vpack.c.b16 %v1225, %v1217
        %v1586 = vpack.c.b16 %v1226, %v1218
        %v1587 = vpack.c.b16 %v1227, %v1219
        %v1588 = vpack.c.b16 %v1236, %v1228
        %v1589 = vpack.c.b16 %v1237, %v1229
        %v1590 = vpack.c.b16 %v1238, %v1230
        %v1591 = vpack.c.b16 %v1239, %v1231
        %v1592 = vpack.c.b16 %v1240, %v1232
        %v1593 = vpack.c.b16 %v1241, %v1233
        %v1594 = vpack.c.b16 %v1242, %v1234
        %v1595 = vpack.c.b16 %v1243, %v1235
        %v1596 = vpack.c.b16 %v1252, %v1244
        %v1597 = vpack.c.b16 %v1253, %v1245
        %v1598 = vpack.c.b16 %v1254, %v1246
        %v1599 = vpack.c.b16 %v1255, %v1247
        %v1600 = vpack.c.b16 %v1256, %v1248
        %v1601 = vpack.c.b16 %v1257, %v1249
        %v1602 = vpack.c.b16 %v1258, %v1250
        %v1603 = vpack.c.b16 %v1259, %v1251
        %v1604 = vpack.c.b16 %v1268, %v1260
        %v1605 = vpack.c.b16 %v1269, %v1261
        %v1606 = vpack.c.b16 %v1270, %v1262
        %v1607 = vpack.c.b16 %v1271, %v1263
        %v1608 = vpack.c.b16 %v1272, %v1264
        %v1609 = vpack.c.b16 %v1273, %v1265
        %v1610 = vpack.c.b16 %v1274, %v1266
        %v1611 = vpack.c.b16 %v1275, %v1267
        %v1612 = vpack.c.b16 %v1284, %v1276
        %v1613 = vpack.c.b16 %v1285, %v1277
        %v1614 = vpack.c.b16 %v1286, %v1278
        %v1615 = vpack.c.b16 %v1287, %v1279
        %v1616 = vpack.c.b16 %v1288, %v1280
        %v1617 = vpack.c.b16 %v1289, %v1281
        %v1618 = vpack.c.b16 %v1290, %v1282
        %v1619 = vpack.c.b16 %v1291, %v1283
        %v1620 = vpack.c.b16 %v1300, %v1292
        %v1621 = vpack.c.b16 %v1301, %v1293
        %v1622 = vpack.c.b16 %v1302, %v1294
        %v1623 = vpack.c.b16 %v1303, %v1295
        %v1624 = vpack.c.b16 %v1304, %v1296
        %v1625 = vpack.c.b16 %v1305, %v1297
        %v1626 = vpack.c.b16 %v1306, %v1298
        %v1627 = vpack.c.b16 %v1307, %v1299
        %v1628 = vpack.c.b16 %v1316, %v1308
        %v1629 = vpack.c.b16 %v1317, %v1309
        %v1630 = vpack.c.b16 %v1318, %v1310
        %v1631 = vpack.c.b16 %v1319, %v1311
        %v1632 = vpack.c.b16 %v1320, %v1312
        %v1633 = vpack.c.b16 %v1321, %v1313
        %v1634 = vpack.c.b16 %v1322, %v1314
        %v1635 = vpack.c.b16 %v1323, %v1315
        %v1636 = vpack.c.b16 %v1332, %v1324
        %v1637 = vpack.c.b16 %v1333, %v1325
        %v1638 = vpack.c.b16 %v1334, %v1326
        %v1639 = vpack.c.b16 %v1335, %v1327
        %v1640 = vpack.c.b16 %v1336, %v1328
        %v1641 = vpack.c.b16 %v1337, %v1329
        %v1642 = vpack.c.b16 %v1338, %v1330
        %v1643 = vpack.c.b16 %v1339, %v1331
        %v1644 = vpack.c.b16 %v1348, %v1340
        %v1645 = vpack.c.b16 %v1349, %v1341
        %v1646 = vpack.c.b16 %v1350, %v1342
        %v1647 = vpack.c.b16 %v1351, %v1343
        %v1648 = vpack.c.b16 %v1352, %v1344
        %v1649 = vpack.c.b16 %v1353, %v1345
        %v1650 = vpack.c.b16 %v1354, %v1346
        %v1651 = vpack.c.b16 %v1355, %v1347
        %v1652 = vpack.c.b16 %v1364, %v1356
        %v1653 = vpack.c.b16 %v1365, %v1357
        %v1654 = vpack.c.b16 %v1366, %v1358
        %v1655 = vpack.c.b16 %v1367, %v1359
        %v1656 = vpack.c.b16 %v1368, %v1360
        %v1657 = vpack.c.b16 %v1369, %v1361
        %v1658 = vpack.c.b16 %v1370, %v1362
        %v1659 = vpack.c.b16 %v1371, %v1363
        %v1660 = vpack.c.b16 %v1380, %v1372
        %v1661 = vpack.c.b16 %v1381, %v1373
        %v1662 = vpack.c.b16 %v1382, %v1374
        %v1663 = vpack.c.b16 %v1383, %v1375
        %v1664 = vpack.c.b16 %v1384, %v1376
        %v1665 = vpack.c.b16 %v1385, %v1377
        %v1666 = vpack.c.b16 %v1386, %v1378
        %v1667 = vpack.c.b16 %v1387, %v1379
        %v1668 = vpack.c.b16 %v1396, %v1388
        %v1669 = vpack.c.b16 %v1397, %v1389
        %v1670 = vpack.c.b16 %v1398, %v1390
        %v1671 = vpack.c.b16 %v1399, %v1391
        %v1672 = vpack.c.b16 %v1400, %v1392
        %v1673 = vpack.c.b16 %v1401, %v1393
        %v1674 = vpack.c.b16 %v1402, %v1394
        %v1675 = vpack.c.b16 %v1403, %v1395
        %v1676 = vpack.c.b16 %v1412, %v1404
        %v1677 = vpack.c.b16 %v1413, %v1405
        %v1678 = vpack.c.b16 %v1414, %v1406
        %v1679 = vpack.c.b16 %v1415, %v1407
        %v1680 = vpack.c.b16 %v1416, %v1408
        %v1681 = vpack.c.b16 %v1417, %v1409
        %v1682 = vpack.c.b16 %v1418, %v1410
        %v1683 = vpack.c.b16 %v1419, %v1411
        %v1684 = vpack.c.b16 %v1428, %v1420
        %v1685 = vpack.c.b16 %v1429, %v1421
        %v1686 = vpack.c.b16 %v1430, %v1422
        %v1687 = vpack.c.b16 %v1431, %v1423
        %v1688 = vpack.c.b16 %v1432, %v1424
        %v1689 = vpack.c.b16 %v1433, %v1425
        %v1690 = vpack.c.b16 %v1434, %v1426
        %v1691 = vpack.c.b16 %v1435, %v1427
        %1948 = vmatprep.subr.bf16.mxu0 %v1437
        %1949 = vmatpush1.bf16.msra.mxu0 %v1436
        %1950 = vmatprep.subr.bf16.mxu0 %v1445
        %1951 = vmatpush1.bf16.msra.mxu0 %v1444
        %1952 = vmatprep.subr.bf16.mxu0 %v1453
        %1953 = vmatpush1.bf16.msra.mxu0 %v1452
        %1954 = vmatprep.subr.bf16.mxu0 %v1461
        %1955 = vmatpush1.bf16.msra.mxu0 %v1460
        %1956 = vmatprep.subr.bf16.mxu0 %v1469
        %1957 = vmatpush1.bf16.msra.mxu0 %v1468
        %1958 = vmatprep.subr.bf16.mxu0 %v1477
        %1959 = vmatpush1.bf16.msra.mxu0 %v1476
        %1960 = vmatprep.subr.bf16.mxu0 %v1485
        %1961 = vmatpush1.bf16.msra.mxu0 %v1484
        %1962 = vmatprep.subr.bf16.mxu0 %v1493
        %1963 = vmatpush1.bf16.msra.mxu0 %v1492
        %1964 = vmatprep.subr.bf16.mxu0 %v1501
        %1965 = vmatpush1.bf16.msra.mxu0 %v1500
        %1966 = vmatprep.subr.bf16.mxu0 %v1509
        %1967 = vmatpush1.bf16.msra.mxu0 %v1508
        %1968 = vmatprep.subr.bf16.mxu0 %v1517
        %1969 = vmatpush1.bf16.msra.mxu0 %v1516
        %1970 = vmatprep.subr.bf16.mxu0 %v1525
        %1971 = vmatpush1.bf16.msra.mxu0 %v1524
        %1972 = vmatprep.subr.bf16.mxu0 %v1533
        %1973 = vmatpush1.bf16.msra.mxu0 %v1532
        %1974 = vmatprep.subr.bf16.mxu0 %v1541
        %1975 = vmatpush1.bf16.msra.mxu0 %v1540
        %1976 = vmatprep.subr.bf16.mxu0 %v1549
        %1977 = vmatpush1.bf16.msra.mxu0 %v1548
        %1978 = vmatprep.subr.bf16.mxu0 %v1557
        %1979 = vmatpush1.bf16.msra.mxu0 %v1556
        %1980 = vmatprep.mubr.bf16.mxu0 %v661
        %1981 = vmatmul.mubr.bf16.gmra.mrb[0].mxu0 %v660
        %v1982 = vpop.f32.mrb[0].mxu0
        %v1983 = vadd.f32 0.0, %v1982
        %v1984 = vpop.f32.mrb[0].mxu0
        %v1985 = vadd.f32 0.0, %v1984
        %v1986 = vpop.f32.mrb[0].mxu0
        %v1987 = vpop.f32.mrb[0].mxu0
        %1988 = vdwg.mxu0
        %1989 = vmatprep.subr.bf16.mxu0 %v1565
        %1990 = vmatpush1.bf16.msra.mxu0 %v1564
        %1991 = vmatprep.subr.bf16.mxu0 %v1573
        %1992 = vmatpush1.bf16.msra.mxu0 %v1572
        %1993 = vmatprep.subr.bf16.mxu0 %v1581
        %1994 = vmatpush1.bf16.msra.mxu0 %v1580
        %1995 = vmatprep.subr.bf16.mxu0 %v1589
        %1996 = vmatpush1.bf16.msra.mxu0 %v1588
        %1997 = vmatprep.subr.bf16.mxu0 %v1597
        %1998 = vmatpush1.bf16.msra.mxu0 %v1596
        %1999 = vmatprep.subr.bf16.mxu0 %v1605
        %2000 = vmatpush1.bf16.msra.mxu0 %v1604
        %2001 = vmatprep.subr.bf16.mxu0 %v1613
        %2002 = vmatpush1.bf16.msra.mxu0 %v1612
        %2003 = vmatprep.subr.bf16.mxu0 %v1621
        %2004 = vmatpush1.bf16.msra.mxu0 %v1620
        %2005 = vmatprep.subr.bf16.mxu0 %v1629
        %2006 = vmatpush1.bf16.msra.mxu0 %v1628
        %2007 = vmatprep.subr.bf16.mxu0 %v1637
        %2008 = vmatpush1.bf16.msra.mxu0 %v1636
        %2009 = vmatprep.subr.bf16.mxu0 %v1645
        %2010 = vmatpush1.bf16.msra.mxu0 %v1644
        %2011 = vmatprep.subr.bf16.mxu0 %v1653
        %2012 = vmatpush1.bf16.msra.mxu0 %v1652
        %2013 = vmatprep.subr.bf16.mxu0 %v1661
        %2014 = vmatpush1.bf16.msra.mxu0 %v1660
        %2015 = vmatprep.subr.bf16.mxu0 %v1669
        %2016 = vmatpush1.bf16.msra.mxu0 %v1668
        %2017 = vmatprep.subr.bf16.mxu0 %v1677
        %2018 = vmatpush1.bf16.msra.mxu0 %v1676
        %2019 = vmatprep.subr.bf16.mxu0 %v1685
        %2020 = vmatpush1.bf16.msra.mxu0 %v1684
        %2021 = vmatprep.mubr.bf16.mxu0 %v663
        %2022 = vmatmul.mubr.bf16.gmra.mrb[0].mxu0 %v662
        %v2023 = vpop.f32.mrb[0].mxu0
        %v2024 = vadd.f32 %v1983, %v2023
        %v2025 = vpop.f32.mrb[0].mxu0
        %v2026 = vadd.f32 %v1985, %v2025
        %v2027 = vpop.f32.mrb[0].mxu0
        %v2028 = vpop.f32.mrb[0].mxu0
        %2029 = vdwg.mxu0
        %2030 = vmatprep.subr.bf16.mxu0 %v1439
        %2031 = vmatpush1.bf16.msra.mxu0 %v1438
        %2032 = vmatprep.subr.bf16.mxu0 %v1447
        %2033 = vmatpush1.bf16.msra.mxu0 %v1446
        %2034 = vmatprep.subr.bf16.mxu0 %v1455
        %2035 = vmatpush1.bf16.msra.mxu0 %v1454
        %2036 = vmatprep.subr.bf16.mxu0 %v1463
        %2037 = vmatpush1.bf16.msra.mxu0 %v1462
        %2038 = vmatprep.subr.bf16.mxu0 %v1471
        %2039 = vmatpush1.bf16.msra.mxu0 %v1470
        %2040 = vmatprep.subr.bf16.mxu0 %v1479
        %2041 = vmatpush1.bf16.msra.mxu0 %v1478
        %2042 = vmatprep.subr.bf16.mxu0 %v1487
        %2043 = vmatpush1.bf16.msra.mxu0 %v1486
        %2044 = vmatprep.subr.bf16.mxu0 %v1495
        %2045 = vmatpush1.bf16.msra.mxu0 %v1494
        %2046 = vmatprep.subr.bf16.mxu0 %v1503
        %2047 = vmatpush1.bf16.msra.mxu0 %v1502
        %2048 = vmatprep.subr.bf16.mxu0 %v1511
        %2049 = vmatpush1.bf16.msra.mxu0 %v1510
        %2050 = vmatprep.subr.bf16.mxu0 %v1519
        %2051 = vmatpush1.bf16.msra.mxu0 %v1518
        %2052 = vmatprep.subr.bf16.mxu0 %v1527
        %2053 = vmatpush1.bf16.msra.mxu0 %v1526
        %2054 = vmatprep.subr.bf16.mxu0 %v1535
        %2055 = vmatpush1.bf16.msra.mxu0 %v1534
        %2056 = vmatprep.subr.bf16.mxu0 %v1543
        %2057 = vmatpush1.bf16.msra.mxu0 %v1542
        %2058 = vmatprep.subr.bf16.mxu0 %v1551
        %2059 = vmatpush1.bf16.msra.mxu0 %v1550
        %2060 = vmatprep.subr.bf16.mxu0 %v1559
        %2061 = vmatpush1.bf16.msra.mxu0 %v1558
        %2062 = vmatprep.mubr.bf16.mxu0 %v661
        %2063 = vmatmul.mubr.bf16.gmra.mrb[0].mxu0 %v660
        %v2064 = vpop.f32.mrb[0].mxu0
        %v2065 = vadd.f32 0.0, %v2064
        %v2066 = vpop.f32.mrb[0].mxu0
        %v2067 = vadd.f32 0.0, %v2066
        %v2068 = vpop.f32.mrb[0].mxu0
        %v2069 = vpop.f32.mrb[0].mxu0
        %2070 = vdwg.mxu0
        %2071 = vmatprep.subr.bf16.mxu0 %v1567
        %2072 = vmatpush1.bf16.msra.mxu0 %v1566
        %2073 = vmatprep.subr.bf16.mxu0 %v1575
        %2074 = vmatpush1.bf16.msra.mxu0 %v1574
        %2075 = vmatprep.subr.bf16.mxu0 %v1583
        %2076 = vmatpush1.bf16.msra.mxu0 %v1582
        %2077 = vmatprep.subr.bf16.mxu0 %v1591
        %2078 = vmatpush1.bf16.msra.mxu0 %v1590
        %2079 = vmatprep.subr.bf16.mxu0 %v1599
        %2080 = vmatpush1.bf16.msra.mxu0 %v1598
        %2081 = vmatprep.subr.bf16.mxu0 %v1607
        %2082 = vmatpush1.bf16.msra.mxu0 %v1606
        %2083 = vmatprep.subr.bf16.mxu0 %v1615
        %2084 = vmatpush1.bf16.msra.mxu0 %v1614
        %2085 = vmatprep.subr.bf16.mxu0 %v1623
        %2086 = vmatpush1.bf16.msra.mxu0 %v1622
        %2087 = vmatprep.subr.bf16.mxu0 %v1631
        %2088 = vmatpush1.bf16.msra.mxu0 %v1630
        %2089 = vmatprep.subr.bf16.mxu0 %v1639
        %2090 = vmatpush1.bf16.msra.mxu0 %v1638
        %2091 = vmatprep.subr.bf16.mxu0 %v1647
        %2092 = vmatpush1.bf16.msra.mxu0 %v1646
        %2093 = vmatprep.subr.bf16.mxu0 %v1655
        %2094 = vmatpush1.bf16.msra.mxu0 %v1654
        %2095 = vmatprep.subr.bf16.mxu0 %v1663
        %2096 = vmatpush1.bf16.msra.mxu0 %v1662
        %2097 = vmatprep.subr.bf16.mxu0 %v1671
        %2098 = vmatpush1.bf16.msra.mxu0 %v1670
        %2099 = vmatprep.subr.bf16.mxu0 %v1679
        %2100 = vmatpush1.bf16.msra.mxu0 %v1678
        %2101 = vmatprep.subr.bf16.mxu0 %v1687
        %2102 = vmatpush1.bf16.msra.mxu0 %v1686
        %2103 = vmatprep.mubr.bf16.mxu0 %v663
        %2104 = vmatmul.mubr.bf16.gmra.mrb[0].mxu0 %v662
        %v2105 = vpop.f32.mrb[0].mxu0
        %v2106 = vadd.f32 %v2065, %v2105
        %v2107 = vpop.f32.mrb[0].mxu0
        %v2108 = vadd.f32 %v2067, %v2107
        %v2109 = vpop.f32.mrb[0].mxu0
        %v2110 = vpop.f32.mrb[0].mxu0
        %2111 = vdwg.mxu0
        %2112 = vmatprep.subr.bf16.mxu0 %v1441
        %2113 = vmatpush1.bf16.msra.mxu0 %v1440
        %2114 = vmatprep.subr.bf16.mxu0 %v1449
        %2115 = vmatpush1.bf16.msra.mxu0 %v1448
        %2116 = vmatprep.subr.bf16.mxu0 %v1457
        %2117 = vmatpush1.bf16.msra.mxu0 %v1456
        %2118 = vmatprep.subr.bf16.mxu0 %v1465
        %2119 = vmatpush1.bf16.msra.mxu0 %v1464
        %2120 = vmatprep.subr.bf16.mxu0 %v1473
        %2121 = vmatpush1.bf16.msra.mxu0 %v1472
        %2122 = vmatprep.subr.bf16.mxu0 %v1481
        %2123 = vmatpush1.bf16.msra.mxu0 %v1480
        %2124 = vmatprep.subr.bf16.mxu0 %v1489
        %2125 = vmatpush1.bf16.msra.mxu0 %v1488
        %2126 = vmatprep.subr.bf16.mxu0 %v1497
        %2127 = vmatpush1.bf16.msra.mxu0 %v1496
        %2128 = vmatprep.subr.bf16.mxu0 %v1505
        %2129 = vmatpush1.bf16.msra.mxu0 %v1504
        %2130 = vmatprep.subr.bf16.mxu0 %v1513
        %2131 = vmatpush1.bf16.msra.mxu0 %v1512
        %2132 = vmatprep.subr.bf16.mxu0 %v1521
        %2133 = vmatpush1.bf16.msra.mxu0 %v1520
        %2134 = vmatprep.subr.bf16.mxu0 %v1529
        %2135 = vmatpush1.bf16.msra.mxu0 %v1528
        %2136 = vmatprep.subr.bf16.mxu0 %v1537
        %2137 = vmatpush1.bf16.msra.mxu0 %v1536
        %2138 = vmatprep.subr.bf16.mxu0 %v1545
        %2139 = vmatpush1.bf16.msra.mxu0 %v1544
        %2140 = vmatprep.subr.bf16.mxu0 %v1553
        %2141 = vmatpush1.bf16.msra.mxu0 %v1552
        %2142 = vmatprep.subr.bf16.mxu0 %v1561
        %2143 = vmatpush1.bf16.msra.mxu0 %v1560
        %2144 = vmatprep.mubr.bf16.mxu0 %v661
        %2145 = vmatmul.mubr.bf16.gmra.mrb[0].mxu0 %v660
        %v2146 = vpop.f32.mrb[0].mxu0
        %v2147 = vadd.f32 0.0, %v2146
        %v2148 = vpop.f32.mrb[0].mxu0
        %v2149 = vadd.f32 0.0, %v2148
        %v2150 = vpop.f32.mrb[0].mxu0
        %v2151 = vpop.f32.mrb[0].mxu0
        %2152 = vdwg.mxu0
        %2153 = vmatprep.subr.bf16.mxu0 %v1569
        %2154 = vmatpush1.bf16.msra.mxu0 %v1568
        %2155 = vmatprep.subr.bf16.mxu0 %v1577
        %2156 = vmatpush1.bf16.msra.mxu0 %v1576
        %2157 = vmatprep.subr.bf16.mxu0 %v1585
        %2158 = vmatpush1.bf16.msra.mxu0 %v1584
        %2159 = vmatprep.subr.bf16.mxu0 %v1593
        %2160 = vmatpush1.bf16.msra.mxu0 %v1592
        %2161 = vmatprep.subr.bf16.mxu0 %v1601
        %2162 = vmatpush1.bf16.msra.mxu0 %v1600
        %2163 = vmatprep.subr.bf16.mxu0 %v1609
        %2164 = vmatpush1.bf16.msra.mxu0 %v1608
        %2165 = vmatprep.subr.bf16.mxu0 %v1617
        %2166 = vmatpush1.bf16.msra.mxu0 %v1616
        %2167 = vmatprep.subr.bf16.mxu0 %v1625
        %2168 = vmatpush1.bf16.msra.mxu0 %v1624
        %2169 = vmatprep.subr.bf16.mxu0 %v1633
        %2170 = vmatpush1.bf16.msra.mxu0 %v1632
        %2171 = vmatprep.subr.bf16.mxu0 %v1641
        %2172 = vmatpush1.bf16.msra.mxu0 %v1640
        %2173 = vmatprep.subr.bf16.mxu0 %v1649
        %2174 = vmatpush1.bf16.msra.mxu0 %v1648
        %2175 = vmatprep.subr.bf16.mxu0 %v1657
        %2176 = vmatpush1.bf16.msra.mxu0 %v1656
        %2177 = vmatprep.subr.bf16.mxu0 %v1665
        %2178 = vmatpush1.bf16.msra.mxu0 %v1664
        %2179 = vmatprep.subr.bf16.mxu0 %v1673
        %2180 = vmatpush1.bf16.msra.mxu0 %v1672
        %2181 = vmatprep.subr.bf16.mxu0 %v1681
        %2182 = vmatpush1.bf16.msra.mxu0 %v1680
        %2183 = vmatprep.subr.bf16.mxu0 %v1689
        %2184 = vmatpush1.bf16.msra.mxu0 %v1688
        %2185 = vmatprep.mubr.bf16.mxu0 %v663
        %2186 = vmatmul.mubr.bf16.gmra.mrb[0].mxu0 %v662
        %v2187 = vpop.f32.mrb[0].mxu0
        %v2188 = vadd.f32 %v2147, %v2187
        %v2189 = vpop.f32.mrb[0].mxu0
        %v2190 = vadd.f32 %v2149, %v2189
        %v2191 = vpop.f32.mrb[0].mxu0
        %v2192 = vpop.f32.mrb[0].mxu0
        %2193 = vdwg.mxu0
        %2194 = vmatprep.subr.bf16.mxu0 %v1443
        %2195 = vmatpush1.bf16.msra.mxu0 %v1442
        %2196 = vmatprep.subr.bf16.mxu0 %v1451
        %2197 = vmatpush1.bf16.msra.mxu0 %v1450
        %2198 = vmatprep.subr.bf16.mxu0 %v1459
        %2199 = vmatpush1.bf16.msra.mxu0 %v1458
        %2200 = vmatprep.subr.bf16.mxu0 %v1467
        %2201 = vmatpush1.bf16.msra.mxu0 %v1466
        %2202 = vmatprep.subr.bf16.mxu0 %v1475
        %2203 = vmatpush1.bf16.msra.mxu0 %v1474
        %2204 = vmatprep.subr.bf16.mxu0 %v1483
        %2205 = vmatpush1.bf16.msra.mxu0 %v1482
        %2206 = vmatprep.subr.bf16.mxu0 %v1491
        %2207 = vmatpush1.bf16.msra.mxu0 %v1490
        %2208 = vmatprep.subr.bf16.mxu0 %v1499
        %2209 = vmatpush1.bf16.msra.mxu0 %v1498
        %2210 = vmatprep.subr.bf16.mxu0 %v1507
        %2211 = vmatpush1.bf16.msra.mxu0 %v1506
        %2212 = vmatprep.subr.bf16.mxu0 %v1515
        %2213 = vmatpush1.bf16.msra.mxu0 %v1514
        %2214 = vmatprep.subr.bf16.mxu0 %v1523
        %2215 = vmatpush1.bf16.msra.mxu0 %v1522
        %2216 = vmatprep.subr.bf16.mxu0 %v1531
        %2217 = vmatpush1.bf16.msra.mxu0 %v1530
        %2218 = vmatprep.subr.bf16.mxu0 %v1539
        %2219 = vmatpush1.bf16.msra.mxu0 %v1538
        %2220 = vmatprep.subr.bf16.mxu0 %v1547
        %2221 = vmatpush1.bf16.msra.mxu0 %v1546
        %2222 = vmatprep.subr.bf16.mxu0 %v1555
        %2223 = vmatpush1.bf16.msra.mxu0 %v1554
        %2224 = vmatprep.subr.bf16.mxu0 %v1563
        %2225 = vmatpush1.bf16.msra.mxu0 %v1562
        %2226 = vmatprep.mubr.bf16.mxu0 %v661
        %2227 = vmatmul.mubr.bf16.gmra.mrb[0].mxu0 %v660
        %v2228 = vpop.f32.mrb[0].mxu0
        %v2229 = vadd.f32 0.0, %v2228
        %v2230 = vpop.f32.mrb[0].mxu0
        %v2231 = vadd.f32 0.0, %v2230
        %v2232 = vpop.f32.mrb[0].mxu0
        %v2233 = vpop.f32.mrb[0].mxu0
        %2234 = vdwg.mxu0
        %2235 = vmatprep.subr.bf16.mxu0 %v1571
        %2236 = vmatpush1.bf16.msra.mxu0 %v1570
        %2237 = vmatprep.subr.bf16.mxu0 %v1579
        %2238 = vmatpush1.bf16.msra.mxu0 %v1578
        %2239 = vmatprep.subr.bf16.mxu0 %v1587
        %2240 = vmatpush1.bf16.msra.mxu0 %v1586
        %2241 = vmatprep.subr.bf16.mxu0 %v1595
        %2242 = vmatpush1.bf16.msra.mxu0 %v1594
        %2243 = vmatprep.subr.bf16.mxu0 %v1603
        %2244 = vmatpush1.bf16.msra.mxu0 %v1602
        %2245 = vmatprep.subr.bf16.mxu0 %v1611
        %2246 = vmatpush1.bf16.msra.mxu0 %v1610
        %2247 = vmatprep.subr.bf16.mxu0 %v1619
        %2248 = vmatpush1.bf16.msra.mxu0 %v1618
        %2249 = vmatprep.subr.bf16.mxu0 %v1627
        %2250 = vmatpush1.bf16.msra.mxu0 %v1626
        %2251 = vmatprep.subr.bf16.mxu0 %v1635
        %2252 = vmatpush1.bf16.msra.mxu0 %v1634
        %2253 = vmatprep.subr.bf16.mxu0 %v1643
        %2254 = vmatpush1.bf16.msra.mxu0 %v1642
        %2255 = vmatprep.subr.bf16.mxu0 %v1651
        %2256 = vmatpush1.bf16.msra.mxu0 %v1650
        %2257 = vmatprep.subr.bf16.mxu0 %v1659
        %2258 = vmatpush1.bf16.msra.mxu0 %v1658
        %2259 = vmatprep.subr.bf16.mxu0 %v1667
        %2260 = vmatpush1.bf16.msra.mxu0 %v1666
        %2261 = vmatprep.subr.bf16.mxu0 %v1675
        %2262 = vmatpush1.bf16.msra.mxu0 %v1674
        %2263 = vmatprep.subr.bf16.mxu0 %v1683
        %2264 = vmatpush1.bf16.msra.mxu0 %v1682
        %2265 = vmatprep.subr.bf16.mxu0 %v1691
        %2266 = vmatpush1.bf16.msra.mxu0 %v1690
        %2267 = vmatprep.mubr.bf16.mxu0 %v663
        %2268 = vmatmul.mubr.bf16.gmra.mrb[0].mxu0 %v662
        %v2269 = vpop.f32.mrb[0].mxu0
        %v2270 = vadd.f32 %v2229, %v2269
        %v2271 = vpop.f32.mrb[0].mxu0
        %v2272 = vadd.f32 %v2231, %v2271
        %v2273 = vpop.f32.mrb[0].mxu0
        %v2274 = vpop.f32.mrb[0].mxu0
        %2275 = vdwg.mxu0
        %v2276 = vadd.f32 %v388, %v2024
        %v2277 = vadd.f32 %v389, %v2026
        %v2278 = vadd.f32 %v390, %v2106
        %v2279 = vadd.f32 %v391, %v2108
        %v2280 = vadd.f32 %v392, %v2188
        %v2281 = vadd.f32 %v393, %v2190
        %v2282 = vadd.f32 %v394, %v2270
        %v2283 = vadd.f32 %v395, %v2272
        %2284 = vst [vmem:[#allocation2] sm:$0xff] %v2276
        %2285 = vst [vmem:[#allocation2 + $0x8] sm:$0xff] %v2277
        %2286 = vst [vmem:[#allocation2 + $0x10] sm:$0xff] %v2278
        %2287 = vst [vmem:[#allocation2 + $0x18] sm:$0xff] %v2279
        %2288 = vst [vmem:[#allocation2 + $0x20] sm:$0xff] %v2280
        %2289 = vst [vmem:[#allocation2 + $0x28] sm:$0xff] %v2281
        %2290 = vst [vmem:[#allocation2 + $0x30] sm:$0xff] %v2282
        %2291 = vst [vmem:[#allocation2 + $0x38] sm:$0xff] %v2283
        %p2292 = scmp.eq.s32.totalorder %s24, 3
        // Predicated region
        $region77: #{cnn_classification_forward.3} parent=47 // pred_check
          %p2293 = pneg %p2292
        $region78: #{cnn_classification_forward.3} parent=47 // pred_check_branch
          %2295 = sbr.rel (%p2293) target = $region80
        $region79: #{cnn_classification_forward.3} parent=47 // pred_region
          %v2296 = vld [vmem:[#allocation2] sm:$0xff]
          %v2297 = vld [vmem:[#allocation2 + $0x8] sm:$0xff]
          %v2298 = vld [vmem:[#allocation2 + $0x10] sm:$0xff]
          %v2299 = vld [vmem:[#allocation2 + $0x18] sm:$0xff]
          %v2300 = vld [vmem:[#allocation2 + $0x20] sm:$0xff]
          %v2301 = vld [vmem:[#allocation2 + $0x28] sm:$0xff]
          %v2302 = vld [vmem:[#allocation2 + $0x30] sm:$0xff]
          %v2303 = vld [vmem:[#allocation2 + $0x38] sm:$0xff]
          %v2304 = vld [vmem:[#allocation5] sm:$0xff]
          %v2306 = vlaneseq
          %v2307 = vshrl.u32 %v2306, 7
          %v2308 = vsub.s32 0, %v2307
          %v2309 = vrot.slane %v2304, %v2308
          %v2310 = vlaneseq
          %v2311 = vshrl.u32 %v2310, 7
          %v2312 = vsub.s32 1, %v2311
          %v2313 = vrot.slane %v2304, %v2312
          %v2314 = vlaneseq
          %v2315 = vshrl.u32 %v2314, 7
          %v2316 = vsub.s32 2, %v2315
          %v2317 = vrot.slane %v2304, %v2316
          %v2318 = vlaneseq
          %v2319 = vshrl.u32 %v2318, 7
          %v2320 = vsub.s32 3, %v2319
          %v2321 = vrot.slane %v2304, %v2320
          %v2322 = vlaneseq
          %v2323 = vshrl.u32 %v2322, 7
          %v2324 = vsub.s32 4, %v2323
          %v2325 = vrot.slane %v2304, %v2324
          %v2326 = vlaneseq
          %v2327 = vshrl.u32 %v2326, 7
          %v2328 = vsub.s32 5, %v2327
          %v2329 = vrot.slane %v2304, %v2328
          %v2330 = vlaneseq
          %v2331 = vshrl.u32 %v2330, 7
          %v2332 = vsub.s32 6, %v2331
          %v2333 = vrot.slane %v2304, %v2332
          %v2334 = vlaneseq
          %v2335 = vshrl.u32 %v2334, 7
          %v2336 = vsub.s32 7, %v2335
          %v2337 = vrot.slane %v2304, %v2336
          %v2346 = vadd.f32 %v2296, %v2309
          %v2347 = vadd.f32 %v2297, %v2313
          %v2348 = vadd.f32 %v2298, %v2317
          %v2349 = vadd.f32 %v2299, %v2321
          %v2350 = vadd.f32 %v2300, %v2325
          %v2351 = vadd.f32 %v2301, %v2329
          %v2352 = vadd.f32 %v2302, %v2333
          %v2353 = vadd.f32 %v2303, %v2337
          %v2354 = vmax.f32 %v2346, 0.0
          %v2355 = vmax.f32 %v2347, 0.0
          %v2356 = vmax.f32 %v2348, 0.0
          %v2357 = vmax.f32 %v2349, 0.0
          %v2358 = vmax.f32 %v2350, 0.0
          %v2359 = vmax.f32 %v2351, 0.0
          %v2360 = vmax.f32 %v2352, 0.0
          %v2361 = vmax.f32 %v2353, 0.0
          %v2362 = vpack.c.bf16 %v2354, %v2354
          %v2363 = vpack.c.bf16 %v2355, %v2355
          %v2364 = vpack.c.bf16 %v2356, %v2356
          %v2365 = vpack.c.bf16 %v2357, %v2357
          %v2366 = vpack.c.bf16 %v2358, %v2358
          %v2367 = vpack.c.bf16 %v2359, %v2359
          %v2368 = vpack.c.bf16 %v2360, %v2360
          %v2369 = vpack.c.bf16 %v2361, %v2361
          %v2370 = vld [vmem:[#allocation7] sm:$0xff]
          %v2371 = vld [vmem:[#allocation7 + $0x8] sm:$0xff]
          %v2372 = vld [vmem:[#allocation7 + $0x10] sm:$0xff]
          %v2373 = vld [vmem:[#allocation7 + $0x18] sm:$0xff]
          %v2374 = vld [vmem:[#allocation7 + $0x20] sm:$0xff]
          %v2375 = vld [vmem:[#allocation7 + $0x28] sm:$0xff]
          %v2376 = vld [vmem:[#allocation7 + $0x30] sm:$0xff]
          %v2377 = vld [vmem:[#allocation7 + $0x38] sm:$0xff]
          %v2378 = vld [vmem:[#allocation7 + $0x40] sm:$0xff]
          %v2379 = vld [vmem:[#allocation7 + $0x48] sm:$0xff]
          %v2380 = vld [vmem:[#allocation7 + $0x50] sm:$0xff]
          %v2381 = vld [vmem:[#allocation7 + $0x58] sm:$0xff]
          %v2382 = vld [vmem:[#allocation7 + $0x60] sm:$0xff]
          %v2383 = vld [vmem:[#allocation7 + $0x68] sm:$0xff]
          %v2384 = vld [vmem:[#allocation7 + $0x70] sm:$0xff]
          %v2385 = vld [vmem:[#allocation7 + $0x78] sm:$0xff]
          %v2386 = vld [vmem:[#allocation7 + $0x80] sm:$0xff]
          %v2387 = vld [vmem:[#allocation7 + $0x88] sm:$0xff]
          %v2388 = vld [vmem:[#allocation7 + $0x90] sm:$0xff]
          %v2389 = vld [vmem:[#allocation7 + $0x98] sm:$0xff]
          %v2390 = vld [vmem:[#allocation7 + $0xa0] sm:$0xff]
          %v2391 = vld [vmem:[#allocation7 + $0xa8] sm:$0xff]
          %v2392 = vld [vmem:[#allocation7 + $0xb0] sm:$0xff]
          %v2393 = vld [vmem:[#allocation7 + $0xb8] sm:$0xff]
          %v2394 = vld [vmem:[#allocation7 + $0xc0] sm:$0xff]
          %v2395 = vld [vmem:[#allocation7 + $0xc8] sm:$0xff]
          %v2396 = vld [vmem:[#allocation7 + $0xd0] sm:$0xff]
          %v2397 = vld [vmem:[#allocation7 + $0xd8] sm:$0xff]
          %v2398 = vld [vmem:[#allocation7 + $0xe0] sm:$0xff]
          %v2399 = vld [vmem:[#allocation7 + $0xe8] sm:$0xff]
          %v2400 = vld [vmem:[#allocation7 + $0xf0] sm:$0xff]
          %v2401 = vld [vmem:[#allocation7 + $0xf8] sm:$0xff]
          %v2402 = vld [vmem:[#allocation7 + $0x100] sm:$0xff]
          %v2403 = vld [vmem:[#allocation7 + $0x108] sm:$0xff]
          %v2404 = vld [vmem:[#allocation7 + $0x110] sm:$0xff]
          %v2405 = vld [vmem:[#allocation7 + $0x118] sm:$0xff]
          %v2406 = vld [vmem:[#allocation7 + $0x120] sm:$0xff]
          %v2407 = vld [vmem:[#allocation7 + $0x128] sm:$0xff]
          %v2408 = vld [vmem:[#allocation7 + $0x130] sm:$0xff]
          %v2409 = vld [vmem:[#allocation7 + $0x138] sm:$0xff]
          %v2410 = vld [vmem:[#allocation7 + $0x140] sm:$0xff]
          %v2411 = vld [vmem:[#allocation7 + $0x148] sm:$0xff]
          %v2412 = vld [vmem:[#allocation7 + $0x150] sm:$0xff]
          %v2413 = vld [vmem:[#allocation7 + $0x158] sm:$0xff]
          %v2414 = vld [vmem:[#allocation7 + $0x160] sm:$0xff]
          %v2415 = vld [vmem:[#allocation7 + $0x168] sm:$0xff]
          %v2416 = vld [vmem:[#allocation7 + $0x170] sm:$0xff]
          %v2417 = vld [vmem:[#allocation7 + $0x178] sm:$0xff]
          %v2418 = vld [vmem:[#allocation7 + $0x180] sm:$0xff]
          %v2419 = vld [vmem:[#allocation7 + $0x188] sm:$0xff]
          %v2420 = vld [vmem:[#allocation7 + $0x190] sm:$0xff]
          %v2421 = vld [vmem:[#allocation7 + $0x198] sm:$0xff]
          %v2422 = vld [vmem:[#allocation7 + $0x1a0] sm:$0xff]
          %v2423 = vld [vmem:[#allocation7 + $0x1a8] sm:$0xff]
          %v2424 = vld [vmem:[#allocation7 + $0x1b0] sm:$0xff]
          %v2425 = vld [vmem:[#allocation7 + $0x1b8] sm:$0xff]
          %v2426 = vld [vmem:[#allocation7 + $0x1c0] sm:$0xff]
          %v2427 = vld [vmem:[#allocation7 + $0x1c8] sm:$0xff]
          %v2428 = vld [vmem:[#allocation7 + $0x1d0] sm:$0xff]
          %v2429 = vld [vmem:[#allocation7 + $0x1d8] sm:$0xff]
          %v2430 = vld [vmem:[#allocation7 + $0x1e0] sm:$0xff]
          %v2431 = vld [vmem:[#allocation7 + $0x1e8] sm:$0xff]
          %v2432 = vld [vmem:[#allocation7 + $0x1f0] sm:$0xff]
          %v2433 = vld [vmem:[#allocation7 + $0x1f8] sm:$0xff]
          %v2434 = vld [vmem:[#allocation7 + $0x200] sm:$0xff]
          %v2435 = vld [vmem:[#allocation7 + $0x208] sm:$0xff]
          %v2436 = vld [vmem:[#allocation7 + $0x210] sm:$0xff]
          %v2437 = vld [vmem:[#allocation7 + $0x218] sm:$0xff]
          %v2438 = vld [vmem:[#allocation7 + $0x220] sm:$0xff]
          %v2439 = vld [vmem:[#allocation7 + $0x228] sm:$0xff]
          %v2440 = vld [vmem:[#allocation7 + $0x230] sm:$0xff]
          %v2441 = vld [vmem:[#allocation7 + $0x238] sm:$0xff]
          %v2442 = vld [vmem:[#allocation7 + $0x240] sm:$0xff]
          %v2443 = vld [vmem:[#allocation7 + $0x248] sm:$0xff]
          %v2444 = vld [vmem:[#allocation7 + $0x250] sm:$0xff]
          %v2445 = vld [vmem:[#allocation7 + $0x258] sm:$0xff]
          %v2446 = vld [vmem:[#allocation7 + $0x260] sm:$0xff]
          %v2447 = vld [vmem:[#allocation7 + $0x268] sm:$0xff]
          %v2448 = vld [vmem:[#allocation7 + $0x270] sm:$0xff]
          %v2449 = vld [vmem:[#allocation7 + $0x278] sm:$0xff]
          %v2450 = vld [vmem:[#allocation7 + $0x280] sm:$0xff]
          %v2451 = vld [vmem:[#allocation7 + $0x288] sm:$0xff]
          %v2452 = vld [vmem:[#allocation7 + $0x290] sm:$0xff]
          %v2453 = vld [vmem:[#allocation7 + $0x298] sm:$0xff]
          %v2454 = vld [vmem:[#allocation7 + $0x2a0] sm:$0xff]
          %v2455 = vld [vmem:[#allocation7 + $0x2a8] sm:$0xff]
          %v2456 = vld [vmem:[#allocation7 + $0x2b0] sm:$0xff]
          %v2457 = vld [vmem:[#allocation7 + $0x2b8] sm:$0xff]
          %v2458 = vld [vmem:[#allocation7 + $0x2c0] sm:$0xff]
          %v2459 = vld [vmem:[#allocation7 + $0x2c8] sm:$0xff]
          %v2460 = vld [vmem:[#allocation7 + $0x2d0] sm:$0xff]
          %v2461 = vld [vmem:[#allocation7 + $0x2d8] sm:$0xff]
          %v2462 = vld [vmem:[#allocation7 + $0x2e0] sm:$0xff]
          %v2463 = vld [vmem:[#allocation7 + $0x2e8] sm:$0xff]
          %v2464 = vld [vmem:[#allocation7 + $0x2f0] sm:$0xff]
          %v2465 = vld [vmem:[#allocation7 + $0x2f8] sm:$0xff]
          %v2466 = vld [vmem:[#allocation7 + $0x300] sm:$0xff]
          %v2467 = vld [vmem:[#allocation7 + $0x308] sm:$0xff]
          %v2468 = vld [vmem:[#allocation7 + $0x310] sm:$0xff]
          %v2469 = vld [vmem:[#allocation7 + $0x318] sm:$0xff]
          %v2470 = vld [vmem:[#allocation7 + $0x320] sm:$0xff]
          %v2471 = vld [vmem:[#allocation7 + $0x328] sm:$0xff]
          %v2472 = vld [vmem:[#allocation7 + $0x330] sm:$0xff]
          %v2473 = vld [vmem:[#allocation7 + $0x338] sm:$0xff]
          %v2474 = vld [vmem:[#allocation7 + $0x340] sm:$0xff]
          %v2475 = vld [vmem:[#allocation7 + $0x348] sm:$0xff]
          %v2476 = vld [vmem:[#allocation7 + $0x350] sm:$0xff]
          %v2477 = vld [vmem:[#allocation7 + $0x358] sm:$0xff]
          %v2478 = vld [vmem:[#allocation7 + $0x360] sm:$0xff]
          %v2479 = vld [vmem:[#allocation7 + $0x368] sm:$0xff]
          %v2480 = vld [vmem:[#allocation7 + $0x370] sm:$0xff]
          %v2481 = vld [vmem:[#allocation7 + $0x378] sm:$0xff]
          %v2482 = vld [vmem:[#allocation7 + $0x380] sm:$0xff]
          %v2483 = vld [vmem:[#allocation7 + $0x388] sm:$0xff]
          %v2484 = vld [vmem:[#allocation7 + $0x390] sm:$0xff]
          %v2485 = vld [vmem:[#allocation7 + $0x398] sm:$0xff]
          %v2486 = vld [vmem:[#allocation7 + $0x3a0] sm:$0xff]
          %v2487 = vld [vmem:[#allocation7 + $0x3a8] sm:$0xff]
          %v2488 = vld [vmem:[#allocation7 + $0x3b0] sm:$0xff]
          %v2489 = vld [vmem:[#allocation7 + $0x3b8] sm:$0xff]
          %v2490 = vld [vmem:[#allocation7 + $0x3c0] sm:$0xff]
          %v2491 = vld [vmem:[#allocation7 + $0x3c8] sm:$0xff]
          %v2492 = vld [vmem:[#allocation7 + $0x3d0] sm:$0xff]
          %v2493 = vld [vmem:[#allocation7 + $0x3d8] sm:$0xff]
          %v2494 = vld [vmem:[#allocation7 + $0x3e0] sm:$0xff]
          %v2495 = vld [vmem:[#allocation7 + $0x3e8] sm:$0xff]
          %v2496 = vld [vmem:[#allocation7 + $0x3f0] sm:$0xff]
          %v2497 = vld [vmem:[#allocation7 + $0x3f8] sm:$0xff]
          %v2498 = vld [vmem:[#allocation7 + $0x400] sm:$0xff]
          %v2499 = vld [vmem:[#allocation7 + $0x408] sm:$0xff]
          %v2500 = vld [vmem:[#allocation7 + $0x410] sm:$0xff]
          %v2501 = vld [vmem:[#allocation7 + $0x418] sm:$0xff]
          %v2502 = vld [vmem:[#allocation7 + $0x420] sm:$0xff]
          %v2503 = vld [vmem:[#allocation7 + $0x428] sm:$0xff]
          %v2504 = vld [vmem:[#allocation7 + $0x430] sm:$0xff]
          %v2505 = vld [vmem:[#allocation7 + $0x438] sm:$0xff]
          %v2506 = vld [vmem:[#allocation7 + $0x440] sm:$0xff]
          %v2507 = vld [vmem:[#allocation7 + $0x448] sm:$0xff]
          %v2508 = vld [vmem:[#allocation7 + $0x450] sm:$0xff]
          %v2509 = vld [vmem:[#allocation7 + $0x458] sm:$0xff]
          %v2510 = vld [vmem:[#allocation7 + $0x460] sm:$0xff]
          %v2511 = vld [vmem:[#allocation7 + $0x468] sm:$0xff]
          %v2512 = vld [vmem:[#allocation7 + $0x470] sm:$0xff]
          %v2513 = vld [vmem:[#allocation7 + $0x478] sm:$0xff]
          %v2514 = vld [vmem:[#allocation7 + $0x480] sm:$0xff]
          %v2515 = vld [vmem:[#allocation7 + $0x488] sm:$0xff]
          %v2516 = vld [vmem:[#allocation7 + $0x490] sm:$0xff]
          %v2517 = vld [vmem:[#allocation7 + $0x498] sm:$0xff]
          %v2518 = vld [vmem:[#allocation7 + $0x4a0] sm:$0xff]
          %v2519 = vld [vmem:[#allocation7 + $0x4a8] sm:$0xff]
          %v2520 = vld [vmem:[#allocation7 + $0x4b0] sm:$0xff]
          %v2521 = vld [vmem:[#allocation7 + $0x4b8] sm:$0xff]
          %v2522 = vld [vmem:[#allocation7 + $0x4c0] sm:$0xff]
          %v2523 = vld [vmem:[#allocation7 + $0x4c8] sm:$0xff]
          %v2524 = vld [vmem:[#allocation7 + $0x4d0] sm:$0xff]
          %v2525 = vld [vmem:[#allocation7 + $0x4d8] sm:$0xff]
          %v2526 = vld [vmem:[#allocation7 + $0x4e0] sm:$0xff]
          %v2527 = vld [vmem:[#allocation7 + $0x4e8] sm:$0xff]
          %v2528 = vld [vmem:[#allocation7 + $0x4f0] sm:$0xff]
          %v2529 = vld [vmem:[#allocation7 + $0x4f8] sm:$0xff]
          %v2530 = vld [vmem:[#allocation7 + $0x500] sm:$0xff]
          %v2531 = vld [vmem:[#allocation7 + $0x508] sm:$0xff]
          %v2532 = vld [vmem:[#allocation7 + $0x510] sm:$0xff]
          %v2533 = vld [vmem:[#allocation7 + $0x518] sm:$0xff]
          %v2534 = vld [vmem:[#allocation7 + $0x520] sm:$0xff]
          %v2535 = vld [vmem:[#allocation7 + $0x528] sm:$0xff]
          %v2536 = vld [vmem:[#allocation7 + $0x530] sm:$0xff]
          %v2537 = vld [vmem:[#allocation7 + $0x538] sm:$0xff]
          %v2538 = vld [vmem:[#allocation7 + $0x540] sm:$0xff]
          %v2539 = vld [vmem:[#allocation7 + $0x548] sm:$0xff]
          %v2540 = vld [vmem:[#allocation7 + $0x550] sm:$0xff]
          %v2541 = vld [vmem:[#allocation7 + $0x558] sm:$0xff]
          %v2542 = vld [vmem:[#allocation7 + $0x560] sm:$0xff]
          %v2543 = vld [vmem:[#allocation7 + $0x568] sm:$0xff]
          %v2544 = vld [vmem:[#allocation7 + $0x570] sm:$0xff]
          %v2545 = vld [vmem:[#allocation7 + $0x578] sm:$0xff]
          %v2546 = vld [vmem:[#allocation7 + $0x580] sm:$0xff]
          %v2547 = vld [vmem:[#allocation7 + $0x588] sm:$0xff]
          %v2548 = vld [vmem:[#allocation7 + $0x590] sm:$0xff]
          %v2549 = vld [vmem:[#allocation7 + $0x598] sm:$0xff]
          %v2550 = vld [vmem:[#allocation7 + $0x5a0] sm:$0xff]
          %v2551 = vld [vmem:[#allocation7 + $0x5a8] sm:$0xff]
          %v2552 = vld [vmem:[#allocation7 + $0x5b0] sm:$0xff]
          %v2553 = vld [vmem:[#allocation7 + $0x5b8] sm:$0xff]
          %v2554 = vld [vmem:[#allocation7 + $0x5c0] sm:$0xff]
          %v2555 = vld [vmem:[#allocation7 + $0x5c8] sm:$0xff]
          %v2556 = vld [vmem:[#allocation7 + $0x5d0] sm:$0xff]
          %v2557 = vld [vmem:[#allocation7 + $0x5d8] sm:$0xff]
          %v2558 = vld [vmem:[#allocation7 + $0x5e0] sm:$0xff]
          %v2559 = vld [vmem:[#allocation7 + $0x5e8] sm:$0xff]
          %v2560 = vld [vmem:[#allocation7 + $0x5f0] sm:$0xff]
          %v2561 = vld [vmem:[#allocation7 + $0x5f8] sm:$0xff]
          %v2562 = vld [vmem:[#allocation7 + $0x600] sm:$0xff]
          %v2563 = vld [vmem:[#allocation7 + $0x608] sm:$0xff]
          %v2564 = vld [vmem:[#allocation7 + $0x610] sm:$0xff]
          %v2565 = vld [vmem:[#allocation7 + $0x618] sm:$0xff]
          %v2566 = vld [vmem:[#allocation7 + $0x620] sm:$0xff]
          %v2567 = vld [vmem:[#allocation7 + $0x628] sm:$0xff]
          %v2568 = vld [vmem:[#allocation7 + $0x630] sm:$0xff]
          %v2569 = vld [vmem:[#allocation7 + $0x638] sm:$0xff]
          %v2570 = vld [vmem:[#allocation7 + $0x640] sm:$0xff]
          %v2571 = vld [vmem:[#allocation7 + $0x648] sm:$0xff]
          %v2572 = vld [vmem:[#allocation7 + $0x650] sm:$0xff]
          %v2573 = vld [vmem:[#allocation7 + $0x658] sm:$0xff]
          %v2574 = vld [vmem:[#allocation7 + $0x660] sm:$0xff]
          %v2575 = vld [vmem:[#allocation7 + $0x668] sm:$0xff]
          %v2576 = vld [vmem:[#allocation7 + $0x670] sm:$0xff]
          %v2577 = vld [vmem:[#allocation7 + $0x678] sm:$0xff]
          %v2578 = vld [vmem:[#allocation7 + $0x680] sm:$0xff]
          %v2579 = vld [vmem:[#allocation7 + $0x688] sm:$0xff]
          %v2580 = vld [vmem:[#allocation7 + $0x690] sm:$0xff]
          %v2581 = vld [vmem:[#allocation7 + $0x698] sm:$0xff]
          %v2582 = vld [vmem:[#allocation7 + $0x6a0] sm:$0xff]
          %v2583 = vld [vmem:[#allocation7 + $0x6a8] sm:$0xff]
          %v2584 = vld [vmem:[#allocation7 + $0x6b0] sm:$0xff]
          %v2585 = vld [vmem:[#allocation7 + $0x6b8] sm:$0xff]
          %v2586 = vld [vmem:[#allocation7 + $0x6c0] sm:$0xff]
          %v2587 = vld [vmem:[#allocation7 + $0x6c8] sm:$0xff]
          %v2588 = vld [vmem:[#allocation7 + $0x6d0] sm:$0xff]
          %v2589 = vld [vmem:[#allocation7 + $0x6d8] sm:$0xff]
          %v2590 = vld [vmem:[#allocation7 + $0x6e0] sm:$0xff]
          %v2591 = vld [vmem:[#allocation7 + $0x6e8] sm:$0xff]
          %v2592 = vld [vmem:[#allocation7 + $0x6f0] sm:$0xff]
          %v2593 = vld [vmem:[#allocation7 + $0x6f8] sm:$0xff]
          %v2594 = vld [vmem:[#allocation7 + $0x700] sm:$0xff]
          %v2595 = vld [vmem:[#allocation7 + $0x708] sm:$0xff]
          %v2596 = vld [vmem:[#allocation7 + $0x710] sm:$0xff]
          %v2597 = vld [vmem:[#allocation7 + $0x718] sm:$0xff]
          %v2598 = vld [vmem:[#allocation7 + $0x720] sm:$0xff]
          %v2599 = vld [vmem:[#allocation7 + $0x728] sm:$0xff]
          %v2600 = vld [vmem:[#allocation7 + $0x730] sm:$0xff]
          %v2601 = vld [vmem:[#allocation7 + $0x738] sm:$0xff]
          %v2602 = vld [vmem:[#allocation7 + $0x740] sm:$0xff]
          %v2603 = vld [vmem:[#allocation7 + $0x748] sm:$0xff]
          %v2604 = vld [vmem:[#allocation7 + $0x750] sm:$0xff]
          %v2605 = vld [vmem:[#allocation7 + $0x758] sm:$0xff]
          %v2606 = vld [vmem:[#allocation7 + $0x760] sm:$0xff]
          %v2607 = vld [vmem:[#allocation7 + $0x768] sm:$0xff]
          %v2608 = vld [vmem:[#allocation7 + $0x770] sm:$0xff]
          %v2609 = vld [vmem:[#allocation7 + $0x778] sm:$0xff]
          %v2610 = vld [vmem:[#allocation7 + $0x780] sm:$0xff]
          %v2611 = vld [vmem:[#allocation7 + $0x788] sm:$0xff]
          %v2612 = vld [vmem:[#allocation7 + $0x790] sm:$0xff]
          %v2613 = vld [vmem:[#allocation7 + $0x798] sm:$0xff]
          %v2614 = vld [vmem:[#allocation7 + $0x7a0] sm:$0xff]
          %v2615 = vld [vmem:[#allocation7 + $0x7a8] sm:$0xff]
          %v2616 = vld [vmem:[#allocation7 + $0x7b0] sm:$0xff]
          %v2617 = vld [vmem:[#allocation7 + $0x7b8] sm:$0xff]
          %v2618 = vld [vmem:[#allocation7 + $0x7c0] sm:$0xff]
          %v2619 = vld [vmem:[#allocation7 + $0x7c8] sm:$0xff]
          %v2620 = vld [vmem:[#allocation7 + $0x7d0] sm:$0xff]
          %v2621 = vld [vmem:[#allocation7 + $0x7d8] sm:$0xff]
          %v2622 = vld [vmem:[#allocation7 + $0x7e0] sm:$0xff]
          %v2623 = vld [vmem:[#allocation7 + $0x7e8] sm:$0xff]
          %v2624 = vld [vmem:[#allocation7 + $0x7f0] sm:$0xff]
          %v2625 = vld [vmem:[#allocation7 + $0x7f8] sm:$0xff]
          %v2626 = vld [vmem:[#allocation8] sm:$0xf]
          %v2628 = vlaneseq
          %v2629 = vshrl.u32 %v2628, 7
          %v2630 = vsub.s32 0, %v2629
          %v2631 = vrot.slane %v2626, %v2630
          %v2632 = vlaneseq
          %v2633 = vshrl.u32 %v2632, 7
          %v2634 = vsub.s32 1, %v2633
          %v2635 = vrot.slane %v2626, %v2634
          %v2636 = vlaneseq
          %v2637 = vshrl.u32 %v2636, 7
          %v2638 = vsub.s32 2, %v2637
          %v2639 = vrot.slane %v2626, %v2638
          %v2640 = vlaneseq
          %v2641 = vshrl.u32 %v2640, 7
          %v2642 = vsub.s32 3, %v2641
          %v2643 = vrot.slane %v2626, %v2642
          %v2904 = vunpack.c.l.b16 %v2370
          %v2905 = vunpack.c.h.b16 %v2370
          %v2906 = vunpack.c.l.b16 %v2371
          %v2907 = vunpack.c.h.b16 %v2371
          %v2908 = vunpack.c.l.b16 %v2372
          %v2909 = vunpack.c.h.b16 %v2372
          %v2910 = vunpack.c.l.b16 %v2373
          %v2911 = vunpack.c.h.b16 %v2373
          %v2912 = vunpack.c.l.b16 %v2374
          %v2913 = vunpack.c.h.b16 %v2374
          %v2914 = vunpack.c.l.b16 %v2375
          %v2915 = vunpack.c.h.b16 %v2375
          %v2916 = vunpack.c.l.b16 %v2376
          %v2917 = vunpack.c.h.b16 %v2376
          %v2918 = vunpack.c.l.b16 %v2377
          %v2919 = vunpack.c.h.b16 %v2377
          %v2920 = vunpack.c.l.b16 %v2378
          %v2921 = vunpack.c.h.b16 %v2378
          %v2922 = vunpack.c.l.b16 %v2379
          %v2923 = vunpack.c.h.b16 %v2379
          %v2924 = vunpack.c.l.b16 %v2380
          %v2925 = vunpack.c.h.b16 %v2380
          %v2926 = vunpack.c.l.b16 %v2381
          %v2927 = vunpack.c.h.b16 %v2381
          %v2928 = vunpack.c.l.b16 %v2382
          %v2929 = vunpack.c.h.b16 %v2382
          %v2930 = vunpack.c.l.b16 %v2383
          %v2931 = vunpack.c.h.b16 %v2383
          %v2932 = vunpack.c.l.b16 %v2384
          %v2933 = vunpack.c.h.b16 %v2384
          %v2934 = vunpack.c.l.b16 %v2385
          %v2935 = vunpack.c.h.b16 %v2385
          %v2936 = vunpack.c.l.b16 %v2386
          %v2937 = vunpack.c.h.b16 %v2386
          %v2938 = vunpack.c.l.b16 %v2387
          %v2939 = vunpack.c.h.b16 %v2387
          %v2940 = vunpack.c.l.b16 %v2388
          %v2941 = vunpack.c.h.b16 %v2388
          %v2942 = vunpack.c.l.b16 %v2389
          %v2943 = vunpack.c.h.b16 %v2389
          %v2944 = vunpack.c.l.b16 %v2390
          %v2945 = vunpack.c.h.b16 %v2390
          %v2946 = vunpack.c.l.b16 %v2391
          %v2947 = vunpack.c.h.b16 %v2391
          %v2948 = vunpack.c.l.b16 %v2392
          %v2949 = vunpack.c.h.b16 %v2392
          %v2950 = vunpack.c.l.b16 %v2393
          %v2951 = vunpack.c.h.b16 %v2393
          %v2952 = vunpack.c.l.b16 %v2394
          %v2953 = vunpack.c.h.b16 %v2394
          %v2954 = vunpack.c.l.b16 %v2395
          %v2955 = vunpack.c.h.b16 %v2395
          %v2956 = vunpack.c.l.b16 %v2396
          %v2957 = vunpack.c.h.b16 %v2396
          %v2958 = vunpack.c.l.b16 %v2397
          %v2959 = vunpack.c.h.b16 %v2397
          %v2960 = vunpack.c.l.b16 %v2398
          %v2961 = vunpack.c.h.b16 %v2398
          %v2962 = vunpack.c.l.b16 %v2399
          %v2963 = vunpack.c.h.b16 %v2399
          %v2964 = vunpack.c.l.b16 %v2400
          %v2965 = vunpack.c.h.b16 %v2400
          %v2966 = vunpack.c.l.b16 %v2401
          %v2967 = vunpack.c.h.b16 %v2401
          %v2968 = vunpack.c.l.b16 %v2402
          %v2969 = vunpack.c.h.b16 %v2402
          %v2970 = vunpack.c.l.b16 %v2403
          %v2971 = vunpack.c.h.b16 %v2403
          %v2972 = vunpack.c.l.b16 %v2404
          %v2973 = vunpack.c.h.b16 %v2404
          %v2974 = vunpack.c.l.b16 %v2405
          %v2975 = vunpack.c.h.b16 %v2405
          %v2976 = vunpack.c.l.b16 %v2406
          %v2977 = vunpack.c.h.b16 %v2406
          %v2978 = vunpack.c.l.b16 %v2407
          %v2979 = vunpack.c.h.b16 %v2407
          %v2980 = vunpack.c.l.b16 %v2408
          %v2981 = vunpack.c.h.b16 %v2408
          %v2982 = vunpack.c.l.b16 %v2409
          %v2983 = vunpack.c.h.b16 %v2409
          %v2984 = vunpack.c.l.b16 %v2410
          %v2985 = vunpack.c.h.b16 %v2410
          %v2986 = vunpack.c.l.b16 %v2411
          %v2987 = vunpack.c.h.b16 %v2411
          %v2988 = vunpack.c.l.b16 %v2412
          %v2989 = vunpack.c.h.b16 %v2412
          %v2990 = vunpack.c.l.b16 %v2413
          %v2991 = vunpack.c.h.b16 %v2413
          %v2992 = vunpack.c.l.b16 %v2414
          %v2993 = vunpack.c.h.b16 %v2414
          %v2994 = vunpack.c.l.b16 %v2415
          %v2995 = vunpack.c.h.b16 %v2415
          %v2996 = vunpack.c.l.b16 %v2416
          %v2997 = vunpack.c.h.b16 %v2416
          %v2998 = vunpack.c.l.b16 %v2417
          %v2999 = vunpack.c.h.b16 %v2417
          %v3000 = vunpack.c.l.b16 %v2418
          %v3001 = vunpack.c.h.b16 %v2418
          %v3002 = vunpack.c.l.b16 %v2419
          %v3003 = vunpack.c.h.b16 %v2419
          %v3004 = vunpack.c.l.b16 %v2420
          %v3005 = vunpack.c.h.b16 %v2420
          %v3006 = vunpack.c.l.b16 %v2421
          %v3007 = vunpack.c.h.b16 %v2421
          %v3008 = vunpack.c.l.b16 %v2422
          %v3009 = vunpack.c.h.b16 %v2422
          %v3010 = vunpack.c.l.b16 %v2423
          %v3011 = vunpack.c.h.b16 %v2423
          %v3012 = vunpack.c.l.b16 %v2424
          %v3013 = vunpack.c.h.b16 %v2424
          %v3014 = vunpack.c.l.b16 %v2425
          %v3015 = vunpack.c.h.b16 %v2425
          %v3016 = vunpack.c.l.b16 %v2426
          %v3017 = vunpack.c.h.b16 %v2426
          %v3018 = vunpack.c.l.b16 %v2427
          %v3019 = vunpack.c.h.b16 %v2427
          %v3020 = vunpack.c.l.b16 %v2428
          %v3021 = vunpack.c.h.b16 %v2428
          %v3022 = vunpack.c.l.b16 %v2429
          %v3023 = vunpack.c.h.b16 %v2429
          %v3024 = vunpack.c.l.b16 %v2430
          %v3025 = vunpack.c.h.b16 %v2430
          %v3026 = vunpack.c.l.b16 %v2431
          %v3027 = vunpack.c.h.b16 %v2431
          %v3028 = vunpack.c.l.b16 %v2432
          %v3029 = vunpack.c.h.b16 %v2432
          %v3030 = vunpack.c.l.b16 %v2433
          %v3031 = vunpack.c.h.b16 %v2433
          %v3032 = vunpack.c.l.b16 %v2434
          %v3033 = vunpack.c.h.b16 %v2434
          %v3034 = vunpack.c.l.b16 %v2435
          %v3035 = vunpack.c.h.b16 %v2435
          %v3036 = vunpack.c.l.b16 %v2436
          %v3037 = vunpack.c.h.b16 %v2436
          %v3038 = vunpack.c.l.b16 %v2437
          %v3039 = vunpack.c.h.b16 %v2437
          %v3040 = vunpack.c.l.b16 %v2438
          %v3041 = vunpack.c.h.b16 %v2438
          %v3042 = vunpack.c.l.b16 %v2439
          %v3043 = vunpack.c.h.b16 %v2439
          %v3044 = vunpack.c.l.b16 %v2440
          %v3045 = vunpack.c.h.b16 %v2440
          %v3046 = vunpack.c.l.b16 %v2441
          %v3047 = vunpack.c.h.b16 %v2441
          %v3048 = vunpack.c.l.b16 %v2442
          %v3049 = vunpack.c.h.b16 %v2442
          %v3050 = vunpack.c.l.b16 %v2443
          %v3051 = vunpack.c.h.b16 %v2443
          %v3052 = vunpack.c.l.b16 %v2444
          %v3053 = vunpack.c.h.b16 %v2444
          %v3054 = vunpack.c.l.b16 %v2445
          %v3055 = vunpack.c.h.b16 %v2445
          %v3056 = vunpack.c.l.b16 %v2446
          %v3057 = vunpack.c.h.b16 %v2446
          %v3058 = vunpack.c.l.b16 %v2447
          %v3059 = vunpack.c.h.b16 %v2447
          %v3060 = vunpack.c.l.b16 %v2448
          %v3061 = vunpack.c.h.b16 %v2448
          %v3062 = vunpack.c.l.b16 %v2449
          %v3063 = vunpack.c.h.b16 %v2449
          %v3064 = vunpack.c.l.b16 %v2450
          %v3065 = vunpack.c.h.b16 %v2450
          %v3066 = vunpack.c.l.b16 %v2451
          %v3067 = vunpack.c.h.b16 %v2451
          %v3068 = vunpack.c.l.b16 %v2452
          %v3069 = vunpack.c.h.b16 %v2452
          %v3070 = vunpack.c.l.b16 %v2453
          %v3071 = vunpack.c.h.b16 %v2453
          %v3072 = vunpack.c.l.b16 %v2454
          %v3073 = vunpack.c.h.b16 %v2454
          %v3074 = vunpack.c.l.b16 %v2455
          %v3075 = vunpack.c.h.b16 %v2455
          %v3076 = vunpack.c.l.b16 %v2456
          %v3077 = vunpack.c.h.b16 %v2456
          %v3078 = vunpack.c.l.b16 %v2457
          %v3079 = vunpack.c.h.b16 %v2457
          %v3080 = vunpack.c.l.b16 %v2458
          %v3081 = vunpack.c.h.b16 %v2458
          %v3082 = vunpack.c.l.b16 %v2459
          %v3083 = vunpack.c.h.b16 %v2459
          %v3084 = vunpack.c.l.b16 %v2460
          %v3085 = vunpack.c.h.b16 %v2460
          %v3086 = vunpack.c.l.b16 %v2461
          %v3087 = vunpack.c.h.b16 %v2461
          %v3088 = vunpack.c.l.b16 %v2462
          %v3089 = vunpack.c.h.b16 %v2462
          %v3090 = vunpack.c.l.b16 %v2463
          %v3091 = vunpack.c.h.b16 %v2463
          %v3092 = vunpack.c.l.b16 %v2464
          %v3093 = vunpack.c.h.b16 %v2464
          %v3094 = vunpack.c.l.b16 %v2465
          %v3095 = vunpack.c.h.b16 %v2465
          %v3096 = vunpack.c.l.b16 %v2466
          %v3097 = vunpack.c.h.b16 %v2466
          %v3098 = vunpack.c.l.b16 %v2467
          %v3099 = vunpack.c.h.b16 %v2467
          %v3100 = vunpack.c.l.b16 %v2468
          %v3101 = vunpack.c.h.b16 %v2468
          %v3102 = vunpack.c.l.b16 %v2469
          %v3103 = vunpack.c.h.b16 %v2469
          %v3104 = vunpack.c.l.b16 %v2470
          %v3105 = vunpack.c.h.b16 %v2470
          %v3106 = vunpack.c.l.b16 %v2471
          %v3107 = vunpack.c.h.b16 %v2471
          %v3108 = vunpack.c.l.b16 %v2472
          %v3109 = vunpack.c.h.b16 %v2472
          %v3110 = vunpack.c.l.b16 %v2473
          %v3111 = vunpack.c.h.b16 %v2473
          %v3112 = vunpack.c.l.b16 %v2474
          %v3113 = vunpack.c.h.b16 %v2474
          %v3114 = vunpack.c.l.b16 %v2475
          %v3115 = vunpack.c.h.b16 %v2475
          %v3116 = vunpack.c.l.b16 %v2476
          %v3117 = vunpack.c.h.b16 %v2476
          %v3118 = vunpack.c.l.b16 %v2477
          %v3119 = vunpack.c.h.b16 %v2477
          %v3120 = vunpack.c.l.b16 %v2478
          %v3121 = vunpack.c.h.b16 %v2478
          %v3122 = vunpack.c.l.b16 %v2479
          %v3123 = vunpack.c.h.b16 %v2479
          %v3124 = vunpack.c.l.b16 %v2480
          %v3125 = vunpack.c.h.b16 %v2480
          %v3126 = vunpack.c.l.b16 %v2481
          %v3127 = vunpack.c.h.b16 %v2481
          %v3128 = vunpack.c.l.b16 %v2482
          %v3129 = vunpack.c.h.b16 %v2482
          %v3130 = vunpack.c.l.b16 %v2483
          %v3131 = vunpack.c.h.b16 %v2483
          %v3132 = vunpack.c.l.b16 %v2484
          %v3133 = vunpack.c.h.b16 %v2484
          %v3134 = vunpack.c.l.b16 %v2485
          %v3135 = vunpack.c.h.b16 %v2485
          %v3136 = vunpack.c.l.b16 %v2486
          %v3137 = vunpack.c.h.b16 %v2486
          %v3138 = vunpack.c.l.b16 %v2487
          %v3139 = vunpack.c.h.b16 %v2487
          %v3140 = vunpack.c.l.b16 %v2488
          %v3141 = vunpack.c.h.b16 %v2488
          %v3142 = vunpack.c.l.b16 %v2489
          %v3143 = vunpack.c.h.b16 %v2489
          %v3144 = vunpack.c.l.b16 %v2490
          %v3145 = vunpack.c.h.b16 %v2490
          %v3146 = vunpack.c.l.b16 %v2491
          %v3147 = vunpack.c.h.b16 %v2491
          %v3148 = vunpack.c.l.b16 %v2492
          %v3149 = vunpack.c.h.b16 %v2492
          %v3150 = vunpack.c.l.b16 %v2493
          %v3151 = vunpack.c.h.b16 %v2493
          %v3152 = vunpack.c.l.b16 %v2494
          %v3153 = vunpack.c.h.b16 %v2494
          %v3154 = vunpack.c.l.b16 %v2495
          %v3155 = vunpack.c.h.b16 %v2495
          %v3156 = vunpack.c.l.b16 %v2496
          %v3157 = vunpack.c.h.b16 %v2496
          %v3158 = vunpack.c.l.b16 %v2497
          %v3159 = vunpack.c.h.b16 %v2497
          %v3160 = vunpack.c.l.b16 %v2498
          %v3161 = vunpack.c.h.b16 %v2498
          %v3162 = vunpack.c.l.b16 %v2499
          %v3163 = vunpack.c.h.b16 %v2499
          %v3164 = vunpack.c.l.b16 %v2500
          %v3165 = vunpack.c.h.b16 %v2500
          %v3166 = vunpack.c.l.b16 %v2501
          %v3167 = vunpack.c.h.b16 %v2501
          %v3168 = vunpack.c.l.b16 %v2502
          %v3169 = vunpack.c.h.b16 %v2502
          %v3170 = vunpack.c.l.b16 %v2503
          %v3171 = vunpack.c.h.b16 %v2503
          %v3172 = vunpack.c.l.b16 %v2504
          %v3173 = vunpack.c.h.b16 %v2504
          %v3174 = vunpack.c.l.b16 %v2505
          %v3175 = vunpack.c.h.b16 %v2505
          %v3176 = vunpack.c.l.b16 %v2506
          %v3177 = vunpack.c.h.b16 %v2506
          %v3178 = vunpack.c.l.b16 %v2507
          %v3179 = vunpack.c.h.b16 %v2507
          %v3180 = vunpack.c.l.b16 %v2508
          %v3181 = vunpack.c.h.b16 %v2508
          %v3182 = vunpack.c.l.b16 %v2509
          %v3183 = vunpack.c.h.b16 %v2509
          %v3184 = vunpack.c.l.b16 %v2510
          %v3185 = vunpack.c.h.b16 %v2510
          %v3186 = vunpack.c.l.b16 %v2511
          %v3187 = vunpack.c.h.b16 %v2511
          %v3188 = vunpack.c.l.b16 %v2512
          %v3189 = vunpack.c.h.b16 %v2512
          %v3190 = vunpack.c.l.b16 %v2513
          %v3191 = vunpack.c.h.b16 %v2513
          %v3192 = vunpack.c.l.b16 %v2514
          %v3193 = vunpack.c.h.b16 %v2514
          %v3194 = vunpack.c.l.b16 %v2515
          %v3195 = vunpack.c.h.b16 %v2515
          %v3196 = vunpack.c.l.b16 %v2516
          %v3197 = vunpack.c.h.b16 %v2516
          %v3198 = vunpack.c.l.b16 %v2517
          %v3199 = vunpack.c.h.b16 %v2517
          %v3200 = vunpack.c.l.b16 %v2518
          %v3201 = vunpack.c.h.b16 %v2518
          %v3202 = vunpack.c.l.b16 %v2519
          %v3203 = vunpack.c.h.b16 %v2519
          %v3204 = vunpack.c.l.b16 %v2520
          %v3205 = vunpack.c.h.b16 %v2520
          %v3206 = vunpack.c.l.b16 %v2521
          %v3207 = vunpack.c.h.b16 %v2521
          %v3208 = vunpack.c.l.b16 %v2522
          %v3209 = vunpack.c.h.b16 %v2522
          %v3210 = vunpack.c.l.b16 %v2523
          %v3211 = vunpack.c.h.b16 %v2523
          %v3212 = vunpack.c.l.b16 %v2524
          %v3213 = vunpack.c.h.b16 %v2524
          %v3214 = vunpack.c.l.b16 %v2525
          %v3215 = vunpack.c.h.b16 %v2525
          %v3216 = vunpack.c.l.b16 %v2526
          %v3217 = vunpack.c.h.b16 %v2526
          %v3218 = vunpack.c.l.b16 %v2527
          %v3219 = vunpack.c.h.b16 %v2527
          %v3220 = vunpack.c.l.b16 %v2528
          %v3221 = vunpack.c.h.b16 %v2528
          %v3222 = vunpack.c.l.b16 %v2529
          %v3223 = vunpack.c.h.b16 %v2529
          %v3224 = vunpack.c.l.b16 %v2530
          %v3225 = vunpack.c.h.b16 %v2530
          %v3226 = vunpack.c.l.b16 %v2531
          %v3227 = vunpack.c.h.b16 %v2531
          %v3228 = vunpack.c.l.b16 %v2532
          %v3229 = vunpack.c.h.b16 %v2532
          %v3230 = vunpack.c.l.b16 %v2533
          %v3231 = vunpack.c.h.b16 %v2533
          %v3232 = vunpack.c.l.b16 %v2534
          %v3233 = vunpack.c.h.b16 %v2534
          %v3234 = vunpack.c.l.b16 %v2535
          %v3235 = vunpack.c.h.b16 %v2535
          %v3236 = vunpack.c.l.b16 %v2536
          %v3237 = vunpack.c.h.b16 %v2536
          %v3238 = vunpack.c.l.b16 %v2537
          %v3239 = vunpack.c.h.b16 %v2537
          %v3240 = vunpack.c.l.b16 %v2538
          %v3241 = vunpack.c.h.b16 %v2538
          %v3242 = vunpack.c.l.b16 %v2539
          %v3243 = vunpack.c.h.b16 %v2539
          %v3244 = vunpack.c.l.b16 %v2540
          %v3245 = vunpack.c.h.b16 %v2540
          %v3246 = vunpack.c.l.b16 %v2541
          %v3247 = vunpack.c.h.b16 %v2541
          %v3248 = vunpack.c.l.b16 %v2542
          %v3249 = vunpack.c.h.b16 %v2542
          %v3250 = vunpack.c.l.b16 %v2543
          %v3251 = vunpack.c.h.b16 %v2543
          %v3252 = vunpack.c.l.b16 %v2544
          %v3253 = vunpack.c.h.b16 %v2544
          %v3254 = vunpack.c.l.b16 %v2545
          %v3255 = vunpack.c.h.b16 %v2545
          %v3256 = vunpack.c.l.b16 %v2546
          %v3257 = vunpack.c.h.b16 %v2546
          %v3258 = vunpack.c.l.b16 %v2547
          %v3259 = vunpack.c.h.b16 %v2547
          %v3260 = vunpack.c.l.b16 %v2548
          %v3261 = vunpack.c.h.b16 %v2548
          %v3262 = vunpack.c.l.b16 %v2549
          %v3263 = vunpack.c.h.b16 %v2549
          %v3264 = vunpack.c.l.b16 %v2550
          %v3265 = vunpack.c.h.b16 %v2550
          %v3266 = vunpack.c.l.b16 %v2551
          %v3267 = vunpack.c.h.b16 %v2551
          %v3268 = vunpack.c.l.b16 %v2552
          %v3269 = vunpack.c.h.b16 %v2552
          %v3270 = vunpack.c.l.b16 %v2553
          %v3271 = vunpack.c.h.b16 %v2553
          %v3272 = vunpack.c.l.b16 %v2554
          %v3273 = vunpack.c.h.b16 %v2554
          %v3274 = vunpack.c.l.b16 %v2555
          %v3275 = vunpack.c.h.b16 %v2555
          %v3276 = vunpack.c.l.b16 %v2556
          %v3277 = vunpack.c.h.b16 %v2556
          %v3278 = vunpack.c.l.b16 %v2557
          %v3279 = vunpack.c.h.b16 %v2557
          %v3280 = vunpack.c.l.b16 %v2558
          %v3281 = vunpack.c.h.b16 %v2558
          %v3282 = vunpack.c.l.b16 %v2559
          %v3283 = vunpack.c.h.b16 %v2559
          %v3284 = vunpack.c.l.b16 %v2560
          %v3285 = vunpack.c.h.b16 %v2560
          %v3286 = vunpack.c.l.b16 %v2561
          %v3287 = vunpack.c.h.b16 %v2561
          %v3288 = vunpack.c.l.b16 %v2562
          %v3289 = vunpack.c.h.b16 %v2562
          %v3290 = vunpack.c.l.b16 %v2563
          %v3291 = vunpack.c.h.b16 %v2563
          %v3292 = vunpack.c.l.b16 %v2564
          %v3293 = vunpack.c.h.b16 %v2564
          %v3294 = vunpack.c.l.b16 %v2565
          %v3295 = vunpack.c.h.b16 %v2565
          %v3296 = vunpack.c.l.b16 %v2566
          %v3297 = vunpack.c.h.b16 %v2566
          %v3298 = vunpack.c.l.b16 %v2567
          %v3299 = vunpack.c.h.b16 %v2567
          %v3300 = vunpack.c.l.b16 %v2568
          %v3301 = vunpack.c.h.b16 %v2568
          %v3302 = vunpack.c.l.b16 %v2569
          %v3303 = vunpack.c.h.b16 %v2569
          %v3304 = vunpack.c.l.b16 %v2570
          %v3305 = vunpack.c.h.b16 %v2570
          %v3306 = vunpack.c.l.b16 %v2571
          %v3307 = vunpack.c.h.b16 %v2571
          %v3308 = vunpack.c.l.b16 %v2572
          %v3309 = vunpack.c.h.b16 %v2572
          %v3310 = vunpack.c.l.b16 %v2573
          %v3311 = vunpack.c.h.b16 %v2573
          %v3312 = vunpack.c.l.b16 %v2574
          %v3313 = vunpack.c.h.b16 %v2574
          %v3314 = vunpack.c.l.b16 %v2575
          %v3315 = vunpack.c.h.b16 %v2575
          %v3316 = vunpack.c.l.b16 %v2576
          %v3317 = vunpack.c.h.b16 %v2576
          %v3318 = vunpack.c.l.b16 %v2577
          %v3319 = vunpack.c.h.b16 %v2577
          %v3320 = vunpack.c.l.b16 %v2578
          %v3321 = vunpack.c.h.b16 %v2578
          %v3322 = vunpack.c.l.b16 %v2579
          %v3323 = vunpack.c.h.b16 %v2579
          %v3324 = vunpack.c.l.b16 %v2580
          %v3325 = vunpack.c.h.b16 %v2580
          %v3326 = vunpack.c.l.b16 %v2581
          %v3327 = vunpack.c.h.b16 %v2581
          %v3328 = vunpack.c.l.b16 %v2582
          %v3329 = vunpack.c.h.b16 %v2582
          %v3330 = vunpack.c.l.b16 %v2583
          %v3331 = vunpack.c.h.b16 %v2583
          %v3332 = vunpack.c.l.b16 %v2584
          %v3333 = vunpack.c.h.b16 %v2584
          %v3334 = vunpack.c.l.b16 %v2585
          %v3335 = vunpack.c.h.b16 %v2585
          %v3336 = vunpack.c.l.b16 %v2586
          %v3337 = vunpack.c.h.b16 %v2586
          %v3338 = vunpack.c.l.b16 %v2587
          %v3339 = vunpack.c.h.b16 %v2587
          %v3340 = vunpack.c.l.b16 %v2588
          %v3341 = vunpack.c.h.b16 %v2588
          %v3342 = vunpack.c.l.b16 %v2589
          %v3343 = vunpack.c.h.b16 %v2589
          %v3344 = vunpack.c.l.b16 %v2590
          %v3345 = vunpack.c.h.b16 %v2590
          %v3346 = vunpack.c.l.b16 %v2591
          %v3347 = vunpack.c.h.b16 %v2591
          %v3348 = vunpack.c.l.b16 %v2592
          %v3349 = vunpack.c.h.b16 %v2592
          %v3350 = vunpack.c.l.b16 %v2593
          %v3351 = vunpack.c.h.b16 %v2593
          %v3352 = vunpack.c.l.b16 %v2594
          %v3353 = vunpack.c.h.b16 %v2594
          %v3354 = vunpack.c.l.b16 %v2595
          %v3355 = vunpack.c.h.b16 %v2595
          %v3356 = vunpack.c.l.b16 %v2596
          %v3357 = vunpack.c.h.b16 %v2596
          %v3358 = vunpack.c.l.b16 %v2597
          %v3359 = vunpack.c.h.b16 %v2597
          %v3360 = vunpack.c.l.b16 %v2598
          %v3361 = vunpack.c.h.b16 %v2598
          %v3362 = vunpack.c.l.b16 %v2599
          %v3363 = vunpack.c.h.b16 %v2599
          %v3364 = vunpack.c.l.b16 %v2600
          %v3365 = vunpack.c.h.b16 %v2600
          %v3366 = vunpack.c.l.b16 %v2601
          %v3367 = vunpack.c.h.b16 %v2601
          %v3368 = vunpack.c.l.b16 %v2602
          %v3369 = vunpack.c.h.b16 %v2602
          %v3370 = vunpack.c.l.b16 %v2603
          %v3371 = vunpack.c.h.b16 %v2603
          %v3372 = vunpack.c.l.b16 %v2604
          %v3373 = vunpack.c.h.b16 %v2604
          %v3374 = vunpack.c.l.b16 %v2605
          %v3375 = vunpack.c.h.b16 %v2605
          %v3376 = vunpack.c.l.b16 %v2606
          %v3377 = vunpack.c.h.b16 %v2606
          %v3378 = vunpack.c.l.b16 %v2607
          %v3379 = vunpack.c.h.b16 %v2607
          %v3380 = vunpack.c.l.b16 %v2608
          %v3381 = vunpack.c.h.b16 %v2608
          %v3382 = vunpack.c.l.b16 %v2609
          %v3383 = vunpack.c.h.b16 %v2609
          %v3384 = vunpack.c.l.b16 %v2610
          %v3385 = vunpack.c.h.b16 %v2610
          %v3386 = vunpack.c.l.b16 %v2611
          %v3387 = vunpack.c.h.b16 %v2611
          %v3388 = vunpack.c.l.b16 %v2612
          %v3389 = vunpack.c.h.b16 %v2612
          %v3390 = vunpack.c.l.b16 %v2613
          %v3391 = vunpack.c.h.b16 %v2613
          %v3392 = vunpack.c.l.b16 %v2614
          %v3393 = vunpack.c.h.b16 %v2614
          %v3394 = vunpack.c.l.b16 %v2615
          %v3395 = vunpack.c.h.b16 %v2615
          %v3396 = vunpack.c.l.b16 %v2616
          %v3397 = vunpack.c.h.b16 %v2616
          %v3398 = vunpack.c.l.b16 %v2617
          %v3399 = vunpack.c.h.b16 %v2617
          %v3400 = vunpack.c.l.b16 %v2618
          %v3401 = vunpack.c.h.b16 %v2618
          %v3402 = vunpack.c.l.b16 %v2619
          %v3403 = vunpack.c.h.b16 %v2619
          %v3404 = vunpack.c.l.b16 %v2620
          %v3405 = vunpack.c.h.b16 %v2620
          %v3406 = vunpack.c.l.b16 %v2621
          %v3407 = vunpack.c.h.b16 %v2621
          %v3408 = vunpack.c.l.b16 %v2622
          %v3409 = vunpack.c.h.b16 %v2622
          %v3410 = vunpack.c.l.b16 %v2623
          %v3411 = vunpack.c.h.b16 %v2623
          %v3412 = vunpack.c.l.b16 %v2624
          %v3413 = vunpack.c.h.b16 %v2624
          %v3414 = vunpack.c.l.b16 %v2625
          %v3415 = vunpack.c.h.b16 %v2625
          %v3416 = vpack.c.b16 %v2908, %v2904
          %v3417 = vpack.c.b16 %v2909, %v2905
          %v3418 = vpack.c.b16 %v2910, %v2906
          %v3419 = vpack.c.b16 %v2911, %v2907
          %v3420 = vpack.c.b16 %v2916, %v2912
          %v3421 = vpack.c.b16 %v2917, %v2913
          %v3422 = vpack.c.b16 %v2918, %v2914
          %v3423 = vpack.c.b16 %v2919, %v2915
          %v3424 = vpack.c.b16 %v2924, %v2920
          %v3425 = vpack.c.b16 %v2925, %v2921
          %v3426 = vpack.c.b16 %v2926, %v2922
          %v3427 = vpack.c.b16 %v2927, %v2923
          %v3428 = vpack.c.b16 %v2932, %v2928
          %v3429 = vpack.c.b16 %v2933, %v2929
          %v3430 = vpack.c.b16 %v2934, %v2930
          %v3431 = vpack.c.b16 %v2935, %v2931
          %v3432 = vpack.c.b16 %v2940, %v2936
          %v3433 = vpack.c.b16 %v2941, %v2937
          %v3434 = vpack.c.b16 %v2942, %v2938
          %v3435 = vpack.c.b16 %v2943, %v2939
          %v3436 = vpack.c.b16 %v2948, %v2944
          %v3437 = vpack.c.b16 %v2949, %v2945
          %v3438 = vpack.c.b16 %v2950, %v2946
          %v3439 = vpack.c.b16 %v2951, %v2947
          %v3440 = vpack.c.b16 %v2956, %v2952
          %v3441 = vpack.c.b16 %v2957, %v2953
          %v3442 = vpack.c.b16 %v2958, %v2954
          %v3443 = vpack.c.b16 %v2959, %v2955
          %v3444 = vpack.c.b16 %v2964, %v2960
          %v3445 = vpack.c.b16 %v2965, %v2961
          %v3446 = vpack.c.b16 %v2966, %v2962
          %v3447 = vpack.c.b16 %v2967, %v2963
          %v3448 = vpack.c.b16 %v2972, %v2968
          %v3449 = vpack.c.b16 %v2973, %v2969
          %v3450 = vpack.c.b16 %v2974, %v2970
          %v3451 = vpack.c.b16 %v2975, %v2971
          %v3452 = vpack.c.b16 %v2980, %v2976
          %v3453 = vpack.c.b16 %v2981, %v2977
          %v3454 = vpack.c.b16 %v2982, %v2978
          %v3455 = vpack.c.b16 %v2983, %v2979
          %v3456 = vpack.c.b16 %v2988, %v2984
          %v3457 = vpack.c.b16 %v2989, %v2985
          %v3458 = vpack.c.b16 %v2990, %v2986
          %v3459 = vpack.c.b16 %v2991, %v2987
          %v3460 = vpack.c.b16 %v2996, %v2992
          %v3461 = vpack.c.b16 %v2997, %v2993
          %v3462 = vpack.c.b16 %v2998, %v2994
          %v3463 = vpack.c.b16 %v2999, %v2995
          %v3464 = vpack.c.b16 %v3004, %v3000
          %v3465 = vpack.c.b16 %v3005, %v3001
          %v3466 = vpack.c.b16 %v3006, %v3002
          %v3467 = vpack.c.b16 %v3007, %v3003
          %v3468 = vpack.c.b16 %v3012, %v3008
          %v3469 = vpack.c.b16 %v3013, %v3009
          %v3470 = vpack.c.b16 %v3014, %v3010
          %v3471 = vpack.c.b16 %v3015, %v3011
          %v3472 = vpack.c.b16 %v3020, %v3016
          %v3473 = vpack.c.b16 %v3021, %v3017
          %v3474 = vpack.c.b16 %v3022, %v3018
          %v3475 = vpack.c.b16 %v3023, %v3019
          %v3476 = vpack.c.b16 %v3028, %v3024
          %v3477 = vpack.c.b16 %v3029, %v3025
          %v3478 = vpack.c.b16 %v3030, %v3026
          %v3479 = vpack.c.b16 %v3031, %v3027
          %v3480 = vpack.c.b16 %v3036, %v3032
          %v3481 = vpack.c.b16 %v3037, %v3033
          %v3482 = vpack.c.b16 %v3038, %v3034
          %v3483 = vpack.c.b16 %v3039, %v3035
          %v3484 = vpack.c.b16 %v3044, %v3040
          %v3485 = vpack.c.b16 %v3045, %v3041
          %v3486 = vpack.c.b16 %v3046, %v3042
          %v3487 = vpack.c.b16 %v3047, %v3043
          %v3488 = vpack.c.b16 %v3052, %v3048
          %v3489 = vpack.c.b16 %v3053, %v3049
          %v3490 = vpack.c.b16 %v3054, %v3050
          %v3491 = vpack.c.b16 %v3055, %v3051
          %v3492 = vpack.c.b16 %v3060, %v3056
          %v3493 = vpack.c.b16 %v3061, %v3057
          %v3494 = vpack.c.b16 %v3062, %v3058
          %v3495 = vpack.c.b16 %v3063, %v3059
          %v3496 = vpack.c.b16 %v3068, %v3064
          %v3497 = vpack.c.b16 %v3069, %v3065
          %v3498 = vpack.c.b16 %v3070, %v3066
          %v3499 = vpack.c.b16 %v3071, %v3067
          %v3500 = vpack.c.b16 %v3076, %v3072
          %v3501 = vpack.c.b16 %v3077, %v3073
          %v3502 = vpack.c.b16 %v3078, %v3074
          %v3503 = vpack.c.b16 %v3079, %v3075
          %v3504 = vpack.c.b16 %v3084, %v3080
          %v3505 = vpack.c.b16 %v3085, %v3081
          %v3506 = vpack.c.b16 %v3086, %v3082
          %v3507 = vpack.c.b16 %v3087, %v3083
          %v3508 = vpack.c.b16 %v3092, %v3088
          %v3509 = vpack.c.b16 %v3093, %v3089
          %v3510 = vpack.c.b16 %v3094, %v3090
          %v3511 = vpack.c.b16 %v3095, %v3091
          %v3512 = vpack.c.b16 %v3100, %v3096
          %v3513 = vpack.c.b16 %v3101, %v3097
          %v3514 = vpack.c.b16 %v3102, %v3098
          %v3515 = vpack.c.b16 %v3103, %v3099
          %v3516 = vpack.c.b16 %v3108, %v3104
          %v3517 = vpack.c.b16 %v3109, %v3105
          %v3518 = vpack.c.b16 %v3110, %v3106
          %v3519 = vpack.c.b16 %v3111, %v3107
          %v3520 = vpack.c.b16 %v3116, %v3112
          %v3521 = vpack.c.b16 %v3117, %v3113
          %v3522 = vpack.c.b16 %v3118, %v3114
          %v3523 = vpack.c.b16 %v3119, %v3115
          %v3524 = vpack.c.b16 %v3124, %v3120
          %v3525 = vpack.c.b16 %v3125, %v3121
          %v3526 = vpack.c.b16 %v3126, %v3122
          %v3527 = vpack.c.b16 %v3127, %v3123
          %v3528 = vpack.c.b16 %v3132, %v3128
          %v3529 = vpack.c.b16 %v3133, %v3129
          %v3530 = vpack.c.b16 %v3134, %v3130
          %v3531 = vpack.c.b16 %v3135, %v3131
          %v3532 = vpack.c.b16 %v3140, %v3136
          %v3533 = vpack.c.b16 %v3141, %v3137
          %v3534 = vpack.c.b16 %v3142, %v3138
          %v3535 = vpack.c.b16 %v3143, %v3139
          %v3536 = vpack.c.b16 %v3148, %v3144
          %v3537 = vpack.c.b16 %v3149, %v3145
          %v3538 = vpack.c.b16 %v3150, %v3146
          %v3539 = vpack.c.b16 %v3151, %v3147
          %v3540 = vpack.c.b16 %v3156, %v3152
          %v3541 = vpack.c.b16 %v3157, %v3153
          %v3542 = vpack.c.b16 %v3158, %v3154
          %v3543 = vpack.c.b16 %v3159, %v3155
          %v3544 = vpack.c.b16 %v3164, %v3160
          %v3545 = vpack.c.b16 %v3165, %v3161
          %v3546 = vpack.c.b16 %v3166, %v3162
          %v3547 = vpack.c.b16 %v3167, %v3163
          %v3548 = vpack.c.b16 %v3172, %v3168
          %v3549 = vpack.c.b16 %v3173, %v3169
          %v3550 = vpack.c.b16 %v3174, %v3170
          %v3551 = vpack.c.b16 %v3175, %v3171
          %v3552 = vpack.c.b16 %v3180, %v3176
          %v3553 = vpack.c.b16 %v3181, %v3177
          %v3554 = vpack.c.b16 %v3182, %v3178
          %v3555 = vpack.c.b16 %v3183, %v3179
          %v3556 = vpack.c.b16 %v3188, %v3184
          %v3557 = vpack.c.b16 %v3189, %v3185
          %v3558 = vpack.c.b16 %v3190, %v3186
          %v3559 = vpack.c.b16 %v3191, %v3187
          %v3560 = vpack.c.b16 %v3196, %v3192
          %v3561 = vpack.c.b16 %v3197, %v3193
          %v3562 = vpack.c.b16 %v3198, %v3194
          %v3563 = vpack.c.b16 %v3199, %v3195
          %v3564 = vpack.c.b16 %v3204, %v3200
          %v3565 = vpack.c.b16 %v3205, %v3201
          %v3566 = vpack.c.b16 %v3206, %v3202
          %v3567 = vpack.c.b16 %v3207, %v3203
          %v3568 = vpack.c.b16 %v3212, %v3208
          %v3569 = vpack.c.b16 %v3213, %v3209
          %v3570 = vpack.c.b16 %v3214, %v3210
          %v3571 = vpack.c.b16 %v3215, %v3211
          %v3572 = vpack.c.b16 %v3220, %v3216
          %v3573 = vpack.c.b16 %v3221, %v3217
          %v3574 = vpack.c.b16 %v3222, %v3218
          %v3575 = vpack.c.b16 %v3223, %v3219
          %v3576 = vpack.c.b16 %v3228, %v3224
          %v3577 = vpack.c.b16 %v3229, %v3225
          %v3578 = vpack.c.b16 %v3230, %v3226
          %v3579 = vpack.c.b16 %v3231, %v3227
          %v3580 = vpack.c.b16 %v3236, %v3232
          %v3581 = vpack.c.b16 %v3237, %v3233
          %v3582 = vpack.c.b16 %v3238, %v3234
          %v3583 = vpack.c.b16 %v3239, %v3235
          %v3584 = vpack.c.b16 %v3244, %v3240
          %v3585 = vpack.c.b16 %v3245, %v3241
          %v3586 = vpack.c.b16 %v3246, %v3242
          %v3587 = vpack.c.b16 %v3247, %v3243
          %v3588 = vpack.c.b16 %v3252, %v3248
          %v3589 = vpack.c.b16 %v3253, %v3249
          %v3590 = vpack.c.b16 %v3254, %v3250
          %v3591 = vpack.c.b16 %v3255, %v3251
          %v3592 = vpack.c.b16 %v3260, %v3256
          %v3593 = vpack.c.b16 %v3261, %v3257
          %v3594 = vpack.c.b16 %v3262, %v3258
          %v3595 = vpack.c.b16 %v3263, %v3259
          %v3596 = vpack.c.b16 %v3268, %v3264
          %v3597 = vpack.c.b16 %v3269, %v3265
          %v3598 = vpack.c.b16 %v3270, %v3266
          %v3599 = vpack.c.b16 %v3271, %v3267
          %v3600 = vpack.c.b16 %v3276, %v3272
          %v3601 = vpack.c.b16 %v3277, %v3273
          %v3602 = vpack.c.b16 %v3278, %v3274
          %v3603 = vpack.c.b16 %v3279, %v3275
          %v3604 = vpack.c.b16 %v3284, %v3280
          %v3605 = vpack.c.b16 %v3285, %v3281
          %v3606 = vpack.c.b16 %v3286, %v3282
          %v3607 = vpack.c.b16 %v3287, %v3283
          %v3608 = vpack.c.b16 %v3292, %v3288
          %v3609 = vpack.c.b16 %v3293, %v3289
          %v3610 = vpack.c.b16 %v3294, %v3290
          %v3611 = vpack.c.b16 %v3295, %v3291
          %v3612 = vpack.c.b16 %v3300, %v3296
          %v3613 = vpack.c.b16 %v3301, %v3297
          %v3614 = vpack.c.b16 %v3302, %v3298
          %v3615 = vpack.c.b16 %v3303, %v3299
          %v3616 = vpack.c.b16 %v3308, %v3304
          %v3617 = vpack.c.b16 %v3309, %v3305
          %v3618 = vpack.c.b16 %v3310, %v3306
          %v3619 = vpack.c.b16 %v3311, %v3307
          %v3620 = vpack.c.b16 %v3316, %v3312
          %v3621 = vpack.c.b16 %v3317, %v3313
          %v3622 = vpack.c.b16 %v3318, %v3314
          %v3623 = vpack.c.b16 %v3319, %v3315
          %v3624 = vpack.c.b16 %v3324, %v3320
          %v3625 = vpack.c.b16 %v3325, %v3321
          %v3626 = vpack.c.b16 %v3326, %v3322
          %v3627 = vpack.c.b16 %v3327, %v3323
          %v3628 = vpack.c.b16 %v3332, %v3328
          %v3629 = vpack.c.b16 %v3333, %v3329
          %v3630 = vpack.c.b16 %v3334, %v3330
          %v3631 = vpack.c.b16 %v3335, %v3331
          %v3632 = vpack.c.b16 %v3340, %v3336
          %v3633 = vpack.c.b16 %v3341, %v3337
          %v3634 = vpack.c.b16 %v3342, %v3338
          %v3635 = vpack.c.b16 %v3343, %v3339
          %v3636 = vpack.c.b16 %v3348, %v3344
          %v3637 = vpack.c.b16 %v3349, %v3345
          %v3638 = vpack.c.b16 %v3350, %v3346
          %v3639 = vpack.c.b16 %v3351, %v3347
          %v3640 = vpack.c.b16 %v3356, %v3352
          %v3641 = vpack.c.b16 %v3357, %v3353
          %v3642 = vpack.c.b16 %v3358, %v3354
          %v3643 = vpack.c.b16 %v3359, %v3355
          %v3644 = vpack.c.b16 %v3364, %v3360
          %v3645 = vpack.c.b16 %v3365, %v3361
          %v3646 = vpack.c.b16 %v3366, %v3362
          %v3647 = vpack.c.b16 %v3367, %v3363
          %v3648 = vpack.c.b16 %v3372, %v3368
          %v3649 = vpack.c.b16 %v3373, %v3369
          %v3650 = vpack.c.b16 %v3374, %v3370
          %v3651 = vpack.c.b16 %v3375, %v3371
          %v3652 = vpack.c.b16 %v3380, %v3376
          %v3653 = vpack.c.b16 %v3381, %v3377
          %v3654 = vpack.c.b16 %v3382, %v3378
          %v3655 = vpack.c.b16 %v3383, %v3379
          %v3656 = vpack.c.b16 %v3388, %v3384
          %v3657 = vpack.c.b16 %v3389, %v3385
          %v3658 = vpack.c.b16 %v3390, %v3386
          %v3659 = vpack.c.b16 %v3391, %v3387
          %v3660 = vpack.c.b16 %v3396, %v3392
          %v3661 = vpack.c.b16 %v3397, %v3393
          %v3662 = vpack.c.b16 %v3398, %v3394
          %v3663 = vpack.c.b16 %v3399, %v3395
          %v3664 = vpack.c.b16 %v3404, %v3400
          %v3665 = vpack.c.b16 %v3405, %v3401
          %v3666 = vpack.c.b16 %v3406, %v3402
          %v3667 = vpack.c.b16 %v3407, %v3403
          %v3668 = vpack.c.b16 %v3412, %v3408
          %v3669 = vpack.c.b16 %v3413, %v3409
          %v3670 = vpack.c.b16 %v3414, %v3410
          %v3671 = vpack.c.b16 %v3415, %v3411
          %3928 = vmatprep.subr.bf16.mxu0 %v3417
          %3929 = vmatpush1.bf16.msra.mxu0 %v3416
          %3930 = vmatprep.subr.bf16.mxu0 %v3421
          %3931 = vmatpush1.bf16.msra.mxu0 %v3420
          %3932 = vmatprep.subr.bf16.mxu0 %v3425
          %3933 = vmatpush1.bf16.msra.mxu0 %v3424
          %3934 = vmatprep.subr.bf16.mxu0 %v3429
          %3935 = vmatpush1.bf16.msra.mxu0 %v3428
          %3936 = vmatprep.subr.bf16.mxu0 %v3433
          %3937 = vmatpush1.bf16.msra.mxu0 %v3432
          %3938 = vmatprep.subr.bf16.mxu0 %v3437
          %3939 = vmatpush1.bf16.msra.mxu0 %v3436
          %3940 = vmatprep.subr.bf16.mxu0 %v3441
          %3941 = vmatpush1.bf16.msra.mxu0 %v3440
          %3942 = vmatprep.subr.bf16.mxu0 %v3445
          %3943 = vmatpush1.bf16.msra.mxu0 %v3444
          %3944 = vmatprep.subr.bf16.mxu0 %v3449
          %3945 = vmatpush1.bf16.msra.mxu0 %v3448
          %3946 = vmatprep.subr.bf16.mxu0 %v3453
          %3947 = vmatpush1.bf16.msra.mxu0 %v3452
          %3948 = vmatprep.subr.bf16.mxu0 %v3457
          %3949 = vmatpush1.bf16.msra.mxu0 %v3456
          %3950 = vmatprep.subr.bf16.mxu0 %v3461
          %3951 = vmatpush1.bf16.msra.mxu0 %v3460
          %3952 = vmatprep.subr.bf16.mxu0 %v3465
          %3953 = vmatpush1.bf16.msra.mxu0 %v3464
          %3954 = vmatprep.subr.bf16.mxu0 %v3469
          %3955 = vmatpush1.bf16.msra.mxu0 %v3468
          %3956 = vmatprep.subr.bf16.mxu0 %v3473
          %3957 = vmatpush1.bf16.msra.mxu0 %v3472
          %3958 = vmatprep.subr.bf16.mxu0 %v3477
          %3959 = vmatpush1.bf16.msra.mxu0 %v3476
          %3960 = vmatprep.mubr.bf16.mxu0 %v2363
          %3961 = vmatmul.mubr.bf16.gmra.mrb[0].mxu0 %v2362
          %v3962 = vpop.f32.mrb[0].mxu0
          %v3963 = vadd.f32 %v2631, %v3962
          %v3964 = vpop.f32.mrb[0].mxu0
          %v3965 = vadd.f32 %v2635, %v3964
          %v3966 = vpop.f32.mrb[0].mxu0
          %v3967 = vpop.f32.mrb[0].mxu0
          %3968 = vdwg.mxu0
          %3969 = vmatprep.subr.bf16.mxu0 %v3481
          %3970 = vmatpush1.bf16.msra.mxu0 %v3480
          %3971 = vmatprep.subr.bf16.mxu0 %v3485
          %3972 = vmatpush1.bf16.msra.mxu0 %v3484
          %3973 = vmatprep.subr.bf16.mxu0 %v3489
          %3974 = vmatpush1.bf16.msra.mxu0 %v3488
          %3975 = vmatprep.subr.bf16.mxu0 %v3493
          %3976 = vmatpush1.bf16.msra.mxu0 %v3492
          %3977 = vmatprep.subr.bf16.mxu0 %v3497
          %3978 = vmatpush1.bf16.msra.mxu0 %v3496
          %3979 = vmatprep.subr.bf16.mxu0 %v3501
          %3980 = vmatpush1.bf16.msra.mxu0 %v3500
          %3981 = vmatprep.subr.bf16.mxu0 %v3505
          %3982 = vmatpush1.bf16.msra.mxu0 %v3504
          %3983 = vmatprep.subr.bf16.mxu0 %v3509
          %3984 = vmatpush1.bf16.msra.mxu0 %v3508
          %3985 = vmatprep.subr.bf16.mxu0 %v3513
          %3986 = vmatpush1.bf16.msra.mxu0 %v3512
          %3987 = vmatprep.subr.bf16.mxu0 %v3517
          %3988 = vmatpush1.bf16.msra.mxu0 %v3516
          %3989 = vmatprep.subr.bf16.mxu0 %v3521
          %3990 = vmatpush1.bf16.msra.mxu0 %v3520
          %3991 = vmatprep.subr.bf16.mxu0 %v3525
          %3992 = vmatpush1.bf16.msra.mxu0 %v3524
          %3993 = vmatprep.subr.bf16.mxu0 %v3529
          %3994 = vmatpush1.bf16.msra.mxu0 %v3528
          %3995 = vmatprep.subr.bf16.mxu0 %v3533
          %3996 = vmatpush1.bf16.msra.mxu0 %v3532
          %3997 = vmatprep.subr.bf16.mxu0 %v3537
          %3998 = vmatpush1.bf16.msra.mxu0 %v3536
          %3999 = vmatprep.subr.bf16.mxu0 %v3541
          %4000 = vmatpush1.bf16.msra.mxu0 %v3540
          %4001 = vmatprep.mubr.bf16.mxu0 %v2365
          %4002 = vmatmul.mubr.bf16.gmra.mrb[0].mxu0 %v2364
          %v4003 = vpop.f32.mrb[0].mxu0
          %v4004 = vadd.f32 %v3963, %v4003
          %v4005 = vpop.f32.mrb[0].mxu0
          %v4006 = vadd.f32 %v3965, %v4005
          %v4007 = vpop.f32.mrb[0].mxu0
          %v4008 = vpop.f32.mrb[0].mxu0
          %4009 = vdwg.mxu0
          %4010 = vmatprep.subr.bf16.mxu0 %v3545
          %4011 = vmatpush1.bf16.msra.mxu0 %v3544
          %4012 = vmatprep.subr.bf16.mxu0 %v3549
          %4013 = vmatpush1.bf16.msra.mxu0 %v3548
          %4014 = vmatprep.subr.bf16.mxu0 %v3553
          %4015 = vmatpush1.bf16.msra.mxu0 %v3552
          %4016 = vmatprep.subr.bf16.mxu0 %v3557
          %4017 = vmatpush1.bf16.msra.mxu0 %v3556
          %4018 = vmatprep.subr.bf16.mxu0 %v3561
          %4019 = vmatpush1.bf16.msra.mxu0 %v3560
          %4020 = vmatprep.subr.bf16.mxu0 %v3565
          %4021 = vmatpush1.bf16.msra.mxu0 %v3564
          %4022 = vmatprep.subr.bf16.mxu0 %v3569
          %4023 = vmatpush1.bf16.msra.mxu0 %v3568
          %4024 = vmatprep.subr.bf16.mxu0 %v3573
          %4025 = vmatpush1.bf16.msra.mxu0 %v3572
          %4026 = vmatprep.subr.bf16.mxu0 %v3577
          %4027 = vmatpush1.bf16.msra.mxu0 %v3576
          %4028 = vmatprep.subr.bf16.mxu0 %v3581
          %4029 = vmatpush1.bf16.msra.mxu0 %v3580
          %4030 = vmatprep.subr.bf16.mxu0 %v3585
          %4031 = vmatpush1.bf16.msra.mxu0 %v3584
          %4032 = vmatprep.subr.bf16.mxu0 %v3589
          %4033 = vmatpush1.bf16.msra.mxu0 %v3588
          %4034 = vmatprep.subr.bf16.mxu0 %v3593
          %4035 = vmatpush1.bf16.msra.mxu0 %v3592
          %4036 = vmatprep.subr.bf16.mxu0 %v3597
          %4037 = vmatpush1.bf16.msra.mxu0 %v3596
          %4038 = vmatprep.subr.bf16.mxu0 %v3601
          %4039 = vmatpush1.bf16.msra.mxu0 %v3600
          %4040 = vmatprep.subr.bf16.mxu0 %v3605
          %4041 = vmatpush1.bf16.msra.mxu0 %v3604
          %4042 = vmatprep.mubr.bf16.mxu0 %v2367
          %4043 = vmatmul.mubr.bf16.gmra.mrb[0].mxu0 %v2366
          %v4044 = vpop.f32.mrb[0].mxu0
          %v4045 = vadd.f32 %v4004, %v4044
          %v4046 = vpop.f32.mrb[0].mxu0
          %v4047 = vadd.f32 %v4006, %v4046
          %v4048 = vpop.f32.mrb[0].mxu0
          %v4049 = vpop.f32.mrb[0].mxu0
          %4050 = vdwg.mxu0
          %4051 = vmatprep.subr.bf16.mxu0 %v3609
          %4052 = vmatpush1.bf16.msra.mxu0 %v3608
          %4053 = vmatprep.subr.bf16.mxu0 %v3613
          %4054 = vmatpush1.bf16.msra.mxu0 %v3612
          %4055 = vmatprep.subr.bf16.mxu0 %v3617
          %4056 = vmatpush1.bf16.msra.mxu0 %v3616
          %4057 = vmatprep.subr.bf16.mxu0 %v3621
          %4058 = vmatpush1.bf16.msra.mxu0 %v3620
          %4059 = vmatprep.subr.bf16.mxu0 %v3625
          %4060 = vmatpush1.bf16.msra.mxu0 %v3624
          %4061 = vmatprep.subr.bf16.mxu0 %v3629
          %4062 = vmatpush1.bf16.msra.mxu0 %v3628
          %4063 = vmatprep.subr.bf16.mxu0 %v3633
          %4064 = vmatpush1.bf16.msra.mxu0 %v3632
          %4065 = vmatprep.subr.bf16.mxu0 %v3637
          %4066 = vmatpush1.bf16.msra.mxu0 %v3636
          %4067 = vmatprep.subr.bf16.mxu0 %v3641
          %4068 = vmatpush1.bf16.msra.mxu0 %v3640
          %4069 = vmatprep.subr.bf16.mxu0 %v3645
          %4070 = vmatpush1.bf16.msra.mxu0 %v3644
          %4071 = vmatprep.subr.bf16.mxu0 %v3649
          %4072 = vmatpush1.bf16.msra.mxu0 %v3648
          %4073 = vmatprep.subr.bf16.mxu0 %v3653
          %4074 = vmatpush1.bf16.msra.mxu0 %v3652
          %4075 = vmatprep.subr.bf16.mxu0 %v3657
          %4076 = vmatpush1.bf16.msra.mxu0 %v3656
          %4077 = vmatprep.subr.bf16.mxu0 %v3661
          %4078 = vmatpush1.bf16.msra.mxu0 %v3660
          %4079 = vmatprep.subr.bf16.mxu0 %v3665
          %4080 = vmatpush1.bf16.msra.mxu0 %v3664
          %4081 = vmatprep.subr.bf16.mxu0 %v3669
          %4082 = vmatpush1.bf16.msra.mxu0 %v3668
          %4083 = vmatprep.mubr.bf16.mxu0 %v2369
          %4084 = vmatmul.mubr.bf16.gmra.mrb[0].mxu0 %v2368
          %v4085 = vpop.f32.mrb[0].mxu0
          %v4086 = vadd.f32 %v4045, %v4085
          %v4087 = vpop.f32.mrb[0].mxu0
          %v4088 = vadd.f32 %v4047, %v4087
          %v4089 = vpop.f32.mrb[0].mxu0
          %v4090 = vpop.f32.mrb[0].mxu0
          %4091 = vdwg.mxu0
          %4092 = vmatprep.subr.bf16.mxu0 %v3419
          %4093 = vmatpush1.bf16.msra.mxu0 %v3418
          %4094 = vmatprep.subr.bf16.mxu0 %v3423
          %4095 = vmatpush1.bf16.msra.mxu0 %v3422
          %4096 = vmatprep.subr.bf16.mxu0 %v3427
          %4097 = vmatpush1.bf16.msra.mxu0 %v3426
          %4098 = vmatprep.subr.bf16.mxu0 %v3431
          %4099 = vmatpush1.bf16.msra.mxu0 %v3430
          %4100 = vmatprep.subr.bf16.mxu0 %v3435
          %4101 = vmatpush1.bf16.msra.mxu0 %v3434
          %4102 = vmatprep.subr.bf16.mxu0 %v3439
          %4103 = vmatpush1.bf16.msra.mxu0 %v3438
          %4104 = vmatprep.subr.bf16.mxu0 %v3443
          %4105 = vmatpush1.bf16.msra.mxu0 %v3442
          %4106 = vmatprep.subr.bf16.mxu0 %v3447
          %4107 = vmatpush1.bf16.msra.mxu0 %v3446
          %4108 = vmatprep.subr.bf16.mxu0 %v3451
          %4109 = vmatpush1.bf16.msra.mxu0 %v3450
          %4110 = vmatprep.subr.bf16.mxu0 %v3455
          %4111 = vmatpush1.bf16.msra.mxu0 %v3454
          %4112 = vmatprep.subr.bf16.mxu0 %v3459
          %4113 = vmatpush1.bf16.msra.mxu0 %v3458
          %4114 = vmatprep.subr.bf16.mxu0 %v3463
          %4115 = vmatpush1.bf16.msra.mxu0 %v3462
          %4116 = vmatprep.subr.bf16.mxu0 %v3467
          %4117 = vmatpush1.bf16.msra.mxu0 %v3466
          %4118 = vmatprep.subr.bf16.mxu0 %v3471
          %4119 = vmatpush1.bf16.msra.mxu0 %v3470
          %4120 = vmatprep.subr.bf16.mxu0 %v3475
          %4121 = vmatpush1.bf16.msra.mxu0 %v3474
          %4122 = vmatprep.subr.bf16.mxu0 %v3479
          %4123 = vmatpush1.bf16.msra.mxu0 %v3478
          %4124 = vmatprep.mubr.bf16.mxu0 %v2363
          %4125 = vmatmul.mubr.bf16.gmra.mrb[0].mxu0 %v2362
          %v4126 = vpop.f32.mrb[0].mxu0
          %v4127 = vadd.f32 %v2639, %v4126
          %v4128 = vpop.f32.mrb[0].mxu0
          %v4129 = vadd.f32 %v2643, %v4128
          %v4130 = vpop.f32.mrb[0].mxu0
          %v4131 = vpop.f32.mrb[0].mxu0
          %4132 = vdwg.mxu0
          %4133 = vmatprep.subr.bf16.mxu0 %v3483
          %4134 = vmatpush1.bf16.msra.mxu0 %v3482
          %4135 = vmatprep.subr.bf16.mxu0 %v3487
          %4136 = vmatpush1.bf16.msra.mxu0 %v3486
          %4137 = vmatprep.subr.bf16.mxu0 %v3491
          %4138 = vmatpush1.bf16.msra.mxu0 %v3490
          %4139 = vmatprep.subr.bf16.mxu0 %v3495
          %4140 = vmatpush1.bf16.msra.mxu0 %v3494
          %4141 = vmatprep.subr.bf16.mxu0 %v3499
          %4142 = vmatpush1.bf16.msra.mxu0 %v3498
          %4143 = vmatprep.subr.bf16.mxu0 %v3503
          %4144 = vmatpush1.bf16.msra.mxu0 %v3502
          %4145 = vmatprep.subr.bf16.mxu0 %v3507
          %4146 = vmatpush1.bf16.msra.mxu0 %v3506
          %4147 = vmatprep.subr.bf16.mxu0 %v3511
          %4148 = vmatpush1.bf16.msra.mxu0 %v3510
          %4149 = vmatprep.subr.bf16.mxu0 %v3515
          %4150 = vmatpush1.bf16.msra.mxu0 %v3514
          %4151 = vmatprep.subr.bf16.mxu0 %v3519
          %4152 = vmatpush1.bf16.msra.mxu0 %v3518
          %4153 = vmatprep.subr.bf16.mxu0 %v3523
          %4154 = vmatpush1.bf16.msra.mxu0 %v3522
          %4155 = vmatprep.subr.bf16.mxu0 %v3527
          %4156 = vmatpush1.bf16.msra.mxu0 %v3526
          %4157 = vmatprep.subr.bf16.mxu0 %v3531
          %4158 = vmatpush1.bf16.msra.mxu0 %v3530
          %4159 = vmatprep.subr.bf16.mxu0 %v3535
          %4160 = vmatpush1.bf16.msra.mxu0 %v3534
          %4161 = vmatprep.subr.bf16.mxu0 %v3539
          %4162 = vmatpush1.bf16.msra.mxu0 %v3538
          %4163 = vmatprep.subr.bf16.mxu0 %v3543
          %4164 = vmatpush1.bf16.msra.mxu0 %v3542
          %4165 = vmatprep.mubr.bf16.mxu0 %v2365
          %4166 = vmatmul.mubr.bf16.gmra.mrb[0].mxu0 %v2364
          %v4167 = vpop.f32.mrb[0].mxu0
          %v4168 = vadd.f32 %v4127, %v4167
          %v4169 = vpop.f32.mrb[0].mxu0
          %v4170 = vadd.f32 %v4129, %v4169
          %v4171 = vpop.f32.mrb[0].mxu0
          %v4172 = vpop.f32.mrb[0].mxu0
          %4173 = vdwg.mxu0
          %4174 = vmatprep.subr.bf16.mxu0 %v3547
          %4175 = vmatpush1.bf16.msra.mxu0 %v3546
          %4176 = vmatprep.subr.bf16.mxu0 %v3551
          %4177 = vmatpush1.bf16.msra.mxu0 %v3550
          %4178 = vmatprep.subr.bf16.mxu0 %v3555
          %4179 = vmatpush1.bf16.msra.mxu0 %v3554
          %4180 = vmatprep.subr.bf16.mxu0 %v3559
          %4181 = vmatpush1.bf16.msra.mxu0 %v3558
          %4182 = vmatprep.subr.bf16.mxu0 %v3563
          %4183 = vmatpush1.bf16.msra.mxu0 %v3562
          %4184 = vmatprep.subr.bf16.mxu0 %v3567
          %4185 = vmatpush1.bf16.msra.mxu0 %v3566
          %4186 = vmatprep.subr.bf16.mxu0 %v3571
          %4187 = vmatpush1.bf16.msra.mxu0 %v3570
          %4188 = vmatprep.subr.bf16.mxu0 %v3575
          %4189 = vmatpush1.bf16.msra.mxu0 %v3574
          %4190 = vmatprep.subr.bf16.mxu0 %v3579
          %4191 = vmatpush1.bf16.msra.mxu0 %v3578
          %4192 = vmatprep.subr.bf16.mxu0 %v3583
          %4193 = vmatpush1.bf16.msra.mxu0 %v3582
          %4194 = vmatprep.subr.bf16.mxu0 %v3587
          %4195 = vmatpush1.bf16.msra.mxu0 %v3586
          %4196 = vmatprep.subr.bf16.mxu0 %v3591
          %4197 = vmatpush1.bf16.msra.mxu0 %v3590
          %4198 = vmatprep.subr.bf16.mxu0 %v3595
          %4199 = vmatpush1.bf16.msra.mxu0 %v3594
          %4200 = vmatprep.subr.bf16.mxu0 %v3599
          %4201 = vmatpush1.bf16.msra.mxu0 %v3598
          %4202 = vmatprep.subr.bf16.mxu0 %v3603
          %4203 = vmatpush1.bf16.msra.mxu0 %v3602
          %4204 = vmatprep.subr.bf16.mxu0 %v3607
          %4205 = vmatpush1.bf16.msra.mxu0 %v3606
          %4206 = vmatprep.mubr.bf16.mxu0 %v2367
          %4207 = vmatmul.mubr.bf16.gmra.mrb[0].mxu0 %v2366
          %v4208 = vpop.f32.mrb[0].mxu0
          %v4209 = vadd.f32 %v4168, %v4208
          %v4210 = vpop.f32.mrb[0].mxu0
          %v4211 = vadd.f32 %v4170, %v4210
          %v4212 = vpop.f32.mrb[0].mxu0
          %v4213 = vpop.f32.mrb[0].mxu0
          %4214 = vdwg.mxu0
          %4215 = vmatprep.subr.bf16.mxu0 %v3611
          %4216 = vmatpush1.bf16.msra.mxu0 %v3610
          %4217 = vmatprep.subr.bf16.mxu0 %v3615
          %4218 = vmatpush1.bf16.msra.mxu0 %v3614
          %4219 = vmatprep.subr.bf16.mxu0 %v3619
          %4220 = vmatpush1.bf16.msra.mxu0 %v3618
          %4221 = vmatprep.subr.bf16.mxu0 %v3623
          %4222 = vmatpush1.bf16.msra.mxu0 %v3622
          %4223 = vmatprep.subr.bf16.mxu0 %v3627
          %4224 = vmatpush1.bf16.msra.mxu0 %v3626
          %4225 = vmatprep.subr.bf16.mxu0 %v3631
          %4226 = vmatpush1.bf16.msra.mxu0 %v3630
          %4227 = vmatprep.subr.bf16.mxu0 %v3635
          %4228 = vmatpush1.bf16.msra.mxu0 %v3634
          %4229 = vmatprep.subr.bf16.mxu0 %v3639
          %4230 = vmatpush1.bf16.msra.mxu0 %v3638
          %4231 = vmatprep.subr.bf16.mxu0 %v3643
          %4232 = vmatpush1.bf16.msra.mxu0 %v3642
          %4233 = vmatprep.subr.bf16.mxu0 %v3647
          %4234 = vmatpush1.bf16.msra.mxu0 %v3646
          %4235 = vmatprep.subr.bf16.mxu0 %v3651
          %4236 = vmatpush1.bf16.msra.mxu0 %v3650
          %4237 = vmatprep.subr.bf16.mxu0 %v3655
          %4238 = vmatpush1.bf16.msra.mxu0 %v3654
          %4239 = vmatprep.subr.bf16.mxu0 %v3659
          %4240 = vmatpush1.bf16.msra.mxu0 %v3658
          %4241 = vmatprep.subr.bf16.mxu0 %v3663
          %4242 = vmatpush1.bf16.msra.mxu0 %v3662
          %4243 = vmatprep.subr.bf16.mxu0 %v3667
          %4244 = vmatpush1.bf16.msra.mxu0 %v3666
          %4245 = vmatprep.subr.bf16.mxu0 %v3671
          %4246 = vmatpush1.bf16.msra.mxu0 %v3670
          %4247 = vmatprep.mubr.bf16.mxu0 %v2369
          %4248 = vmatmul.mubr.bf16.gmra.mrb[0].mxu0 %v2368
          %v4249 = vpop.f32.mrb[0].mxu0
          %v4250 = vadd.f32 %v4209, %v4249
          %v4251 = vpop.f32.mrb[0].mxu0
          %v4252 = vadd.f32 %v4211, %v4251
          %v4253 = vpop.f32.mrb[0].mxu0
          %v4254 = vpop.f32.mrb[0].mxu0
          %4255 = vdwg.mxu0
          %v4256 = vmax.f32 %v4086, 0.0
          %v4257 = vmax.f32 %v4088, 0.0
          %v4258 = vmax.f32 %v4250, 0.0
          %v4259 = vmax.f32 %v4252, 0.0
          %v4260 = vpack.c.bf16 %v4256, %v4256
          %v4261 = vpack.c.bf16 %v4257, %v4257
          %v4262 = vpack.c.bf16 %v4258, %v4258
          %v4263 = vpack.c.bf16 %v4259, %v4259
          %v4264 = vld [vmem:[#allocation10] sm:$0xf]
          %v4265 = vld [vmem:[#allocation10 + $0x4] sm:$0xf]
          %v4266 = vld [vmem:[#allocation10 + $0x8] sm:$0xf]
          %v4267 = vld [vmem:[#allocation10 + $0xc] sm:$0xf]
          %v4268 = vld [vmem:[#allocation10 + $0x10] sm:$0xf]
          %v4269 = vld [vmem:[#allocation10 + $0x14] sm:$0xf]
          %v4270 = vld [vmem:[#allocation10 + $0x18] sm:$0xf]
          %v4271 = vld [vmem:[#allocation10 + $0x1c] sm:$0xf]
          %v4272 = vld [vmem:[#allocation10 + $0x20] sm:$0xf]
          %v4273 = vld [vmem:[#allocation10 + $0x24] sm:$0xf]
          %v4274 = vld [vmem:[#allocation10 + $0x28] sm:$0xf]
          %v4275 = vld [vmem:[#allocation10 + $0x2c] sm:$0xf]
          %v4276 = vld [vmem:[#allocation10 + $0x30] sm:$0xf]
          %v4277 = vld [vmem:[#allocation10 + $0x34] sm:$0xf]
          %v4278 = vld [vmem:[#allocation10 + $0x38] sm:$0xf]
          %v4279 = vld [vmem:[#allocation10 + $0x3c] sm:$0xf]
          %v4280 = vld [vmem:[#allocation10 + $0x40] sm:$0xf]
          %v4281 = vld [vmem:[#allocation10 + $0x44] sm:$0xf]
          %v4282 = vld [vmem:[#allocation10 + $0x48] sm:$0xf]
          %v4283 = vld [vmem:[#allocation10 + $0x4c] sm:$0xf]
          %v4284 = vld [vmem:[#allocation10 + $0x50] sm:$0xf]
          %v4285 = vld [vmem:[#allocation10 + $0x54] sm:$0xf]
          %v4286 = vld [vmem:[#allocation10 + $0x58] sm:$0xf]
          %v4287 = vld [vmem:[#allocation10 + $0x5c] sm:$0xf]
          %v4288 = vld [vmem:[#allocation10 + $0x60] sm:$0xf]
          %v4289 = vld [vmem:[#allocation10 + $0x64] sm:$0xf]
          %v4290 = vld [vmem:[#allocation10 + $0x68] sm:$0xf]
          %v4291 = vld [vmem:[#allocation10 + $0x6c] sm:$0xf]
          %v4292 = vld [vmem:[#allocation10 + $0x70] sm:$0xf]
          %v4293 = vld [vmem:[#allocation10 + $0x74] sm:$0xf]
          %v4294 = vld [vmem:[#allocation10 + $0x78] sm:$0xf]
          %v4295 = vld [vmem:[#allocation10 + $0x7c] sm:$0xf]
          %v4296 = vld [vmem:[#allocation10 + $0x80] sm:$0xf]
          %v4297 = vld [vmem:[#allocation10 + $0x84] sm:$0xf]
          %v4298 = vld [vmem:[#allocation10 + $0x88] sm:$0xf]
          %v4299 = vld [vmem:[#allocation10 + $0x8c] sm:$0xf]
          %v4300 = vld [vmem:[#allocation10 + $0x90] sm:$0xf]
          %v4301 = vld [vmem:[#allocation10 + $0x94] sm:$0xf]
          %v4302 = vld [vmem:[#allocation10 + $0x98] sm:$0xf]
          %v4303 = vld [vmem:[#allocation10 + $0x9c] sm:$0xf]
          %v4304 = vld [vmem:[#allocation10 + $0xa0] sm:$0xf]
          %v4305 = vld [vmem:[#allocation10 + $0xa4] sm:$0xf]
          %v4306 = vld [vmem:[#allocation10 + $0xa8] sm:$0xf]
          %v4307 = vld [vmem:[#allocation10 + $0xac] sm:$0xf]
          %v4308 = vld [vmem:[#allocation10 + $0xb0] sm:$0xf]
          %v4309 = vld [vmem:[#allocation10 + $0xb4] sm:$0xf]
          %v4310 = vld [vmem:[#allocation10 + $0xb8] sm:$0xf]
          %v4311 = vld [vmem:[#allocation10 + $0xbc] sm:$0xf]
          %v4312 = vld [vmem:[#allocation10 + $0xc0] sm:$0xf]
          %v4313 = vld [vmem:[#allocation10 + $0xc4] sm:$0xf]
          %v4314 = vld [vmem:[#allocation10 + $0xc8] sm:$0xf]
          %v4315 = vld [vmem:[#allocation10 + $0xcc] sm:$0xf]
          %v4316 = vld [vmem:[#allocation10 + $0xd0] sm:$0xf]
          %v4317 = vld [vmem:[#allocation10 + $0xd4] sm:$0xf]
          %v4318 = vld [vmem:[#allocation10 + $0xd8] sm:$0xf]
          %v4319 = vld [vmem:[#allocation10 + $0xdc] sm:$0xf]
          %v4320 = vld [vmem:[#allocation10 + $0xe0] sm:$0xf]
          %v4321 = vld [vmem:[#allocation10 + $0xe4] sm:$0xf]
          %v4322 = vld [vmem:[#allocation10 + $0xe8] sm:$0xf]
          %v4323 = vld [vmem:[#allocation10 + $0xec] sm:$0xf]
          %v4324 = vld [vmem:[#allocation10 + $0xf0] sm:$0xf]
          %v4325 = vld [vmem:[#allocation10 + $0xf4] sm:$0xf]
          %v4326 = vld [vmem:[#allocation10 + $0xf8] sm:$0xf]
          %v4327 = vld [vmem:[#allocation10 + $0xfc] sm:$0xf]
          %v4328 = vld [vmem:[#allocation11] sm:$0x1]
          %v4330 = vlaneseq
          %v4331 = vshrl.u32 %v4330, 7
          %v4332 = vsub.s32 0, %v4331
          %v4333 = vrot.slane %v4328, %v4332
          %v4399 = vunpack.c.l.b16 %v4264
          %v4400 = vunpack.c.l.b16 %v4265
          %v4401 = vunpack.c.l.b16 %v4266
          %v4402 = vunpack.c.l.b16 %v4267
          %v4403 = vunpack.c.l.b16 %v4268
          %v4404 = vunpack.c.l.b16 %v4269
          %v4405 = vunpack.c.l.b16 %v4270
          %v4406 = vunpack.c.l.b16 %v4271
          %v4407 = vunpack.c.l.b16 %v4272
          %v4408 = vunpack.c.l.b16 %v4273
          %v4409 = vunpack.c.l.b16 %v4274
          %v4410 = vunpack.c.l.b16 %v4275
          %v4411 = vunpack.c.l.b16 %v4276
          %v4412 = vunpack.c.l.b16 %v4277
          %v4413 = vunpack.c.l.b16 %v4278
          %v4414 = vunpack.c.l.b16 %v4279
          %v4415 = vunpack.c.l.b16 %v4280
          %v4416 = vunpack.c.l.b16 %v4281
          %v4417 = vunpack.c.l.b16 %v4282
          %v4418 = vunpack.c.l.b16 %v4283
          %v4419 = vunpack.c.l.b16 %v4284
          %v4420 = vunpack.c.l.b16 %v4285
          %v4421 = vunpack.c.l.b16 %v4286
          %v4422 = vunpack.c.l.b16 %v4287
          %v4423 = vunpack.c.l.b16 %v4288
          %v4424 = vunpack.c.l.b16 %v4289
          %v4425 = vunpack.c.l.b16 %v4290
          %v4426 = vunpack.c.l.b16 %v4291
          %v4427 = vunpack.c.l.b16 %v4292
          %v4428 = vunpack.c.l.b16 %v4293
          %v4429 = vunpack.c.l.b16 %v4294
          %v4430 = vunpack.c.l.b16 %v4295
          %v4431 = vunpack.c.l.b16 %v4296
          %v4432 = vunpack.c.l.b16 %v4297
          %v4433 = vunpack.c.l.b16 %v4298
          %v4434 = vunpack.c.l.b16 %v4299
          %v4435 = vunpack.c.l.b16 %v4300
          %v4436 = vunpack.c.l.b16 %v4301
          %v4437 = vunpack.c.l.b16 %v4302
          %v4438 = vunpack.c.l.b16 %v4303
          %v4439 = vunpack.c.l.b16 %v4304
          %v4440 = vunpack.c.l.b16 %v4305
          %v4441 = vunpack.c.l.b16 %v4306
          %v4442 = vunpack.c.l.b16 %v4307
          %v4443 = vunpack.c.l.b16 %v4308
          %v4444 = vunpack.c.l.b16 %v4309
          %v4445 = vunpack.c.l.b16 %v4310
          %v4446 = vunpack.c.l.b16 %v4311
          %v4447 = vunpack.c.l.b16 %v4312
          %v4448 = vunpack.c.l.b16 %v4313
          %v4449 = vunpack.c.l.b16 %v4314
          %v4450 = vunpack.c.l.b16 %v4315
          %v4451 = vunpack.c.l.b16 %v4316
          %v4452 = vunpack.c.l.b16 %v4317
          %v4453 = vunpack.c.l.b16 %v4318
          %v4454 = vunpack.c.l.b16 %v4319
          %v4455 = vunpack.c.l.b16 %v4320
          %v4456 = vunpack.c.l.b16 %v4321
          %v4457 = vunpack.c.l.b16 %v4322
          %v4458 = vunpack.c.l.b16 %v4323
          %v4459 = vunpack.c.l.b16 %v4324
          %v4460 = vunpack.c.l.b16 %v4325
          %v4461 = vunpack.c.l.b16 %v4326
          %v4462 = vunpack.c.l.b16 %v4327
          %v4463 = vpack.c.b16 %v4400, %v4399
          %v4464 = vpack.c.b16 %v4402, %v4401
          %v4465 = vpack.c.b16 %v4404, %v4403
          %v4466 = vpack.c.b16 %v4406, %v4405
          %v4467 = vpack.c.b16 %v4408, %v4407
          %v4468 = vpack.c.b16 %v4410, %v4409
          %v4469 = vpack.c.b16 %v4412, %v4411
          %v4470 = vpack.c.b16 %v4414, %v4413
          %v4471 = vpack.c.b16 %v4416, %v4415
          %v4472 = vpack.c.b16 %v4418, %v4417
          %v4473 = vpack.c.b16 %v4420, %v4419
          %v4474 = vpack.c.b16 %v4422, %v4421
          %v4475 = vpack.c.b16 %v4424, %v4423
          %v4476 = vpack.c.b16 %v4426, %v4425
          %v4477 = vpack.c.b16 %v4428, %v4427
          %v4478 = vpack.c.b16 %v4430, %v4429
          %v4479 = vpack.c.b16 %v4432, %v4431
          %v4480 = vpack.c.b16 %v4434, %v4433
          %v4481 = vpack.c.b16 %v4436, %v4435
          %v4482 = vpack.c.b16 %v4438, %v4437
          %v4483 = vpack.c.b16 %v4440, %v4439
          %v4484 = vpack.c.b16 %v4442, %v4441
          %v4485 = vpack.c.b16 %v4444, %v4443
          %v4486 = vpack.c.b16 %v4446, %v4445
          %v4487 = vpack.c.b16 %v4448, %v4447
          %v4488 = vpack.c.b16 %v4450, %v4449
          %v4489 = vpack.c.b16 %v4452, %v4451
          %v4490 = vpack.c.b16 %v4454, %v4453
          %v4491 = vpack.c.b16 %v4456, %v4455
          %v4492 = vpack.c.b16 %v4458, %v4457
          %v4493 = vpack.c.b16 %v4460, %v4459
          %v4494 = vpack.c.b16 %v4462, %v4461
          %4527 = vmatprep.subr.bf16.mxu0 0
          %4528 = vmatpush1.bf16.msra.mxu0 %v4463
          %4529 = vmatprep.subr.bf16.mxu0 0
          %4530 = vmatpush1.bf16.msra.mxu0 %v4464
          %4531 = vmatprep.subr.bf16.mxu0 0
          %4532 = vmatpush1.bf16.msra.mxu0 %v4465
          %4533 = vmatprep.subr.bf16.mxu0 0
          %4534 = vmatpush1.bf16.msra.mxu0 %v4466
          %4535 = vmatprep.subr.bf16.mxu0 0
          %4536 = vmatpush1.bf16.msra.mxu0 %v4467
          %4537 = vmatprep.subr.bf16.mxu0 0
          %4538 = vmatpush1.bf16.msra.mxu0 %v4468
          %4539 = vmatprep.subr.bf16.mxu0 0
          %4540 = vmatpush1.bf16.msra.mxu0 %v4469
          %4541 = vmatprep.subr.bf16.mxu0 0
          %4542 = vmatpush1.bf16.msra.mxu0 %v4470
          %4543 = vmatprep.subr.bf16.mxu0 0
          %4544 = vmatpush1.bf16.msra.mxu0 %v4471
          %4545 = vmatprep.subr.bf16.mxu0 0
          %4546 = vmatpush1.bf16.msra.mxu0 %v4472
          %4547 = vmatprep.subr.bf16.mxu0 0
          %4548 = vmatpush1.bf16.msra.mxu0 %v4473
          %4549 = vmatprep.subr.bf16.mxu0 0
          %4550 = vmatpush1.bf16.msra.mxu0 %v4474
          %4551 = vmatprep.subr.bf16.mxu0 0
          %4552 = vmatpush1.bf16.msra.mxu0 %v4475
          %4553 = vmatprep.subr.bf16.mxu0 0
          %4554 = vmatpush1.bf16.msra.mxu0 %v4476
          %4555 = vmatprep.subr.bf16.mxu0 0
          %4556 = vmatpush1.bf16.msra.mxu0 %v4477
          %4557 = vmatprep.subr.bf16.mxu0 0
          %4558 = vmatpush1.bf16.msra.mxu0 %v4478
          %4559 = vmatprep.mubr.bf16.mxu0 %v4261
          %4560 = vmatmul.mubr.bf16.gmra.mrb[0].mxu0 %v4260
          %v4561 = vpop.f32.mrb[0].mxu0
          %v4562 = vadd.f32 %v4333, %v4561
          %v4563 = vpop.f32.mrb[0].mxu0
          %v4564 = vpop.f32.mrb[0].mxu0
          %v4565 = vpop.f32.mrb[0].mxu0
          %4566 = vdwg.mxu0
          %4567 = vmatprep.subr.bf16.mxu0 0
          %4568 = vmatpush1.bf16.msra.mxu0 %v4479
          %4569 = vmatprep.subr.bf16.mxu0 0
          %4570 = vmatpush1.bf16.msra.mxu0 %v4480
          %4571 = vmatprep.subr.bf16.mxu0 0
          %4572 = vmatpush1.bf16.msra.mxu0 %v4481
          %4573 = vmatprep.subr.bf16.mxu0 0
          %4574 = vmatpush1.bf16.msra.mxu0 %v4482
          %4575 = vmatprep.subr.bf16.mxu0 0
          %4576 = vmatpush1.bf16.msra.mxu0 %v4483
          %4577 = vmatprep.subr.bf16.mxu0 0
          %4578 = vmatpush1.bf16.msra.mxu0 %v4484
          %4579 = vmatprep.subr.bf16.mxu0 0
          %4580 = vmatpush1.bf16.msra.mxu0 %v4485
          %4581 = vmatprep.subr.bf16.mxu0 0
          %4582 = vmatpush1.bf16.msra.mxu0 %v4486
          %4583 = vmatprep.subr.bf16.mxu0 0
          %4584 = vmatpush1.bf16.msra.mxu0 %v4487
          %4585 = vmatprep.subr.bf16.mxu0 0
          %4586 = vmatpush1.bf16.msra.mxu0 %v4488
          %4587 = vmatprep.subr.bf16.mxu0 0
          %4588 = vmatpush1.bf16.msra.mxu0 %v4489
          %4589 = vmatprep.subr.bf16.mxu0 0
          %4590 = vmatpush1.bf16.msra.mxu0 %v4490
          %4591 = vmatprep.subr.bf16.mxu0 0
          %4592 = vmatpush1.bf16.msra.mxu0 %v4491
          %4593 = vmatprep.subr.bf16.mxu0 0
          %4594 = vmatpush1.bf16.msra.mxu0 %v4492
          %4595 = vmatprep.subr.bf16.mxu0 0
          %4596 = vmatpush1.bf16.msra.mxu0 %v4493
          %4597 = vmatprep.subr.bf16.mxu0 0
          %4598 = vmatpush1.bf16.msra.mxu0 %v4494
          %4599 = vmatprep.mubr.bf16.mxu0 %v4263
          %4600 = vmatmul.mubr.bf16.gmra.mrb[0].mxu0 %v4262
          %v4601 = vpop.f32.mrb[0].mxu0
          %v4602 = vadd.f32 %v4562, %v4601
          %v4603 = vpop.f32.mrb[0].mxu0
          %v4604 = vpop.f32.mrb[0].mxu0
          %v4605 = vpop.f32.mrb[0].mxu0
          %4606 = vdwg.mxu0
          %4607 = vst [vmem:[%s7] sm:$0xff] %v4602
        $region80: #{cnn_classification_forward.3} parent=47 // pred_fallthru
          _
        // Predicated region
        $region81: #{cnn_classification_forward.3} parent=47 // pred_check
          %p4608 = pneg %p194
        $region82: #{cnn_classification_forward.3} parent=47 // pred_check_branch
          %4610 = sbr.rel (%p4608) target = $region84
        $region83: #{cnn_classification_forward.3} parent=47 // pred_region
          _
        $region84: #{cnn_classification_forward.3} parent=47 // pred_fallthru
          _
        // Predicated region
        $region85: #{cnn_classification_forward.3} parent=47 // pred_check
          %p4611 = pneg %p194
        $region86: #{cnn_classification_forward.3} parent=47 // pred_check_branch
          %4613 = sbr.rel (%p4611) target = $region88
        $region87: #{cnn_classification_forward.3} parent=47 // pred_region
          _
        $region88: #{cnn_classification_forward.3} parent=47 // pred_fallthru
          _
      $region48: #{cnn_classification_forward.3} parent=5 // pred_fallthru
        _
      %p4614 = scmp.le.s32.totalorder 2, %s19
      // Predicated region
      $region89: #{cnn_classification_forward.3} parent=5 // pred_check
        %p4615 = pneg %p4614
      $region90: #{cnn_classification_forward.3} parent=5 // pred_check_branch
        %4617 = sbr.rel (%p4615) target = $region92
      $region91: #{cnn_classification_forward.3} parent=5 // pred_region
        %s4618 = ssub.s32 %s19, 2
      $region92: #{cnn_classification_forward.3} parent=5 // pred_fallthru
        _
    $region6: #{cnn_classification_forward.3} parent=1 // loop_footer
      %s23 = sadd.s32 1, %s19
    $region7: #{cnn_classification_forward.3} parent=1 // loop_footer_branch
      %18 = sbr.rel target = $region3
    $region8: #{cnn_classification_forward.3} parent=1 // loop_exit
      _
    %4619 = vsyncpa [#allocation4], 1
    %s4620 = scalar_lea.sflag [#allocation4], 1
    %4621 = vsyncpa %s4620, 1
    %4622 = vsyncpa [#allocation6], 1
    %4623 = vsyncpa [#allocation9], 1
    %4624 = vsyncpa [#allocation12], 1

// kernel: cnn_classification_forward.2
$region0: #{cnn_classification_forward.2}
  #allocation0 [shape = 'u32[]', space=smem, size = 0x4, offset = 0x4, fixed_abs, tag = 'smem constant byte address 0x4 - core index']
  #allocation1 [shape = 'u32[144,128]{1,0:T(1,128)}', space=vmem, size = 0x12000, scoped, tag = 'internal scratch']
  %s0 = inlined_call_operand.vmem [shape: bf16[2,16,16,4], index: 0, kind: input, shape index: {}]
  %s1 = inlined_call_operand.vmem [shape: bf16[36,32], index: 1, kind: input, shape index: {}]
  %s2 = inlined_call_operand.hbm [shape: f32[1,32], index: 2, kind: input, shape index: {}]
  %s3 = inlined_call_operand.vmem [shape: bf16[288,64], index: 3, kind: input, shape index: {}]
  %s4 = inlined_call_operand.hbm [shape: f32[1,64], index: 4, kind: input, shape index: {}]
  %s5 = inlined_call_operand.hbm [shape: bf16[576,128], index: 5, kind: input, shape index: {}]
  %s6 = inlined_call_operand.hbm [shape: f32[1,128], index: 6, kind: input, shape index: {}]
  %s7 = inlined_call_operand.hbm [shape: bf16[1152,128], index: 7, kind: input, shape index: {}]
  %s8 = inlined_call_operand.hbm [shape: f32[1,128], index: 8, kind: input, shape index: {}]
  %s9 = inlined_call_operand.vmem [shape: bf16[2,4,4,128], index: 9, kind: output, shape index: {}]
  %s10 = sld [smem:[#allocation0]]
  $region93: #{cnn_classification_forward.2} parent=0
    _
  %s12 = ssub.s32 1, %s10
  %s13 = scalar_select 0, %s12, %s10
  $region1: #{cnn_classification_forward.2} parent=0
    #allocation2 [shape = 'u8[512]{0}', space=vmem, size = 0x400, scoped, tag = 'input window, operand 2, single buffered']
    #allocation3 [shape = 's32[2]{0}', space=sflag, size = 0x8, scoped, tag = 'scoped memory for cnn_classification_forward.2']
    #allocation4 [shape = 'u8[512]{0}', space=vmem, size = 0x400, scoped, tag = 'input window, operand 4, single buffered']
    #allocation5 [shape = 's32[1]{0}', space=sflag, size = 0x4, scoped, tag = 'scoped memory for cnn_classification_forward.2']
    #allocation6 [shape = 'u8[147456]{0}', space=vmem, size = 0x24000, scoped, tag = 'input window, operand 5, single buffered']
    #allocation7 [shape = 'u8[512]{0}', space=vmem, size = 0x400, scoped, tag = 'input window, operand 6, single buffered']
    #allocation8 [shape = 's32[1]{0}', space=sflag, size = 0x4, scoped, tag = 'scoped memory for cnn_classification_forward.2']
    #allocation9 [shape = 'u8[294912]{0}', space=vmem, size = 0x48000, scoped, tag = 'input window, operand 7, single buffered']
    #allocation10 [shape = 'u8[512]{0}', space=vmem, size = 0x400, scoped, tag = 'input window, operand 8, single buffered']
    #allocation11 [shape = 's32[1]{0}', space=sflag, size = 0x4, scoped, tag = 'scoped memory for cnn_classification_forward.2']
    %14 = vsyncpa [#allocation3], 0
    %15 = vsyncpa [#allocation5], 0
    %16 = vsyncpa [#allocation8], 0
    %17 = vsyncpa [#allocation11], 0
    loop: start=0, step=1, limit=4
    $region2: #{cnn_classification_forward.2} parent=1 // loop_pre_header
      _
    $region3: #{cnn_classification_forward.2} parent=1 // loop_header
      %s19 = sphi 0, %s23
      %p20 = scmp.ge.s32.totalorder %s19, 4
      %s29 = sphi 0, %s31
      %s32 = sphi 0, %s29
      %s33 = sphi 0, %s32
      %s49 = sphi 0, %s33
      %s53 = sphi 0, %s53
      %s55 = sphi 0, %s53
      %s56 = sphi 0, %s55
      %s70 = sphi 0, %s56
      %s74 = sphi 0, %s74
      %s76 = sphi 0, %s74
      %s77 = sphi 0, %s76
      %s91 = sphi 0, %s77
      %s95 = sphi 0, %s95
      %s97 = sphi 0, %s95
      %s98 = sphi 0, %s97
      %s112 = sphi 0, %s98
      %s116 = sphi 0, %s116
      %s118 = sphi 0, %s116
      %s119 = sphi 0, %s118
      %s133 = sphi 0, %s119
      %s137 = sphi 0, %s137
      %s139 = sphi 0, %s137
      %s140 = sphi 0, %s139
      %s154 = sphi 0, %s140
      %s158 = sphi 0, %s158
      %s160 = sphi 0, %s158
      %s161 = sphi 0, %s160
      %s175 = sphi 0, %s161
      %s179 = sphi 0, %s179
      %s181 = sphi 0, %s179
      %s182 = sphi 0, %s181
      %s196 = sphi 0, %s182
      %s200 = sphi 0, %s200
      %s202 = sphi 0, %s200
      %s203 = sphi 0, %s202
      %s217 = sphi 0, %s203
      %s223 = sphi 0, %s225
      %s226 = sphi 0, %s223
      %s227 = sphi 0, %s226
      %s243 = sphi 0, %s227
    $region4: #{cnn_classification_forward.2} parent=1 // loop_header_branch
      %22 = sbr.rel (%p20) target = $region8
    $region5: #{cnn_classification_forward.2} parent=1 // loop_body
      %s24 = ssub.s32 %s19, 1
      %s25 = ssub.s32 %s19, 2
      %s26 = sadd.s32 %s19, 1
      %s27 = ssub.s32 %s19, %s26
      %p28 = scmp.eq.s32.totalorder %s27, 0
      %s30 = sadd.s32 %s29, 1
      %s31 = scalar_select %p28, %s29, %s30
      %p34 = pneg %p28
      %p35 = scmp.eq.s32.totalorder %s19, 1
      %p36 = por %p34, %p35
      %p37 = scmp.ne.s32.totalorder %s29, %s32
      %p38 = scmp.eq.s32.totalorder %s19, 0
      %p39 = por %p37, %p38
      %p40 = scmp.ne.s32.totalorder %s29, %s32
      %p41 = scmp.eq.s32.totalorder %s24, 1
      %p42 = por %p40, %p41
      %p43 = scmp.ne.s32.totalorder %s32, %s33
      %p44 = scmp.eq.s32.totalorder %s24, 0
      %p45 = por %p43, %p44
      %p46 = scmp.ne.s32.totalorder %s32, %s33
      %p47 = scmp.eq.s32.totalorder %s25, 1
      %p48 = por %p46, %p47
      %p50 = scmp.ne.s32.totalorder %s33, %s49
      %p51 = scmp.eq.s32.totalorder %s25, 0
      %p52 = por %p50, %p51
      %s54 = sadd.s32 %s53, 1
      %p57 = scmp.eq.s32.totalorder %s19, 1
      %p58 = scmp.ne.s32.totalorder %s53, %s55
      %p59 = scmp.eq.s32.totalorder %s19, 0
      %p60 = por %p58, %p59
      %p61 = scmp.ne.s32.totalorder %s53, %s55
      %p62 = scmp.eq.s32.totalorder %s24, 1
      %p63 = por %p61, %p62
      %p64 = scmp.ne.s32.totalorder %s55, %s56
      %p65 = scmp.eq.s32.totalorder %s24, 0
      %p66 = por %p64, %p65
      %p67 = scmp.ne.s32.totalorder %s55, %s56
      %p68 = scmp.eq.s32.totalorder %s25, 1
      %p69 = por %p67, %p68
      %p71 = scmp.ne.s32.totalorder %s56, %s70
      %p72 = scmp.eq.s32.totalorder %s25, 0
      %p73 = por %p71, %p72
      %s75 = sadd.s32 %s74, 1
      %p78 = scmp.eq.s32.totalorder %s19, 1
      %p79 = scmp.ne.s32.totalorder %s74, %s76
      %p80 = scmp.eq.s32.totalorder %s19, 0
      %p81 = por %p79, %p80
      %p82 = scmp.ne.s32.totalorder %s74, %s76
      %p83 = scmp.eq.s32.totalorder %s24, 1
      %p84 = por %p82, %p83
      %p85 = scmp.ne.s32.totalorder %s76, %s77
      %p86 = scmp.eq.s32.totalorder %s24, 0
      %p87 = por %p85, %p86
      %p88 = scmp.ne.s32.totalorder %s76, %s77
      %p89 = scmp.eq.s32.totalorder %s25, 1
      %p90 = por %p88, %p89
      %p92 = scmp.ne.s32.totalorder %s77, %s91
      %p93 = scmp.eq.s32.totalorder %s25, 0
      %p94 = por %p92, %p93
      %s96 = sadd.s32 %s95, 1
      %p99 = scmp.eq.s32.totalorder %s19, 1
      %p100 = scmp.ne.s32.totalorder %s95, %s97
      %p101 = scmp.eq.s32.totalorder %s19, 0
      %p102 = por %p100, %p101
      %p103 = scmp.ne.s32.totalorder %s95, %s97
      %p104 = scmp.eq.s32.totalorder %s24, 1
      %p105 = por %p103, %p104
      %p106 = scmp.ne.s32.totalorder %s97, %s98
      %p107 = scmp.eq.s32.totalorder %s24, 0
      %p108 = por %p106, %p107
      %p109 = scmp.ne.s32.totalorder %s97, %s98
      %p110 = scmp.eq.s32.totalorder %s25, 1
      %p111 = por %p109, %p110
      %p113 = scmp.ne.s32.totalorder %s98, %s112
      %p114 = scmp.eq.s32.totalorder %s25, 0
      %p115 = por %p113, %p114
      %s117 = sadd.s32 %s116, 1
      %p120 = scmp.eq.s32.totalorder %s19, 1
      %p121 = scmp.ne.s32.totalorder %s116, %s118
      %p122 = scmp.eq.s32.totalorder %s19, 0
      %p123 = por %p121, %p122
      %p124 = scmp.ne.s32.totalorder %s116, %s118
      %p125 = scmp.eq.s32.totalorder %s24, 1
      %p126 = por %p124, %p125
      %p127 = scmp.ne.s32.totalorder %s118, %s119
      %p128 = scmp.eq.s32.totalorder %s24, 0
      %p129 = por %p127, %p128
      %p130 = scmp.ne.s32.totalorder %s118, %s119
      %p131 = scmp.eq.s32.totalorder %s25, 1
      %p132 = por %p130, %p131
      %p134 = scmp.ne.s32.totalorder %s119, %s133
      %p135 = scmp.eq.s32.totalorder %s25, 0
      %p136 = por %p134, %p135
      %s138 = sadd.s32 %s137, 1
      %p141 = scmp.eq.s32.totalorder %s19, 1
      %p142 = scmp.ne.s32.totalorder %s137, %s139
      %p143 = scmp.eq.s32.totalorder %s19, 0
      %p144 = por %p142, %p143
      %p145 = scmp.ne.s32.totalorder %s137, %s139
      %p146 = scmp.eq.s32.totalorder %s24, 1
      %p147 = por %p145, %p146
      %p148 = scmp.ne.s32.totalorder %s139, %s140
      %p149 = scmp.eq.s32.totalorder %s24, 0
      %p150 = por %p148, %p149
      %p151 = scmp.ne.s32.totalorder %s139, %s140
      %p152 = scmp.eq.s32.totalorder %s25, 1
      %p153 = por %p151, %p152
      %p155 = scmp.ne.s32.totalorder %s140, %s154
      %p156 = scmp.eq.s32.totalorder %s25, 0
      %p157 = por %p155, %p156
      %s159 = sadd.s32 %s158, 1
      %p162 = scmp.eq.s32.totalorder %s19, 1
      %p163 = scmp.ne.s32.totalorder %s158, %s160
      %p164 = scmp.eq.s32.totalorder %s19, 0
      %p165 = por %p163, %p164
      %p166 = scmp.ne.s32.totalorder %s158, %s160
      %p167 = scmp.eq.s32.totalorder %s24, 1
      %p168 = por %p166, %p167
      %p169 = scmp.ne.s32.totalorder %s160, %s161
      %p170 = scmp.eq.s32.totalorder %s24, 0
      %p171 = por %p169, %p170
      %p172 = scmp.ne.s32.totalorder %s160, %s161
      %p173 = scmp.eq.s32.totalorder %s25, 1
      %p174 = por %p172, %p173
      %p176 = scmp.ne.s32.totalorder %s161, %s175
      %p177 = scmp.eq.s32.totalorder %s25, 0
      %p178 = por %p176, %p177
      %s180 = sadd.s32 %s179, 1
      %p183 = scmp.eq.s32.totalorder %s19, 1
      %p184 = scmp.ne.s32.totalorder %s179, %s181
      %p185 = scmp.eq.s32.totalorder %s19, 0
      %p186 = por %p184, %p185
      %p187 = scmp.ne.s32.totalorder %s179, %s181
      %p188 = scmp.eq.s32.totalorder %s24, 1
      %p189 = por %p187, %p188
      %p190 = scmp.ne.s32.totalorder %s181, %s182
      %p191 = scmp.eq.s32.totalorder %s24, 0
      %p192 = por %p190, %p191
      %p193 = scmp.ne.s32.totalorder %s181, %s182
      %p194 = scmp.eq.s32.totalorder %s25, 1
      %p195 = por %p193, %p194
      %p197 = scmp.ne.s32.totalorder %s182, %s196
      %p198 = scmp.eq.s32.totalorder %s25, 0
      %p199 = por %p197, %p198
      %s201 = sadd.s32 %s200, 1
      %p204 = scmp.eq.s32.totalorder %s19, 1
      %p205 = scmp.ne.s32.totalorder %s200, %s202
      %p206 = scmp.eq.s32.totalorder %s19, 0
      %p207 = por %p205, %p206
      %p208 = scmp.ne.s32.totalorder %s200, %s202
      %p209 = scmp.eq.s32.totalorder %s24, 1
      %p210 = por %p208, %p209
      %p211 = scmp.ne.s32.totalorder %s202, %s203
      %p212 = scmp.eq.s32.totalorder %s24, 0
      %p213 = por %p211, %p212
      %p214 = scmp.ne.s32.totalorder %s202, %s203
      %p215 = scmp.eq.s32.totalorder %s25, 1
      %p216 = por %p214, %p215
      %p218 = scmp.ne.s32.totalorder %s203, %s217
      %p219 = scmp.eq.s32.totalorder %s25, 0
      %p220 = por %p218, %p219
      %s221 = ssub.s32 %s19, %s26
      %p222 = scmp.eq.s32.totalorder %s221, 0
      %s224 = sadd.s32 %s223, 1
      %s225 = scalar_select %p222, %s223, %s224
      %p228 = pneg %p222
      %p229 = scmp.eq.s32.totalorder %s19, 1
      %p230 = por %p228, %p229
      %p231 = scmp.ne.s32.totalorder %s223, %s226
      %p232 = scmp.eq.s32.totalorder %s19, 0
      %p233 = por %p231, %p232
      %p234 = scmp.ne.s32.totalorder %s223, %s226
      %p235 = scmp.eq.s32.totalorder %s24, 1
      %p236 = por %p234, %p235
      %p237 = scmp.ne.s32.totalorder %s226, %s227
      %p238 = scmp.eq.s32.totalorder %s24, 0
      %p239 = por %p237, %p238
      %p240 = scmp.ne.s32.totalorder %s226, %s227
      %p241 = scmp.eq.s32.totalorder %s25, 1
      %p242 = por %p240, %p241
      %p244 = scmp.ne.s32.totalorder %s227, %s243
      %p245 = scmp.eq.s32.totalorder %s25, 0
      %p246 = por %p244, %p245
      %p247 = scmp.le.s32.totalorder 1, %s19
      %p248 = scmp.lt.s32.totalorder %s19, 3
      %p249 = pnand %p247, %p248
      %p250 = pneg %p249
      // Predicated region
      $region9: #{cnn_classification_forward.2} parent=5 // pred_check
        _
      $region10: #{cnn_classification_forward.2} parent=5 // pred_check_branch
        %252 = sbr.rel (%p249) target = $region12
      $region11: #{cnn_classification_forward.2} parent=5 // pred_region
        %s253 = ssub.s32 %s19, 1
        // Predicated region
        $region13: #{cnn_classification_forward.2} parent=11 // pred_check
          %p254 = pneg %p66
        $region14: #{cnn_classification_forward.2} parent=11 // pred_check_branch
          %256 = sbr.rel (%p254) target = $region16
        $region15: #{cnn_classification_forward.2} parent=11 // pred_region
          _
        $region16: #{cnn_classification_forward.2} parent=11 // pred_fallthru
          _
        // Predicated region
        $region17: #{cnn_classification_forward.2} parent=11 // pred_check
          %p257 = pneg %p87
        $region18: #{cnn_classification_forward.2} parent=11 // pred_check_branch
          %259 = sbr.rel (%p257) target = $region20
        $region19: #{cnn_classification_forward.2} parent=11 // pred_region
          %s261 = ssub.s32 16, 16
          %262 = vsyncadd [#allocation3], %s261
          %s264 = sshll.u32 [#allocation2], 4
          %s265 = int_to_ptr.vmem [resolvable:$true] %s264
          %267 = dma.hbm_to_vmem [thread:$0]  %s2, 16, %s265, [#allocation3]
        $region20: #{cnn_classification_forward.2} parent=11 // pred_fallthru
          _
        // Predicated region
        $region21: #{cnn_classification_forward.2} parent=11 // pred_check
          %p268 = pneg %p108
        $region22: #{cnn_classification_forward.2} parent=11 // pred_check_branch
          %270 = sbr.rel (%p268) target = $region24
        $region23: #{cnn_classification_forward.2} parent=11 // pred_region
          _
        $region24: #{cnn_classification_forward.2} parent=11 // pred_fallthru
          _
        // Predicated region
        $region25: #{cnn_classification_forward.2} parent=11 // pred_check
          %p271 = pneg %p129
        $region26: #{cnn_classification_forward.2} parent=11 // pred_check_branch
          %273 = sbr.rel (%p271) target = $region28
        $region27: #{cnn_classification_forward.2} parent=11 // pred_region
          %s275 = ssub.s32 16, 16
          %276 = vsyncadd [#allocation5], %s275
          %s278 = sshll.u32 [#allocation4], 4
          %s279 = int_to_ptr.vmem [resolvable:$true] %s278
          %281 = dma.hbm_to_vmem [thread:$0]  %s4, 16, %s279, [#allocation5]
        $region28: #{cnn_classification_forward.2} parent=11 // pred_fallthru
          _
        // Predicated region
        $region29: #{cnn_classification_forward.2} parent=11 // pred_check
          %p282 = pneg %p150
        $region30: #{cnn_classification_forward.2} parent=11 // pred_check_branch
          %284 = sbr.rel (%p282) target = $region32
        $region31: #{cnn_classification_forward.2} parent=11 // pred_region
          %s286 = ssub.s32 4608, 4608
          %287 = vsyncadd [#allocation5], %s286
          %s288 = sshll.u32 [#allocation6], 4
          %s289 = int_to_ptr.vmem [resolvable:$true] %s288
          %294 = dma.hbm_to_vmem [thread:$0]  %s5, 4608, %s289, [#allocation5], 64, 64, 4
        $region32: #{cnn_classification_forward.2} parent=11 // pred_fallthru
          _
        // Predicated region
        $region33: #{cnn_classification_forward.2} parent=11 // pred_check
          %p295 = pneg %p171
        $region34: #{cnn_classification_forward.2} parent=11 // pred_check_branch
          %297 = sbr.rel (%p295) target = $region36
        $region35: #{cnn_classification_forward.2} parent=11 // pred_region
          %s299 = ssub.s32 16, 16
          %300 = vsyncadd [#allocation8], %s299
          %s302 = sshll.u32 [#allocation7], 4
          %s303 = int_to_ptr.vmem [resolvable:$true] %s302
          %305 = dma.hbm_to_vmem [thread:$0]  %s6, 16, %s303, [#allocation8]
        $region36: #{cnn_classification_forward.2} parent=11 // pred_fallthru
          _
        // Predicated region
        $region37: #{cnn_classification_forward.2} parent=11 // pred_check
          %p306 = pneg %p192
        $region38: #{cnn_classification_forward.2} parent=11 // pred_check_branch
          %308 = sbr.rel (%p306) target = $region40
        $region39: #{cnn_classification_forward.2} parent=11 // pred_region
          %s310 = ssub.s32 9216, 9216
          %311 = vsyncadd [#allocation8], %s310
          %s312 = sshll.u32 [#allocation9], 4
          %s313 = int_to_ptr.vmem [resolvable:$true] %s312
          %318 = dma.hbm_to_vmem [thread:$0]  %s7, 9216, %s313, [#allocation8], 64, 64, 4
        $region40: #{cnn_classification_forward.2} parent=11 // pred_fallthru
          _
        // Predicated region
        $region41: #{cnn_classification_forward.2} parent=11 // pred_check
          %p319 = pneg %p213
        $region42: #{cnn_classification_forward.2} parent=11 // pred_check_branch
          %321 = sbr.rel (%p319) target = $region44
        $region43: #{cnn_classification_forward.2} parent=11 // pred_region
          %s323 = ssub.s32 16, 16
          %324 = vsyncadd [#allocation11], %s323
          %s326 = sshll.u32 [#allocation10], 4
          %s327 = int_to_ptr.vmem [resolvable:$true] %s326
          %329 = dma.hbm_to_vmem [thread:$0]  %s8, 16, %s327, [#allocation11]
        $region44: #{cnn_classification_forward.2} parent=11 // pred_fallthru
          _
      $region12: #{cnn_classification_forward.2} parent=5 // pred_fallthru
        _
      %p330 = scmp.lt.s32.totalorder %s19, 2
      // Predicated region
      $region45: #{cnn_classification_forward.2} parent=5 // pred_check
        %p331 = pneg %p330
      $region46: #{cnn_classification_forward.2} parent=5 // pred_check_branch
        %333 = sbr.rel (%p331) target = $region48
      $region47: #{cnn_classification_forward.2} parent=5 // pred_region
        // Predicated region
        $region49: #{cnn_classification_forward.2} parent=47 // pred_check
          %p334 = pneg %p39
        $region50: #{cnn_classification_forward.2} parent=47 // pred_check_branch
          %336 = sbr.rel (%p334) target = $region52
        $region51: #{cnn_classification_forward.2} parent=47 // pred_region
          %p337 = scmp.lt.s32.totalorder %s19, 1
          %s338 = scalar_select %p337, %s19, 1
          %s339 = smul.addr %s338, 32
          %s340 = smul.addr %s339, 4
          %s341 = scalar_lea.vmem %s0, %s340
        $region52: #{cnn_classification_forward.2} parent=47 // pred_fallthru
          _
      $region48: #{cnn_classification_forward.2} parent=5 // pred_fallthru
        _
      %p342 = scmp.le.s32.totalorder 1, %s19
      %p343 = scmp.lt.s32.totalorder %s19, 3
      %p344 = pnand %p342, %p343
      %p345 = pneg %p344
      // Predicated region
      $region53: #{cnn_classification_forward.2} parent=5 // pred_check
        _
      $region54: #{cnn_classification_forward.2} parent=5 // pred_check_branch
        %347 = sbr.rel (%p344) target = $region56
      $region55: #{cnn_classification_forward.2} parent=5 // pred_region
        %s348 = ssub.s32 %s19, 1
        // Predicated region
        $region57: #{cnn_classification_forward.2} parent=55 // pred_check
          %p349 = pneg %p87
        $region58: #{cnn_classification_forward.2} parent=55 // pred_check_branch
          %351 = sbr.rel (%p349) target = $region60
        $region59: #{cnn_classification_forward.2} parent=55 // pred_region
          %352 = dma.done [#allocation3], 16
        $region60: #{cnn_classification_forward.2} parent=55 // pred_fallthru
          _
        // Predicated region
        $region61: #{cnn_classification_forward.2} parent=55 // pred_check
          %p353 = pneg %p129
        $region62: #{cnn_classification_forward.2} parent=55 // pred_check_branch
          %355 = sbr.rel (%p353) target = $region64
        $region63: #{cnn_classification_forward.2} parent=55 // pred_region
          %356 = dma.done [#allocation5], 16
        $region64: #{cnn_classification_forward.2} parent=55 // pred_fallthru
          _
        // Predicated region
        $region65: #{cnn_classification_forward.2} parent=55 // pred_check
          %p357 = pneg %p150
        $region66: #{cnn_classification_forward.2} parent=55 // pred_check_branch
          %359 = sbr.rel (%p357) target = $region68
        $region67: #{cnn_classification_forward.2} parent=55 // pred_region
          %360 = dma.done [#allocation5], 4608
        $region68: #{cnn_classification_forward.2} parent=55 // pred_fallthru
          _
        // Predicated region
        $region69: #{cnn_classification_forward.2} parent=55 // pred_check
          %p361 = pneg %p171
        $region70: #{cnn_classification_forward.2} parent=55 // pred_check_branch
          %363 = sbr.rel (%p361) target = $region72
        $region71: #{cnn_classification_forward.2} parent=55 // pred_region
          %364 = dma.done [#allocation8], 16
        $region72: #{cnn_classification_forward.2} parent=55 // pred_fallthru
          _
        // Predicated region
        $region73: #{cnn_classification_forward.2} parent=55 // pred_check
          %p365 = pneg %p192
        $region74: #{cnn_classification_forward.2} parent=55 // pred_check_branch
          %367 = sbr.rel (%p365) target = $region76
        $region75: #{cnn_classification_forward.2} parent=55 // pred_region
          %368 = dma.done [#allocation8], 9216
        $region76: #{cnn_classification_forward.2} parent=55 // pred_fallthru
          _
        // Predicated region
        $region77: #{cnn_classification_forward.2} parent=55 // pred_check
          %p369 = pneg %p213
        $region78: #{cnn_classification_forward.2} parent=55 // pred_check_branch
          %371 = sbr.rel (%p369) target = $region80
        $region79: #{cnn_classification_forward.2} parent=55 // pred_region
          %372 = dma.done [#allocation11], 16
        $region80: #{cnn_classification_forward.2} parent=55 // pred_fallthru
          _
        %p373 = scmp.lt.s32.totalorder %s24, 1
        %s374 = scalar_select %p373, %s24, 1
        %s375 = smul.addr %s374, 32
        %s376 = smul.addr %s375, 4
        %s377 = scalar_lea.vmem %s0, %s376
        %p378 = pneg %p45
        %p379 = pneg %p42
        %p380 = pneg %p66
        %p381 = pneg %p63
        %p382 = pneg %p87
        %p383 = pneg %p84
        %p384 = pneg %p108
        %p385 = pneg %p105
        %p386 = pneg %p129
        %p387 = pneg %p126
        %p388 = pneg %p150
        %p389 = pneg %p147
        %p390 = pneg %p171
        %p391 = pneg %p168
        %p392 = pneg %p192
        %p393 = pneg %p189
        %p394 = pneg %p213
        %p395 = pneg %p210
        %p396 = pneg %p239
        %p397 = pneg %p236
        %p398 = scmp.lt.s32.totalorder %s24, 1
        %s399 = scalar_select %p398, %s24, 1
        %s400 = smul.addr %s399, 4
        %s401 = smul.addr %s400, 2
        %s402 = scalar_lea.vmem %s9, %s401
        %p403 = scmp.lt.s32.totalorder %s24, 1
        %s404 = scalar_select %p403, %s24, 1
        %s405 = smul.addr %s404, 32
        %s406 = smul.addr %s405, 4
        %s407 = scalar_lea.vmem %s0, %s406
        %p408 = scmp.lt.s32.totalorder %s24, 1
        %s409 = scalar_select %p408, %s24, 1
        %s410 = smul.addr %s409, 4
        %s411 = smul.addr %s410, 2
        %s412 = scalar_lea.vmem %s9, %s411
        %v414 = vld [vmem:[%s407] sm:$0xf]
        %v415 = vld [vmem:[%s407 + $0x4] sm:$0xf]
        %v416 = vld [vmem:[%s407 + $0x8] sm:$0xf]
        %v417 = vld [vmem:[%s407 + $0xc] sm:$0xf]
        %v418 = vld [vmem:[%s407 + $0x10] sm:$0xf]
        %v419 = vld [vmem:[%s407 + $0x14] sm:$0xf]
        %v420 = vld [vmem:[%s407 + $0x18] sm:$0xf]
        %v421 = vld [vmem:[%s407 + $0x1c] sm:$0xf]
        %v422 = vld [vmem:[%s407 + $0x20] sm:$0xf]
        %v423 = vld [vmem:[%s407 + $0x24] sm:$0xf]
        %v424 = vld [vmem:[%s407 + $0x28] sm:$0xf]
        %v425 = vld [vmem:[%s407 + $0x2c] sm:$0xf]
        %v426 = vld [vmem:[%s407 + $0x30] sm:$0xf]
        %v427 = vld [vmem:[%s407 + $0x34] sm:$0xf]
        %v428 = vld [vmem:[%s407 + $0x38] sm:$0xf]
        %v429 = vld [vmem:[%s407 + $0x3c] sm:$0xf]
        %v430 = vld [vmem:[%s407 + $0x40] sm:$0xf]
        %v431 = vld [vmem:[%s407 + $0x44] sm:$0xf]
        %v432 = vld [vmem:[%s407 + $0x48] sm:$0xf]
        %v433 = vld [vmem:[%s407 + $0x4c] sm:$0xf]
        %v434 = vld [vmem:[%s407 + $0x50] sm:$0xf]
        %v435 = vld [vmem:[%s407 + $0x54] sm:$0xf]
        %v436 = vld [vmem:[%s407 + $0x58] sm:$0xf]
        %v437 = vld [vmem:[%s407 + $0x5c] sm:$0xf]
        %v438 = vld [vmem:[%s407 + $0x60] sm:$0xf]
        %v439 = vld [vmem:[%s407 + $0x64] sm:$0xf]
        %v440 = vld [vmem:[%s407 + $0x68] sm:$0xf]
        %v441 = vld [vmem:[%s407 + $0x6c] sm:$0xf]
        %v442 = vld [vmem:[%s407 + $0x70] sm:$0xf]
        %v443 = vld [vmem:[%s407 + $0x74] sm:$0xf]
        %v444 = vld [vmem:[%s407 + $0x78] sm:$0xf]
        %v445 = vld [vmem:[%s407 + $0x7c] sm:$0xf]
        %v478 = vunpack.c.l.b16 %v414
        %v479 = vunpack.c.l.b16 %v415
        %v480 = vunpack.c.l.b16 %v416
        %v481 = vunpack.c.l.b16 %v417
        %v482 = vunpack.c.l.b16 %v418
        %v483 = vunpack.c.l.b16 %v419
        %v484 = vunpack.c.l.b16 %v420
        %v485 = vunpack.c.l.b16 %v421
        %v486 = vunpack.c.l.b16 %v422
        %v487 = vunpack.c.l.b16 %v423
        %v488 = vunpack.c.l.b16 %v424
        %v489 = vunpack.c.l.b16 %v425
        %v490 = vunpack.c.l.b16 %v426
        %v491 = vunpack.c.l.b16 %v427
        %v492 = vunpack.c.l.b16 %v428
        %v493 = vunpack.c.l.b16 %v429
        %v494 = vunpack.c.l.b16 %v430
        %v495 = vunpack.c.l.b16 %v431
        %v496 = vunpack.c.l.b16 %v432
        %v497 = vunpack.c.l.b16 %v433
        %v498 = vunpack.c.l.b16 %v434
        %v499 = vunpack.c.l.b16 %v435
        %v500 = vunpack.c.l.b16 %v436
        %v501 = vunpack.c.l.b16 %v437
        %v502 = vunpack.c.l.b16 %v438
        %v503 = vunpack.c.l.b16 %v439
        %v504 = vunpack.c.l.b16 %v440
        %v505 = vunpack.c.l.b16 %v441
        %v506 = vunpack.c.l.b16 %v442
        %v507 = vunpack.c.l.b16 %v443
        %v508 = vunpack.c.l.b16 %v444
        %v509 = vunpack.c.l.b16 %v445
        %v510 = vpack.c.b16 %v479, %v478
        %v511 = vpack.c.b16 %v481, %v480
        %v512 = vpack.c.b16 %v483, %v482
        %v513 = vpack.c.b16 %v485, %v484
        %v514 = vpack.c.b16 %v487, %v486
        %v515 = vpack.c.b16 %v489, %v488
        %v516 = vpack.c.b16 %v491, %v490
        %v517 = vpack.c.b16 %v493, %v492
        %v518 = vpack.c.b16 %v495, %v494
        %v519 = vpack.c.b16 %v497, %v496
        %v520 = vpack.c.b16 %v499, %v498
        %v521 = vpack.c.b16 %v501, %v500
        %v522 = vpack.c.b16 %v503, %v502
        %v523 = vpack.c.b16 %v505, %v504
        %v524 = vpack.c.b16 %v507, %v506
        %v525 = vpack.c.b16 %v509, %v508
        %v527 = vshrl.u32 %v510, 16
        %v529 = vrot.slane %v527, 7
        %v530 = vshll.u32 %v510, 16
        %v532 = vor.u32 %v529, %v530
        %v534 = vshrl.u32 %v511, 16
        %v536 = vrot.slane %v534, 7
        %v537 = vshll.u32 %v511, 16
        %v539 = vor.u32 %v536, %v537
        %v541 = vshrl.u32 %v512, 16
        %v543 = vrot.slane %v541, 7
        %v544 = vshll.u32 %v512, 16
        %v546 = vor.u32 %v543, %v544
        %v548 = vshrl.u32 %v513, 16
        %v550 = vrot.slane %v548, 7
        %v551 = vshll.u32 %v513, 16
        %v553 = vor.u32 %v550, %v551
        %v555 = vshrl.u32 %v514, 16
        %v557 = vrot.slane %v555, 7
        %v558 = vshll.u32 %v514, 16
        %v560 = vor.u32 %v557, %v558
        %v562 = vshrl.u32 %v515, 16
        %v564 = vrot.slane %v562, 7
        %v565 = vshll.u32 %v515, 16
        %v567 = vor.u32 %v564, %v565
        %v569 = vshrl.u32 %v516, 16
        %v571 = vrot.slane %v569, 7
        %v572 = vshll.u32 %v516, 16
        %v574 = vor.u32 %v571, %v572
        %v576 = vshrl.u32 %v517, 16
        %v578 = vrot.slane %v576, 7
        %v579 = vshll.u32 %v517, 16
        %v581 = vor.u32 %v578, %v579
        %v583 = vshrl.u32 %v518, 16
        %v585 = vrot.slane %v583, 7
        %v586 = vshll.u32 %v518, 16
        %v588 = vor.u32 %v585, %v586
        %v590 = vshrl.u32 %v519, 16
        %v592 = vrot.slane %v590, 7
        %v593 = vshll.u32 %v519, 16
        %v595 = vor.u32 %v592, %v593
        %v597 = vshrl.u32 %v520, 16
        %v599 = vrot.slane %v597, 7
        %v600 = vshll.u32 %v520, 16
        %v602 = vor.u32 %v599, %v600
        %v604 = vshrl.u32 %v521, 16
        %v606 = vrot.slane %v604, 7
        %v607 = vshll.u32 %v521, 16
        %v609 = vor.u32 %v606, %v607
        %v611 = vshrl.u32 %v522, 16
        %v613 = vrot.slane %v611, 7
        %v614 = vshll.u32 %v522, 16
        %v616 = vor.u32 %v613, %v614
        %v618 = vshrl.u32 %v523, 16
        %v620 = vrot.slane %v618, 7
        %v621 = vshll.u32 %v523, 16
        %v623 = vor.u32 %v620, %v621
        %v625 = vshrl.u32 %v524, 16
        %v627 = vrot.slane %v625, 7
        %v628 = vshll.u32 %v524, 16
        %v630 = vor.u32 %v627, %v628
        %v632 = vshrl.u32 %v525, 16
        %v634 = vrot.slane %v632, 7
        %v635 = vshll.u32 %v525, 16
        %v637 = vor.u32 %v634, %v635
        %vm670 = vcmask 1040384
        %vm671 = vsmask.f32 256
        %vm672 = vmand %vm670, %vm671
        %v673 = vsel %vm672, 0, %v532
        %v674 = vsel %vm672, 0, %v539
        %v675 = vsel %vm672, 0, %v546
        %v676 = vsel %vm672, 0, %v553
        %v677 = vsel %vm672, 0, %v560
        %v678 = vsel %vm672, 0, %v567
        %v679 = vsel %vm672, 0, %v574
        %v680 = vsel %vm672, 0, %v581
        %v681 = vsel %vm672, 0, %v588
        %v682 = vsel %vm672, 0, %v595
        %v683 = vsel %vm672, 0, %v602
        %v684 = vsel %vm672, 0, %v609
        %v685 = vsel %vm672, 0, %v616
        %v686 = vsel %vm672, 0, %v623
        %v687 = vsel %vm672, 0, %v630
        %v688 = vsel %vm672, 0, %v637
        %v689 = vsel %vm672, %v529, 0
        %v690 = vsel %vm672, %v536, 0
        %v691 = vsel %vm672, %v543, 0
        %v692 = vsel %vm672, %v550, 0
        %v693 = vsel %vm672, %v557, 0
        %v694 = vsel %vm672, %v564, 0
        %v695 = vsel %vm672, %v571, 0
        %v696 = vsel %vm672, %v578, 0
        %v697 = vsel %vm672, %v585, 0
        %v698 = vsel %vm672, %v592, 0
        %v699 = vsel %vm672, %v599, 0
        %v700 = vsel %vm672, %v606, 0
        %v701 = vsel %vm672, %v613, 0
        %v702 = vsel %vm672, %v620, 0
        %v703 = vsel %vm672, %v627, 0
        %v704 = vsel %vm672, %v634, 0
        %vm705 = vsmask.f32 7424
        %v707 = vshrl.u32 0, 16
        %v709 = vshll.u32 0, 16
        %v711 = vrot.slane %v709, 1
        %v712 = vor.u32 %v707, %v711
        %v713 = vsel %vm705, %v712, %v711
        %v715 = vshrl.u32 %v673, 16
        %v717 = vshll.u32 %v673, 16
        %v719 = vrot.slane %v717, 1
        %v720 = vor.u32 %v715, %v719
        %v722 = vshll.u32 %v689, 16
        %v724 = vrot.slane %v722, 1
        %v725 = vsel %vm705, %v720, %v724
        %v727 = vshrl.u32 %v674, 16
        %v729 = vshll.u32 %v674, 16
        %v731 = vrot.slane %v729, 1
        %v732 = vor.u32 %v727, %v731
        %v734 = vshll.u32 %v690, 16
        %v736 = vrot.slane %v734, 1
        %v737 = vsel %vm705, %v732, %v736
        %v739 = vshrl.u32 %v675, 16
        %v741 = vshll.u32 %v675, 16
        %v743 = vrot.slane %v741, 1
        %v744 = vor.u32 %v739, %v743
        %v746 = vshll.u32 %v691, 16
        %v748 = vrot.slane %v746, 1
        %v749 = vsel %vm705, %v744, %v748
        %v751 = vshrl.u32 %v676, 16
        %v753 = vshll.u32 %v676, 16
        %v755 = vrot.slane %v753, 1
        %v756 = vor.u32 %v751, %v755
        %v758 = vshll.u32 %v692, 16
        %v760 = vrot.slane %v758, 1
        %v761 = vsel %vm705, %v756, %v760
        %v763 = vshrl.u32 %v677, 16
        %v765 = vshll.u32 %v677, 16
        %v767 = vrot.slane %v765, 1
        %v768 = vor.u32 %v763, %v767
        %v770 = vshll.u32 %v693, 16
        %v772 = vrot.slane %v770, 1
        %v773 = vsel %vm705, %v768, %v772
        %v775 = vshrl.u32 %v678, 16
        %v777 = vshll.u32 %v678, 16
        %v779 = vrot.slane %v777, 1
        %v780 = vor.u32 %v775, %v779
        %v782 = vshll.u32 %v694, 16
        %v784 = vrot.slane %v782, 1
        %v785 = vsel %vm705, %v780, %v784
        %v787 = vshrl.u32 %v679, 16
        %v789 = vshll.u32 %v679, 16
        %v791 = vrot.slane %v789, 1
        %v792 = vor.u32 %v787, %v791
        %v794 = vshll.u32 %v695, 16
        %v796 = vrot.slane %v794, 1
        %v797 = vsel %vm705, %v792, %v796
        %v799 = vshrl.u32 %v680, 16
        %v801 = vshll.u32 %v680, 16
        %v803 = vrot.slane %v801, 1
        %v804 = vor.u32 %v799, %v803
        %v806 = vshll.u32 %v696, 16
        %v808 = vrot.slane %v806, 1
        %v809 = vsel %vm705, %v804, %v808
        %v811 = vshrl.u32 %v681, 16
        %v813 = vshll.u32 %v681, 16
        %v815 = vrot.slane %v813, 1
        %v816 = vor.u32 %v811, %v815
        %v818 = vshll.u32 %v697, 16
        %v820 = vrot.slane %v818, 1
        %v821 = vsel %vm705, %v816, %v820
        %v823 = vshrl.u32 %v682, 16
        %v825 = vshll.u32 %v682, 16
        %v827 = vrot.slane %v825, 1
        %v828 = vor.u32 %v823, %v827
        %v830 = vshll.u32 %v698, 16
        %v832 = vrot.slane %v830, 1
        %v833 = vsel %vm705, %v828, %v832
        %v835 = vshrl.u32 %v683, 16
        %v837 = vshll.u32 %v683, 16
        %v839 = vrot.slane %v837, 1
        %v840 = vor.u32 %v835, %v839
        %v842 = vshll.u32 %v699, 16
        %v844 = vrot.slane %v842, 1
        %v845 = vsel %vm705, %v840, %v844
        %v847 = vshrl.u32 %v684, 16
        %v849 = vshll.u32 %v684, 16
        %v851 = vrot.slane %v849, 1
        %v852 = vor.u32 %v847, %v851
        %v854 = vshll.u32 %v700, 16
        %v856 = vrot.slane %v854, 1
        %v857 = vsel %vm705, %v852, %v856
        %v859 = vshrl.u32 %v685, 16
        %v861 = vshll.u32 %v685, 16
        %v863 = vrot.slane %v861, 1
        %v864 = vor.u32 %v859, %v863
        %v866 = vshll.u32 %v701, 16
        %v868 = vrot.slane %v866, 1
        %v869 = vsel %vm705, %v864, %v868
        %v871 = vshrl.u32 %v686, 16
        %v873 = vshll.u32 %v686, 16
        %v875 = vrot.slane %v873, 1
        %v876 = vor.u32 %v871, %v875
        %v878 = vshll.u32 %v702, 16
        %v880 = vrot.slane %v878, 1
        %v881 = vsel %vm705, %v876, %v880
        %v883 = vshrl.u32 %v687, 16
        %v885 = vshll.u32 %v687, 16
        %v887 = vrot.slane %v885, 1
        %v888 = vor.u32 %v883, %v887
        %v890 = vshll.u32 %v703, 16
        %v892 = vrot.slane %v890, 1
        %v893 = vsel %vm705, %v888, %v892
        %894 = vrot.lane.b32.xlu0 %v713, 4
        %v895 = vpop.permute.xlu0 %894
        %896 = vrot.lane.b32.xlu0 %v725, 4
        %v897 = vpop.permute.xlu0 %896
        %898 = vrot.lane.b32.xlu0 %v737, 4
        %v899 = vpop.permute.xlu0 %898
        %900 = vrot.lane.b32.xlu0 %v749, 4
        %v901 = vpop.permute.xlu0 %900
        %902 = vrot.lane.b32.xlu0 %v761, 4
        %v903 = vpop.permute.xlu0 %902
        %904 = vrot.lane.b32.xlu0 %v773, 4
        %v905 = vpop.permute.xlu0 %904
        %906 = vrot.lane.b32.xlu0 %v785, 4
        %v907 = vpop.permute.xlu0 %906
        %908 = vrot.lane.b32.xlu0 %v797, 4
        %v909 = vpop.permute.xlu0 %908
        %910 = vrot.lane.b32.xlu0 %v809, 4
        %v911 = vpop.permute.xlu0 %910
        %912 = vrot.lane.b32.xlu0 %v821, 4
        %v913 = vpop.permute.xlu0 %912
        %914 = vrot.lane.b32.xlu0 %v833, 4
        %v915 = vpop.permute.xlu0 %914
        %916 = vrot.lane.b32.xlu0 %v845, 4
        %v917 = vpop.permute.xlu0 %916
        %918 = vrot.lane.b32.xlu0 %v857, 4
        %v919 = vpop.permute.xlu0 %918
        %920 = vrot.lane.b32.xlu0 %v869, 4
        %v921 = vpop.permute.xlu0 %920
        %922 = vrot.lane.b32.xlu0 %v881, 4
        %v923 = vpop.permute.xlu0 %922
        %924 = vrot.lane.b32.xlu0 %v893, 4
        %v925 = vpop.permute.xlu0 %924
        %vm957 = vcmask 1046528
        %v958 = vrot.slane 0, 1
        %v959 = vsel %vm957, %v958, %v958
        %v960 = vrot.slane %v673, 1
        %v961 = vrot.slane %v689, 1
        %v962 = vsel %vm957, %v960, %v961
        %v963 = vrot.slane %v674, 1
        %v964 = vrot.slane %v690, 1
        %v965 = vsel %vm957, %v963, %v964
        %v966 = vrot.slane %v675, 1
        %v967 = vrot.slane %v691, 1
        %v968 = vsel %vm957, %v966, %v967
        %v969 = vrot.slane %v676, 1
        %v970 = vrot.slane %v692, 1
        %v971 = vsel %vm957, %v969, %v970
        %v972 = vrot.slane %v677, 1
        %v973 = vrot.slane %v693, 1
        %v974 = vsel %vm957, %v972, %v973
        %v975 = vrot.slane %v678, 1
        %v976 = vrot.slane %v694, 1
        %v977 = vsel %vm957, %v975, %v976
        %v978 = vrot.slane %v679, 1
        %v979 = vrot.slane %v695, 1
        %v980 = vsel %vm957, %v978, %v979
        %v981 = vrot.slane %v680, 1
        %v982 = vrot.slane %v696, 1
        %v983 = vsel %vm957, %v981, %v982
        %v984 = vrot.slane %v681, 1
        %v985 = vrot.slane %v697, 1
        %v986 = vsel %vm957, %v984, %v985
        %v987 = vrot.slane %v682, 1
        %v988 = vrot.slane %v698, 1
        %v989 = vsel %vm957, %v987, %v988
        %v990 = vrot.slane %v683, 1
        %v991 = vrot.slane %v699, 1
        %v992 = vsel %vm957, %v990, %v991
        %v993 = vrot.slane %v684, 1
        %v994 = vrot.slane %v700, 1
        %v995 = vsel %vm957, %v993, %v994
        %v996 = vrot.slane %v685, 1
        %v997 = vrot.slane %v701, 1
        %v998 = vsel %vm957, %v996, %v997
        %v999 = vrot.slane %v686, 1
        %v1000 = vrot.slane %v702, 1
        %v1001 = vsel %vm957, %v999, %v1000
        %v1002 = vrot.slane %v687, 1
        %v1003 = vrot.slane %v703, 1
        %v1004 = vsel %vm957, %v1002, %v1003
        %1005 = vrot.lane.b32.xlu0 %v959, 8
        %v1006 = vpop.permute.xlu0 %1005
        %1007 = vrot.lane.b32.xlu0 %v962, 8
        %v1008 = vpop.permute.xlu0 %1007
        %1009 = vrot.lane.b32.xlu0 %v965, 8
        %v1010 = vpop.permute.xlu0 %1009
        %1011 = vrot.lane.b32.xlu0 %v968, 8
        %v1012 = vpop.permute.xlu0 %1011
        %1013 = vrot.lane.b32.xlu0 %v971, 8
        %v1014 = vpop.permute.xlu0 %1013
        %1015 = vrot.lane.b32.xlu0 %v974, 8
        %v1016 = vpop.permute.xlu0 %1015
        %1017 = vrot.lane.b32.xlu0 %v977, 8
        %v1018 = vpop.permute.xlu0 %1017
        %1019 = vrot.lane.b32.xlu0 %v980, 8
        %v1020 = vpop.permute.xlu0 %1019
        %1021 = vrot.lane.b32.xlu0 %v983, 8
        %v1022 = vpop.permute.xlu0 %1021
        %1023 = vrot.lane.b32.xlu0 %v986, 8
        %v1024 = vpop.permute.xlu0 %1023
        %1025 = vrot.lane.b32.xlu0 %v989, 8
        %v1026 = vpop.permute.xlu0 %1025
        %1027 = vrot.lane.b32.xlu0 %v992, 8
        %v1028 = vpop.permute.xlu0 %1027
        %1029 = vrot.lane.b32.xlu0 %v995, 8
        %v1030 = vpop.permute.xlu0 %1029
        %1031 = vrot.lane.b32.xlu0 %v998, 8
        %v1032 = vpop.permute.xlu0 %1031
        %1033 = vrot.lane.b32.xlu0 %v1001, 8
        %v1034 = vpop.permute.xlu0 %1033
        %1035 = vrot.lane.b32.xlu0 %v1004, 8
        %v1036 = vpop.permute.xlu0 %1035
        %1038 = vrot.lane.b32.xlu0 %v673, 12
        %v1039 = vpop.permute.xlu0 %1038
        %1040 = vrot.lane.b32.xlu0 %v674, 12
        %v1041 = vpop.permute.xlu0 %1040
        %1042 = vrot.lane.b32.xlu0 %v675, 12
        %v1043 = vpop.permute.xlu0 %1042
        %1044 = vrot.lane.b32.xlu0 %v676, 12
        %v1045 = vpop.permute.xlu0 %1044
        %1046 = vrot.lane.b32.xlu0 %v677, 12
        %v1047 = vpop.permute.xlu0 %1046
        %1048 = vrot.lane.b32.xlu0 %v678, 12
        %v1049 = vpop.permute.xlu0 %1048
        %1050 = vrot.lane.b32.xlu0 %v679, 12
        %v1051 = vpop.permute.xlu0 %1050
        %1052 = vrot.lane.b32.xlu0 %v680, 12
        %v1053 = vpop.permute.xlu0 %1052
        %1054 = vrot.lane.b32.xlu0 %v681, 12
        %v1055 = vpop.permute.xlu0 %1054
        %1056 = vrot.lane.b32.xlu0 %v682, 12
        %v1057 = vpop.permute.xlu0 %1056
        %1058 = vrot.lane.b32.xlu0 %v683, 12
        %v1059 = vpop.permute.xlu0 %1058
        %1060 = vrot.lane.b32.xlu0 %v684, 12
        %v1061 = vpop.permute.xlu0 %1060
        %1062 = vrot.lane.b32.xlu0 %v685, 12
        %v1063 = vpop.permute.xlu0 %1062
        %1064 = vrot.lane.b32.xlu0 %v686, 12
        %v1065 = vpop.permute.xlu0 %1064
        %1066 = vrot.lane.b32.xlu0 %v687, 12
        %v1067 = vpop.permute.xlu0 %1066
        %1068 = vrot.lane.b32.xlu0 %v688, 12
        %v1069 = vpop.permute.xlu0 %1068
        %v1071 = vshrl.u32 %v688, 16
        %v1073 = vshll.u32 %v688, 16
        %v1075 = vrot.slane %v1073, 1
        %v1076 = vor.u32 %v1071, %v1075
        %v1078 = vshll.u32 %v704, 16
        %v1080 = vrot.slane %v1078, 1
        %v1081 = vsel %vm705, %v1076, %v1080
        %1082 = vrot.lane.b32.xlu0 %v725, 16
        %v1083 = vpop.permute.xlu0 %1082
        %1084 = vrot.lane.b32.xlu0 %v737, 16
        %v1085 = vpop.permute.xlu0 %1084
        %1086 = vrot.lane.b32.xlu0 %v749, 16
        %v1087 = vpop.permute.xlu0 %1086
        %1088 = vrot.lane.b32.xlu0 %v761, 16
        %v1089 = vpop.permute.xlu0 %1088
        %1090 = vrot.lane.b32.xlu0 %v773, 16
        %v1091 = vpop.permute.xlu0 %1090
        %1092 = vrot.lane.b32.xlu0 %v785, 16
        %v1093 = vpop.permute.xlu0 %1092
        %1094 = vrot.lane.b32.xlu0 %v797, 16
        %v1095 = vpop.permute.xlu0 %1094
        %1096 = vrot.lane.b32.xlu0 %v809, 16
        %v1097 = vpop.permute.xlu0 %1096
        %1098 = vrot.lane.b32.xlu0 %v821, 16
        %v1099 = vpop.permute.xlu0 %1098
        %1100 = vrot.lane.b32.xlu0 %v833, 16
        %v1101 = vpop.permute.xlu0 %1100
        %1102 = vrot.lane.b32.xlu0 %v845, 16
        %v1103 = vpop.permute.xlu0 %1102
        %1104 = vrot.lane.b32.xlu0 %v857, 16
        %v1105 = vpop.permute.xlu0 %1104
        %1106 = vrot.lane.b32.xlu0 %v869, 16
        %v1107 = vpop.permute.xlu0 %1106
        %1108 = vrot.lane.b32.xlu0 %v881, 16
        %v1109 = vpop.permute.xlu0 %1108
        %1110 = vrot.lane.b32.xlu0 %v893, 16
        %v1111 = vpop.permute.xlu0 %1110
        %1112 = vrot.lane.b32.xlu0 %v1081, 16
        %v1113 = vpop.permute.xlu0 %1112
        %v1115 = vrot.slane %v688, 1
        %v1116 = vrot.slane %v704, 1
        %v1117 = vsel %vm957, %v1115, %v1116
        %1118 = vrot.lane.b32.xlu0 %v962, 20
        %v1119 = vpop.permute.xlu0 %1118
        %1120 = vrot.lane.b32.xlu0 %v965, 20
        %v1121 = vpop.permute.xlu0 %1120
        %1122 = vrot.lane.b32.xlu0 %v968, 20
        %v1123 = vpop.permute.xlu0 %1122
        %1124 = vrot.lane.b32.xlu0 %v971, 20
        %v1125 = vpop.permute.xlu0 %1124
        %1126 = vrot.lane.b32.xlu0 %v974, 20
        %v1127 = vpop.permute.xlu0 %1126
        %1128 = vrot.lane.b32.xlu0 %v977, 20
        %v1129 = vpop.permute.xlu0 %1128
        %1130 = vrot.lane.b32.xlu0 %v980, 20
        %v1131 = vpop.permute.xlu0 %1130
        %1132 = vrot.lane.b32.xlu0 %v983, 20
        %v1133 = vpop.permute.xlu0 %1132
        %1134 = vrot.lane.b32.xlu0 %v986, 20
        %v1135 = vpop.permute.xlu0 %1134
        %1136 = vrot.lane.b32.xlu0 %v989, 20
        %v1137 = vpop.permute.xlu0 %1136
        %1138 = vrot.lane.b32.xlu0 %v992, 20
        %v1139 = vpop.permute.xlu0 %1138
        %1140 = vrot.lane.b32.xlu0 %v995, 20
        %v1141 = vpop.permute.xlu0 %1140
        %1142 = vrot.lane.b32.xlu0 %v998, 20
        %v1143 = vpop.permute.xlu0 %1142
        %1144 = vrot.lane.b32.xlu0 %v1001, 20
        %v1145 = vpop.permute.xlu0 %1144
        %1146 = vrot.lane.b32.xlu0 %v1004, 20
        %v1147 = vpop.permute.xlu0 %1146
        %1148 = vrot.lane.b32.xlu0 %v1117, 20
        %v1149 = vpop.permute.xlu0 %1148
        %1150 = vrot.lane.b32.xlu0 %v674, 24
        %v1151 = vpop.permute.xlu0 %1150
        %1152 = vrot.lane.b32.xlu0 %v675, 24
        %v1153 = vpop.permute.xlu0 %1152
        %1154 = vrot.lane.b32.xlu0 %v676, 24
        %v1155 = vpop.permute.xlu0 %1154
        %1156 = vrot.lane.b32.xlu0 %v677, 24
        %v1157 = vpop.permute.xlu0 %1156
        %1158 = vrot.lane.b32.xlu0 %v678, 24
        %v1159 = vpop.permute.xlu0 %1158
        %1160 = vrot.lane.b32.xlu0 %v679, 24
        %v1161 = vpop.permute.xlu0 %1160
        %1162 = vrot.lane.b32.xlu0 %v680, 24
        %v1163 = vpop.permute.xlu0 %1162
        %1164 = vrot.lane.b32.xlu0 %v681, 24
        %v1165 = vpop.permute.xlu0 %1164
        %1166 = vrot.lane.b32.xlu0 %v682, 24
        %v1167 = vpop.permute.xlu0 %1166
        %1168 = vrot.lane.b32.xlu0 %v683, 24
        %v1169 = vpop.permute.xlu0 %1168
        %1170 = vrot.lane.b32.xlu0 %v684, 24
        %v1171 = vpop.permute.xlu0 %1170
        %1172 = vrot.lane.b32.xlu0 %v685, 24
        %v1173 = vpop.permute.xlu0 %1172
        %1174 = vrot.lane.b32.xlu0 %v686, 24
        %v1175 = vpop.permute.xlu0 %1174
        %1176 = vrot.lane.b32.xlu0 %v687, 24
        %v1177 = vpop.permute.xlu0 %1176
        %1178 = vrot.lane.b32.xlu0 %v688, 24
        %v1179 = vpop.permute.xlu0 %1178
        %1180 = vrot.lane.b32.xlu0 0, 24
        %v1181 = vpop.permute.xlu0 %1180
        %1182 = vrot.lane.b32.xlu0 %v737, 28
        %v1183 = vpop.permute.xlu0 %1182
        %1184 = vrot.lane.b32.xlu0 %v749, 28
        %v1185 = vpop.permute.xlu0 %1184
        %1186 = vrot.lane.b32.xlu0 %v761, 28
        %v1187 = vpop.permute.xlu0 %1186
        %1188 = vrot.lane.b32.xlu0 %v773, 28
        %v1189 = vpop.permute.xlu0 %1188
        %1190 = vrot.lane.b32.xlu0 %v785, 28
        %v1191 = vpop.permute.xlu0 %1190
        %1192 = vrot.lane.b32.xlu0 %v797, 28
        %v1193 = vpop.permute.xlu0 %1192
        %1194 = vrot.lane.b32.xlu0 %v809, 28
        %v1195 = vpop.permute.xlu0 %1194
        %1196 = vrot.lane.b32.xlu0 %v821, 28
        %v1197 = vpop.permute.xlu0 %1196
        %1198 = vrot.lane.b32.xlu0 %v833, 28
        %v1199 = vpop.permute.xlu0 %1198
        %1200 = vrot.lane.b32.xlu0 %v845, 28
        %v1201 = vpop.permute.xlu0 %1200
        %1202 = vrot.lane.b32.xlu0 %v857, 28
        %v1203 = vpop.permute.xlu0 %1202
        %1204 = vrot.lane.b32.xlu0 %v869, 28
        %v1205 = vpop.permute.xlu0 %1204
        %1206 = vrot.lane.b32.xlu0 %v881, 28
        %v1207 = vpop.permute.xlu0 %1206
        %1208 = vrot.lane.b32.xlu0 %v893, 28
        %v1209 = vpop.permute.xlu0 %1208
        %1210 = vrot.lane.b32.xlu0 %v1081, 28
        %v1211 = vpop.permute.xlu0 %1210
        %1212 = vrot.lane.b32.xlu0 %v713, 28
        %v1213 = vpop.permute.xlu0 %1212
        %1214 = vrot.lane.b32.xlu0 %v965, 32
        %v1215 = vpop.permute.xlu0 %1214
        %1216 = vrot.lane.b32.xlu0 %v968, 32
        %v1217 = vpop.permute.xlu0 %1216
        %1218 = vrot.lane.b32.xlu0 %v971, 32
        %v1219 = vpop.permute.xlu0 %1218
        %1220 = vrot.lane.b32.xlu0 %v974, 32
        %v1221 = vpop.permute.xlu0 %1220
        %1222 = vrot.lane.b32.xlu0 %v977, 32
        %v1223 = vpop.permute.xlu0 %1222
        %1224 = vrot.lane.b32.xlu0 %v980, 32
        %v1225 = vpop.permute.xlu0 %1224
        %1226 = vrot.lane.b32.xlu0 %v983, 32
        %v1227 = vpop.permute.xlu0 %1226
        %1228 = vrot.lane.b32.xlu0 %v986, 32
        %v1229 = vpop.permute.xlu0 %1228
        %1230 = vrot.lane.b32.xlu0 %v989, 32
        %v1231 = vpop.permute.xlu0 %1230
        %1232 = vrot.lane.b32.xlu0 %v992, 32
        %v1233 = vpop.permute.xlu0 %1232
        %1234 = vrot.lane.b32.xlu0 %v995, 32
        %v1235 = vpop.permute.xlu0 %1234
        %1236 = vrot.lane.b32.xlu0 %v998, 32
        %v1237 = vpop.permute.xlu0 %1236
        %1238 = vrot.lane.b32.xlu0 %v1001, 32
        %v1239 = vpop.permute.xlu0 %1238
        %1240 = vrot.lane.b32.xlu0 %v1004, 32
        %v1241 = vpop.permute.xlu0 %1240
        %1242 = vrot.lane.b32.xlu0 %v1117, 32
        %v1243 = vpop.permute.xlu0 %1242
        %1244 = vrot.lane.b32.xlu0 %v959, 32
        %v1245 = vpop.permute.xlu0 %1244
        %vm1246 = vcmask 31744
        %v1248 = vsel %vm1246, 0, %v895
        %v1250 = vsel %vm1246, %v673, %v897
        %v1252 = vsel %vm1246, %v674, %v899
        %v1254 = vsel %vm1246, %v675, %v901
        %v1256 = vsel %vm1246, %v676, %v903
        %v1258 = vsel %vm1246, %v677, %v905
        %v1260 = vsel %vm1246, %v678, %v907
        %v1262 = vsel %vm1246, %v679, %v909
        %v1264 = vsel %vm1246, %v680, %v911
        %v1266 = vsel %vm1246, %v681, %v913
        %v1268 = vsel %vm1246, %v682, %v915
        %v1270 = vsel %vm1246, %v683, %v917
        %v1272 = vsel %vm1246, %v684, %v919
        %v1274 = vsel %vm1246, %v685, %v921
        %v1276 = vsel %vm1246, %v686, %v923
        %v1278 = vsel %vm1246, %v687, %v925
        %vm1279 = vcmask 64512
        %v1281 = vsel %vm1279, %v1248, %v1006
        %v1283 = vsel %vm1279, %v1250, %v1008
        %v1285 = vsel %vm1279, %v1252, %v1010
        %v1287 = vsel %vm1279, %v1254, %v1012
        %v1289 = vsel %vm1279, %v1256, %v1014
        %v1291 = vsel %vm1279, %v1258, %v1016
        %v1293 = vsel %vm1279, %v1260, %v1018
        %v1295 = vsel %vm1279, %v1262, %v1020
        %v1297 = vsel %vm1279, %v1264, %v1022
        %v1299 = vsel %vm1279, %v1266, %v1024
        %v1301 = vsel %vm1279, %v1268, %v1026
        %v1303 = vsel %vm1279, %v1270, %v1028
        %v1305 = vsel %vm1279, %v1272, %v1030
        %v1307 = vsel %vm1279, %v1274, %v1032
        %v1309 = vsel %vm1279, %v1276, %v1034
        %v1311 = vsel %vm1279, %v1278, %v1036
        %vm1312 = vcmask 97280
        %v1314 = vsel %vm1312, %v1281, %v1039
        %v1316 = vsel %vm1312, %v1283, %v1041
        %v1318 = vsel %vm1312, %v1285, %v1043
        %v1320 = vsel %vm1312, %v1287, %v1045
        %v1322 = vsel %vm1312, %v1289, %v1047
        %v1324 = vsel %vm1312, %v1291, %v1049
        %v1326 = vsel %vm1312, %v1293, %v1051
        %v1328 = vsel %vm1312, %v1295, %v1053
        %v1330 = vsel %vm1312, %v1297, %v1055
        %v1332 = vsel %vm1312, %v1299, %v1057
        %v1334 = vsel %vm1312, %v1301, %v1059
        %v1336 = vsel %vm1312, %v1303, %v1061
        %v1338 = vsel %vm1312, %v1305, %v1063
        %v1340 = vsel %vm1312, %v1307, %v1065
        %v1342 = vsel %vm1312, %v1309, %v1067
        %v1344 = vsel %vm1312, %v1311, %v1069
        %vm1345 = vcmask 130048
        %v1347 = vsel %vm1345, %v1314, %v1083
        %v1349 = vsel %vm1345, %v1316, %v1085
        %v1351 = vsel %vm1345, %v1318, %v1087
        %v1353 = vsel %vm1345, %v1320, %v1089
        %v1355 = vsel %vm1345, %v1322, %v1091
        %v1357 = vsel %vm1345, %v1324, %v1093
        %v1359 = vsel %vm1345, %v1326, %v1095
        %v1361 = vsel %vm1345, %v1328, %v1097
        %v1363 = vsel %vm1345, %v1330, %v1099
        %v1365 = vsel %vm1345, %v1332, %v1101
        %v1367 = vsel %vm1345, %v1334, %v1103
        %v1369 = vsel %vm1345, %v1336, %v1105
        %v1371 = vsel %vm1345, %v1338, %v1107
        %v1373 = vsel %vm1345, %v1340, %v1109
        %v1375 = vsel %vm1345, %v1342, %v1111
        %v1377 = vsel %vm1345, %v1344, %v1113
        %vm1378 = vcmask 162816
        %v1380 = vsel %vm1378, %v1347, %v1119
        %v1382 = vsel %vm1378, %v1349, %v1121
        %v1384 = vsel %vm1378, %v1351, %v1123
        %v1386 = vsel %vm1378, %v1353, %v1125
        %v1388 = vsel %vm1378, %v1355, %v1127
        %v1390 = vsel %vm1378, %v1357, %v1129
        %v1392 = vsel %vm1378, %v1359, %v1131
        %v1394 = vsel %vm1378, %v1361, %v1133
        %v1396 = vsel %vm1378, %v1363, %v1135
        %v1398 = vsel %vm1378, %v1365, %v1137
        %v1400 = vsel %vm1378, %v1367, %v1139
        %v1402 = vsel %vm1378, %v1369, %v1141
        %v1404 = vsel %vm1378, %v1371, %v1143
        %v1406 = vsel %vm1378, %v1373, %v1145
        %v1408 = vsel %vm1378, %v1375, %v1147
        %v1410 = vsel %vm1378, %v1377, %v1149
        %vm1411 = vcmask 195584
        %v1413 = vsel %vm1411, %v1380, %v1151
        %v1415 = vsel %vm1411, %v1382, %v1153
        %v1417 = vsel %vm1411, %v1384, %v1155
        %v1419 = vsel %vm1411, %v1386, %v1157
        %v1421 = vsel %vm1411, %v1388, %v1159
        %v1423 = vsel %vm1411, %v1390, %v1161
        %v1425 = vsel %vm1411, %v1392, %v1163
        %v1427 = vsel %vm1411, %v1394, %v1165
        %v1429 = vsel %vm1411, %v1396, %v1167
        %v1431 = vsel %vm1411, %v1398, %v1169
        %v1433 = vsel %vm1411, %v1400, %v1171
        %v1435 = vsel %vm1411, %v1402, %v1173
        %v1437 = vsel %vm1411, %v1404, %v1175
        %v1439 = vsel %vm1411, %v1406, %v1177
        %v1441 = vsel %vm1411, %v1408, %v1179
        %v1443 = vsel %vm1411, %v1410, %v1181
        %vm1444 = vcmask 228352
        %v1446 = vsel %vm1444, %v1413, %v1183
        %v1448 = vsel %vm1444, %v1415, %v1185
        %v1450 = vsel %vm1444, %v1417, %v1187
        %v1452 = vsel %vm1444, %v1419, %v1189
        %v1454 = vsel %vm1444, %v1421, %v1191
        %v1456 = vsel %vm1444, %v1423, %v1193
        %v1458 = vsel %vm1444, %v1425, %v1195
        %v1460 = vsel %vm1444, %v1427, %v1197
        %v1462 = vsel %vm1444, %v1429, %v1199
        %v1464 = vsel %vm1444, %v1431, %v1201
        %v1466 = vsel %vm1444, %v1433, %v1203
        %v1468 = vsel %vm1444, %v1435, %v1205
        %v1470 = vsel %vm1444, %v1437, %v1207
        %v1472 = vsel %vm1444, %v1439, %v1209
        %v1474 = vsel %vm1444, %v1441, %v1211
        %v1476 = vsel %vm1444, %v1443, %v1213
        %vm1477 = vcmask 261120
        %v1479 = vsel %vm1477, %v1446, %v1215
        %v1481 = vsel %vm1477, %v1448, %v1217
        %v1483 = vsel %vm1477, %v1450, %v1219
        %v1485 = vsel %vm1477, %v1452, %v1221
        %v1487 = vsel %vm1477, %v1454, %v1223
        %v1489 = vsel %vm1477, %v1456, %v1225
        %v1491 = vsel %vm1477, %v1458, %v1227
        %v1493 = vsel %vm1477, %v1460, %v1229
        %v1495 = vsel %vm1477, %v1462, %v1231
        %v1497 = vsel %vm1477, %v1464, %v1233
        %v1499 = vsel %vm1477, %v1466, %v1235
        %v1501 = vsel %vm1477, %v1468, %v1237
        %v1503 = vsel %vm1477, %v1470, %v1239
        %v1505 = vsel %vm1477, %v1472, %v1241
        %v1507 = vsel %vm1477, %v1474, %v1243
        %v1509 = vsel %vm1477, %v1476, %v1245
        %v1510 = vld [vmem:[%s1] sm:$0xf]
        %v1511 = vld [vmem:[%s1 + $0x4] sm:$0xf]
        %v1512 = vld [vmem:[%s1 + $0x8] sm:$0xf]
        %v1513 = vld [vmem:[%s1 + $0xc] sm:$0xf]
        %v1514 = vld [vmem:[%s1 + $0x10] sm:$0x3]
        %v1515 = vld [vmem:[#allocation2] sm:$0x1]
        %v1517 = vlaneseq
        %v1518 = vshrl.u32 %v1517, 7
        %v1519 = vsub.s32 0, %v1518
        %v1520 = vrot.slane %v1515, %v1519
        %v1527 = vunpack.c.l.b16 %v1510
        %v1528 = vunpack.c.l.b16 %v1511
        %v1529 = vunpack.c.l.b16 %v1512
        %v1530 = vunpack.c.l.b16 %v1513
        %v1531 = vunpack.c.l.b16 %v1514
        %v1532 = vpack.c.b16 %v1528, %v1527
        %v1533 = vpack.c.b16 %v1530, %v1529
        %v1534 = vpack.c.b16 %v1531, %v1531
        %vm1537 = vcmask 293888
        %v1538 = vsel %vm1537, %v1479, 0
        %v1540 = vsel %vm1537, %v1481, 0
        %v1542 = vsel %vm1537, %v1483, 0
        %v1544 = vsel %vm1537, %v1485, 0
        %v1546 = vsel %vm1537, %v1487, 0
        %v1548 = vsel %vm1537, %v1489, 0
        %v1550 = vsel %vm1537, %v1491, 0
        %v1552 = vsel %vm1537, %v1493, 0
        %v1554 = vsel %vm1537, %v1495, 0
        %v1556 = vsel %vm1537, %v1497, 0
        %v1558 = vsel %vm1537, %v1499, 0
        %v1560 = vsel %vm1537, %v1501, 0
        %v1562 = vsel %vm1537, %v1503, 0
        %v1564 = vsel %vm1537, %v1505, 0
        %v1566 = vsel %vm1537, %v1507, 0
        %v1568 = vsel %vm1537, %v1509, 0
        %vm1570 = vcmask 1041408
        %v1572 = vsel %vm1570, %v1534, 0
        %1574 = vmatprep.subr.bf16.mxu0 0
        %1575 = vmatpush1.bf16.msra.mxu0 %v1532
        %1576 = vmatprep.subr.bf16.mxu0 0
        %1577 = vmatpush1.bf16.msra.mxu0 %v1533
        %1578 = vmatprep.subr.bf16.mxu0 0
        %1579 = vmatpush1.bf16.msra.mxu0 %v1572
        %1580 = vmatprep.subr.bf16.mxu0 0
        %1581 = vmatpush1.bf16.msra.mxu0 0
        %1582 = vmatprep.subr.bf16.mxu0 0
        %1583 = vmatpush1.bf16.msra.mxu0 0
        %1584 = vmatprep.subr.bf16.mxu0 0
        %1585 = vmatpush1.bf16.msra.mxu0 0
        %1586 = vmatprep.subr.bf16.mxu0 0
        %1587 = vmatpush1.bf16.msra.mxu0 0
        %1588 = vmatprep.subr.bf16.mxu0 0
        %1589 = vmatpush1.bf16.msra.mxu0 0
        %1590 = vmatprep.subr.bf16.mxu0 0
        %1591 = vmatpush1.bf16.msra.mxu0 0
        %1592 = vmatprep.subr.bf16.mxu0 0
        %1593 = vmatpush1.bf16.msra.mxu0 0
        %1594 = vmatprep.subr.bf16.mxu0 0
        %1595 = vmatpush1.bf16.msra.mxu0 0
        %1596 = vmatprep.subr.bf16.mxu0 0
        %1597 = vmatpush1.bf16.msra.mxu0 0
        %1598 = vmatprep.subr.bf16.mxu0 0
        %1599 = vmatpush1.bf16.msra.mxu0 0
        %1600 = vmatprep.subr.bf16.mxu0 0
        %1601 = vmatpush1.bf16.msra.mxu0 0
        %1602 = vmatprep.subr.bf16.mxu0 0
        %1603 = vmatpush1.bf16.msra.mxu0 0
        %1604 = vmatprep.subr.bf16.mxu0 0
        %1605 = vmatpush1.bf16.msra.mxu0 0
        %1606 = vmatprep.mubr.bf16.mxu0 0
        %1607 = vmatmul.mubr.bf16.gmra.mrb[0].mxu0 %v1538
        %v1608 = vpop.f32.mrb[0].mxu0
        %v1609 = vadd.f32 %v1520, %v1608
        %v1610 = vpop.f32.mrb[0].mxu0
        %v1611 = vpop.f32.mrb[0].mxu0
        %v1612 = vadd.f32 %v1520, %v1611
        %v1613 = vpop.f32.mrb[0].mxu0
        %1614 = vmatprep.mubr.bf16.mxu0 0
        %1615 = vmatmul.mubr.bf16.gmra.mrb[0].mxu0 %v1540
        %v1616 = vpop.f32.mrb[0].mxu0
        %v1617 = vadd.f32 %v1520, %v1616
        %v1618 = vpop.f32.mrb[0].mxu0
        %v1619 = vpop.f32.mrb[0].mxu0
        %v1620 = vadd.f32 %v1520, %v1619
        %v1621 = vpop.f32.mrb[0].mxu0
        %1622 = vmatprep.mubr.bf16.mxu0 0
        %1623 = vmatmul.mubr.bf16.gmra.mrb[0].mxu0 %v1542
        %v1624 = vpop.f32.mrb[0].mxu0
        %v1625 = vadd.f32 %v1520, %v1624
        %v1626 = vpop.f32.mrb[0].mxu0
        %v1627 = vpop.f32.mrb[0].mxu0
        %v1628 = vadd.f32 %v1520, %v1627
        %v1629 = vpop.f32.mrb[0].mxu0
        %1630 = vmatprep.mubr.bf16.mxu0 0
        %1631 = vmatmul.mubr.bf16.gmra.mrb[0].mxu0 %v1544
        %v1632 = vpop.f32.mrb[0].mxu0
        %v1633 = vadd.f32 %v1520, %v1632
        %v1634 = vpop.f32.mrb[0].mxu0
        %v1635 = vpop.f32.mrb[0].mxu0
        %v1636 = vadd.f32 %v1520, %v1635
        %v1637 = vpop.f32.mrb[0].mxu0
        %1638 = vmatprep.mubr.bf16.mxu0 0
        %1639 = vmatmul.mubr.bf16.gmra.mrb[0].mxu0 %v1546
        %v1640 = vpop.f32.mrb[0].mxu0
        %v1641 = vadd.f32 %v1520, %v1640
        %v1642 = vpop.f32.mrb[0].mxu0
        %v1643 = vpop.f32.mrb[0].mxu0
        %v1644 = vadd.f32 %v1520, %v1643
        %v1645 = vpop.f32.mrb[0].mxu0
        %1646 = vmatprep.mubr.bf16.mxu0 0
        %1647 = vmatmul.mubr.bf16.gmra.mrb[0].mxu0 %v1548
        %v1648 = vpop.f32.mrb[0].mxu0
        %v1649 = vadd.f32 %v1520, %v1648
        %v1650 = vpop.f32.mrb[0].mxu0
        %v1651 = vpop.f32.mrb[0].mxu0
        %v1652 = vadd.f32 %v1520, %v1651
        %v1653 = vpop.f32.mrb[0].mxu0
        %1654 = vmatprep.mubr.bf16.mxu0 0
        %1655 = vmatmul.mubr.bf16.gmra.mrb[0].mxu0 %v1550
        %v1656 = vpop.f32.mrb[0].mxu0
        %v1657 = vadd.f32 %v1520, %v1656
        %v1658 = vpop.f32.mrb[0].mxu0
        %v1659 = vpop.f32.mrb[0].mxu0
        %v1660 = vadd.f32 %v1520, %v1659
        %v1661 = vpop.f32.mrb[0].mxu0
        %1662 = vmatprep.mubr.bf16.mxu0 0
        %1663 = vmatmul.mubr.bf16.gmra.mrb[0].mxu0 %v1552
        %v1664 = vpop.f32.mrb[0].mxu0
        %v1665 = vadd.f32 %v1520, %v1664
        %v1666 = vpop.f32.mrb[0].mxu0
        %v1667 = vpop.f32.mrb[0].mxu0
        %v1668 = vadd.f32 %v1520, %v1667
        %v1669 = vpop.f32.mrb[0].mxu0
        %1670 = vmatprep.mubr.bf16.mxu0 0
        %1671 = vmatmul.mubr.bf16.gmra.mrb[0].mxu0 %v1554
        %v1672 = vpop.f32.mrb[0].mxu0
        %v1673 = vadd.f32 %v1520, %v1672
        %v1674 = vpop.f32.mrb[0].mxu0
        %v1675 = vpop.f32.mrb[0].mxu0
        %v1676 = vadd.f32 %v1520, %v1675
        %v1677 = vpop.f32.mrb[0].mxu0
        %1678 = vmatprep.mubr.bf16.mxu0 0
        %1679 = vmatmul.mubr.bf16.gmra.mrb[0].mxu0 %v1556
        %v1680 = vpop.f32.mrb[0].mxu0
        %v1681 = vadd.f32 %v1520, %v1680
        %v1682 = vpop.f32.mrb[0].mxu0
        %v1683 = vpop.f32.mrb[0].mxu0
        %v1684 = vadd.f32 %v1520, %v1683
        %v1685 = vpop.f32.mrb[0].mxu0
        %1686 = vmatprep.mubr.bf16.mxu0 0
        %1687 = vmatmul.mubr.bf16.gmra.mrb[0].mxu0 %v1558
        %v1688 = vpop.f32.mrb[0].mxu0
        %v1689 = vadd.f32 %v1520, %v1688
        %v1690 = vpop.f32.mrb[0].mxu0
        %v1691 = vpop.f32.mrb[0].mxu0
        %v1692 = vadd.f32 %v1520, %v1691
        %v1693 = vpop.f32.mrb[0].mxu0
        %1694 = vmatprep.mubr.bf16.mxu0 0
        %1695 = vmatmul.mubr.bf16.gmra.mrb[0].mxu0 %v1560
        %v1696 = vpop.f32.mrb[0].mxu0
        %v1697 = vadd.f32 %v1520, %v1696
        %v1698 = vpop.f32.mrb[0].mxu0
        %v1699 = vpop.f32.mrb[0].mxu0
        %v1700 = vadd.f32 %v1520, %v1699
        %v1701 = vpop.f32.mrb[0].mxu0
        %1702 = vmatprep.mubr.bf16.mxu0 0
        %1703 = vmatmul.mubr.bf16.gmra.mrb[0].mxu0 %v1562
        %v1704 = vpop.f32.mrb[0].mxu0
        %v1705 = vadd.f32 %v1520, %v1704
        %v1706 = vpop.f32.mrb[0].mxu0
        %v1707 = vpop.f32.mrb[0].mxu0
        %v1708 = vadd.f32 %v1520, %v1707
        %v1709 = vpop.f32.mrb[0].mxu0
        %1710 = vmatprep.mubr.bf16.mxu0 0
        %1711 = vmatmul.mubr.bf16.gmra.mrb[0].mxu0 %v1564
        %v1712 = vpop.f32.mrb[0].mxu0
        %v1713 = vadd.f32 %v1520, %v1712
        %v1714 = vpop.f32.mrb[0].mxu0
        %v1715 = vpop.f32.mrb[0].mxu0
        %v1716 = vadd.f32 %v1520, %v1715
        %v1717 = vpop.f32.mrb[0].mxu0
        %1718 = vmatprep.mubr.bf16.mxu0 0
        %1719 = vmatmul.mubr.bf16.gmra.mrb[0].mxu0 %v1566
        %v1720 = vpop.f32.mrb[0].mxu0
        %v1721 = vadd.f32 %v1520, %v1720
        %v1722 = vpop.f32.mrb[0].mxu0
        %v1723 = vpop.f32.mrb[0].mxu0
        %v1724 = vadd.f32 %v1520, %v1723
        %v1725 = vpop.f32.mrb[0].mxu0
        %1726 = vmatprep.mubr.bf16.mxu0 0
        %1727 = vmatmul.mubr.bf16.gmra.mrb[0].mxu0 %v1568
        %v1728 = vpop.f32.mrb[0].mxu0
        %v1729 = vadd.f32 %v1520, %v1728
        %v1730 = vpop.f32.mrb[0].mxu0
        %v1731 = vpop.f32.mrb[0].mxu0
        %v1732 = vadd.f32 %v1520, %v1731
        %v1733 = vpop.f32.mrb[0].mxu0
        %1734 = vdwg.mxu0
        %v1735 = vmax.f32 %v1609, 0.0
        %v1736 = vmax.f32 %v1612, 0.0
        %v1737 = vmax.f32 %v1617, 0.0
        %v1738 = vmax.f32 %v1620, 0.0
        %v1739 = vmax.f32 %v1625, 0.0
        %v1740 = vmax.f32 %v1628, 0.0
        %v1741 = vmax.f32 %v1633, 0.0
        %v1742 = vmax.f32 %v1636, 0.0
        %v1743 = vmax.f32 %v1641, 0.0
        %v1744 = vmax.f32 %v1644, 0.0
        %v1745 = vmax.f32 %v1649, 0.0
        %v1746 = vmax.f32 %v1652, 0.0
        %v1747 = vmax.f32 %v1657, 0.0
        %v1748 = vmax.f32 %v1660, 0.0
        %v1749 = vmax.f32 %v1665, 0.0
        %v1750 = vmax.f32 %v1668, 0.0
        %v1751 = vmax.f32 %v1673, 0.0
        %v1752 = vmax.f32 %v1676, 0.0
        %v1753 = vmax.f32 %v1681, 0.0
        %v1754 = vmax.f32 %v1684, 0.0
        %v1755 = vmax.f32 %v1689, 0.0
        %v1756 = vmax.f32 %v1692, 0.0
        %v1757 = vmax.f32 %v1697, 0.0
        %v1758 = vmax.f32 %v1700, 0.0
        %v1759 = vmax.f32 %v1705, 0.0
        %v1760 = vmax.f32 %v1708, 0.0
        %v1761 = vmax.f32 %v1713, 0.0
        %v1762 = vmax.f32 %v1716, 0.0
        %v1763 = vmax.f32 %v1721, 0.0
        %v1764 = vmax.f32 %v1724, 0.0
        %v1765 = vmax.f32 %v1729, 0.0
        %v1766 = vmax.f32 %v1732, 0.0
        %v1767 = vpack.c.bf16 %v1736, %v1735
        %v1768 = vpack.c.bf16 %v1738, %v1737
        %v1769 = vpack.c.bf16 %v1740, %v1739
        %v1770 = vpack.c.bf16 %v1742, %v1741
        %v1771 = vpack.c.bf16 %v1744, %v1743
        %v1772 = vpack.c.bf16 %v1746, %v1745
        %v1773 = vpack.c.bf16 %v1748, %v1747
        %v1774 = vpack.c.bf16 %v1750, %v1749
        %v1775 = vpack.c.bf16 %v1752, %v1751
        %v1776 = vpack.c.bf16 %v1754, %v1753
        %v1777 = vpack.c.bf16 %v1756, %v1755
        %v1778 = vpack.c.bf16 %v1758, %v1757
        %v1779 = vpack.c.bf16 %v1760, %v1759
        %v1780 = vpack.c.bf16 %v1762, %v1761
        %v1781 = vpack.c.bf16 %v1764, %v1763
        %v1782 = vpack.c.bf16 %v1766, %v1765
        %v1784 = vshrl.u32 %v1767, 16
        %v1786 = vrot.slane %v1784, 7
        %v1787 = vshll.u32 %v1767, 16
        %v1789 = vor.u32 %v1786, %v1787
        %v1791 = vshrl.u32 %v1768, 16
        %v1793 = vrot.slane %v1791, 7
        %v1794 = vshll.u32 %v1768, 16
        %v1796 = vor.u32 %v1793, %v1794
        %v1798 = vshrl.u32 %v1769, 16
        %v1800 = vrot.slane %v1798, 7
        %v1801 = vshll.u32 %v1769, 16
        %v1803 = vor.u32 %v1800, %v1801
        %v1805 = vshrl.u32 %v1770, 16
        %v1807 = vrot.slane %v1805, 7
        %v1808 = vshll.u32 %v1770, 16
        %v1810 = vor.u32 %v1807, %v1808
        %v1812 = vshrl.u32 %v1771, 16
        %v1814 = vrot.slane %v1812, 7
        %v1815 = vshll.u32 %v1771, 16
        %v1817 = vor.u32 %v1814, %v1815
        %v1819 = vshrl.u32 %v1772, 16
        %v1821 = vrot.slane %v1819, 7
        %v1822 = vshll.u32 %v1772, 16
        %v1824 = vor.u32 %v1821, %v1822
        %v1826 = vshrl.u32 %v1773, 16
        %v1828 = vrot.slane %v1826, 7
        %v1829 = vshll.u32 %v1773, 16
        %v1831 = vor.u32 %v1828, %v1829
        %v1833 = vshrl.u32 %v1774, 16
        %v1835 = vrot.slane %v1833, 7
        %v1836 = vshll.u32 %v1774, 16
        %v1838 = vor.u32 %v1835, %v1836
        %v1840 = vshrl.u32 %v1775, 16
        %v1842 = vrot.slane %v1840, 7
        %v1843 = vshll.u32 %v1775, 16
        %v1845 = vor.u32 %v1842, %v1843
        %v1847 = vshrl.u32 %v1776, 16
        %v1849 = vrot.slane %v1847, 7
        %v1850 = vshll.u32 %v1776, 16
        %v1852 = vor.u32 %v1849, %v1850
        %v1854 = vshrl.u32 %v1777, 16
        %v1856 = vrot.slane %v1854, 7
        %v1857 = vshll.u32 %v1777, 16
        %v1859 = vor.u32 %v1856, %v1857
        %v1861 = vshrl.u32 %v1778, 16
        %v1863 = vrot.slane %v1861, 7
        %v1864 = vshll.u32 %v1778, 16
        %v1866 = vor.u32 %v1863, %v1864
        %v1868 = vshrl.u32 %v1779, 16
        %v1870 = vrot.slane %v1868, 7
        %v1871 = vshll.u32 %v1779, 16
        %v1873 = vor.u32 %v1870, %v1871
        %v1875 = vshrl.u32 %v1780, 16
        %v1877 = vrot.slane %v1875, 7
        %v1878 = vshll.u32 %v1780, 16
        %v1880 = vor.u32 %v1877, %v1878
        %v1882 = vshrl.u32 %v1781, 16
        %v1884 = vrot.slane %v1882, 7
        %v1885 = vshll.u32 %v1781, 16
        %v1887 = vor.u32 %v1884, %v1885
        %v1889 = vshrl.u32 %v1782, 16
        %v1891 = vrot.slane %v1889, 7
        %v1892 = vshll.u32 %v1782, 16
        %v1894 = vor.u32 %v1891, %v1892
        %v1927 = vsel %vm672, 0, %v1789
        %v1928 = vsel %vm672, 0, %v1796
        %v1929 = vsel %vm672, 0, %v1803
        %v1930 = vsel %vm672, 0, %v1810
        %v1931 = vsel %vm672, 0, %v1817
        %v1932 = vsel %vm672, 0, %v1824
        %v1933 = vsel %vm672, 0, %v1831
        %v1934 = vsel %vm672, 0, %v1838
        %v1935 = vsel %vm672, 0, %v1845
        %v1936 = vsel %vm672, 0, %v1852
        %v1937 = vsel %vm672, 0, %v1859
        %v1938 = vsel %vm672, 0, %v1866
        %v1939 = vsel %vm672, 0, %v1873
        %v1940 = vsel %vm672, 0, %v1880
        %v1941 = vsel %vm672, 0, %v1887
        %v1942 = vsel %vm672, 0, %v1894
        %v1943 = vsel %vm672, %v1786, 0
        %v1944 = vsel %vm672, %v1793, 0
        %v1945 = vsel %vm672, %v1800, 0
        %v1946 = vsel %vm672, %v1807, 0
        %v1947 = vsel %vm672, %v1814, 0
        %v1948 = vsel %vm672, %v1821, 0
        %v1949 = vsel %vm672, %v1828, 0
        %v1950 = vsel %vm672, %v1835, 0
        %v1951 = vsel %vm672, %v1842, 0
        %v1952 = vsel %vm672, %v1849, 0
        %v1953 = vsel %vm672, %v1856, 0
        %v1954 = vsel %vm672, %v1863, 0
        %v1955 = vsel %vm672, %v1870, 0
        %v1956 = vsel %vm672, %v1877, 0
        %v1957 = vsel %vm672, %v1884, 0
        %v1958 = vsel %vm672, %v1891, 0
        %v1960 = vshrl.u32 %v1927, 16
        %v1962 = vshll.u32 %v1927, 16
        %v1964 = vrot.slane %v1962, 1
        %v1965 = vor.u32 %v1960, %v1964
        %v1967 = vshll.u32 %v1943, 16
        %v1969 = vrot.slane %v1967, 1
        %v1970 = vsel %vm705, %v1965, %v1969
        %v1972 = vshrl.u32 %v1928, 16
        %v1974 = vshll.u32 %v1928, 16
        %v1976 = vrot.slane %v1974, 1
        %v1977 = vor.u32 %v1972, %v1976
        %v1979 = vshll.u32 %v1944, 16
        %v1981 = vrot.slane %v1979, 1
        %v1982 = vsel %vm705, %v1977, %v1981
        %v1984 = vshrl.u32 %v1929, 16
        %v1986 = vshll.u32 %v1929, 16
        %v1988 = vrot.slane %v1986, 1
        %v1989 = vor.u32 %v1984, %v1988
        %v1991 = vshll.u32 %v1945, 16
        %v1993 = vrot.slane %v1991, 1
        %v1994 = vsel %vm705, %v1989, %v1993
        %v1996 = vshrl.u32 %v1930, 16
        %v1998 = vshll.u32 %v1930, 16
        %v2000 = vrot.slane %v1998, 1
        %v2001 = vor.u32 %v1996, %v2000
        %v2003 = vshll.u32 %v1946, 16
        %v2005 = vrot.slane %v2003, 1
        %v2006 = vsel %vm705, %v2001, %v2005
        %v2008 = vshrl.u32 %v1931, 16
        %v2010 = vshll.u32 %v1931, 16
        %v2012 = vrot.slane %v2010, 1
        %v2013 = vor.u32 %v2008, %v2012
        %v2015 = vshll.u32 %v1947, 16
        %v2017 = vrot.slane %v2015, 1
        %v2018 = vsel %vm705, %v2013, %v2017
        %v2020 = vshrl.u32 %v1932, 16
        %v2022 = vshll.u32 %v1932, 16
        %v2024 = vrot.slane %v2022, 1
        %v2025 = vor.u32 %v2020, %v2024
        %v2027 = vshll.u32 %v1948, 16
        %v2029 = vrot.slane %v2027, 1
        %v2030 = vsel %vm705, %v2025, %v2029
        %v2032 = vshrl.u32 %v1933, 16
        %v2034 = vshll.u32 %v1933, 16
        %v2036 = vrot.slane %v2034, 1
        %v2037 = vor.u32 %v2032, %v2036
        %v2039 = vshll.u32 %v1949, 16
        %v2041 = vrot.slane %v2039, 1
        %v2042 = vsel %vm705, %v2037, %v2041
        %v2044 = vshrl.u32 %v1934, 16
        %v2046 = vshll.u32 %v1934, 16
        %v2048 = vrot.slane %v2046, 1
        %v2049 = vor.u32 %v2044, %v2048
        %v2051 = vshll.u32 %v1950, 16
        %v2053 = vrot.slane %v2051, 1
        %v2054 = vsel %vm705, %v2049, %v2053
        %v2056 = vshrl.u32 %v1935, 16
        %v2058 = vshll.u32 %v1935, 16
        %v2060 = vrot.slane %v2058, 1
        %v2061 = vor.u32 %v2056, %v2060
        %v2063 = vshll.u32 %v1951, 16
        %v2065 = vrot.slane %v2063, 1
        %v2066 = vsel %vm705, %v2061, %v2065
        %v2068 = vshrl.u32 %v1936, 16
        %v2070 = vshll.u32 %v1936, 16
        %v2072 = vrot.slane %v2070, 1
        %v2073 = vor.u32 %v2068, %v2072
        %v2075 = vshll.u32 %v1952, 16
        %v2077 = vrot.slane %v2075, 1
        %v2078 = vsel %vm705, %v2073, %v2077
        %v2080 = vshrl.u32 %v1937, 16
        %v2082 = vshll.u32 %v1937, 16
        %v2084 = vrot.slane %v2082, 1
        %v2085 = vor.u32 %v2080, %v2084
        %v2087 = vshll.u32 %v1953, 16
        %v2089 = vrot.slane %v2087, 1
        %v2090 = vsel %vm705, %v2085, %v2089
        %v2092 = vshrl.u32 %v1938, 16
        %v2094 = vshll.u32 %v1938, 16
        %v2096 = vrot.slane %v2094, 1
        %v2097 = vor.u32 %v2092, %v2096
        %v2099 = vshll.u32 %v1954, 16
        %v2101 = vrot.slane %v2099, 1
        %v2102 = vsel %vm705, %v2097, %v2101
        %v2104 = vshrl.u32 %v1939, 16
        %v2106 = vshll.u32 %v1939, 16
        %v2108 = vrot.slane %v2106, 1
        %v2109 = vor.u32 %v2104, %v2108
        %v2111 = vshll.u32 %v1955, 16
        %v2113 = vrot.slane %v2111, 1
        %v2114 = vsel %vm705, %v2109, %v2113
        %v2116 = vshrl.u32 %v1940, 16
        %v2118 = vshll.u32 %v1940, 16
        %v2120 = vrot.slane %v2118, 1
        %v2121 = vor.u32 %v2116, %v2120
        %v2123 = vshll.u32 %v1956, 16
        %v2125 = vrot.slane %v2123, 1
        %v2126 = vsel %vm705, %v2121, %v2125
        %v2128 = vshrl.u32 %v1941, 16
        %v2130 = vshll.u32 %v1941, 16
        %v2132 = vrot.slane %v2130, 1
        %v2133 = vor.u32 %v2128, %v2132
        %v2135 = vshll.u32 %v1957, 16
        %v2137 = vrot.slane %v2135, 1
        %v2138 = vsel %vm705, %v2133, %v2137
        %2139 = vrot.lane.b32.xlu0 %v713, 32
        %v2140 = vpop.permute.xlu0 %2139
        %2141 = vrot.lane.b32.xlu0 %v1970, 32
        %v2142 = vpop.permute.xlu0 %2141
        %2143 = vrot.lane.b32.xlu0 %v1982, 32
        %v2144 = vpop.permute.xlu0 %2143
        %2145 = vrot.lane.b32.xlu0 %v1994, 32
        %v2146 = vpop.permute.xlu0 %2145
        %2147 = vrot.lane.b32.xlu0 %v2006, 32
        %v2148 = vpop.permute.xlu0 %2147
        %2149 = vrot.lane.b32.xlu0 %v2018, 32
        %v2150 = vpop.permute.xlu0 %2149
        %2151 = vrot.lane.b32.xlu0 %v2030, 32
        %v2152 = vpop.permute.xlu0 %2151
        %2153 = vrot.lane.b32.xlu0 %v2042, 32
        %v2154 = vpop.permute.xlu0 %2153
        %2155 = vrot.lane.b32.xlu0 %v2054, 32
        %v2156 = vpop.permute.xlu0 %2155
        %2157 = vrot.lane.b32.xlu0 %v2066, 32
        %v2158 = vpop.permute.xlu0 %2157
        %2159 = vrot.lane.b32.xlu0 %v2078, 32
        %v2160 = vpop.permute.xlu0 %2159
        %2161 = vrot.lane.b32.xlu0 %v2090, 32
        %v2162 = vpop.permute.xlu0 %2161
        %2163 = vrot.lane.b32.xlu0 %v2102, 32
        %v2164 = vpop.permute.xlu0 %2163
        %2165 = vrot.lane.b32.xlu0 %v2114, 32
        %v2166 = vpop.permute.xlu0 %2165
        %2167 = vrot.lane.b32.xlu0 %v2126, 32
        %v2168 = vpop.permute.xlu0 %2167
        %2169 = vrot.lane.b32.xlu0 %v2138, 32
        %v2170 = vpop.permute.xlu0 %2169
        %v2201 = vrot.slane %v1927, 1
        %v2202 = vrot.slane %v1943, 1
        %v2203 = vsel %vm957, %v2201, %v2202
        %v2204 = vrot.slane %v1928, 1
        %v2205 = vrot.slane %v1944, 1
        %v2206 = vsel %vm957, %v2204, %v2205
        %v2207 = vrot.slane %v1929, 1
        %v2208 = vrot.slane %v1945, 1
        %v2209 = vsel %vm957, %v2207, %v2208
        %v2210 = vrot.slane %v1930, 1
        %v2211 = vrot.slane %v1946, 1
        %v2212 = vsel %vm957, %v2210, %v2211
        %v2213 = vrot.slane %v1931, 1
        %v2214 = vrot.slane %v1947, 1
        %v2215 = vsel %vm957, %v2213, %v2214
        %v2216 = vrot.slane %v1932, 1
        %v2217 = vrot.slane %v1948, 1
        %v2218 = vsel %vm957, %v2216, %v2217
        %v2219 = vrot.slane %v1933, 1
        %v2220 = vrot.slane %v1949, 1
        %v2221 = vsel %vm957, %v2219, %v2220
        %v2222 = vrot.slane %v1934, 1
        %v2223 = vrot.slane %v1950, 1
        %v2224 = vsel %vm957, %v2222, %v2223
        %v2225 = vrot.slane %v1935, 1
        %v2226 = vrot.slane %v1951, 1
        %v2227 = vsel %vm957, %v2225, %v2226
        %v2228 = vrot.slane %v1936, 1
        %v2229 = vrot.slane %v1952, 1
        %v2230 = vsel %vm957, %v2228, %v2229
        %v2231 = vrot.slane %v1937, 1
        %v2232 = vrot.slane %v1953, 1
        %v2233 = vsel %vm957, %v2231, %v2232
        %v2234 = vrot.slane %v1938, 1
        %v2235 = vrot.slane %v1954, 1
        %v2236 = vsel %vm957, %v2234, %v2235
        %v2237 = vrot.slane %v1939, 1
        %v2238 = vrot.slane %v1955, 1
        %v2239 = vsel %vm957, %v2237, %v2238
        %v2240 = vrot.slane %v1940, 1
        %v2241 = vrot.slane %v1956, 1
        %v2242 = vsel %vm957, %v2240, %v2241
        %v2243 = vrot.slane %v1941, 1
        %v2244 = vrot.slane %v1957, 1
        %v2245 = vsel %vm957, %v2243, %v2244
        %2246 = vrot.lane.b32.xlu0 %v959, 64
        %v2247 = vpop.permute.xlu0 %2246
        %2248 = vrot.lane.b32.xlu0 %v2203, 64
        %v2249 = vpop.permute.xlu0 %2248
        %2250 = vrot.lane.b32.xlu0 %v2206, 64
        %v2251 = vpop.permute.xlu0 %2250
        %2252 = vrot.lane.b32.xlu0 %v2209, 64
        %v2253 = vpop.permute.xlu0 %2252
        %2254 = vrot.lane.b32.xlu0 %v2212, 64
        %v2255 = vpop.permute.xlu0 %2254
        %2256 = vrot.lane.b32.xlu0 %v2215, 64
        %v2257 = vpop.permute.xlu0 %2256
        %2258 = vrot.lane.b32.xlu0 %v2218, 64
        %v2259 = vpop.permute.xlu0 %2258
        %2260 = vrot.lane.b32.xlu0 %v2221, 64
        %v2261 = vpop.permute.xlu0 %2260
        %2262 = vrot.lane.b32.xlu0 %v2224, 64
        %v2263 = vpop.permute.xlu0 %2262
        %2264 = vrot.lane.b32.xlu0 %v2227, 64
        %v2265 = vpop.permute.xlu0 %2264
        %2266 = vrot.lane.b32.xlu0 %v2230, 64
        %v2267 = vpop.permute.xlu0 %2266
        %2268 = vrot.lane.b32.xlu0 %v2233, 64
        %v2269 = vpop.permute.xlu0 %2268
        %2270 = vrot.lane.b32.xlu0 %v2236, 64
        %v2271 = vpop.permute.xlu0 %2270
        %2272 = vrot.lane.b32.xlu0 %v2239, 64
        %v2273 = vpop.permute.xlu0 %2272
        %2274 = vrot.lane.b32.xlu0 %v2242, 64
        %v2275 = vpop.permute.xlu0 %2274
        %2276 = vrot.lane.b32.xlu0 %v2245, 64
        %v2277 = vpop.permute.xlu0 %2276
        %2279 = vrot.lane.b32.xlu0 %v1927, 96
        %v2280 = vpop.permute.xlu0 %2279
        %2281 = vrot.lane.b32.xlu0 %v1928, 96
        %v2282 = vpop.permute.xlu0 %2281
        %2283 = vrot.lane.b32.xlu0 %v1929, 96
        %v2284 = vpop.permute.xlu0 %2283
        %2285 = vrot.lane.b32.xlu0 %v1930, 96
        %v2286 = vpop.permute.xlu0 %2285
        %2287 = vrot.lane.b32.xlu0 %v1931, 96
        %v2288 = vpop.permute.xlu0 %2287
        %2289 = vrot.lane.b32.xlu0 %v1932, 96
        %v2290 = vpop.permute.xlu0 %2289
        %2291 = vrot.lane.b32.xlu0 %v1933, 96
        %v2292 = vpop.permute.xlu0 %2291
        %2293 = vrot.lane.b32.xlu0 %v1934, 96
        %v2294 = vpop.permute.xlu0 %2293
        %2295 = vrot.lane.b32.xlu0 %v1935, 96
        %v2296 = vpop.permute.xlu0 %2295
        %2297 = vrot.lane.b32.xlu0 %v1936, 96
        %v2298 = vpop.permute.xlu0 %2297
        %2299 = vrot.lane.b32.xlu0 %v1937, 96
        %v2300 = vpop.permute.xlu0 %2299
        %2301 = vrot.lane.b32.xlu0 %v1938, 96
        %v2302 = vpop.permute.xlu0 %2301
        %2303 = vrot.lane.b32.xlu0 %v1939, 96
        %v2304 = vpop.permute.xlu0 %2303
        %2305 = vrot.lane.b32.xlu0 %v1940, 96
        %v2306 = vpop.permute.xlu0 %2305
        %2307 = vrot.lane.b32.xlu0 %v1941, 96
        %v2308 = vpop.permute.xlu0 %2307
        %2309 = vrot.lane.b32.xlu0 %v1942, 96
        %v2310 = vpop.permute.xlu0 %2309
        %v2312 = vshrl.u32 %v1942, 16
        %v2314 = vshll.u32 %v1942, 16
        %v2316 = vrot.slane %v2314, 1
        %v2317 = vor.u32 %v2312, %v2316
        %v2319 = vshll.u32 %v1958, 16
        %v2321 = vrot.slane %v2319, 1
        %v2322 = vsel %vm705, %v2317, %v2321
        %v2324 = vrot.slane %v1942, 1
        %v2325 = vrot.slane %v1958, 1
        %v2326 = vsel %vm957, %v2324, %v2325
        %2327 = vrot.lane.b32.xlu0 %v2203, 32
        %v2328 = vpop.permute.xlu0 %2327
        %2329 = vrot.lane.b32.xlu0 %v2206, 32
        %v2330 = vpop.permute.xlu0 %2329
        %2331 = vrot.lane.b32.xlu0 %v2209, 32
        %v2332 = vpop.permute.xlu0 %2331
        %2333 = vrot.lane.b32.xlu0 %v2212, 32
        %v2334 = vpop.permute.xlu0 %2333
        %2335 = vrot.lane.b32.xlu0 %v2215, 32
        %v2336 = vpop.permute.xlu0 %2335
        %2337 = vrot.lane.b32.xlu0 %v2218, 32
        %v2338 = vpop.permute.xlu0 %2337
        %2339 = vrot.lane.b32.xlu0 %v2221, 32
        %v2340 = vpop.permute.xlu0 %2339
        %2341 = vrot.lane.b32.xlu0 %v2224, 32
        %v2342 = vpop.permute.xlu0 %2341
        %2343 = vrot.lane.b32.xlu0 %v2227, 32
        %v2344 = vpop.permute.xlu0 %2343
        %2345 = vrot.lane.b32.xlu0 %v2230, 32
        %v2346 = vpop.permute.xlu0 %2345
        %2347 = vrot.lane.b32.xlu0 %v2233, 32
        %v2348 = vpop.permute.xlu0 %2347
        %2349 = vrot.lane.b32.xlu0 %v2236, 32
        %v2350 = vpop.permute.xlu0 %2349
        %2351 = vrot.lane.b32.xlu0 %v2239, 32
        %v2352 = vpop.permute.xlu0 %2351
        %2353 = vrot.lane.b32.xlu0 %v2242, 32
        %v2354 = vpop.permute.xlu0 %2353
        %2355 = vrot.lane.b32.xlu0 %v2245, 32
        %v2356 = vpop.permute.xlu0 %2355
        %2357 = vrot.lane.b32.xlu0 %v2326, 32
        %v2358 = vpop.permute.xlu0 %2357
        %2359 = vrot.lane.b32.xlu0 %v1928, 64
        %v2360 = vpop.permute.xlu0 %2359
        %2361 = vrot.lane.b32.xlu0 %v1929, 64
        %v2362 = vpop.permute.xlu0 %2361
        %2363 = vrot.lane.b32.xlu0 %v1930, 64
        %v2364 = vpop.permute.xlu0 %2363
        %2365 = vrot.lane.b32.xlu0 %v1931, 64
        %v2366 = vpop.permute.xlu0 %2365
        %2367 = vrot.lane.b32.xlu0 %v1932, 64
        %v2368 = vpop.permute.xlu0 %2367
        %2369 = vrot.lane.b32.xlu0 %v1933, 64
        %v2370 = vpop.permute.xlu0 %2369
        %2371 = vrot.lane.b32.xlu0 %v1934, 64
        %v2372 = vpop.permute.xlu0 %2371
        %2373 = vrot.lane.b32.xlu0 %v1935, 64
        %v2374 = vpop.permute.xlu0 %2373
        %2375 = vrot.lane.b32.xlu0 %v1936, 64
        %v2376 = vpop.permute.xlu0 %2375
        %2377 = vrot.lane.b32.xlu0 %v1937, 64
        %v2378 = vpop.permute.xlu0 %2377
        %2379 = vrot.lane.b32.xlu0 %v1938, 64
        %v2380 = vpop.permute.xlu0 %2379
        %2381 = vrot.lane.b32.xlu0 %v1939, 64
        %v2382 = vpop.permute.xlu0 %2381
        %2383 = vrot.lane.b32.xlu0 %v1940, 64
        %v2384 = vpop.permute.xlu0 %2383
        %2385 = vrot.lane.b32.xlu0 %v1941, 64
        %v2386 = vpop.permute.xlu0 %2385
        %2387 = vrot.lane.b32.xlu0 %v1942, 64
        %v2388 = vpop.permute.xlu0 %2387
        %2389 = vrot.lane.b32.xlu0 0, 64
        %v2390 = vpop.permute.xlu0 %2389
        %2391 = vrot.lane.b32.xlu0 %v1982, 96
        %v2392 = vpop.permute.xlu0 %2391
        %2393 = vrot.lane.b32.xlu0 %v1994, 96
        %v2394 = vpop.permute.xlu0 %2393
        %2395 = vrot.lane.b32.xlu0 %v2006, 96
        %v2396 = vpop.permute.xlu0 %2395
        %2397 = vrot.lane.b32.xlu0 %v2018, 96
        %v2398 = vpop.permute.xlu0 %2397
        %2399 = vrot.lane.b32.xlu0 %v2030, 96
        %v2400 = vpop.permute.xlu0 %2399
        %2401 = vrot.lane.b32.xlu0 %v2042, 96
        %v2402 = vpop.permute.xlu0 %2401
        %2403 = vrot.lane.b32.xlu0 %v2054, 96
        %v2404 = vpop.permute.xlu0 %2403
        %2405 = vrot.lane.b32.xlu0 %v2066, 96
        %v2406 = vpop.permute.xlu0 %2405
        %2407 = vrot.lane.b32.xlu0 %v2078, 96
        %v2408 = vpop.permute.xlu0 %2407
        %2409 = vrot.lane.b32.xlu0 %v2090, 96
        %v2410 = vpop.permute.xlu0 %2409
        %2411 = vrot.lane.b32.xlu0 %v2102, 96
        %v2412 = vpop.permute.xlu0 %2411
        %2413 = vrot.lane.b32.xlu0 %v2114, 96
        %v2414 = vpop.permute.xlu0 %2413
        %2415 = vrot.lane.b32.xlu0 %v2126, 96
        %v2416 = vpop.permute.xlu0 %2415
        %2417 = vrot.lane.b32.xlu0 %v2138, 96
        %v2418 = vpop.permute.xlu0 %2417
        %2419 = vrot.lane.b32.xlu0 %v2322, 96
        %v2420 = vpop.permute.xlu0 %2419
        %2421 = vrot.lane.b32.xlu0 %v713, 96
        %v2422 = vpop.permute.xlu0 %2421
        %v2424 = vsel %vm1477, 0, %v2140
        %v2426 = vsel %vm1477, %v1927, %v2142
        %v2428 = vsel %vm1477, %v1928, %v2144
        %v2430 = vsel %vm1477, %v1929, %v2146
        %v2432 = vsel %vm1477, %v1930, %v2148
        %v2434 = vsel %vm1477, %v1931, %v2150
        %v2436 = vsel %vm1477, %v1932, %v2152
        %v2438 = vsel %vm1477, %v1933, %v2154
        %v2440 = vsel %vm1477, %v1934, %v2156
        %v2442 = vsel %vm1477, %v1935, %v2158
        %v2444 = vsel %vm1477, %v1936, %v2160
        %v2446 = vsel %vm1477, %v1937, %v2162
        %v2448 = vsel %vm1477, %v1938, %v2164
        %v2450 = vsel %vm1477, %v1939, %v2166
        %v2452 = vsel %vm1477, %v1940, %v2168
        %v2454 = vsel %vm1477, %v1941, %v2170
        %vm2455 = vcmask 523264
        %v2457 = vsel %vm2455, %v2424, %v2247
        %v2459 = vsel %vm2455, %v2426, %v2249
        %v2461 = vsel %vm2455, %v2428, %v2251
        %v2463 = vsel %vm2455, %v2430, %v2253
        %v2465 = vsel %vm2455, %v2432, %v2255
        %v2467 = vsel %vm2455, %v2434, %v2257
        %v2469 = vsel %vm2455, %v2436, %v2259
        %v2471 = vsel %vm2455, %v2438, %v2261
        %v2473 = vsel %vm2455, %v2440, %v2263
        %v2475 = vsel %vm2455, %v2442, %v2265
        %v2477 = vsel %vm2455, %v2444, %v2267
        %v2479 = vsel %vm2455, %v2446, %v2269
        %v2481 = vsel %vm2455, %v2448, %v2271
        %v2483 = vsel %vm2455, %v2450, %v2273
        %v2485 = vsel %vm2455, %v2452, %v2275
        %v2487 = vsel %vm2455, %v2454, %v2277
        %vm2488 = vcmask 785408
        %v2490 = vsel %vm2488, %v2457, %v2280
        %v2493 = vsel %vm2488, %v2459, %v2282
        %v2496 = vsel %vm2488, %v2461, %v2284
        %v2499 = vsel %vm2488, %v2463, %v2286
        %v2502 = vsel %vm2488, %v2465, %v2288
        %v2505 = vsel %vm2488, %v2467, %v2290
        %v2508 = vsel %vm2488, %v2469, %v2292
        %v2511 = vsel %vm2488, %v2471, %v2294
        %v2514 = vsel %vm2488, %v2473, %v2296
        %v2517 = vsel %vm2488, %v2475, %v2298
        %v2520 = vsel %vm2488, %v2477, %v2300
        %v2523 = vsel %vm2488, %v2479, %v2302
        %v2526 = vsel %vm2488, %v2481, %v2304
        %v2529 = vsel %vm2488, %v2483, %v2306
        %v2532 = vsel %vm2488, %v2485, %v2308
        %v2535 = vsel %vm2488, %v2487, %v2310
        %v2539 = vsel %vm1477, %v1970, %v2328
        %v2542 = vsel %vm1477, %v1982, %v2330
        %v2545 = vsel %vm1477, %v1994, %v2332
        %v2548 = vsel %vm1477, %v2006, %v2334
        %v2551 = vsel %vm1477, %v2018, %v2336
        %v2554 = vsel %vm1477, %v2030, %v2338
        %v2557 = vsel %vm1477, %v2042, %v2340
        %v2560 = vsel %vm1477, %v2054, %v2342
        %v2563 = vsel %vm1477, %v2066, %v2344
        %v2566 = vsel %vm1477, %v2078, %v2346
        %v2569 = vsel %vm1477, %v2090, %v2348
        %v2572 = vsel %vm1477, %v2102, %v2350
        %v2575 = vsel %vm1477, %v2114, %v2352
        %v2578 = vsel %vm1477, %v2126, %v2354
        %v2581 = vsel %vm1477, %v2138, %v2356
        %v2584 = vsel %vm1477, %v2322, %v2358
        %v2586 = vsel %vm2455, %v2539, %v2360
        %v2588 = vsel %vm2455, %v2542, %v2362
        %v2590 = vsel %vm2455, %v2545, %v2364
        %v2592 = vsel %vm2455, %v2548, %v2366
        %v2594 = vsel %vm2455, %v2551, %v2368
        %v2596 = vsel %vm2455, %v2554, %v2370
        %v2598 = vsel %vm2455, %v2557, %v2372
        %v2600 = vsel %vm2455, %v2560, %v2374
        %v2602 = vsel %vm2455, %v2563, %v2376
        %v2604 = vsel %vm2455, %v2566, %v2378
        %v2606 = vsel %vm2455, %v2569, %v2380
        %v2608 = vsel %vm2455, %v2572, %v2382
        %v2610 = vsel %vm2455, %v2575, %v2384
        %v2612 = vsel %vm2455, %v2578, %v2386
        %v2614 = vsel %vm2455, %v2581, %v2388
        %v2616 = vsel %vm2455, %v2584, %v2390
        %v2618 = vsel %vm2488, %v2586, %v2392
        %v2621 = vsel %vm2488, %v2588, %v2394
        %v2624 = vsel %vm2488, %v2590, %v2396
        %v2627 = vsel %vm2488, %v2592, %v2398
        %v2630 = vsel %vm2488, %v2594, %v2400
        %v2633 = vsel %vm2488, %v2596, %v2402
        %v2636 = vsel %vm2488, %v2598, %v2404
        %v2639 = vsel %vm2488, %v2600, %v2406
        %v2642 = vsel %vm2488, %v2602, %v2408
        %v2645 = vsel %vm2488, %v2604, %v2410
        %v2648 = vsel %vm2488, %v2606, %v2412
        %v2651 = vsel %vm2488, %v2608, %v2414
        %v2654 = vsel %vm2488, %v2610, %v2416
        %v2657 = vsel %vm2488, %v2612, %v2418
        %v2660 = vsel %vm2488, %v2614, %v2420
        %v2663 = vsel %vm2488, %v2616, %v2422
        %v2665 = vld [vmem:[%s3] sm:$0xf]
        %v2666 = vld [vmem:[%s3 + $0x4] sm:$0xf]
        %v2667 = vld [vmem:[%s3 + $0x8] sm:$0xf]
        %v2668 = vld [vmem:[%s3 + $0xc] sm:$0xf]
        %v2669 = vld [vmem:[%s3 + $0x10] sm:$0xf]
        %v2670 = vld [vmem:[%s3 + $0x14] sm:$0xf]
        %v2671 = vld [vmem:[%s3 + $0x18] sm:$0xf]
        %v2672 = vld [vmem:[%s3 + $0x1c] sm:$0xf]
        %v2673 = vld [vmem:[%s3 + $0x20] sm:$0xf]
        %v2674 = vld [vmem:[%s3 + $0x24] sm:$0xf]
        %v2675 = vld [vmem:[%s3 + $0x28] sm:$0xf]
        %v2676 = vld [vmem:[%s3 + $0x2c] sm:$0xf]
        %v2677 = vld [vmem:[%s3 + $0x30] sm:$0xf]
        %v2678 = vld [vmem:[%s3 + $0x34] sm:$0xf]
        %v2679 = vld [vmem:[%s3 + $0x38] sm:$0xf]
        %v2680 = vld [vmem:[%s3 + $0x3c] sm:$0xf]
        %v2681 = vld [vmem:[%s3 + $0x40] sm:$0xf]
        %v2682 = vld [vmem:[%s3 + $0x44] sm:$0xf]
        %v2683 = vld [vmem:[%s3 + $0x48] sm:$0xf]
        %v2684 = vld [vmem:[%s3 + $0x4c] sm:$0xf]
        %v2685 = vld [vmem:[%s3 + $0x50] sm:$0xf]
        %v2686 = vld [vmem:[%s3 + $0x54] sm:$0xf]
        %v2687 = vld [vmem:[%s3 + $0x58] sm:$0xf]
        %v2688 = vld [vmem:[%s3 + $0x5c] sm:$0xf]
        %v2689 = vld [vmem:[%s3 + $0x60] sm:$0xf]
        %v2690 = vld [vmem:[%s3 + $0x64] sm:$0xf]
        %v2691 = vld [vmem:[%s3 + $0x68] sm:$0xf]
        %v2692 = vld [vmem:[%s3 + $0x6c] sm:$0xf]
        %v2693 = vld [vmem:[%s3 + $0x70] sm:$0xf]
        %v2694 = vld [vmem:[%s3 + $0x74] sm:$0xf]
        %v2695 = vld [vmem:[%s3 + $0x78] sm:$0xf]
        %v2696 = vld [vmem:[%s3 + $0x7c] sm:$0xf]
        %v2697 = vld [vmem:[%s3 + $0x80] sm:$0xf]
        %v2698 = vld [vmem:[%s3 + $0x84] sm:$0xf]
        %v2699 = vld [vmem:[%s3 + $0x88] sm:$0xf]
        %v2700 = vld [vmem:[%s3 + $0x8c] sm:$0xf]
        %v2701 = vld [vmem:[#allocation4] sm:$0x1]
        %v2703 = vlaneseq
        %v2704 = vshrl.u32 %v2703, 7
        %v2705 = vsub.s32 0, %v2704
        %v2706 = vrot.slane %v2701, %v2705
        %v2744 = vunpack.c.l.b16 %v2665
        %v2745 = vunpack.c.l.b16 %v2666
        %v2746 = vunpack.c.l.b16 %v2667
        %v2747 = vunpack.c.l.b16 %v2668
        %v2748 = vunpack.c.l.b16 %v2669
        %v2749 = vunpack.c.l.b16 %v2670
        %v2750 = vunpack.c.l.b16 %v2671
        %v2751 = vunpack.c.l.b16 %v2672
        %v2752 = vunpack.c.l.b16 %v2673
        %v2753 = vunpack.c.l.b16 %v2674
        %v2754 = vunpack.c.l.b16 %v2675
        %v2755 = vunpack.c.l.b16 %v2676
        %v2756 = vunpack.c.l.b16 %v2677
        %v2757 = vunpack.c.l.b16 %v2678
        %v2758 = vunpack.c.l.b16 %v2679
        %v2759 = vunpack.c.l.b16 %v2680
        %v2760 = vunpack.c.l.b16 %v2681
        %v2761 = vunpack.c.l.b16 %v2682
        %v2762 = vunpack.c.l.b16 %v2683
        %v2763 = vunpack.c.l.b16 %v2684
        %v2764 = vunpack.c.l.b16 %v2685
        %v2765 = vunpack.c.l.b16 %v2686
        %v2766 = vunpack.c.l.b16 %v2687
        %v2767 = vunpack.c.l.b16 %v2688
        %v2768 = vunpack.c.l.b16 %v2689
        %v2769 = vunpack.c.l.b16 %v2690
        %v2770 = vunpack.c.l.b16 %v2691
        %v2771 = vunpack.c.l.b16 %v2692
        %v2772 = vunpack.c.l.b16 %v2693
        %v2773 = vunpack.c.l.b16 %v2694
        %v2774 = vunpack.c.l.b16 %v2695
        %v2775 = vunpack.c.l.b16 %v2696
        %v2776 = vunpack.c.l.b16 %v2697
        %v2777 = vunpack.c.l.b16 %v2698
        %v2778 = vunpack.c.l.b16 %v2699
        %v2779 = vunpack.c.l.b16 %v2700
        %v2780 = vpack.c.b16 %v2745, %v2744
        %v2781 = vpack.c.b16 %v2747, %v2746
        %v2782 = vpack.c.b16 %v2749, %v2748
        %v2783 = vpack.c.b16 %v2751, %v2750
        %v2784 = vpack.c.b16 %v2753, %v2752
        %v2785 = vpack.c.b16 %v2755, %v2754
        %v2786 = vpack.c.b16 %v2757, %v2756
        %v2787 = vpack.c.b16 %v2759, %v2758
        %v2788 = vpack.c.b16 %v2761, %v2760
        %v2789 = vpack.c.b16 %v2763, %v2762
        %v2790 = vpack.c.b16 %v2765, %v2764
        %v2791 = vpack.c.b16 %v2767, %v2766
        %v2792 = vpack.c.b16 %v2769, %v2768
        %v2793 = vpack.c.b16 %v2771, %v2770
        %v2794 = vpack.c.b16 %v2773, %v2772
        %v2795 = vpack.c.b16 %v2775, %v2774
        %v2796 = vpack.c.b16 %v2777, %v2776
        %v2797 = vpack.c.b16 %v2779, %v2778
        %v2817 = vsel %vm1477, %v2206, 0
        %v2820 = vsel %vm1477, %v2209, 0
        %v2823 = vsel %vm1477, %v2212, 0
        %v2826 = vsel %vm1477, %v2215, 0
        %v2829 = vsel %vm1477, %v2218, 0
        %v2832 = vsel %vm1477, %v2221, 0
        %v2835 = vsel %vm1477, %v2224, 0
        %v2838 = vsel %vm1477, %v2227, 0
        %v2841 = vsel %vm1477, %v2230, 0
        %v2844 = vsel %vm1477, %v2233, 0
        %v2847 = vsel %vm1477, %v2236, 0
        %v2850 = vsel %vm1477, %v2239, 0
        %v2853 = vsel %vm1477, %v2242, 0
        %v2856 = vsel %vm1477, %v2245, 0
        %v2859 = vsel %vm1477, %v2326, 0
        %v2862 = vsel %vm1477, %v959, 0
        %2864 = vmatprep.subr.bf16.mxu0 0
        %2865 = vmatpush1.bf16.msra.mxu0 %v2780
        %2866 = vmatprep.subr.bf16.mxu0 0
        %2867 = vmatpush1.bf16.msra.mxu0 %v2781
        %2868 = vmatprep.subr.bf16.mxu0 0
        %2869 = vmatpush1.bf16.msra.mxu0 %v2782
        %2870 = vmatprep.subr.bf16.mxu0 0
        %2871 = vmatpush1.bf16.msra.mxu0 %v2783
        %2872 = vmatprep.subr.bf16.mxu0 0
        %2873 = vmatpush1.bf16.msra.mxu0 %v2784
        %2874 = vmatprep.subr.bf16.mxu0 0
        %2875 = vmatpush1.bf16.msra.mxu0 %v2785
        %2876 = vmatprep.subr.bf16.mxu0 0
        %2877 = vmatpush1.bf16.msra.mxu0 %v2786
        %2878 = vmatprep.subr.bf16.mxu0 0
        %2879 = vmatpush1.bf16.msra.mxu0 %v2787
        %2880 = vmatprep.subr.bf16.mxu0 0
        %2881 = vmatpush1.bf16.msra.mxu0 %v2788
        %2882 = vmatprep.subr.bf16.mxu0 0
        %2883 = vmatpush1.bf16.msra.mxu0 %v2789
        %2884 = vmatprep.subr.bf16.mxu0 0
        %2885 = vmatpush1.bf16.msra.mxu0 %v2790
        %2886 = vmatprep.subr.bf16.mxu0 0
        %2887 = vmatpush1.bf16.msra.mxu0 %v2791
        %2888 = vmatprep.subr.bf16.mxu0 0
        %2889 = vmatpush1.bf16.msra.mxu0 %v2792
        %2890 = vmatprep.subr.bf16.mxu0 0
        %2891 = vmatpush1.bf16.msra.mxu0 %v2793
        %2892 = vmatprep.subr.bf16.mxu0 0
        %2893 = vmatpush1.bf16.msra.mxu0 %v2794
        %2894 = vmatprep.subr.bf16.mxu0 0
        %2895 = vmatpush1.bf16.msra.mxu0 %v2795
        %2896 = vmatprep.mubr.bf16.mxu0 %v2618
        %2897 = vmatmul.mubr.bf16.gmra.mrb[0].mxu0 %v2490
        %v2898 = vpop.f32.mrb[0].mxu0
        %v2899 = vadd.f32 %v2706, %v2898
        %v2900 = vpop.f32.mrb[0].mxu0
        %v2901 = vpop.f32.mrb[0].mxu0
        %v2902 = vadd.f32 %v2706, %v2901
        %v2903 = vpop.f32.mrb[0].mxu0
        %2904 = vmatprep.mubr.bf16.mxu0 %v2621
        %2905 = vmatmul.mubr.bf16.gmra.mrb[0].mxu0 %v2493
        %v2906 = vpop.f32.mrb[0].mxu0
        %v2907 = vadd.f32 %v2706, %v2906
        %v2908 = vpop.f32.mrb[0].mxu0
        %v2909 = vpop.f32.mrb[0].mxu0
        %v2910 = vadd.f32 %v2706, %v2909
        %v2911 = vpop.f32.mrb[0].mxu0
        %2912 = vmatprep.mubr.bf16.mxu0 %v2624
        %2913 = vmatmul.mubr.bf16.gmra.mrb[0].mxu0 %v2496
        %v2914 = vpop.f32.mrb[0].mxu0
        %v2915 = vadd.f32 %v2706, %v2914
        %v2916 = vpop.f32.mrb[0].mxu0
        %v2917 = vpop.f32.mrb[0].mxu0
        %v2918 = vadd.f32 %v2706, %v2917
        %v2919 = vpop.f32.mrb[0].mxu0
        %2920 = vmatprep.mubr.bf16.mxu0 %v2627
        %2921 = vmatmul.mubr.bf16.gmra.mrb[0].mxu0 %v2499
        %v2922 = vpop.f32.mrb[0].mxu0
        %v2923 = vadd.f32 %v2706, %v2922
        %v2924 = vpop.f32.mrb[0].mxu0
        %v2925 = vpop.f32.mrb[0].mxu0
        %v2926 = vadd.f32 %v2706, %v2925
        %v2927 = vpop.f32.mrb[0].mxu0
        %2928 = vmatprep.mubr.bf16.mxu0 %v2630
        %2929 = vmatmul.mubr.bf16.gmra.mrb[0].mxu0 %v2502
        %v2930 = vpop.f32.mrb[0].mxu0
        %v2931 = vadd.f32 %v2706, %v2930
        %v2932 = vpop.f32.mrb[0].mxu0
        %v2933 = vpop.f32.mrb[0].mxu0
        %v2934 = vadd.f32 %v2706, %v2933
        %v2935 = vpop.f32.mrb[0].mxu0
        %2936 = vmatprep.mubr.bf16.mxu0 %v2633
        %2937 = vmatmul.mubr.bf16.gmra.mrb[0].mxu0 %v2505
        %v2938 = vpop.f32.mrb[0].mxu0
        %v2939 = vadd.f32 %v2706, %v2938
        %v2940 = vpop.f32.mrb[0].mxu0
        %v2941 = vpop.f32.mrb[0].mxu0
        %v2942 = vadd.f32 %v2706, %v2941
        %v2943 = vpop.f32.mrb[0].mxu0
        %2944 = vmatprep.mubr.bf16.mxu0 %v2636
        %2945 = vmatmul.mubr.bf16.gmra.mrb[0].mxu0 %v2508
        %v2946 = vpop.f32.mrb[0].mxu0
        %v2947 = vadd.f32 %v2706, %v2946
        %v2948 = vpop.f32.mrb[0].mxu0
        %v2949 = vpop.f32.mrb[0].mxu0
        %v2950 = vadd.f32 %v2706, %v2949
        %v2951 = vpop.f32.mrb[0].mxu0
        %2952 = vmatprep.mubr.bf16.mxu0 %v2639
        %2953 = vmatmul.mubr.bf16.gmra.mrb[0].mxu0 %v2511
        %v2954 = vpop.f32.mrb[0].mxu0
        %v2955 = vadd.f32 %v2706, %v2954
        %v2956 = vpop.f32.mrb[0].mxu0
        %v2957 = vpop.f32.mrb[0].mxu0
        %v2958 = vadd.f32 %v2706, %v2957
        %v2959 = vpop.f32.mrb[0].mxu0
        %2960 = vmatprep.mubr.bf16.mxu0 %v2642
        %2961 = vmatmul.mubr.bf16.gmra.mrb[0].mxu0 %v2514
        %v2962 = vpop.f32.mrb[0].mxu0
        %v2963 = vadd.f32 %v2706, %v2962
        %v2964 = vpop.f32.mrb[0].mxu0
        %v2965 = vpop.f32.mrb[0].mxu0
        %v2966 = vadd.f32 %v2706, %v2965
        %v2967 = vpop.f32.mrb[0].mxu0
        %2968 = vmatprep.mubr.bf16.mxu0 %v2645
        %2969 = vmatmul.mubr.bf16.gmra.mrb[0].mxu0 %v2517
        %v2970 = vpop.f32.mrb[0].mxu0
        %v2971 = vadd.f32 %v2706, %v2970
        %v2972 = vpop.f32.mrb[0].mxu0
        %v2973 = vpop.f32.mrb[0].mxu0
        %v2974 = vadd.f32 %v2706, %v2973
        %v2975 = vpop.f32.mrb[0].mxu0
        %2976 = vmatprep.mubr.bf16.mxu0 %v2648
        %2977 = vmatmul.mubr.bf16.gmra.mrb[0].mxu0 %v2520
        %v2978 = vpop.f32.mrb[0].mxu0
        %v2979 = vadd.f32 %v2706, %v2978
        %v2980 = vpop.f32.mrb[0].mxu0
        %v2981 = vpop.f32.mrb[0].mxu0
        %v2982 = vadd.f32 %v2706, %v2981
        %v2983 = vpop.f32.mrb[0].mxu0
        %2984 = vmatprep.mubr.bf16.mxu0 %v2651
        %2985 = vmatmul.mubr.bf16.gmra.mrb[0].mxu0 %v2523
        %v2986 = vpop.f32.mrb[0].mxu0
        %v2987 = vadd.f32 %v2706, %v2986
        %v2988 = vpop.f32.mrb[0].mxu0
        %v2989 = vpop.f32.mrb[0].mxu0
        %v2990 = vadd.f32 %v2706, %v2989
        %v2991 = vpop.f32.mrb[0].mxu0
        %2992 = vmatprep.mubr.bf16.mxu0 %v2654
        %2993 = vmatmul.mubr.bf16.gmra.mrb[0].mxu0 %v2526
        %v2994 = vpop.f32.mrb[0].mxu0
        %v2995 = vadd.f32 %v2706, %v2994
        %v2996 = vpop.f32.mrb[0].mxu0
        %v2997 = vpop.f32.mrb[0].mxu0
        %v2998 = vadd.f32 %v2706, %v2997
        %v2999 = vpop.f32.mrb[0].mxu0
        %3000 = vmatprep.mubr.bf16.mxu0 %v2657
        %3001 = vmatmul.mubr.bf16.gmra.mrb[0].mxu0 %v2529
        %v3002 = vpop.f32.mrb[0].mxu0
        %v3003 = vadd.f32 %v2706, %v3002
        %v3004 = vpop.f32.mrb[0].mxu0
        %v3005 = vpop.f32.mrb[0].mxu0
        %v3006 = vadd.f32 %v2706, %v3005
        %v3007 = vpop.f32.mrb[0].mxu0
        %3008 = vmatprep.mubr.bf16.mxu0 %v2660
        %3009 = vmatmul.mubr.bf16.gmra.mrb[0].mxu0 %v2532
        %v3010 = vpop.f32.mrb[0].mxu0
        %v3011 = vadd.f32 %v2706, %v3010
        %v3012 = vpop.f32.mrb[0].mxu0
        %v3013 = vpop.f32.mrb[0].mxu0
        %v3014 = vadd.f32 %v2706, %v3013
        %v3015 = vpop.f32.mrb[0].mxu0
        %3016 = vmatprep.mubr.bf16.mxu0 %v2663
        %3017 = vmatmul.mubr.bf16.gmra.mrb[0].mxu0 %v2535
        %v3018 = vpop.f32.mrb[0].mxu0
        %v3019 = vadd.f32 %v2706, %v3018
        %v3020 = vpop.f32.mrb[0].mxu0
        %v3021 = vpop.f32.mrb[0].mxu0
        %v3022 = vadd.f32 %v2706, %v3021
        %v3023 = vpop.f32.mrb[0].mxu0
        %3024 = vdwg.mxu0
        %3025 = vmatprep.subr.bf16.mxu0 0
        %3026 = vmatpush1.bf16.msra.mxu0 %v2796
        %3027 = vmatprep.subr.bf16.mxu0 0
        %3028 = vmatpush1.bf16.msra.mxu0 %v2797
        %3029 = vmatprep.subr.bf16.mxu0 0
        %3030 = vmatpush1.bf16.msra.mxu0 0
        %3031 = vmatprep.subr.bf16.mxu0 0
        %3032 = vmatpush1.bf16.msra.mxu0 0
        %3033 = vmatprep.subr.bf16.mxu0 0
        %3034 = vmatpush1.bf16.msra.mxu0 0
        %3035 = vmatprep.subr.bf16.mxu0 0
        %3036 = vmatpush1.bf16.msra.mxu0 0
        %3037 = vmatprep.subr.bf16.mxu0 0
        %3038 = vmatpush1.bf16.msra.mxu0 0
        %3039 = vmatprep.subr.bf16.mxu0 0
        %3040 = vmatpush1.bf16.msra.mxu0 0
        %3041 = vmatprep.subr.bf16.mxu0 0
        %3042 = vmatpush1.bf16.msra.mxu0 0
        %3043 = vmatprep.subr.bf16.mxu0 0
        %3044 = vmatpush1.bf16.msra.mxu0 0
        %3045 = vmatprep.subr.bf16.mxu0 0
        %3046 = vmatpush1.bf16.msra.mxu0 0
        %3047 = vmatprep.subr.bf16.mxu0 0
        %3048 = vmatpush1.bf16.msra.mxu0 0
        %3049 = vmatprep.subr.bf16.mxu0 0
        %3050 = vmatpush1.bf16.msra.mxu0 0
        %3051 = vmatprep.subr.bf16.mxu0 0
        %3052 = vmatpush1.bf16.msra.mxu0 0
        %3053 = vmatprep.subr.bf16.mxu0 0
        %3054 = vmatpush1.bf16.msra.mxu0 0
        %3055 = vmatprep.subr.bf16.mxu0 0
        %3056 = vmatpush1.bf16.msra.mxu0 0
        %3057 = vmatprep.mubr.bf16.mxu0 0
        %3058 = vmatmul.mubr.bf16.gmra.mrb[0].mxu0 %v2817
        %v3059 = vpop.f32.mrb[0].mxu0
        %v3060 = vadd.f32 %v2899, %v3059
        %v3061 = vpop.f32.mrb[0].mxu0
        %v3062 = vpop.f32.mrb[0].mxu0
        %v3063 = vadd.f32 %v2902, %v3062
        %v3064 = vpop.f32.mrb[0].mxu0
        %3065 = vmatprep.mubr.bf16.mxu0 0
        %3066 = vmatmul.mubr.bf16.gmra.mrb[0].mxu0 %v2820
        %v3067 = vpop.f32.mrb[0].mxu0
        %v3068 = vadd.f32 %v2907, %v3067
        %v3069 = vpop.f32.mrb[0].mxu0
        %v3070 = vpop.f32.mrb[0].mxu0
        %v3071 = vadd.f32 %v2910, %v3070
        %v3072 = vpop.f32.mrb[0].mxu0
        %3073 = vmatprep.mubr.bf16.mxu0 0
        %3074 = vmatmul.mubr.bf16.gmra.mrb[0].mxu0 %v2823
        %v3075 = vpop.f32.mrb[0].mxu0
        %v3076 = vadd.f32 %v2915, %v3075
        %v3077 = vpop.f32.mrb[0].mxu0
        %v3078 = vpop.f32.mrb[0].mxu0
        %v3079 = vadd.f32 %v2918, %v3078
        %v3080 = vpop.f32.mrb[0].mxu0
        %3081 = vmatprep.mubr.bf16.mxu0 0
        %3082 = vmatmul.mubr.bf16.gmra.mrb[0].mxu0 %v2826
        %v3083 = vpop.f32.mrb[0].mxu0
        %v3084 = vadd.f32 %v2923, %v3083
        %v3085 = vpop.f32.mrb[0].mxu0
        %v3086 = vpop.f32.mrb[0].mxu0
        %v3087 = vadd.f32 %v2926, %v3086
        %v3088 = vpop.f32.mrb[0].mxu0
        %3089 = vmatprep.mubr.bf16.mxu0 0
        %3090 = vmatmul.mubr.bf16.gmra.mrb[0].mxu0 %v2829
        %v3091 = vpop.f32.mrb[0].mxu0
        %v3092 = vadd.f32 %v2931, %v3091
        %v3093 = vpop.f32.mrb[0].mxu0
        %v3094 = vpop.f32.mrb[0].mxu0
        %v3095 = vadd.f32 %v2934, %v3094
        %v3096 = vpop.f32.mrb[0].mxu0
        %3097 = vmatprep.mubr.bf16.mxu0 0
        %3098 = vmatmul.mubr.bf16.gmra.mrb[0].mxu0 %v2832
        %v3099 = vpop.f32.mrb[0].mxu0
        %v3100 = vadd.f32 %v2939, %v3099
        %v3101 = vpop.f32.mrb[0].mxu0
        %v3102 = vpop.f32.mrb[0].mxu0
        %v3103 = vadd.f32 %v2942, %v3102
        %v3104 = vpop.f32.mrb[0].mxu0
        %3105 = vmatprep.mubr.bf16.mxu0 0
        %3106 = vmatmul.mubr.bf16.gmra.mrb[0].mxu0 %v2835
        %v3107 = vpop.f32.mrb[0].mxu0
        %v3108 = vadd.f32 %v2947, %v3107
        %v3109 = vpop.f32.mrb[0].mxu0
        %v3110 = vpop.f32.mrb[0].mxu0
        %v3111 = vadd.f32 %v2950, %v3110
        %v3112 = vpop.f32.mrb[0].mxu0
        %3113 = vmatprep.mubr.bf16.mxu0 0
        %3114 = vmatmul.mubr.bf16.gmra.mrb[0].mxu0 %v2838
        %v3115 = vpop.f32.mrb[0].mxu0
        %v3116 = vadd.f32 %v2955, %v3115
        %v3117 = vpop.f32.mrb[0].mxu0
        %v3118 = vpop.f32.mrb[0].mxu0
        %v3119 = vadd.f32 %v2958, %v3118
        %v3120 = vpop.f32.mrb[0].mxu0
        %3121 = vmatprep.mubr.bf16.mxu0 0
        %3122 = vmatmul.mubr.bf16.gmra.mrb[0].mxu0 %v2841
        %v3123 = vpop.f32.mrb[0].mxu0
        %v3124 = vadd.f32 %v2963, %v3123
        %v3125 = vpop.f32.mrb[0].mxu0
        %v3126 = vpop.f32.mrb[0].mxu0
        %v3127 = vadd.f32 %v2966, %v3126
        %v3128 = vpop.f32.mrb[0].mxu0
        %3129 = vmatprep.mubr.bf16.mxu0 0
        %3130 = vmatmul.mubr.bf16.gmra.mrb[0].mxu0 %v2844
        %v3131 = vpop.f32.mrb[0].mxu0
        %v3132 = vadd.f32 %v2971, %v3131
        %v3133 = vpop.f32.mrb[0].mxu0
        %v3134 = vpop.f32.mrb[0].mxu0
        %v3135 = vadd.f32 %v2974, %v3134
        %v3136 = vpop.f32.mrb[0].mxu0
        %3137 = vmatprep.mubr.bf16.mxu0 0
        %3138 = vmatmul.mubr.bf16.gmra.mrb[0].mxu0 %v2847
        %v3139 = vpop.f32.mrb[0].mxu0
        %v3140 = vadd.f32 %v2979, %v3139
        %v3141 = vpop.f32.mrb[0].mxu0
        %v3142 = vpop.f32.mrb[0].mxu0
        %v3143 = vadd.f32 %v2982, %v3142
        %v3144 = vpop.f32.mrb[0].mxu0
        %3145 = vmatprep.mubr.bf16.mxu0 0
        %3146 = vmatmul.mubr.bf16.gmra.mrb[0].mxu0 %v2850
        %v3147 = vpop.f32.mrb[0].mxu0
        %v3148 = vadd.f32 %v2987, %v3147
        %v3149 = vpop.f32.mrb[0].mxu0
        %v3150 = vpop.f32.mrb[0].mxu0
        %v3151 = vadd.f32 %v2990, %v3150
        %v3152 = vpop.f32.mrb[0].mxu0
        %3153 = vmatprep.mubr.bf16.mxu0 0
        %3154 = vmatmul.mubr.bf16.gmra.mrb[0].mxu0 %v2853
        %v3155 = vpop.f32.mrb[0].mxu0
        %v3156 = vadd.f32 %v2995, %v3155
        %v3157 = vpop.f32.mrb[0].mxu0
        %v3158 = vpop.f32.mrb[0].mxu0
        %v3159 = vadd.f32 %v2998, %v3158
        %v3160 = vpop.f32.mrb[0].mxu0
        %3161 = vmatprep.mubr.bf16.mxu0 0
        %3162 = vmatmul.mubr.bf16.gmra.mrb[0].mxu0 %v2856
        %v3163 = vpop.f32.mrb[0].mxu0
        %v3164 = vadd.f32 %v3003, %v3163
        %v3165 = vpop.f32.mrb[0].mxu0
        %v3166 = vpop.f32.mrb[0].mxu0
        %v3167 = vadd.f32 %v3006, %v3166
        %v3168 = vpop.f32.mrb[0].mxu0
        %3169 = vmatprep.mubr.bf16.mxu0 0
        %3170 = vmatmul.mubr.bf16.gmra.mrb[0].mxu0 %v2859
        %v3171 = vpop.f32.mrb[0].mxu0
        %v3172 = vadd.f32 %v3011, %v3171
        %v3173 = vpop.f32.mrb[0].mxu0
        %v3174 = vpop.f32.mrb[0].mxu0
        %v3175 = vadd.f32 %v3014, %v3174
        %v3176 = vpop.f32.mrb[0].mxu0
        %3177 = vmatprep.mubr.bf16.mxu0 0
        %3178 = vmatmul.mubr.bf16.gmra.mrb[0].mxu0 %v2862
        %v3179 = vpop.f32.mrb[0].mxu0
        %v3180 = vadd.f32 %v3019, %v3179
        %v3181 = vpop.f32.mrb[0].mxu0
        %v3182 = vpop.f32.mrb[0].mxu0
        %v3183 = vadd.f32 %v3022, %v3182
        %v3184 = vpop.f32.mrb[0].mxu0
        %3185 = vdwg.mxu0
        %v3186 = vmax.f32 %v3060, 0.0
        %v3187 = vmax.f32 %v3063, 0.0
        %v3188 = vmax.f32 %v3068, 0.0
        %v3189 = vmax.f32 %v3071, 0.0
        %v3190 = vmax.f32 %v3076, 0.0
        %v3191 = vmax.f32 %v3079, 0.0
        %v3192 = vmax.f32 %v3084, 0.0
        %v3193 = vmax.f32 %v3087, 0.0
        %v3194 = vmax.f32 %v3092, 0.0
        %v3195 = vmax.f32 %v3095, 0.0
        %v3196 = vmax.f32 %v3100, 0.0
        %v3197 = vmax.f32 %v3103, 0.0
        %v3198 = vmax.f32 %v3108, 0.0
        %v3199 = vmax.f32 %v3111, 0.0
        %v3200 = vmax.f32 %v3116, 0.0
        %v3201 = vmax.f32 %v3119, 0.0
        %v3202 = vmax.f32 %v3124, 0.0
        %v3203 = vmax.f32 %v3127, 0.0
        %v3204 = vmax.f32 %v3132, 0.0
        %v3205 = vmax.f32 %v3135, 0.0
        %v3206 = vmax.f32 %v3140, 0.0
        %v3207 = vmax.f32 %v3143, 0.0
        %v3208 = vmax.f32 %v3148, 0.0
        %v3209 = vmax.f32 %v3151, 0.0
        %v3210 = vmax.f32 %v3156, 0.0
        %v3211 = vmax.f32 %v3159, 0.0
        %v3212 = vmax.f32 %v3164, 0.0
        %v3213 = vmax.f32 %v3167, 0.0
        %v3214 = vmax.f32 %v3172, 0.0
        %v3215 = vmax.f32 %v3175, 0.0
        %v3216 = vmax.f32 %v3180, 0.0
        %v3217 = vmax.f32 %v3183, 0.0
        %v3250 = vcombine.high %v3186, %v3186
        %v3252 = vunpack.c.l.s4 1983009808
        %v3253 = vunpack.c.0.s8 %v3252
        %v3254 = vlaneseq
        %v3255 = vshrl.u32 %v3254, 7
        %v3256 = vsub.s32 %v3253, %v3255
        %v3257 = vrot.slane %v3186, %v3256
        %v3259 = vunpack.c.l.s4 1983009808
        %v3260 = vunpack.c.0.s8 %v3259
        %v3261 = vlaneseq
        %v3262 = vshrl.u32 %v3261, 7
        %v3263 = vsub.s32 %v3260, %v3262
        %v3264 = vrot.slane %v3250, %v3263
        %v3265 = vcombine.high %v3257, %v3257
        %v3266 = vcombine.high %v3264, %v3264
        %v3267 = vcombine.high %v3187, %v3187
        %v3269 = vunpack.c.l.s4 1983009808
        %v3270 = vunpack.c.0.s8 %v3269
        %v3271 = vlaneseq
        %v3272 = vshrl.u32 %v3271, 7
        %v3273 = vsub.s32 %v3270, %v3272
        %v3274 = vrot.slane %v3187, %v3273
        %v3276 = vunpack.c.l.s4 1983009808
        %v3277 = vunpack.c.0.s8 %v3276
        %v3278 = vlaneseq
        %v3279 = vshrl.u32 %v3278, 7
        %v3280 = vsub.s32 %v3277, %v3279
        %v3281 = vrot.slane %v3267, %v3280
        %v3282 = vcombine.high %v3274, %v3274
        %v3283 = vcombine.high %v3281, %v3281
        %v3284 = vcombine.high %v3188, %v3188
        %v3286 = vunpack.c.l.s4 1983009808
        %v3287 = vunpack.c.0.s8 %v3286
        %v3288 = vlaneseq
        %v3289 = vshrl.u32 %v3288, 7
        %v3290 = vsub.s32 %v3287, %v3289
        %v3291 = vrot.slane %v3188, %v3290
        %v3293 = vunpack.c.l.s4 1983009808
        %v3294 = vunpack.c.0.s8 %v3293
        %v3295 = vlaneseq
        %v3296 = vshrl.u32 %v3295, 7
        %v3297 = vsub.s32 %v3294, %v3296
        %v3298 = vrot.slane %v3284, %v3297
        %v3299 = vcombine.high %v3291, %v3291
        %v3300 = vcombine.high %v3298, %v3298
        %v3301 = vcombine.high %v3189, %v3189
        %v3303 = vunpack.c.l.s4 1983009808
        %v3304 = vunpack.c.0.s8 %v3303
        %v3305 = vlaneseq
        %v3306 = vshrl.u32 %v3305, 7
        %v3307 = vsub.s32 %v3304, %v3306
        %v3308 = vrot.slane %v3189, %v3307
        %v3310 = vunpack.c.l.s4 1983009808
        %v3311 = vunpack.c.0.s8 %v3310
        %v3312 = vlaneseq
        %v3313 = vshrl.u32 %v3312, 7
        %v3314 = vsub.s32 %v3311, %v3313
        %v3315 = vrot.slane %v3301, %v3314
        %v3316 = vcombine.high %v3308, %v3308
        %v3317 = vcombine.high %v3315, %v3315
        %v3318 = vcombine.high %v3190, %v3190
        %v3320 = vunpack.c.l.s4 1983009808
        %v3321 = vunpack.c.0.s8 %v3320
        %v3322 = vlaneseq
        %v3323 = vshrl.u32 %v3322, 7
        %v3324 = vsub.s32 %v3321, %v3323
        %v3325 = vrot.slane %v3190, %v3324
        %v3327 = vunpack.c.l.s4 1983009808
        %v3328 = vunpack.c.0.s8 %v3327
        %v3329 = vlaneseq
        %v3330 = vshrl.u32 %v3329, 7
        %v3331 = vsub.s32 %v3328, %v3330
        %v3332 = vrot.slane %v3318, %v3331
        %v3333 = vcombine.high %v3325, %v3325
        %v3334 = vcombine.high %v3332, %v3332
        %v3335 = vcombine.high %v3191, %v3191
        %v3337 = vunpack.c.l.s4 1983009808
        %v3338 = vunpack.c.0.s8 %v3337
        %v3339 = vlaneseq
        %v3340 = vshrl.u32 %v3339, 7
        %v3341 = vsub.s32 %v3338, %v3340
        %v3342 = vrot.slane %v3191, %v3341
        %v3344 = vunpack.c.l.s4 1983009808
        %v3345 = vunpack.c.0.s8 %v3344
        %v3346 = vlaneseq
        %v3347 = vshrl.u32 %v3346, 7
        %v3348 = vsub.s32 %v3345, %v3347
        %v3349 = vrot.slane %v3335, %v3348
        %v3350 = vcombine.high %v3342, %v3342
        %v3351 = vcombine.high %v3349, %v3349
        %v3352 = vcombine.high %v3192, %v3192
        %v3354 = vunpack.c.l.s4 1983009808
        %v3355 = vunpack.c.0.s8 %v3354
        %v3356 = vlaneseq
        %v3357 = vshrl.u32 %v3356, 7
        %v3358 = vsub.s32 %v3355, %v3357
        %v3359 = vrot.slane %v3192, %v3358
        %v3361 = vunpack.c.l.s4 1983009808
        %v3362 = vunpack.c.0.s8 %v3361
        %v3363 = vlaneseq
        %v3364 = vshrl.u32 %v3363, 7
        %v3365 = vsub.s32 %v3362, %v3364
        %v3366 = vrot.slane %v3352, %v3365
        %v3367 = vcombine.high %v3359, %v3359
        %v3368 = vcombine.high %v3366, %v3366
        %v3369 = vcombine.high %v3193, %v3193
        %v3371 = vunpack.c.l.s4 1983009808
        %v3372 = vunpack.c.0.s8 %v3371
        %v3373 = vlaneseq
        %v3374 = vshrl.u32 %v3373, 7
        %v3375 = vsub.s32 %v3372, %v3374
        %v3376 = vrot.slane %v3193, %v3375
        %v3378 = vunpack.c.l.s4 1983009808
        %v3379 = vunpack.c.0.s8 %v3378
        %v3380 = vlaneseq
        %v3381 = vshrl.u32 %v3380, 7
        %v3382 = vsub.s32 %v3379, %v3381
        %v3383 = vrot.slane %v3369, %v3382
        %v3384 = vcombine.high %v3376, %v3376
        %v3385 = vcombine.high %v3383, %v3383
        %v3386 = vcombine.high %v3194, %v3194
        %v3388 = vunpack.c.l.s4 1983009808
        %v3389 = vunpack.c.0.s8 %v3388
        %v3390 = vlaneseq
        %v3391 = vshrl.u32 %v3390, 7
        %v3392 = vsub.s32 %v3389, %v3391
        %v3393 = vrot.slane %v3194, %v3392
        %v3395 = vunpack.c.l.s4 1983009808
        %v3396 = vunpack.c.0.s8 %v3395
        %v3397 = vlaneseq
        %v3398 = vshrl.u32 %v3397, 7
        %v3399 = vsub.s32 %v3396, %v3398
        %v3400 = vrot.slane %v3386, %v3399
        %v3401 = vcombine.high %v3393, %v3393
        %v3402 = vcombine.high %v3400, %v3400
        %v3403 = vcombine.high %v3195, %v3195
        %v3405 = vunpack.c.l.s4 1983009808
        %v3406 = vunpack.c.0.s8 %v3405
        %v3407 = vlaneseq
        %v3408 = vshrl.u32 %v3407, 7
        %v3409 = vsub.s32 %v3406, %v3408
        %v3410 = vrot.slane %v3195, %v3409
        %v3412 = vunpack.c.l.s4 1983009808
        %v3413 = vunpack.c.0.s8 %v3412
        %v3414 = vlaneseq
        %v3415 = vshrl.u32 %v3414, 7
        %v3416 = vsub.s32 %v3413, %v3415
        %v3417 = vrot.slane %v3403, %v3416
        %v3418 = vcombine.high %v3410, %v3410
        %v3419 = vcombine.high %v3417, %v3417
        %v3420 = vcombine.high %v3196, %v3196
        %v3422 = vunpack.c.l.s4 1983009808
        %v3423 = vunpack.c.0.s8 %v3422
        %v3424 = vlaneseq
        %v3425 = vshrl.u32 %v3424, 7
        %v3426 = vsub.s32 %v3423, %v3425
        %v3427 = vrot.slane %v3196, %v3426
        %v3429 = vunpack.c.l.s4 1983009808
        %v3430 = vunpack.c.0.s8 %v3429
        %v3431 = vlaneseq
        %v3432 = vshrl.u32 %v3431, 7
        %v3433 = vsub.s32 %v3430, %v3432
        %v3434 = vrot.slane %v3420, %v3433
        %v3435 = vcombine.high %v3427, %v3427
        %v3436 = vcombine.high %v3434, %v3434
        %v3437 = vcombine.high %v3197, %v3197
        %v3439 = vunpack.c.l.s4 1983009808
        %v3440 = vunpack.c.0.s8 %v3439
        %v3441 = vlaneseq
        %v3442 = vshrl.u32 %v3441, 7
        %v3443 = vsub.s32 %v3440, %v3442
        %v3444 = vrot.slane %v3197, %v3443
        %v3446 = vunpack.c.l.s4 1983009808
        %v3447 = vunpack.c.0.s8 %v3446
        %v3448 = vlaneseq
        %v3449 = vshrl.u32 %v3448, 7
        %v3450 = vsub.s32 %v3447, %v3449
        %v3451 = vrot.slane %v3437, %v3450
        %v3452 = vcombine.high %v3444, %v3444
        %v3453 = vcombine.high %v3451, %v3451
        %v3454 = vcombine.high %v3198, %v3198
        %v3456 = vunpack.c.l.s4 1983009808
        %v3457 = vunpack.c.0.s8 %v3456
        %v3458 = vlaneseq
        %v3459 = vshrl.u32 %v3458, 7
        %v3460 = vsub.s32 %v3457, %v3459
        %v3461 = vrot.slane %v3198, %v3460
        %v3463 = vunpack.c.l.s4 1983009808
        %v3464 = vunpack.c.0.s8 %v3463
        %v3465 = vlaneseq
        %v3466 = vshrl.u32 %v3465, 7
        %v3467 = vsub.s32 %v3464, %v3466
        %v3468 = vrot.slane %v3454, %v3467
        %v3469 = vcombine.high %v3461, %v3461
        %v3470 = vcombine.high %v3468, %v3468
        %v3471 = vcombine.high %v3199, %v3199
        %v3473 = vunpack.c.l.s4 1983009808
        %v3474 = vunpack.c.0.s8 %v3473
        %v3475 = vlaneseq
        %v3476 = vshrl.u32 %v3475, 7
        %v3477 = vsub.s32 %v3474, %v3476
        %v3478 = vrot.slane %v3199, %v3477
        %v3480 = vunpack.c.l.s4 1983009808
        %v3481 = vunpack.c.0.s8 %v3480
        %v3482 = vlaneseq
        %v3483 = vshrl.u32 %v3482, 7
        %v3484 = vsub.s32 %v3481, %v3483
        %v3485 = vrot.slane %v3471, %v3484
        %v3486 = vcombine.high %v3478, %v3478
        %v3487 = vcombine.high %v3485, %v3485
        %v3488 = vcombine.high %v3200, %v3200
        %v3490 = vunpack.c.l.s4 1983009808
        %v3491 = vunpack.c.0.s8 %v3490
        %v3492 = vlaneseq
        %v3493 = vshrl.u32 %v3492, 7
        %v3494 = vsub.s32 %v3491, %v3493
        %v3495 = vrot.slane %v3200, %v3494
        %v3497 = vunpack.c.l.s4 1983009808
        %v3498 = vunpack.c.0.s8 %v3497
        %v3499 = vlaneseq
        %v3500 = vshrl.u32 %v3499, 7
        %v3501 = vsub.s32 %v3498, %v3500
        %v3502 = vrot.slane %v3488, %v3501
        %v3503 = vcombine.high %v3495, %v3495
        %v3504 = vcombine.high %v3502, %v3502
        %v3505 = vcombine.high %v3201, %v3201
        %v3507 = vunpack.c.l.s4 1983009808
        %v3508 = vunpack.c.0.s8 %v3507
        %v3509 = vlaneseq
        %v3510 = vshrl.u32 %v3509, 7
        %v3511 = vsub.s32 %v3508, %v3510
        %v3512 = vrot.slane %v3201, %v3511
        %v3514 = vunpack.c.l.s4 1983009808
        %v3515 = vunpack.c.0.s8 %v3514
        %v3516 = vlaneseq
        %v3517 = vshrl.u32 %v3516, 7
        %v3518 = vsub.s32 %v3515, %v3517
        %v3519 = vrot.slane %v3505, %v3518
        %v3520 = vcombine.high %v3512, %v3512
        %v3521 = vcombine.high %v3519, %v3519
        %v3522 = vcombine.high %v3202, %v3202
        %v3524 = vunpack.c.l.s4 1983009808
        %v3525 = vunpack.c.0.s8 %v3524
        %v3526 = vlaneseq
        %v3527 = vshrl.u32 %v3526, 7
        %v3528 = vsub.s32 %v3525, %v3527
        %v3529 = vrot.slane %v3202, %v3528
        %v3531 = vunpack.c.l.s4 1983009808
        %v3532 = vunpack.c.0.s8 %v3531
        %v3533 = vlaneseq
        %v3534 = vshrl.u32 %v3533, 7
        %v3535 = vsub.s32 %v3532, %v3534
        %v3536 = vrot.slane %v3522, %v3535
        %v3537 = vcombine.high %v3529, %v3529
        %v3538 = vcombine.high %v3536, %v3536
        %v3539 = vcombine.high %v3203, %v3203
        %v3541 = vunpack.c.l.s4 1983009808
        %v3542 = vunpack.c.0.s8 %v3541
        %v3543 = vlaneseq
        %v3544 = vshrl.u32 %v3543, 7
        %v3545 = vsub.s32 %v3542, %v3544
        %v3546 = vrot.slane %v3203, %v3545
        %v3548 = vunpack.c.l.s4 1983009808
        %v3549 = vunpack.c.0.s8 %v3548
        %v3550 = vlaneseq
        %v3551 = vshrl.u32 %v3550, 7
        %v3552 = vsub.s32 %v3549, %v3551
        %v3553 = vrot.slane %v3539, %v3552
        %v3554 = vcombine.high %v3546, %v3546
        %v3555 = vcombine.high %v3553, %v3553
        %v3556 = vcombine.high %v3204, %v3204
        %v3558 = vunpack.c.l.s4 1983009808
        %v3559 = vunpack.c.0.s8 %v3558
        %v3560 = vlaneseq
        %v3561 = vshrl.u32 %v3560, 7
        %v3562 = vsub.s32 %v3559, %v3561
        %v3563 = vrot.slane %v3204, %v3562
        %v3565 = vunpack.c.l.s4 1983009808
        %v3566 = vunpack.c.0.s8 %v3565
        %v3567 = vlaneseq
        %v3568 = vshrl.u32 %v3567, 7
        %v3569 = vsub.s32 %v3566, %v3568
        %v3570 = vrot.slane %v3556, %v3569
        %v3571 = vcombine.high %v3563, %v3563
        %v3572 = vcombine.high %v3570, %v3570
        %v3573 = vcombine.high %v3205, %v3205
        %v3575 = vunpack.c.l.s4 1983009808
        %v3576 = vunpack.c.0.s8 %v3575
        %v3577 = vlaneseq
        %v3578 = vshrl.u32 %v3577, 7
        %v3579 = vsub.s32 %v3576, %v3578
        %v3580 = vrot.slane %v3205, %v3579
        %v3582 = vunpack.c.l.s4 1983009808
        %v3583 = vunpack.c.0.s8 %v3582
        %v3584 = vlaneseq
        %v3585 = vshrl.u32 %v3584, 7
        %v3586 = vsub.s32 %v3583, %v3585
        %v3587 = vrot.slane %v3573, %v3586
        %v3588 = vcombine.high %v3580, %v3580
        %v3589 = vcombine.high %v3587, %v3587
        %v3590 = vcombine.high %v3206, %v3206
        %v3592 = vunpack.c.l.s4 1983009808
        %v3593 = vunpack.c.0.s8 %v3592
        %v3594 = vlaneseq
        %v3595 = vshrl.u32 %v3594, 7
        %v3596 = vsub.s32 %v3593, %v3595
        %v3597 = vrot.slane %v3206, %v3596
        %v3599 = vunpack.c.l.s4 1983009808
        %v3600 = vunpack.c.0.s8 %v3599
        %v3601 = vlaneseq
        %v3602 = vshrl.u32 %v3601, 7
        %v3603 = vsub.s32 %v3600, %v3602
        %v3604 = vrot.slane %v3590, %v3603
        %v3605 = vcombine.high %v3597, %v3597
        %v3606 = vcombine.high %v3604, %v3604
        %v3607 = vcombine.high %v3207, %v3207
        %v3609 = vunpack.c.l.s4 1983009808
        %v3610 = vunpack.c.0.s8 %v3609
        %v3611 = vlaneseq
        %v3612 = vshrl.u32 %v3611, 7
        %v3613 = vsub.s32 %v3610, %v3612
        %v3614 = vrot.slane %v3207, %v3613
        %v3616 = vunpack.c.l.s4 1983009808
        %v3617 = vunpack.c.0.s8 %v3616
        %v3618 = vlaneseq
        %v3619 = vshrl.u32 %v3618, 7
        %v3620 = vsub.s32 %v3617, %v3619
        %v3621 = vrot.slane %v3607, %v3620
        %v3622 = vcombine.high %v3614, %v3614
        %v3623 = vcombine.high %v3621, %v3621
        %v3624 = vcombine.high %v3208, %v3208
        %v3626 = vunpack.c.l.s4 1983009808
        %v3627 = vunpack.c.0.s8 %v3626
        %v3628 = vlaneseq
        %v3629 = vshrl.u32 %v3628, 7
        %v3630 = vsub.s32 %v3627, %v3629
        %v3631 = vrot.slane %v3208, %v3630
        %v3633 = vunpack.c.l.s4 1983009808
        %v3634 = vunpack.c.0.s8 %v3633
        %v3635 = vlaneseq
        %v3636 = vshrl.u32 %v3635, 7
        %v3637 = vsub.s32 %v3634, %v3636
        %v3638 = vrot.slane %v3624, %v3637
        %v3639 = vcombine.high %v3631, %v3631
        %v3640 = vcombine.high %v3638, %v3638
        %v3641 = vcombine.high %v3209, %v3209
        %v3643 = vunpack.c.l.s4 1983009808
        %v3644 = vunpack.c.0.s8 %v3643
        %v3645 = vlaneseq
        %v3646 = vshrl.u32 %v3645, 7
        %v3647 = vsub.s32 %v3644, %v3646
        %v3648 = vrot.slane %v3209, %v3647
        %v3650 = vunpack.c.l.s4 1983009808
        %v3651 = vunpack.c.0.s8 %v3650
        %v3652 = vlaneseq
        %v3653 = vshrl.u32 %v3652, 7
        %v3654 = vsub.s32 %v3651, %v3653
        %v3655 = vrot.slane %v3641, %v3654
        %v3656 = vcombine.high %v3648, %v3648
        %v3657 = vcombine.high %v3655, %v3655
        %v3658 = vcombine.high %v3210, %v3210
        %v3660 = vunpack.c.l.s4 1983009808
        %v3661 = vunpack.c.0.s8 %v3660
        %v3662 = vlaneseq
        %v3663 = vshrl.u32 %v3662, 7
        %v3664 = vsub.s32 %v3661, %v3663
        %v3665 = vrot.slane %v3210, %v3664
        %v3667 = vunpack.c.l.s4 1983009808
        %v3668 = vunpack.c.0.s8 %v3667
        %v3669 = vlaneseq
        %v3670 = vshrl.u32 %v3669, 7
        %v3671 = vsub.s32 %v3668, %v3670
        %v3672 = vrot.slane %v3658, %v3671
        %v3673 = vcombine.high %v3665, %v3665
        %v3674 = vcombine.high %v3672, %v3672
        %v3675 = vcombine.high %v3211, %v3211
        %v3677 = vunpack.c.l.s4 1983009808
        %v3678 = vunpack.c.0.s8 %v3677
        %v3679 = vlaneseq
        %v3680 = vshrl.u32 %v3679, 7
        %v3681 = vsub.s32 %v3678, %v3680
        %v3682 = vrot.slane %v3211, %v3681
        %v3684 = vunpack.c.l.s4 1983009808
        %v3685 = vunpack.c.0.s8 %v3684
        %v3686 = vlaneseq
        %v3687 = vshrl.u32 %v3686, 7
        %v3688 = vsub.s32 %v3685, %v3687
        %v3689 = vrot.slane %v3675, %v3688
        %v3690 = vcombine.high %v3682, %v3682
        %v3691 = vcombine.high %v3689, %v3689
        %v3692 = vcombine.high %v3212, %v3212
        %v3694 = vunpack.c.l.s4 1983009808
        %v3695 = vunpack.c.0.s8 %v3694
        %v3696 = vlaneseq
        %v3697 = vshrl.u32 %v3696, 7
        %v3698 = vsub.s32 %v3695, %v3697
        %v3699 = vrot.slane %v3212, %v3698
        %v3701 = vunpack.c.l.s4 1983009808
        %v3702 = vunpack.c.0.s8 %v3701
        %v3703 = vlaneseq
        %v3704 = vshrl.u32 %v3703, 7
        %v3705 = vsub.s32 %v3702, %v3704
        %v3706 = vrot.slane %v3692, %v3705
        %v3707 = vcombine.high %v3699, %v3699
        %v3708 = vcombine.high %v3706, %v3706
        %v3709 = vcombine.high %v3213, %v3213
        %v3711 = vunpack.c.l.s4 1983009808
        %v3712 = vunpack.c.0.s8 %v3711
        %v3713 = vlaneseq
        %v3714 = vshrl.u32 %v3713, 7
        %v3715 = vsub.s32 %v3712, %v3714
        %v3716 = vrot.slane %v3213, %v3715
        %v3718 = vunpack.c.l.s4 1983009808
        %v3719 = vunpack.c.0.s8 %v3718
        %v3720 = vlaneseq
        %v3721 = vshrl.u32 %v3720, 7
        %v3722 = vsub.s32 %v3719, %v3721
        %v3723 = vrot.slane %v3709, %v3722
        %v3724 = vcombine.high %v3716, %v3716
        %v3725 = vcombine.high %v3723, %v3723
        %v3726 = vcombine.high %v3214, %v3214
        %v3728 = vunpack.c.l.s4 1983009808
        %v3729 = vunpack.c.0.s8 %v3728
        %v3730 = vlaneseq
        %v3731 = vshrl.u32 %v3730, 7
        %v3732 = vsub.s32 %v3729, %v3731
        %v3733 = vrot.slane %v3214, %v3732
        %v3735 = vunpack.c.l.s4 1983009808
        %v3736 = vunpack.c.0.s8 %v3735
        %v3737 = vlaneseq
        %v3738 = vshrl.u32 %v3737, 7
        %v3739 = vsub.s32 %v3736, %v3738
        %v3740 = vrot.slane %v3726, %v3739
        %v3741 = vcombine.high %v3733, %v3733
        %v3742 = vcombine.high %v3740, %v3740
        %v3743 = vcombine.high %v3215, %v3215
        %v3745 = vunpack.c.l.s4 1983009808
        %v3746 = vunpack.c.0.s8 %v3745
        %v3747 = vlaneseq
        %v3748 = vshrl.u32 %v3747, 7
        %v3749 = vsub.s32 %v3746, %v3748
        %v3750 = vrot.slane %v3215, %v3749
        %v3752 = vunpack.c.l.s4 1983009808
        %v3753 = vunpack.c.0.s8 %v3752
        %v3754 = vlaneseq
        %v3755 = vshrl.u32 %v3754, 7
        %v3756 = vsub.s32 %v3753, %v3755
        %v3757 = vrot.slane %v3743, %v3756
        %v3758 = vcombine.high %v3750, %v3750
        %v3759 = vcombine.high %v3757, %v3757
        %v3760 = vcombine.high %v3216, %v3216
        %v3762 = vunpack.c.l.s4 1983009808
        %v3763 = vunpack.c.0.s8 %v3762
        %v3764 = vlaneseq
        %v3765 = vshrl.u32 %v3764, 7
        %v3766 = vsub.s32 %v3763, %v3765
        %v3767 = vrot.slane %v3216, %v3766
        %v3769 = vunpack.c.l.s4 1983009808
        %v3770 = vunpack.c.0.s8 %v3769
        %v3771 = vlaneseq
        %v3772 = vshrl.u32 %v3771, 7
        %v3773 = vsub.s32 %v3770, %v3772
        %v3774 = vrot.slane %v3760, %v3773
        %v3775 = vcombine.high %v3767, %v3767
        %v3776 = vcombine.high %v3774, %v3774
        %v3777 = vcombine.high %v3217, %v3217
        %v3779 = vunpack.c.l.s4 1983009808
        %v3780 = vunpack.c.0.s8 %v3779
        %v3781 = vlaneseq
        %v3782 = vshrl.u32 %v3781, 7
        %v3783 = vsub.s32 %v3780, %v3782
        %v3784 = vrot.slane %v3217, %v3783
        %v3786 = vunpack.c.l.s4 1983009808
        %v3787 = vunpack.c.0.s8 %v3786
        %v3788 = vlaneseq
        %v3789 = vshrl.u32 %v3788, 7
        %v3790 = vsub.s32 %v3787, %v3789
        %v3791 = vrot.slane %v3777, %v3790
        %v3792 = vcombine.high %v3784, %v3784
        %v3793 = vcombine.high %v3791, %v3791
        %vm3922 = vcmask 517120
        %v3923 = vsel %vm3922, %v3257, -inf
        %v3924 = vrot.slane %v3923, 4
        %v3925 = vmax.f32 %v3923, %v3924
        %v3926 = vrot.slane %v3925, 2
        %v3927 = vmax.f32 %v3925, %v3926
        %v3928 = vrot.slane %v3927, 1
        %v3929 = vmax.f32 %v3927, %v3928
        %v3930 = vsel %vm3922, %v3265, -inf
        %v3931 = vrot.slane %v3930, 4
        %v3932 = vmax.f32 %v3930, %v3931
        %v3933 = vrot.slane %v3932, 2
        %v3934 = vmax.f32 %v3932, %v3933
        %v3935 = vrot.slane %v3934, 1
        %v3936 = vmax.f32 %v3934, %v3935
        %v3937 = vsel %vm3922, %v3264, -inf
        %v3938 = vrot.slane %v3937, 4
        %v3939 = vmax.f32 %v3937, %v3938
        %v3940 = vrot.slane %v3939, 2
        %v3941 = vmax.f32 %v3939, %v3940
        %v3942 = vrot.slane %v3941, 1
        %v3943 = vmax.f32 %v3941, %v3942
        %v3944 = vsel %vm3922, %v3266, -inf
        %v3945 = vrot.slane %v3944, 4
        %v3946 = vmax.f32 %v3944, %v3945
        %v3947 = vrot.slane %v3946, 2
        %v3948 = vmax.f32 %v3946, %v3947
        %v3949 = vrot.slane %v3948, 1
        %v3950 = vmax.f32 %v3948, %v3949
        %v3951 = vsel %vm3922, %v3274, -inf
        %v3952 = vrot.slane %v3951, 4
        %v3953 = vmax.f32 %v3951, %v3952
        %v3954 = vrot.slane %v3953, 2
        %v3955 = vmax.f32 %v3953, %v3954
        %v3956 = vrot.slane %v3955, 1
        %v3957 = vmax.f32 %v3955, %v3956
        %v3958 = vsel %vm3922, %v3282, -inf
        %v3959 = vrot.slane %v3958, 4
        %v3960 = vmax.f32 %v3958, %v3959
        %v3961 = vrot.slane %v3960, 2
        %v3962 = vmax.f32 %v3960, %v3961
        %v3963 = vrot.slane %v3962, 1
        %v3964 = vmax.f32 %v3962, %v3963
        %v3965 = vsel %vm3922, %v3281, -inf
        %v3966 = vrot.slane %v3965, 4
        %v3967 = vmax.f32 %v3965, %v3966
        %v3968 = vrot.slane %v3967, 2
        %v3969 = vmax.f32 %v3967, %v3968
        %v3970 = vrot.slane %v3969, 1
        %v3971 = vmax.f32 %v3969, %v3970
        %v3972 = vsel %vm3922, %v3283, -inf
        %v3973 = vrot.slane %v3972, 4
        %v3974 = vmax.f32 %v3972, %v3973
        %v3975 = vrot.slane %v3974, 2
        %v3976 = vmax.f32 %v3974, %v3975
        %v3977 = vrot.slane %v3976, 1
        %v3978 = vmax.f32 %v3976, %v3977
        %v3979 = vsel %vm3922, %v3291, -inf
        %v3980 = vrot.slane %v3979, 4
        %v3981 = vmax.f32 %v3979, %v3980
        %v3982 = vrot.slane %v3981, 2
        %v3983 = vmax.f32 %v3981, %v3982
        %v3984 = vrot.slane %v3983, 1
        %v3985 = vmax.f32 %v3983, %v3984
        %v3986 = vsel %vm3922, %v3299, -inf
        %v3987 = vrot.slane %v3986, 4
        %v3988 = vmax.f32 %v3986, %v3987
        %v3989 = vrot.slane %v3988, 2
        %v3990 = vmax.f32 %v3988, %v3989
        %v3991 = vrot.slane %v3990, 1
        %v3992 = vmax.f32 %v3990, %v3991
        %v3993 = vsel %vm3922, %v3298, -inf
        %v3994 = vrot.slane %v3993, 4
        %v3995 = vmax.f32 %v3993, %v3994
        %v3996 = vrot.slane %v3995, 2
        %v3997 = vmax.f32 %v3995, %v3996
        %v3998 = vrot.slane %v3997, 1
        %v3999 = vmax.f32 %v3997, %v3998
        %v4000 = vsel %vm3922, %v3300, -inf
        %v4001 = vrot.slane %v4000, 4
        %v4002 = vmax.f32 %v4000, %v4001
        %v4003 = vrot.slane %v4002, 2
        %v4004 = vmax.f32 %v4002, %v4003
        %v4005 = vrot.slane %v4004, 1
        %v4006 = vmax.f32 %v4004, %v4005
        %v4007 = vsel %vm3922, %v3308, -inf
        %v4008 = vrot.slane %v4007, 4
        %v4009 = vmax.f32 %v4007, %v4008
        %v4010 = vrot.slane %v4009, 2
        %v4011 = vmax.f32 %v4009, %v4010
        %v4012 = vrot.slane %v4011, 1
        %v4013 = vmax.f32 %v4011, %v4012
        %v4014 = vsel %vm3922, %v3316, -inf
        %v4015 = vrot.slane %v4014, 4
        %v4016 = vmax.f32 %v4014, %v4015
        %v4017 = vrot.slane %v4016, 2
        %v4018 = vmax.f32 %v4016, %v4017
        %v4019 = vrot.slane %v4018, 1
        %v4020 = vmax.f32 %v4018, %v4019
        %v4021 = vsel %vm3922, %v3315, -inf
        %v4022 = vrot.slane %v4021, 4
        %v4023 = vmax.f32 %v4021, %v4022
        %v4024 = vrot.slane %v4023, 2
        %v4025 = vmax.f32 %v4023, %v4024
        %v4026 = vrot.slane %v4025, 1
        %v4027 = vmax.f32 %v4025, %v4026
        %v4028 = vsel %vm3922, %v3317, -inf
        %v4029 = vrot.slane %v4028, 4
        %v4030 = vmax.f32 %v4028, %v4029
        %v4031 = vrot.slane %v4030, 2
        %v4032 = vmax.f32 %v4030, %v4031
        %v4033 = vrot.slane %v4032, 1
        %v4034 = vmax.f32 %v4032, %v4033
        %v4035 = vsel %vm3922, %v3325, -inf
        %v4036 = vrot.slane %v4035, 4
        %v4037 = vmax.f32 %v4035, %v4036
        %v4038 = vrot.slane %v4037, 2
        %v4039 = vmax.f32 %v4037, %v4038
        %v4040 = vrot.slane %v4039, 1
        %v4041 = vmax.f32 %v4039, %v4040
        %v4042 = vsel %vm3922, %v3333, -inf
        %v4043 = vrot.slane %v4042, 4
        %v4044 = vmax.f32 %v4042, %v4043
        %v4045 = vrot.slane %v4044, 2
        %v4046 = vmax.f32 %v4044, %v4045
        %v4047 = vrot.slane %v4046, 1
        %v4048 = vmax.f32 %v4046, %v4047
        %v4049 = vsel %vm3922, %v3332, -inf
        %v4050 = vrot.slane %v4049, 4
        %v4051 = vmax.f32 %v4049, %v4050
        %v4052 = vrot.slane %v4051, 2
        %v4053 = vmax.f32 %v4051, %v4052
        %v4054 = vrot.slane %v4053, 1
        %v4055 = vmax.f32 %v4053, %v4054
        %v4056 = vsel %vm3922, %v3334, -inf
        %v4057 = vrot.slane %v4056, 4
        %v4058 = vmax.f32 %v4056, %v4057
        %v4059 = vrot.slane %v4058, 2
        %v4060 = vmax.f32 %v4058, %v4059
        %v4061 = vrot.slane %v4060, 1
        %v4062 = vmax.f32 %v4060, %v4061
        %v4063 = vsel %vm3922, %v3342, -inf
        %v4064 = vrot.slane %v4063, 4
        %v4065 = vmax.f32 %v4063, %v4064
        %v4066 = vrot.slane %v4065, 2
        %v4067 = vmax.f32 %v4065, %v4066
        %v4068 = vrot.slane %v4067, 1
        %v4069 = vmax.f32 %v4067, %v4068
        %v4070 = vsel %vm3922, %v3350, -inf
        %v4071 = vrot.slane %v4070, 4
        %v4072 = vmax.f32 %v4070, %v4071
        %v4073 = vrot.slane %v4072, 2
        %v4074 = vmax.f32 %v4072, %v4073
        %v4075 = vrot.slane %v4074, 1
        %v4076 = vmax.f32 %v4074, %v4075
        %v4077 = vsel %vm3922, %v3349, -inf
        %v4078 = vrot.slane %v4077, 4
        %v4079 = vmax.f32 %v4077, %v4078
        %v4080 = vrot.slane %v4079, 2
        %v4081 = vmax.f32 %v4079, %v4080
        %v4082 = vrot.slane %v4081, 1
        %v4083 = vmax.f32 %v4081, %v4082
        %v4084 = vsel %vm3922, %v3351, -inf
        %v4085 = vrot.slane %v4084, 4
        %v4086 = vmax.f32 %v4084, %v4085
        %v4087 = vrot.slane %v4086, 2
        %v4088 = vmax.f32 %v4086, %v4087
        %v4089 = vrot.slane %v4088, 1
        %v4090 = vmax.f32 %v4088, %v4089
        %v4091 = vsel %vm3922, %v3359, -inf
        %v4092 = vrot.slane %v4091, 4
        %v4093 = vmax.f32 %v4091, %v4092
        %v4094 = vrot.slane %v4093, 2
        %v4095 = vmax.f32 %v4093, %v4094
        %v4096 = vrot.slane %v4095, 1
        %v4097 = vmax.f32 %v4095, %v4096
        %v4098 = vsel %vm3922, %v3367, -inf
        %v4099 = vrot.slane %v4098, 4
        %v4100 = vmax.f32 %v4098, %v4099
        %v4101 = vrot.slane %v4100, 2
        %v4102 = vmax.f32 %v4100, %v4101
        %v4103 = vrot.slane %v4102, 1
        %v4104 = vmax.f32 %v4102, %v4103
        %v4105 = vsel %vm3922, %v3366, -inf
        %v4106 = vrot.slane %v4105, 4
        %v4107 = vmax.f32 %v4105, %v4106
        %v4108 = vrot.slane %v4107, 2
        %v4109 = vmax.f32 %v4107, %v4108
        %v4110 = vrot.slane %v4109, 1
        %v4111 = vmax.f32 %v4109, %v4110
        %v4112 = vsel %vm3922, %v3368, -inf
        %v4113 = vrot.slane %v4112, 4
        %v4114 = vmax.f32 %v4112, %v4113
        %v4115 = vrot.slane %v4114, 2
        %v4116 = vmax.f32 %v4114, %v4115
        %v4117 = vrot.slane %v4116, 1
        %v4118 = vmax.f32 %v4116, %v4117
        %v4119 = vsel %vm3922, %v3376, -inf
        %v4120 = vrot.slane %v4119, 4
        %v4121 = vmax.f32 %v4119, %v4120
        %v4122 = vrot.slane %v4121, 2
        %v4123 = vmax.f32 %v4121, %v4122
        %v4124 = vrot.slane %v4123, 1
        %v4125 = vmax.f32 %v4123, %v4124
        %v4126 = vsel %vm3922, %v3384, -inf
        %v4127 = vrot.slane %v4126, 4
        %v4128 = vmax.f32 %v4126, %v4127
        %v4129 = vrot.slane %v4128, 2
        %v4130 = vmax.f32 %v4128, %v4129
        %v4131 = vrot.slane %v4130, 1
        %v4132 = vmax.f32 %v4130, %v4131
        %v4133 = vsel %vm3922, %v3383, -inf
        %v4134 = vrot.slane %v4133, 4
        %v4135 = vmax.f32 %v4133, %v4134
        %v4136 = vrot.slane %v4135, 2
        %v4137 = vmax.f32 %v4135, %v4136
        %v4138 = vrot.slane %v4137, 1
        %v4139 = vmax.f32 %v4137, %v4138
        %v4140 = vsel %vm3922, %v3385, -inf
        %v4141 = vrot.slane %v4140, 4
        %v4142 = vmax.f32 %v4140, %v4141
        %v4143 = vrot.slane %v4142, 2
        %v4144 = vmax.f32 %v4142, %v4143
        %v4145 = vrot.slane %v4144, 1
        %v4146 = vmax.f32 %v4144, %v4145
        %v4147 = vsel %vm3922, %v3393, -inf
        %v4148 = vrot.slane %v4147, 4
        %v4149 = vmax.f32 %v4147, %v4148
        %v4150 = vrot.slane %v4149, 2
        %v4151 = vmax.f32 %v4149, %v4150
        %v4152 = vrot.slane %v4151, 1
        %v4153 = vmax.f32 %v4151, %v4152
        %v4154 = vsel %vm3922, %v3401, -inf
        %v4155 = vrot.slane %v4154, 4
        %v4156 = vmax.f32 %v4154, %v4155
        %v4157 = vrot.slane %v4156, 2
        %v4158 = vmax.f32 %v4156, %v4157
        %v4159 = vrot.slane %v4158, 1
        %v4160 = vmax.f32 %v4158, %v4159
        %v4161 = vsel %vm3922, %v3400, -inf
        %v4162 = vrot.slane %v4161, 4
        %v4163 = vmax.f32 %v4161, %v4162
        %v4164 = vrot.slane %v4163, 2
        %v4165 = vmax.f32 %v4163, %v4164
        %v4166 = vrot.slane %v4165, 1
        %v4167 = vmax.f32 %v4165, %v4166
        %v4168 = vsel %vm3922, %v3402, -inf
        %v4169 = vrot.slane %v4168, 4
        %v4170 = vmax.f32 %v4168, %v4169
        %v4171 = vrot.slane %v4170, 2
        %v4172 = vmax.f32 %v4170, %v4171
        %v4173 = vrot.slane %v4172, 1
        %v4174 = vmax.f32 %v4172, %v4173
        %v4175 = vsel %vm3922, %v3410, -inf
        %v4176 = vrot.slane %v4175, 4
        %v4177 = vmax.f32 %v4175, %v4176
        %v4178 = vrot.slane %v4177, 2
        %v4179 = vmax.f32 %v4177, %v4178
        %v4180 = vrot.slane %v4179, 1
        %v4181 = vmax.f32 %v4179, %v4180
        %v4182 = vsel %vm3922, %v3418, -inf
        %v4183 = vrot.slane %v4182, 4
        %v4184 = vmax.f32 %v4182, %v4183
        %v4185 = vrot.slane %v4184, 2
        %v4186 = vmax.f32 %v4184, %v4185
        %v4187 = vrot.slane %v4186, 1
        %v4188 = vmax.f32 %v4186, %v4187
        %v4189 = vsel %vm3922, %v3417, -inf
        %v4190 = vrot.slane %v4189, 4
        %v4191 = vmax.f32 %v4189, %v4190
        %v4192 = vrot.slane %v4191, 2
        %v4193 = vmax.f32 %v4191, %v4192
        %v4194 = vrot.slane %v4193, 1
        %v4195 = vmax.f32 %v4193, %v4194
        %v4196 = vsel %vm3922, %v3419, -inf
        %v4197 = vrot.slane %v4196, 4
        %v4198 = vmax.f32 %v4196, %v4197
        %v4199 = vrot.slane %v4198, 2
        %v4200 = vmax.f32 %v4198, %v4199
        %v4201 = vrot.slane %v4200, 1
        %v4202 = vmax.f32 %v4200, %v4201
        %v4203 = vsel %vm3922, %v3427, -inf
        %v4204 = vrot.slane %v4203, 4
        %v4205 = vmax.f32 %v4203, %v4204
        %v4206 = vrot.slane %v4205, 2
        %v4207 = vmax.f32 %v4205, %v4206
        %v4208 = vrot.slane %v4207, 1
        %v4209 = vmax.f32 %v4207, %v4208
        %v4210 = vsel %vm3922, %v3435, -inf
        %v4211 = vrot.slane %v4210, 4
        %v4212 = vmax.f32 %v4210, %v4211
        %v4213 = vrot.slane %v4212, 2
        %v4214 = vmax.f32 %v4212, %v4213
        %v4215 = vrot.slane %v4214, 1
        %v4216 = vmax.f32 %v4214, %v4215
        %v4217 = vsel %vm3922, %v3434, -inf
        %v4218 = vrot.slane %v4217, 4
        %v4219 = vmax.f32 %v4217, %v4218
        %v4220 = vrot.slane %v4219, 2
        %v4221 = vmax.f32 %v4219, %v4220
        %v4222 = vrot.slane %v4221, 1
        %v4223 = vmax.f32 %v4221, %v4222
        %v4224 = vsel %vm3922, %v3436, -inf
        %v4225 = vrot.slane %v4224, 4
        %v4226 = vmax.f32 %v4224, %v4225
        %v4227 = vrot.slane %v4226, 2
        %v4228 = vmax.f32 %v4226, %v4227
        %v4229 = vrot.slane %v4228, 1
        %v4230 = vmax.f32 %v4228, %v4229
        %v4231 = vsel %vm3922, %v3444, -inf
        %v4232 = vrot.slane %v4231, 4
        %v4233 = vmax.f32 %v4231, %v4232
        %v4234 = vrot.slane %v4233, 2
        %v4235 = vmax.f32 %v4233, %v4234
        %v4236 = vrot.slane %v4235, 1
        %v4237 = vmax.f32 %v4235, %v4236
        %v4238 = vsel %vm3922, %v3452, -inf
        %v4239 = vrot.slane %v4238, 4
        %v4240 = vmax.f32 %v4238, %v4239
        %v4241 = vrot.slane %v4240, 2
        %v4242 = vmax.f32 %v4240, %v4241
        %v4243 = vrot.slane %v4242, 1
        %v4244 = vmax.f32 %v4242, %v4243
        %v4245 = vsel %vm3922, %v3451, -inf
        %v4246 = vrot.slane %v4245, 4
        %v4247 = vmax.f32 %v4245, %v4246
        %v4248 = vrot.slane %v4247, 2
        %v4249 = vmax.f32 %v4247, %v4248
        %v4250 = vrot.slane %v4249, 1
        %v4251 = vmax.f32 %v4249, %v4250
        %v4252 = vsel %vm3922, %v3453, -inf
        %v4253 = vrot.slane %v4252, 4
        %v4254 = vmax.f32 %v4252, %v4253
        %v4255 = vrot.slane %v4254, 2
        %v4256 = vmax.f32 %v4254, %v4255
        %v4257 = vrot.slane %v4256, 1
        %v4258 = vmax.f32 %v4256, %v4257
        %v4259 = vsel %vm3922, %v3461, -inf
        %v4260 = vrot.slane %v4259, 4
        %v4261 = vmax.f32 %v4259, %v4260
        %v4262 = vrot.slane %v4261, 2
        %v4263 = vmax.f32 %v4261, %v4262
        %v4264 = vrot.slane %v4263, 1
        %v4265 = vmax.f32 %v4263, %v4264
        %v4266 = vsel %vm3922, %v3469, -inf
        %v4267 = vrot.slane %v4266, 4
        %v4268 = vmax.f32 %v4266, %v4267
        %v4269 = vrot.slane %v4268, 2
        %v4270 = vmax.f32 %v4268, %v4269
        %v4271 = vrot.slane %v4270, 1
        %v4272 = vmax.f32 %v4270, %v4271
        %v4273 = vsel %vm3922, %v3468, -inf
        %v4274 = vrot.slane %v4273, 4
        %v4275 = vmax.f32 %v4273, %v4274
        %v4276 = vrot.slane %v4275, 2
        %v4277 = vmax.f32 %v4275, %v4276
        %v4278 = vrot.slane %v4277, 1
        %v4279 = vmax.f32 %v4277, %v4278
        %v4280 = vsel %vm3922, %v3470, -inf
        %v4281 = vrot.slane %v4280, 4
        %v4282 = vmax.f32 %v4280, %v4281
        %v4283 = vrot.slane %v4282, 2
        %v4284 = vmax.f32 %v4282, %v4283
        %v4285 = vrot.slane %v4284, 1
        %v4286 = vmax.f32 %v4284, %v4285
        %v4287 = vsel %vm3922, %v3478, -inf
        %v4288 = vrot.slane %v4287, 4
        %v4289 = vmax.f32 %v4287, %v4288
        %v4290 = vrot.slane %v4289, 2
        %v4291 = vmax.f32 %v4289, %v4290
        %v4292 = vrot.slane %v4291, 1
        %v4293 = vmax.f32 %v4291, %v4292
        %v4294 = vsel %vm3922, %v3486, -inf
        %v4295 = vrot.slane %v4294, 4
        %v4296 = vmax.f32 %v4294, %v4295
        %v4297 = vrot.slane %v4296, 2
        %v4298 = vmax.f32 %v4296, %v4297
        %v4299 = vrot.slane %v4298, 1
        %v4300 = vmax.f32 %v4298, %v4299
        %v4301 = vsel %vm3922, %v3485, -inf
        %v4302 = vrot.slane %v4301, 4
        %v4303 = vmax.f32 %v4301, %v4302
        %v4304 = vrot.slane %v4303, 2
        %v4305 = vmax.f32 %v4303, %v4304
        %v4306 = vrot.slane %v4305, 1
        %v4307 = vmax.f32 %v4305, %v4306
        %v4308 = vsel %vm3922, %v3487, -inf
        %v4309 = vrot.slane %v4308, 4
        %v4310 = vmax.f32 %v4308, %v4309
        %v4311 = vrot.slane %v4310, 2
        %v4312 = vmax.f32 %v4310, %v4311
        %v4313 = vrot.slane %v4312, 1
        %v4314 = vmax.f32 %v4312, %v4313
        %v4315 = vsel %vm3922, %v3495, -inf
        %v4316 = vrot.slane %v4315, 4
        %v4317 = vmax.f32 %v4315, %v4316
        %v4318 = vrot.slane %v4317, 2
        %v4319 = vmax.f32 %v4317, %v4318
        %v4320 = vrot.slane %v4319, 1
        %v4321 = vmax.f32 %v4319, %v4320
        %v4322 = vsel %vm3922, %v3503, -inf
        %v4323 = vrot.slane %v4322, 4
        %v4324 = vmax.f32 %v4322, %v4323
        %v4325 = vrot.slane %v4324, 2
        %v4326 = vmax.f32 %v4324, %v4325
        %v4327 = vrot.slane %v4326, 1
        %v4328 = vmax.f32 %v4326, %v4327
        %v4329 = vsel %vm3922, %v3502, -inf
        %v4330 = vrot.slane %v4329, 4
        %v4331 = vmax.f32 %v4329, %v4330
        %v4332 = vrot.slane %v4331, 2
        %v4333 = vmax.f32 %v4331, %v4332
        %v4334 = vrot.slane %v4333, 1
        %v4335 = vmax.f32 %v4333, %v4334
        %v4336 = vsel %vm3922, %v3504, -inf
        %v4337 = vrot.slane %v4336, 4
        %v4338 = vmax.f32 %v4336, %v4337
        %v4339 = vrot.slane %v4338, 2
        %v4340 = vmax.f32 %v4338, %v4339
        %v4341 = vrot.slane %v4340, 1
        %v4342 = vmax.f32 %v4340, %v4341
        %v4343 = vsel %vm3922, %v3512, -inf
        %v4344 = vrot.slane %v4343, 4
        %v4345 = vmax.f32 %v4343, %v4344
        %v4346 = vrot.slane %v4345, 2
        %v4347 = vmax.f32 %v4345, %v4346
        %v4348 = vrot.slane %v4347, 1
        %v4349 = vmax.f32 %v4347, %v4348
        %v4350 = vsel %vm3922, %v3520, -inf
        %v4351 = vrot.slane %v4350, 4
        %v4352 = vmax.f32 %v4350, %v4351
        %v4353 = vrot.slane %v4352, 2
        %v4354 = vmax.f32 %v4352, %v4353
        %v4355 = vrot.slane %v4354, 1
        %v4356 = vmax.f32 %v4354, %v4355
        %v4357 = vsel %vm3922, %v3519, -inf
        %v4358 = vrot.slane %v4357, 4
        %v4359 = vmax.f32 %v4357, %v4358
        %v4360 = vrot.slane %v4359, 2
        %v4361 = vmax.f32 %v4359, %v4360
        %v4362 = vrot.slane %v4361, 1
        %v4363 = vmax.f32 %v4361, %v4362
        %v4364 = vsel %vm3922, %v3521, -inf
        %v4365 = vrot.slane %v4364, 4
        %v4366 = vmax.f32 %v4364, %v4365
        %v4367 = vrot.slane %v4366, 2
        %v4368 = vmax.f32 %v4366, %v4367
        %v4369 = vrot.slane %v4368, 1
        %v4370 = vmax.f32 %v4368, %v4369
        %v4371 = vsel %vm3922, %v3529, -inf
        %v4372 = vrot.slane %v4371, 4
        %v4373 = vmax.f32 %v4371, %v4372
        %v4374 = vrot.slane %v4373, 2
        %v4375 = vmax.f32 %v4373, %v4374
        %v4376 = vrot.slane %v4375, 1
        %v4377 = vmax.f32 %v4375, %v4376
        %v4378 = vsel %vm3922, %v3537, -inf
        %v4379 = vrot.slane %v4378, 4
        %v4380 = vmax.f32 %v4378, %v4379
        %v4381 = vrot.slane %v4380, 2
        %v4382 = vmax.f32 %v4380, %v4381
        %v4383 = vrot.slane %v4382, 1
        %v4384 = vmax.f32 %v4382, %v4383
        %v4385 = vsel %vm3922, %v3536, -inf
        %v4386 = vrot.slane %v4385, 4
        %v4387 = vmax.f32 %v4385, %v4386
        %v4388 = vrot.slane %v4387, 2
        %v4389 = vmax.f32 %v4387, %v4388
        %v4390 = vrot.slane %v4389, 1
        %v4391 = vmax.f32 %v4389, %v4390
        %v4392 = vsel %vm3922, %v3538, -inf
        %v4393 = vrot.slane %v4392, 4
        %v4394 = vmax.f32 %v4392, %v4393
        %v4395 = vrot.slane %v4394, 2
        %v4396 = vmax.f32 %v4394, %v4395
        %v4397 = vrot.slane %v4396, 1
        %v4398 = vmax.f32 %v4396, %v4397
        %v4399 = vsel %vm3922, %v3546, -inf
        %v4400 = vrot.slane %v4399, 4
        %v4401 = vmax.f32 %v4399, %v4400
        %v4402 = vrot.slane %v4401, 2
        %v4403 = vmax.f32 %v4401, %v4402
        %v4404 = vrot.slane %v4403, 1
        %v4405 = vmax.f32 %v4403, %v4404
        %v4406 = vsel %vm3922, %v3554, -inf
        %v4407 = vrot.slane %v4406, 4
        %v4408 = vmax.f32 %v4406, %v4407
        %v4409 = vrot.slane %v4408, 2
        %v4410 = vmax.f32 %v4408, %v4409
        %v4411 = vrot.slane %v4410, 1
        %v4412 = vmax.f32 %v4410, %v4411
        %v4413 = vsel %vm3922, %v3553, -inf
        %v4414 = vrot.slane %v4413, 4
        %v4415 = vmax.f32 %v4413, %v4414
        %v4416 = vrot.slane %v4415, 2
        %v4417 = vmax.f32 %v4415, %v4416
        %v4418 = vrot.slane %v4417, 1
        %v4419 = vmax.f32 %v4417, %v4418
        %v4420 = vsel %vm3922, %v3555, -inf
        %v4421 = vrot.slane %v4420, 4
        %v4422 = vmax.f32 %v4420, %v4421
        %v4423 = vrot.slane %v4422, 2
        %v4424 = vmax.f32 %v4422, %v4423
        %v4425 = vrot.slane %v4424, 1
        %v4426 = vmax.f32 %v4424, %v4425
        %v4427 = vsel %vm3922, %v3563, -inf
        %v4428 = vrot.slane %v4427, 4
        %v4429 = vmax.f32 %v4427, %v4428
        %v4430 = vrot.slane %v4429, 2
        %v4431 = vmax.f32 %v4429, %v4430
        %v4432 = vrot.slane %v4431, 1
        %v4433 = vmax.f32 %v4431, %v4432
        %v4434 = vsel %vm3922, %v3571, -inf
        %v4435 = vrot.slane %v4434, 4
        %v4436 = vmax.f32 %v4434, %v4435
        %v4437 = vrot.slane %v4436, 2
        %v4438 = vmax.f32 %v4436, %v4437
        %v4439 = vrot.slane %v4438, 1
        %v4440 = vmax.f32 %v4438, %v4439
        %v4441 = vsel %vm3922, %v3570, -inf
        %v4442 = vrot.slane %v4441, 4
        %v4443 = vmax.f32 %v4441, %v4442
        %v4444 = vrot.slane %v4443, 2
        %v4445 = vmax.f32 %v4443, %v4444
        %v4446 = vrot.slane %v4445, 1
        %v4447 = vmax.f32 %v4445, %v4446
        %v4448 = vsel %vm3922, %v3572, -inf
        %v4449 = vrot.slane %v4448, 4
        %v4450 = vmax.f32 %v4448, %v4449
        %v4451 = vrot.slane %v4450, 2
        %v4452 = vmax.f32 %v4450, %v4451
        %v4453 = vrot.slane %v4452, 1
        %v4454 = vmax.f32 %v4452, %v4453
        %v4455 = vsel %vm3922, %v3580, -inf
        %v4456 = vrot.slane %v4455, 4
        %v4457 = vmax.f32 %v4455, %v4456
        %v4458 = vrot.slane %v4457, 2
        %v4459 = vmax.f32 %v4457, %v4458
        %v4460 = vrot.slane %v4459, 1
        %v4461 = vmax.f32 %v4459, %v4460
        %v4462 = vsel %vm3922, %v3588, -inf
        %v4463 = vrot.slane %v4462, 4
        %v4464 = vmax.f32 %v4462, %v4463
        %v4465 = vrot.slane %v4464, 2
        %v4466 = vmax.f32 %v4464, %v4465
        %v4467 = vrot.slane %v4466, 1
        %v4468 = vmax.f32 %v4466, %v4467
        %v4469 = vsel %vm3922, %v3587, -inf
        %v4470 = vrot.slane %v4469, 4
        %v4471 = vmax.f32 %v4469, %v4470
        %v4472 = vrot.slane %v4471, 2
        %v4473 = vmax.f32 %v4471, %v4472
        %v4474 = vrot.slane %v4473, 1
        %v4475 = vmax.f32 %v4473, %v4474
        %v4476 = vsel %vm3922, %v3589, -inf
        %v4477 = vrot.slane %v4476, 4
        %v4478 = vmax.f32 %v4476, %v4477
        %v4479 = vrot.slane %v4478, 2
        %v4480 = vmax.f32 %v4478, %v4479
        %v4481 = vrot.slane %v4480, 1
        %v4482 = vmax.f32 %v4480, %v4481
        %v4483 = vsel %vm3922, %v3597, -inf
        %v4484 = vrot.slane %v4483, 4
        %v4485 = vmax.f32 %v4483, %v4484
        %v4486 = vrot.slane %v4485, 2
        %v4487 = vmax.f32 %v4485, %v4486
        %v4488 = vrot.slane %v4487, 1
        %v4489 = vmax.f32 %v4487, %v4488
        %v4490 = vsel %vm3922, %v3605, -inf
        %v4491 = vrot.slane %v4490, 4
        %v4492 = vmax.f32 %v4490, %v4491
        %v4493 = vrot.slane %v4492, 2
        %v4494 = vmax.f32 %v4492, %v4493
        %v4495 = vrot.slane %v4494, 1
        %v4496 = vmax.f32 %v4494, %v4495
        %v4497 = vsel %vm3922, %v3604, -inf
        %v4498 = vrot.slane %v4497, 4
        %v4499 = vmax.f32 %v4497, %v4498
        %v4500 = vrot.slane %v4499, 2
        %v4501 = vmax.f32 %v4499, %v4500
        %v4502 = vrot.slane %v4501, 1
        %v4503 = vmax.f32 %v4501, %v4502
        %v4504 = vsel %vm3922, %v3606, -inf
        %v4505 = vrot.slane %v4504, 4
        %v4506 = vmax.f32 %v4504, %v4505
        %v4507 = vrot.slane %v4506, 2
        %v4508 = vmax.f32 %v4506, %v4507
        %v4509 = vrot.slane %v4508, 1
        %v4510 = vmax.f32 %v4508, %v4509
        %v4511 = vsel %vm3922, %v3614, -inf
        %v4512 = vrot.slane %v4511, 4
        %v4513 = vmax.f32 %v4511, %v4512
        %v4514 = vrot.slane %v4513, 2
        %v4515 = vmax.f32 %v4513, %v4514
        %v4516 = vrot.slane %v4515, 1
        %v4517 = vmax.f32 %v4515, %v4516
        %v4518 = vsel %vm3922, %v3622, -inf
        %v4519 = vrot.slane %v4518, 4
        %v4520 = vmax.f32 %v4518, %v4519
        %v4521 = vrot.slane %v4520, 2
        %v4522 = vmax.f32 %v4520, %v4521
        %v4523 = vrot.slane %v4522, 1
        %v4524 = vmax.f32 %v4522, %v4523
        %v4525 = vsel %vm3922, %v3621, -inf
        %v4526 = vrot.slane %v4525, 4
        %v4527 = vmax.f32 %v4525, %v4526
        %v4528 = vrot.slane %v4527, 2
        %v4529 = vmax.f32 %v4527, %v4528
        %v4530 = vrot.slane %v4529, 1
        %v4531 = vmax.f32 %v4529, %v4530
        %v4532 = vsel %vm3922, %v3623, -inf
        %v4533 = vrot.slane %v4532, 4
        %v4534 = vmax.f32 %v4532, %v4533
        %v4535 = vrot.slane %v4534, 2
        %v4536 = vmax.f32 %v4534, %v4535
        %v4537 = vrot.slane %v4536, 1
        %v4538 = vmax.f32 %v4536, %v4537
        %v4539 = vsel %vm3922, %v3631, -inf
        %v4540 = vrot.slane %v4539, 4
        %v4541 = vmax.f32 %v4539, %v4540
        %v4542 = vrot.slane %v4541, 2
        %v4543 = vmax.f32 %v4541, %v4542
        %v4544 = vrot.slane %v4543, 1
        %v4545 = vmax.f32 %v4543, %v4544
        %v4546 = vsel %vm3922, %v3639, -inf
        %v4547 = vrot.slane %v4546, 4
        %v4548 = vmax.f32 %v4546, %v4547
        %v4549 = vrot.slane %v4548, 2
        %v4550 = vmax.f32 %v4548, %v4549
        %v4551 = vrot.slane %v4550, 1
        %v4552 = vmax.f32 %v4550, %v4551
        %v4553 = vsel %vm3922, %v3638, -inf
        %v4554 = vrot.slane %v4553, 4
        %v4555 = vmax.f32 %v4553, %v4554
        %v4556 = vrot.slane %v4555, 2
        %v4557 = vmax.f32 %v4555, %v4556
        %v4558 = vrot.slane %v4557, 1
        %v4559 = vmax.f32 %v4557, %v4558
        %v4560 = vsel %vm3922, %v3640, -inf
        %v4561 = vrot.slane %v4560, 4
        %v4562 = vmax.f32 %v4560, %v4561
        %v4563 = vrot.slane %v4562, 2
        %v4564 = vmax.f32 %v4562, %v4563
        %v4565 = vrot.slane %v4564, 1
        %v4566 = vmax.f32 %v4564, %v4565
        %v4567 = vsel %vm3922, %v3648, -inf
        %v4568 = vrot.slane %v4567, 4
        %v4569 = vmax.f32 %v4567, %v4568
        %v4570 = vrot.slane %v4569, 2
        %v4571 = vmax.f32 %v4569, %v4570
        %v4572 = vrot.slane %v4571, 1
        %v4573 = vmax.f32 %v4571, %v4572
        %v4574 = vsel %vm3922, %v3656, -inf
        %v4575 = vrot.slane %v4574, 4
        %v4576 = vmax.f32 %v4574, %v4575
        %v4577 = vrot.slane %v4576, 2
        %v4578 = vmax.f32 %v4576, %v4577
        %v4579 = vrot.slane %v4578, 1
        %v4580 = vmax.f32 %v4578, %v4579
        %v4581 = vsel %vm3922, %v3655, -inf
        %v4582 = vrot.slane %v4581, 4
        %v4583 = vmax.f32 %v4581, %v4582
        %v4584 = vrot.slane %v4583, 2
        %v4585 = vmax.f32 %v4583, %v4584
        %v4586 = vrot.slane %v4585, 1
        %v4587 = vmax.f32 %v4585, %v4586
        %v4588 = vsel %vm3922, %v3657, -inf
        %v4589 = vrot.slane %v4588, 4
        %v4590 = vmax.f32 %v4588, %v4589
        %v4591 = vrot.slane %v4590, 2
        %v4592 = vmax.f32 %v4590, %v4591
        %v4593 = vrot.slane %v4592, 1
        %v4594 = vmax.f32 %v4592, %v4593
        %v4595 = vsel %vm3922, %v3665, -inf
        %v4596 = vrot.slane %v4595, 4
        %v4597 = vmax.f32 %v4595, %v4596
        %v4598 = vrot.slane %v4597, 2
        %v4599 = vmax.f32 %v4597, %v4598
        %v4600 = vrot.slane %v4599, 1
        %v4601 = vmax.f32 %v4599, %v4600
        %v4602 = vsel %vm3922, %v3673, -inf
        %v4603 = vrot.slane %v4602, 4
        %v4604 = vmax.f32 %v4602, %v4603
        %v4605 = vrot.slane %v4604, 2
        %v4606 = vmax.f32 %v4604, %v4605
        %v4607 = vrot.slane %v4606, 1
        %v4608 = vmax.f32 %v4606, %v4607
        %v4609 = vsel %vm3922, %v3672, -inf
        %v4610 = vrot.slane %v4609, 4
        %v4611 = vmax.f32 %v4609, %v4610
        %v4612 = vrot.slane %v4611, 2
        %v4613 = vmax.f32 %v4611, %v4612
        %v4614 = vrot.slane %v4613, 1
        %v4615 = vmax.f32 %v4613, %v4614
        %v4616 = vsel %vm3922, %v3674, -inf
        %v4617 = vrot.slane %v4616, 4
        %v4618 = vmax.f32 %v4616, %v4617
        %v4619 = vrot.slane %v4618, 2
        %v4620 = vmax.f32 %v4618, %v4619
        %v4621 = vrot.slane %v4620, 1
        %v4622 = vmax.f32 %v4620, %v4621
        %v4623 = vsel %vm3922, %v3682, -inf
        %v4624 = vrot.slane %v4623, 4
        %v4625 = vmax.f32 %v4623, %v4624
        %v4626 = vrot.slane %v4625, 2
        %v4627 = vmax.f32 %v4625, %v4626
        %v4628 = vrot.slane %v4627, 1
        %v4629 = vmax.f32 %v4627, %v4628
        %v4630 = vsel %vm3922, %v3690, -inf
        %v4631 = vrot.slane %v4630, 4
        %v4632 = vmax.f32 %v4630, %v4631
        %v4633 = vrot.slane %v4632, 2
        %v4634 = vmax.f32 %v4632, %v4633
        %v4635 = vrot.slane %v4634, 1
        %v4636 = vmax.f32 %v4634, %v4635
        %v4637 = vsel %vm3922, %v3689, -inf
        %v4638 = vrot.slane %v4637, 4
        %v4639 = vmax.f32 %v4637, %v4638
        %v4640 = vrot.slane %v4639, 2
        %v4641 = vmax.f32 %v4639, %v4640
        %v4642 = vrot.slane %v4641, 1
        %v4643 = vmax.f32 %v4641, %v4642
        %v4644 = vsel %vm3922, %v3691, -inf
        %v4645 = vrot.slane %v4644, 4
        %v4646 = vmax.f32 %v4644, %v4645
        %v4647 = vrot.slane %v4646, 2
        %v4648 = vmax.f32 %v4646, %v4647
        %v4649 = vrot.slane %v4648, 1
        %v4650 = vmax.f32 %v4648, %v4649
        %v4651 = vsel %vm3922, %v3699, -inf
        %v4652 = vrot.slane %v4651, 4
        %v4653 = vmax.f32 %v4651, %v4652
        %v4654 = vrot.slane %v4653, 2
        %v4655 = vmax.f32 %v4653, %v4654
        %v4656 = vrot.slane %v4655, 1
        %v4657 = vmax.f32 %v4655, %v4656
        %v4658 = vsel %vm3922, %v3707, -inf
        %v4659 = vrot.slane %v4658, 4
        %v4660 = vmax.f32 %v4658, %v4659
        %v4661 = vrot.slane %v4660, 2
        %v4662 = vmax.f32 %v4660, %v4661
        %v4663 = vrot.slane %v4662, 1
        %v4664 = vmax.f32 %v4662, %v4663
        %v4665 = vsel %vm3922, %v3706, -inf
        %v4666 = vrot.slane %v4665, 4
        %v4667 = vmax.f32 %v4665, %v4666
        %v4668 = vrot.slane %v4667, 2
        %v4669 = vmax.f32 %v4667, %v4668
        %v4670 = vrot.slane %v4669, 1
        %v4671 = vmax.f32 %v4669, %v4670
        %v4672 = vsel %vm3922, %v3708, -inf
        %v4673 = vrot.slane %v4672, 4
        %v4674 = vmax.f32 %v4672, %v4673
        %v4675 = vrot.slane %v4674, 2
        %v4676 = vmax.f32 %v4674, %v4675
        %v4677 = vrot.slane %v4676, 1
        %v4678 = vmax.f32 %v4676, %v4677
        %v4679 = vsel %vm3922, %v3716, -inf
        %v4680 = vrot.slane %v4679, 4
        %v4681 = vmax.f32 %v4679, %v4680
        %v4682 = vrot.slane %v4681, 2
        %v4683 = vmax.f32 %v4681, %v4682
        %v4684 = vrot.slane %v4683, 1
        %v4685 = vmax.f32 %v4683, %v4684
        %v4686 = vsel %vm3922, %v3724, -inf
        %v4687 = vrot.slane %v4686, 4
        %v4688 = vmax.f32 %v4686, %v4687
        %v4689 = vrot.slane %v4688, 2
        %v4690 = vmax.f32 %v4688, %v4689
        %v4691 = vrot.slane %v4690, 1
        %v4692 = vmax.f32 %v4690, %v4691
        %v4693 = vsel %vm3922, %v3723, -inf
        %v4694 = vrot.slane %v4693, 4
        %v4695 = vmax.f32 %v4693, %v4694
        %v4696 = vrot.slane %v4695, 2
        %v4697 = vmax.f32 %v4695, %v4696
        %v4698 = vrot.slane %v4697, 1
        %v4699 = vmax.f32 %v4697, %v4698
        %v4700 = vsel %vm3922, %v3725, -inf
        %v4701 = vrot.slane %v4700, 4
        %v4702 = vmax.f32 %v4700, %v4701
        %v4703 = vrot.slane %v4702, 2
        %v4704 = vmax.f32 %v4702, %v4703
        %v4705 = vrot.slane %v4704, 1
        %v4706 = vmax.f32 %v4704, %v4705
        %v4707 = vsel %vm3922, %v3733, -inf
        %v4708 = vrot.slane %v4707, 4
        %v4709 = vmax.f32 %v4707, %v4708
        %v4710 = vrot.slane %v4709, 2
        %v4711 = vmax.f32 %v4709, %v4710
        %v4712 = vrot.slane %v4711, 1
        %v4713 = vmax.f32 %v4711, %v4712
        %v4714 = vsel %vm3922, %v3741, -inf
        %v4715 = vrot.slane %v4714, 4
        %v4716 = vmax.f32 %v4714, %v4715
        %v4717 = vrot.slane %v4716, 2
        %v4718 = vmax.f32 %v4716, %v4717
        %v4719 = vrot.slane %v4718, 1
        %v4720 = vmax.f32 %v4718, %v4719
        %v4721 = vsel %vm3922, %v3740, -inf
        %v4722 = vrot.slane %v4721, 4
        %v4723 = vmax.f32 %v4721, %v4722
        %v4724 = vrot.slane %v4723, 2
        %v4725 = vmax.f32 %v4723, %v4724
        %v4726 = vrot.slane %v4725, 1
        %v4727 = vmax.f32 %v4725, %v4726
        %v4728 = vsel %vm3922, %v3742, -inf
        %v4729 = vrot.slane %v4728, 4
        %v4730 = vmax.f32 %v4728, %v4729
        %v4731 = vrot.slane %v4730, 2
        %v4732 = vmax.f32 %v4730, %v4731
        %v4733 = vrot.slane %v4732, 1
        %v4734 = vmax.f32 %v4732, %v4733
        %v4735 = vsel %vm3922, %v3750, -inf
        %v4736 = vrot.slane %v4735, 4
        %v4737 = vmax.f32 %v4735, %v4736
        %v4738 = vrot.slane %v4737, 2
        %v4739 = vmax.f32 %v4737, %v4738
        %v4740 = vrot.slane %v4739, 1
        %v4741 = vmax.f32 %v4739, %v4740
        %v4742 = vsel %vm3922, %v3758, -inf
        %v4743 = vrot.slane %v4742, 4
        %v4744 = vmax.f32 %v4742, %v4743
        %v4745 = vrot.slane %v4744, 2
        %v4746 = vmax.f32 %v4744, %v4745
        %v4747 = vrot.slane %v4746, 1
        %v4748 = vmax.f32 %v4746, %v4747
        %v4749 = vsel %vm3922, %v3757, -inf
        %v4750 = vrot.slane %v4749, 4
        %v4751 = vmax.f32 %v4749, %v4750
        %v4752 = vrot.slane %v4751, 2
        %v4753 = vmax.f32 %v4751, %v4752
        %v4754 = vrot.slane %v4753, 1
        %v4755 = vmax.f32 %v4753, %v4754
        %v4756 = vsel %vm3922, %v3759, -inf
        %v4757 = vrot.slane %v4756, 4
        %v4758 = vmax.f32 %v4756, %v4757
        %v4759 = vrot.slane %v4758, 2
        %v4760 = vmax.f32 %v4758, %v4759
        %v4761 = vrot.slane %v4760, 1
        %v4762 = vmax.f32 %v4760, %v4761
        %v4763 = vsel %vm3922, %v3767, -inf
        %v4764 = vrot.slane %v4763, 4
        %v4765 = vmax.f32 %v4763, %v4764
        %v4766 = vrot.slane %v4765, 2
        %v4767 = vmax.f32 %v4765, %v4766
        %v4768 = vrot.slane %v4767, 1
        %v4769 = vmax.f32 %v4767, %v4768
        %v4770 = vsel %vm3922, %v3775, -inf
        %v4771 = vrot.slane %v4770, 4
        %v4772 = vmax.f32 %v4770, %v4771
        %v4773 = vrot.slane %v4772, 2
        %v4774 = vmax.f32 %v4772, %v4773
        %v4775 = vrot.slane %v4774, 1
        %v4776 = vmax.f32 %v4774, %v4775
        %v4777 = vsel %vm3922, %v3774, -inf
        %v4778 = vrot.slane %v4777, 4
        %v4779 = vmax.f32 %v4777, %v4778
        %v4780 = vrot.slane %v4779, 2
        %v4781 = vmax.f32 %v4779, %v4780
        %v4782 = vrot.slane %v4781, 1
        %v4783 = vmax.f32 %v4781, %v4782
        %v4784 = vsel %vm3922, %v3776, -inf
        %v4785 = vrot.slane %v4784, 4
        %v4786 = vmax.f32 %v4784, %v4785
        %v4787 = vrot.slane %v4786, 2
        %v4788 = vmax.f32 %v4786, %v4787
        %v4789 = vrot.slane %v4788, 1
        %v4790 = vmax.f32 %v4788, %v4789
        %v4791 = vsel %vm3922, %v3784, -inf
        %v4792 = vrot.slane %v4791, 4
        %v4793 = vmax.f32 %v4791, %v4792
        %v4794 = vrot.slane %v4793, 2
        %v4795 = vmax.f32 %v4793, %v4794
        %v4796 = vrot.slane %v4795, 1
        %v4797 = vmax.f32 %v4795, %v4796
        %v4798 = vsel %vm3922, %v3792, -inf
        %v4799 = vrot.slane %v4798, 4
        %v4800 = vmax.f32 %v4798, %v4799
        %v4801 = vrot.slane %v4800, 2
        %v4802 = vmax.f32 %v4800, %v4801
        %v4803 = vrot.slane %v4802, 1
        %v4804 = vmax.f32 %v4802, %v4803
        %v4805 = vsel %vm3922, %v3791, -inf
        %v4806 = vrot.slane %v4805, 4
        %v4807 = vmax.f32 %v4805, %v4806
        %v4808 = vrot.slane %v4807, 2
        %v4809 = vmax.f32 %v4807, %v4808
        %v4810 = vrot.slane %v4809, 1
        %v4811 = vmax.f32 %v4809, %v4810
        %v4812 = vsel %vm3922, %v3793, -inf
        %v4813 = vrot.slane %v4812, 4
        %v4814 = vmax.f32 %v4812, %v4813
        %v4815 = vrot.slane %v4814, 2
        %v4816 = vmax.f32 %v4814, %v4815
        %v4817 = vrot.slane %v4816, 1
        %v4818 = vmax.f32 %v4816, %v4817
        %v4819 = vsel %vm2455, %v3929, -inf
        %v4820 = vsel %vm2455, %v3985, -inf
        %v4821 = vmax.f32 %v4819, %v4820
        %v4822 = vsel %vm2455, %v3936, -inf
        %v4823 = vsel %vm2455, %v3992, -inf
        %v4824 = vmax.f32 %v4822, %v4823
        %v4825 = vsel %vm2455, %v3943, -inf
        %v4826 = vsel %vm2455, %v3999, -inf
        %v4827 = vmax.f32 %v4825, %v4826
        %v4828 = vsel %vm2455, %v3950, -inf
        %v4829 = vsel %vm2455, %v4006, -inf
        %v4830 = vmax.f32 %v4828, %v4829
        %v4831 = vsel %vm2455, %v3957, -inf
        %v4832 = vsel %vm2455, %v4013, -inf
        %v4833 = vmax.f32 %v4831, %v4832
        %v4834 = vsel %vm2455, %v3964, -inf
        %v4835 = vsel %vm2455, %v4020, -inf
        %v4836 = vmax.f32 %v4834, %v4835
        %v4837 = vsel %vm2455, %v3971, -inf
        %v4838 = vsel %vm2455, %v4027, -inf
        %v4839 = vmax.f32 %v4837, %v4838
        %v4840 = vsel %vm2455, %v3978, -inf
        %v4841 = vsel %vm2455, %v4034, -inf
        %v4842 = vmax.f32 %v4840, %v4841
        %v4843 = vsel %vm2455, %v4041, -inf
        %v4844 = vsel %vm2455, %v4097, -inf
        %v4845 = vmax.f32 %v4843, %v4844
        %v4846 = vsel %vm2455, %v4048, -inf
        %v4847 = vsel %vm2455, %v4104, -inf
        %v4848 = vmax.f32 %v4846, %v4847
        %v4849 = vsel %vm2455, %v4055, -inf
        %v4850 = vsel %vm2455, %v4111, -inf
        %v4851 = vmax.f32 %v4849, %v4850
        %v4852 = vsel %vm2455, %v4062, -inf
        %v4853 = vsel %vm2455, %v4118, -inf
        %v4854 = vmax.f32 %v4852, %v4853
        %v4855 = vsel %vm2455, %v4069, -inf
        %v4856 = vsel %vm2455, %v4125, -inf
        %v4857 = vmax.f32 %v4855, %v4856
        %v4858 = vsel %vm2455, %v4076, -inf
        %v4859 = vsel %vm2455, %v4132, -inf
        %v4860 = vmax.f32 %v4858, %v4859
        %v4861 = vsel %vm2455, %v4083, -inf
        %v4862 = vsel %vm2455, %v4139, -inf
        %v4863 = vmax.f32 %v4861, %v4862
        %v4864 = vsel %vm2455, %v4090, -inf
        %v4865 = vsel %vm2455, %v4146, -inf
        %v4866 = vmax.f32 %v4864, %v4865
        %v4867 = vsel %vm2455, %v4153, -inf
        %v4868 = vsel %vm2455, %v4209, -inf
        %v4869 = vmax.f32 %v4867, %v4868
        %v4870 = vsel %vm2455, %v4160, -inf
        %v4871 = vsel %vm2455, %v4216, -inf
        %v4872 = vmax.f32 %v4870, %v4871
        %v4873 = vsel %vm2455, %v4167, -inf
        %v4874 = vsel %vm2455, %v4223, -inf
        %v4875 = vmax.f32 %v4873, %v4874
        %v4876 = vsel %vm2455, %v4174, -inf
        %v4877 = vsel %vm2455, %v4230, -inf
        %v4878 = vmax.f32 %v4876, %v4877
        %v4879 = vsel %vm2455, %v4181, -inf
        %v4880 = vsel %vm2455, %v4237, -inf
        %v4881 = vmax.f32 %v4879, %v4880
        %v4882 = vsel %vm2455, %v4188, -inf
        %v4883 = vsel %vm2455, %v4244, -inf
        %v4884 = vmax.f32 %v4882, %v4883
        %v4885 = vsel %vm2455, %v4195, -inf
        %v4886 = vsel %vm2455, %v4251, -inf
        %v4887 = vmax.f32 %v4885, %v4886
        %v4888 = vsel %vm2455, %v4202, -inf
        %v4889 = vsel %vm2455, %v4258, -inf
        %v4890 = vmax.f32 %v4888, %v4889
        %v4891 = vsel %vm2455, %v4265, -inf
        %v4892 = vsel %vm2455, %v4321, -inf
        %v4893 = vmax.f32 %v4891, %v4892
        %v4894 = vsel %vm2455, %v4272, -inf
        %v4895 = vsel %vm2455, %v4328, -inf
        %v4896 = vmax.f32 %v4894, %v4895
        %v4897 = vsel %vm2455, %v4279, -inf
        %v4898 = vsel %vm2455, %v4335, -inf
        %v4899 = vmax.f32 %v4897, %v4898
        %v4900 = vsel %vm2455, %v4286, -inf
        %v4901 = vsel %vm2455, %v4342, -inf
        %v4902 = vmax.f32 %v4900, %v4901
        %v4903 = vsel %vm2455, %v4293, -inf
        %v4904 = vsel %vm2455, %v4349, -inf
        %v4905 = vmax.f32 %v4903, %v4904
        %v4906 = vsel %vm2455, %v4300, -inf
        %v4907 = vsel %vm2455, %v4356, -inf
        %v4908 = vmax.f32 %v4906, %v4907
        %v4909 = vsel %vm2455, %v4307, -inf
        %v4910 = vsel %vm2455, %v4363, -inf
        %v4911 = vmax.f32 %v4909, %v4910
        %v4912 = vsel %vm2455, %v4314, -inf
        %v4913 = vsel %vm2455, %v4370, -inf
        %v4914 = vmax.f32 %v4912, %v4913
        %v4915 = vsel %vm2455, %v4377, -inf
        %v4916 = vsel %vm2455, %v4433, -inf
        %v4917 = vmax.f32 %v4915, %v4916
        %v4918 = vsel %vm2455, %v4384, -inf
        %v4919 = vsel %vm2455, %v4440, -inf
        %v4920 = vmax.f32 %v4918, %v4919
        %v4921 = vsel %vm2455, %v4391, -inf
        %v4922 = vsel %vm2455, %v4447, -inf
        %v4923 = vmax.f32 %v4921, %v4922
        %v4924 = vsel %vm2455, %v4398, -inf
        %v4925 = vsel %vm2455, %v4454, -inf
        %v4926 = vmax.f32 %v4924, %v4925
        %v4927 = vsel %vm2455, %v4405, -inf
        %v4928 = vsel %vm2455, %v4461, -inf
        %v4929 = vmax.f32 %v4927, %v4928
        %v4930 = vsel %vm2455, %v4412, -inf
        %v4931 = vsel %vm2455, %v4468, -inf
        %v4932 = vmax.f32 %v4930, %v4931
        %v4933 = vsel %vm2455, %v4419, -inf
        %v4934 = vsel %vm2455, %v4475, -inf
        %v4935 = vmax.f32 %v4933, %v4934
        %v4936 = vsel %vm2455, %v4426, -inf
        %v4937 = vsel %vm2455, %v4482, -inf
        %v4938 = vmax.f32 %v4936, %v4937
        %v4939 = vsel %vm2455, %v4489, -inf
        %v4940 = vsel %vm2455, %v4545, -inf
        %v4941 = vmax.f32 %v4939, %v4940
        %v4942 = vsel %vm2455, %v4496, -inf
        %v4943 = vsel %vm2455, %v4552, -inf
        %v4944 = vmax.f32 %v4942, %v4943
        %v4945 = vsel %vm2455, %v4503, -inf
        %v4946 = vsel %vm2455, %v4559, -inf
        %v4947 = vmax.f32 %v4945, %v4946
        %v4948 = vsel %vm2455, %v4510, -inf
        %v4949 = vsel %vm2455, %v4566, -inf
        %v4950 = vmax.f32 %v4948, %v4949
        %v4951 = vsel %vm2455, %v4517, -inf
        %v4952 = vsel %vm2455, %v4573, -inf
        %v4953 = vmax.f32 %v4951, %v4952
        %v4954 = vsel %vm2455, %v4524, -inf
        %v4955 = vsel %vm2455, %v4580, -inf
        %v4956 = vmax.f32 %v4954, %v4955
        %v4957 = vsel %vm2455, %v4531, -inf
        %v4958 = vsel %vm2455, %v4587, -inf
        %v4959 = vmax.f32 %v4957, %v4958
        %v4960 = vsel %vm2455, %v4538, -inf
        %v4961 = vsel %vm2455, %v4594, -inf
        %v4962 = vmax.f32 %v4960, %v4961
        %v4963 = vsel %vm2455, %v4601, -inf
        %v4964 = vsel %vm2455, %v4657, -inf
        %v4965 = vmax.f32 %v4963, %v4964
        %v4966 = vsel %vm2455, %v4608, -inf
        %v4967 = vsel %vm2455, %v4664, -inf
        %v4968 = vmax.f32 %v4966, %v4967
        %v4969 = vsel %vm2455, %v4615, -inf
        %v4970 = vsel %vm2455, %v4671, -inf
        %v4971 = vmax.f32 %v4969, %v4970
        %v4972 = vsel %vm2455, %v4622, -inf
        %v4973 = vsel %vm2455, %v4678, -inf
        %v4974 = vmax.f32 %v4972, %v4973
        %v4975 = vsel %vm2455, %v4629, -inf
        %v4976 = vsel %vm2455, %v4685, -inf
        %v4977 = vmax.f32 %v4975, %v4976
        %v4978 = vsel %vm2455, %v4636, -inf
        %v4979 = vsel %vm2455, %v4692, -inf
        %v4980 = vmax.f32 %v4978, %v4979
        %v4981 = vsel %vm2455, %v4643, -inf
        %v4982 = vsel %vm2455, %v4699, -inf
        %v4983 = vmax.f32 %v4981, %v4982
        %v4984 = vsel %vm2455, %v4650, -inf
        %v4985 = vsel %vm2455, %v4706, -inf
        %v4986 = vmax.f32 %v4984, %v4985
        %v4987 = vsel %vm2455, %v4713, -inf
        %v4988 = vsel %vm2455, %v4769, -inf
        %v4989 = vmax.f32 %v4987, %v4988
        %v4990 = vsel %vm2455, %v4720, -inf
        %v4991 = vsel %vm2455, %v4776, -inf
        %v4992 = vmax.f32 %v4990, %v4991
        %v4993 = vsel %vm2455, %v4727, -inf
        %v4994 = vsel %vm2455, %v4783, -inf
        %v4995 = vmax.f32 %v4993, %v4994
        %v4996 = vsel %vm2455, %v4734, -inf
        %v4997 = vsel %vm2455, %v4790, -inf
        %v4998 = vmax.f32 %v4996, %v4997
        %v4999 = vsel %vm2455, %v4741, -inf
        %v5000 = vsel %vm2455, %v4797, -inf
        %v5001 = vmax.f32 %v4999, %v5000
        %v5002 = vsel %vm2455, %v4748, -inf
        %v5003 = vsel %vm2455, %v4804, -inf
        %v5004 = vmax.f32 %v5002, %v5003
        %v5005 = vsel %vm2455, %v4755, -inf
        %v5006 = vsel %vm2455, %v4811, -inf
        %v5007 = vmax.f32 %v5005, %v5006
        %v5008 = vsel %vm2455, %v4762, -inf
        %v5009 = vsel %vm2455, %v4818, -inf
        %v5010 = vmax.f32 %v5008, %v5009
        %v5011 = vpack.c.bf16 %v4821, %v4821
        %v5012 = vpack.c.bf16 %v4824, %v4824
        %v5013 = vpack.c.bf16 %v4827, %v4827
        %v5014 = vpack.c.bf16 %v4830, %v4830
        %v5015 = vpack.c.bf16 %v4833, %v4833
        %v5016 = vpack.c.bf16 %v4836, %v4836
        %v5017 = vpack.c.bf16 %v4839, %v4839
        %v5018 = vpack.c.bf16 %v4842, %v4842
        %v5019 = vpack.c.bf16 %v4845, %v4845
        %v5020 = vpack.c.bf16 %v4848, %v4848
        %v5021 = vpack.c.bf16 %v4851, %v4851
        %v5022 = vpack.c.bf16 %v4854, %v4854
        %v5023 = vpack.c.bf16 %v4857, %v4857
        %v5024 = vpack.c.bf16 %v4860, %v4860
        %v5025 = vpack.c.bf16 %v4863, %v4863
        %v5026 = vpack.c.bf16 %v4866, %v4866
        %v5027 = vpack.c.bf16 %v4869, %v4869
        %v5028 = vpack.c.bf16 %v4872, %v4872
        %v5029 = vpack.c.bf16 %v4875, %v4875
        %v5030 = vpack.c.bf16 %v4878, %v4878
        %v5031 = vpack.c.bf16 %v4881, %v4881
        %v5032 = vpack.c.bf16 %v4884, %v4884
        %v5033 = vpack.c.bf16 %v4887, %v4887
        %v5034 = vpack.c.bf16 %v4890, %v4890
        %v5035 = vpack.c.bf16 %v4893, %v4893
        %v5036 = vpack.c.bf16 %v4896, %v4896
        %v5037 = vpack.c.bf16 %v4899, %v4899
        %v5038 = vpack.c.bf16 %v4902, %v4902
        %v5039 = vpack.c.bf16 %v4905, %v4905
        %v5040 = vpack.c.bf16 %v4908, %v4908
        %v5041 = vpack.c.bf16 %v4911, %v4911
        %v5042 = vpack.c.bf16 %v4914, %v4914
        %v5043 = vpack.c.bf16 %v4917, %v4917
        %v5044 = vpack.c.bf16 %v4920, %v4920
        %v5045 = vpack.c.bf16 %v4923, %v4923
        %v5046 = vpack.c.bf16 %v4926, %v4926
        %v5047 = vpack.c.bf16 %v4929, %v4929
        %v5048 = vpack.c.bf16 %v4932, %v4932
        %v5049 = vpack.c.bf16 %v4935, %v4935
        %v5050 = vpack.c.bf16 %v4938, %v4938
        %v5051 = vpack.c.bf16 %v4941, %v4941
        %v5052 = vpack.c.bf16 %v4944, %v4944
        %v5053 = vpack.c.bf16 %v4947, %v4947
        %v5054 = vpack.c.bf16 %v4950, %v4950
        %v5055 = vpack.c.bf16 %v4953, %v4953
        %v5056 = vpack.c.bf16 %v4956, %v4956
        %v5057 = vpack.c.bf16 %v4959, %v4959
        %v5058 = vpack.c.bf16 %v4962, %v4962
        %v5059 = vpack.c.bf16 %v4965, %v4965
        %v5060 = vpack.c.bf16 %v4968, %v4968
        %v5061 = vpack.c.bf16 %v4971, %v4971
        %v5062 = vpack.c.bf16 %v4974, %v4974
        %v5063 = vpack.c.bf16 %v4977, %v4977
        %v5064 = vpack.c.bf16 %v4980, %v4980
        %v5065 = vpack.c.bf16 %v4983, %v4983
        %v5066 = vpack.c.bf16 %v4986, %v4986
        %v5067 = vpack.c.bf16 %v4989, %v4989
        %v5068 = vpack.c.bf16 %v4992, %v4992
        %v5069 = vpack.c.bf16 %v4995, %v4995
        %v5070 = vpack.c.bf16 %v4998, %v4998
        %v5071 = vpack.c.bf16 %v5001, %v5001
        %v5072 = vpack.c.bf16 %v5004, %v5004
        %v5073 = vpack.c.bf16 %v5007, %v5007
        %v5074 = vpack.c.bf16 %v5010, %v5010
        %v5139 = vunpack.c.l.b16 %v5011
        %v5140 = vunpack.c.l.b16 %v5012
        %v5141 = vunpack.c.l.b16 %v5013
        %v5142 = vunpack.c.l.b16 %v5014
        %v5143 = vunpack.c.l.b16 %v5015
        %v5144 = vunpack.c.l.b16 %v5016
        %v5145 = vunpack.c.l.b16 %v5017
        %v5146 = vunpack.c.l.b16 %v5018
        %v5147 = vunpack.c.l.b16 %v5019
        %v5148 = vunpack.c.l.b16 %v5020
        %v5149 = vunpack.c.l.b16 %v5021
        %v5150 = vunpack.c.l.b16 %v5022
        %v5151 = vunpack.c.l.b16 %v5023
        %v5152 = vunpack.c.l.b16 %v5024
        %v5153 = vunpack.c.l.b16 %v5025
        %v5154 = vunpack.c.l.b16 %v5026
        %v5155 = vunpack.c.l.b16 %v5027
        %v5156 = vunpack.c.l.b16 %v5028
        %v5157 = vunpack.c.l.b16 %v5029
        %v5158 = vunpack.c.l.b16 %v5030
        %v5159 = vunpack.c.l.b16 %v5031
        %v5160 = vunpack.c.l.b16 %v5032
        %v5161 = vunpack.c.l.b16 %v5033
        %v5162 = vunpack.c.l.b16 %v5034
        %v5163 = vunpack.c.l.b16 %v5035
        %v5164 = vunpack.c.l.b16 %v5036
        %v5165 = vunpack.c.l.b16 %v5037
        %v5166 = vunpack.c.l.b16 %v5038
        %v5167 = vunpack.c.l.b16 %v5039
        %v5168 = vunpack.c.l.b16 %v5040
        %v5169 = vunpack.c.l.b16 %v5041
        %v5170 = vunpack.c.l.b16 %v5042
        %v5171 = vunpack.c.l.b16 %v5043
        %v5172 = vunpack.c.l.b16 %v5044
        %v5173 = vunpack.c.l.b16 %v5045
        %v5174 = vunpack.c.l.b16 %v5046
        %v5175 = vunpack.c.l.b16 %v5047
        %v5176 = vunpack.c.l.b16 %v5048
        %v5177 = vunpack.c.l.b16 %v5049
        %v5178 = vunpack.c.l.b16 %v5050
        %v5179 = vunpack.c.l.b16 %v5051
        %v5180 = vunpack.c.l.b16 %v5052
        %v5181 = vunpack.c.l.b16 %v5053
        %v5182 = vunpack.c.l.b16 %v5054
        %v5183 = vunpack.c.l.b16 %v5055
        %v5184 = vunpack.c.l.b16 %v5056
        %v5185 = vunpack.c.l.b16 %v5057
        %v5186 = vunpack.c.l.b16 %v5058
        %v5187 = vunpack.c.l.b16 %v5059
        %v5188 = vunpack.c.l.b16 %v5060
        %v5189 = vunpack.c.l.b16 %v5061
        %v5190 = vunpack.c.l.b16 %v5062
        %v5191 = vunpack.c.l.b16 %v5063
        %v5192 = vunpack.c.l.b16 %v5064
        %v5193 = vunpack.c.l.b16 %v5065
        %v5194 = vunpack.c.l.b16 %v5066
        %v5195 = vunpack.c.l.b16 %v5067
        %v5196 = vunpack.c.l.b16 %v5068
        %v5197 = vunpack.c.l.b16 %v5069
        %v5198 = vunpack.c.l.b16 %v5070
        %v5199 = vunpack.c.l.b16 %v5071
        %v5200 = vunpack.c.l.b16 %v5072
        %v5201 = vunpack.c.l.b16 %v5073
        %v5202 = vunpack.c.l.b16 %v5074
        %vm5203 = vcmask 1042434
        %v5204 = vsel %vm5203, %v5140, %v5139
        %vm5205 = vcmask 1043459
        %v5206 = vsel %vm5205, %v5141, %v5204
        %vm5207 = vcmask 1044484
        %v5208 = vsel %vm5207, %v5142, %v5206
        %vm5209 = vcmask 1045509
        %v5210 = vsel %vm5209, %v5143, %v5208
        %vm5211 = vcmask 1046534
        %v5212 = vsel %vm5211, %v5144, %v5210
        %vm5213 = vcmask 1047559
        %v5214 = vsel %vm5213, %v5145, %v5212
        %v5215 = vsel %vm5203, %v5148, %v5147
        %v5216 = vsel %vm5205, %v5149, %v5215
        %v5217 = vsel %vm5207, %v5150, %v5216
        %v5218 = vsel %vm5209, %v5151, %v5217
        %v5219 = vsel %vm5211, %v5152, %v5218
        %v5220 = vsel %vm5213, %v5153, %v5219
        %v5221 = vsel %vm5203, %v5156, %v5155
        %v5222 = vsel %vm5205, %v5157, %v5221
        %v5223 = vsel %vm5207, %v5158, %v5222
        %v5224 = vsel %vm5209, %v5159, %v5223
        %v5225 = vsel %vm5211, %v5160, %v5224
        %v5226 = vsel %vm5213, %v5161, %v5225
        %v5227 = vsel %vm5203, %v5164, %v5163
        %v5228 = vsel %vm5205, %v5165, %v5227
        %v5229 = vsel %vm5207, %v5166, %v5228
        %v5230 = vsel %vm5209, %v5167, %v5229
        %v5231 = vsel %vm5211, %v5168, %v5230
        %v5232 = vsel %vm5213, %v5169, %v5231
        %v5233 = vsel %vm5203, %v5172, %v5171
        %v5234 = vsel %vm5205, %v5173, %v5233
        %v5235 = vsel %vm5207, %v5174, %v5234
        %v5236 = vsel %vm5209, %v5175, %v5235
        %v5237 = vsel %vm5211, %v5176, %v5236
        %v5238 = vsel %vm5213, %v5177, %v5237
        %v5239 = vsel %vm5203, %v5180, %v5179
        %v5240 = vsel %vm5205, %v5181, %v5239
        %v5241 = vsel %vm5207, %v5182, %v5240
        %v5242 = vsel %vm5209, %v5183, %v5241
        %v5243 = vsel %vm5211, %v5184, %v5242
        %v5244 = vsel %vm5213, %v5185, %v5243
        %v5245 = vsel %vm5203, %v5188, %v5187
        %v5246 = vsel %vm5205, %v5189, %v5245
        %v5247 = vsel %vm5207, %v5190, %v5246
        %v5248 = vsel %vm5209, %v5191, %v5247
        %v5249 = vsel %vm5211, %v5192, %v5248
        %v5250 = vsel %vm5213, %v5193, %v5249
        %v5251 = vsel %vm5203, %v5196, %v5195
        %v5252 = vsel %vm5205, %v5197, %v5251
        %v5253 = vsel %vm5207, %v5198, %v5252
        %v5254 = vsel %vm5209, %v5199, %v5253
        %v5255 = vsel %vm5211, %v5200, %v5254
        %v5256 = vsel %vm5213, %v5201, %v5255
        %v5257 = vpack.c.b16 %v5146, %v5214
        %v5258 = vpack.c.b16 %v5154, %v5220
        %v5259 = vpack.c.b16 %v5162, %v5226
        %v5260 = vpack.c.b16 %v5170, %v5232
        %v5261 = vpack.c.b16 %v5178, %v5238
        %v5262 = vpack.c.b16 %v5186, %v5244
        %v5263 = vpack.c.b16 %v5194, %v5250
        %v5264 = vpack.c.b16 %v5202, %v5256
        %v5273 = vsel %vm672, 0, %v5257
        %v5274 = vsel %vm672, 0, %v5258
        %v5275 = vsel %vm672, 0, %v5259
        %v5276 = vsel %vm672, 0, %v5260
        %v5277 = vsel %vm672, 0, %v5261
        %v5278 = vsel %vm672, 0, %v5262
        %v5279 = vsel %vm672, 0, %v5263
        %v5280 = vsel %vm672, 0, %v5264
        %vm5281 = vcmask 1044480
        %vm5282 = vsmask.f32 4352
        %vm5283 = vmand %vm5281, %vm5282
        %v5284 = vsel %vm5283, %v5273, 0
        %v5285 = vsel %vm5283, %v5274, 0
        %v5286 = vsel %vm5283, %v5275, 0
        %v5287 = vsel %vm5283, %v5276, 0
        %v5288 = vsel %vm5283, %v5277, 0
        %v5289 = vsel %vm5283, %v5278, 0
        %v5290 = vsel %vm5283, %v5279, 0
        %v5291 = vsel %vm5283, %v5280, 0
        %v5293 = vshrl.u32 %v5284, 16
        %v5295 = vshll.u32 %v5284, 16
        %v5297 = vrot.slane %v5295, 1
        %v5298 = vor.u32 %v5293, %v5297
        %v5300 = vshrl.u32 %v5285, 16
        %v5302 = vshll.u32 %v5285, 16
        %v5304 = vrot.slane %v5302, 1
        %v5305 = vor.u32 %v5300, %v5304
        %v5307 = vshrl.u32 %v5286, 16
        %v5309 = vshll.u32 %v5286, 16
        %v5311 = vrot.slane %v5309, 1
        %v5312 = vor.u32 %v5307, %v5311
        %v5314 = vshrl.u32 %v5287, 16
        %v5316 = vshll.u32 %v5287, 16
        %v5318 = vrot.slane %v5316, 1
        %v5319 = vor.u32 %v5314, %v5318
        %v5321 = vshrl.u32 %v5288, 16
        %v5323 = vshll.u32 %v5288, 16
        %v5325 = vrot.slane %v5323, 1
        %v5326 = vor.u32 %v5321, %v5325
        %v5328 = vshrl.u32 %v5289, 16
        %v5330 = vshll.u32 %v5289, 16
        %v5332 = vrot.slane %v5330, 1
        %v5333 = vor.u32 %v5328, %v5332
        %v5335 = vshrl.u32 %v5290, 16
        %v5337 = vshll.u32 %v5290, 16
        %v5339 = vrot.slane %v5337, 1
        %v5340 = vor.u32 %v5335, %v5339
        %5341 = vrot.lane.b32.xlu0 %v712, 64
        %v5342 = vpop.permute.xlu0 %5341
        %5343 = vrot.lane.b32.xlu0 %v5298, 64
        %v5344 = vpop.permute.xlu0 %5343
        %5345 = vrot.lane.b32.xlu0 %v5305, 64
        %v5346 = vpop.permute.xlu0 %5345
        %5347 = vrot.lane.b32.xlu0 %v5312, 64
        %v5348 = vpop.permute.xlu0 %5347
        %5349 = vrot.lane.b32.xlu0 %v5319, 64
        %v5350 = vpop.permute.xlu0 %5349
        %5351 = vrot.lane.b32.xlu0 %v5326, 64
        %v5352 = vpop.permute.xlu0 %5351
        %5353 = vrot.lane.b32.xlu0 %v5333, 64
        %v5354 = vpop.permute.xlu0 %5353
        %5355 = vrot.lane.b32.xlu0 %v5340, 64
        %v5356 = vpop.permute.xlu0 %5355
        %v5364 = vrot.slane %v5284, 1
        %v5365 = vrot.slane %v5285, 1
        %v5366 = vrot.slane %v5286, 1
        %v5367 = vrot.slane %v5287, 1
        %v5368 = vrot.slane %v5288, 1
        %v5369 = vrot.slane %v5289, 1
        %v5370 = vrot.slane %v5290, 1
        %5372 = vrot.lane.b32.xlu0 %v5284, 64
        %v5373 = vpop.permute.xlu0 %5372
        %5374 = vrot.lane.b32.xlu0 %v5285, 64
        %v5375 = vpop.permute.xlu0 %5374
        %5376 = vrot.lane.b32.xlu0 %v5286, 64
        %v5377 = vpop.permute.xlu0 %5376
        %5378 = vrot.lane.b32.xlu0 %v5287, 64
        %v5379 = vpop.permute.xlu0 %5378
        %5380 = vrot.lane.b32.xlu0 %v5288, 64
        %v5381 = vpop.permute.xlu0 %5380
        %5382 = vrot.lane.b32.xlu0 %v5289, 64
        %v5383 = vpop.permute.xlu0 %5382
        %5384 = vrot.lane.b32.xlu0 %v5290, 64
        %v5385 = vpop.permute.xlu0 %5384
        %5386 = vrot.lane.b32.xlu0 %v5291, 64
        %v5387 = vpop.permute.xlu0 %5386
        %v5389 = vshrl.u32 %v5291, 16
        %v5391 = vshll.u32 %v5291, 16
        %v5393 = vrot.slane %v5391, 1
        %v5394 = vor.u32 %v5389, %v5393
        %v5395 = vrot.slane %v5291, 1
        %5396 = vrot.lane.b32.xlu0 %v5364, 64
        %v5397 = vpop.permute.xlu0 %5396
        %5398 = vrot.lane.b32.xlu0 %v5365, 64
        %v5399 = vpop.permute.xlu0 %5398
        %5400 = vrot.lane.b32.xlu0 %v5366, 64
        %v5401 = vpop.permute.xlu0 %5400
        %5402 = vrot.lane.b32.xlu0 %v5367, 64
        %v5403 = vpop.permute.xlu0 %5402
        %5404 = vrot.lane.b32.xlu0 %v5368, 64
        %v5405 = vpop.permute.xlu0 %5404
        %5406 = vrot.lane.b32.xlu0 %v5369, 64
        %v5407 = vpop.permute.xlu0 %5406
        %5408 = vrot.lane.b32.xlu0 %v5370, 64
        %v5409 = vpop.permute.xlu0 %5408
        %5410 = vrot.lane.b32.xlu0 %v5395, 64
        %v5411 = vpop.permute.xlu0 %5410
        %5412 = vrot.lane.b32.xlu0 %v5394, 64
        %v5413 = vpop.permute.xlu0 %5412
        %v5415 = vsel %vm2455, 0, %v5342
        %v5417 = vsel %vm2455, %v5284, %v5344
        %v5419 = vsel %vm2455, %v5285, %v5346
        %v5421 = vsel %vm2455, %v5286, %v5348
        %v5423 = vsel %vm2455, %v5287, %v5350
        %v5425 = vsel %vm2455, %v5288, %v5352
        %v5427 = vsel %vm2455, %v5289, %v5354
        %v5429 = vsel %vm2455, %v5290, %v5356
        %v5432 = vsel %vm2455, %v958, %v5373
        %v5435 = vsel %vm2455, %v5364, %v5375
        %v5438 = vsel %vm2455, %v5365, %v5377
        %v5441 = vsel %vm2455, %v5366, %v5379
        %v5444 = vsel %vm2455, %v5367, %v5381
        %v5447 = vsel %vm2455, %v5368, %v5383
        %v5450 = vsel %vm2455, %v5369, %v5385
        %v5453 = vsel %vm2455, %v5370, %v5387
        %v5456 = vsel %vm2455, %v5298, %v5397
        %v5459 = vsel %vm2455, %v5305, %v5399
        %v5462 = vsel %vm2455, %v5312, %v5401
        %v5465 = vsel %vm2455, %v5319, %v5403
        %v5468 = vsel %vm2455, %v5326, %v5405
        %v5471 = vsel %vm2455, %v5333, %v5407
        %v5474 = vsel %vm2455, %v5340, %v5409
        %v5477 = vsel %vm2455, %v5394, %v5411
        %v5479 = vsel %vm2455, %v5291, %v5413
        %v5505 = vunpack.c.l.b16 %v5415
        %v5506 = vunpack.c.l.b16 %v5432
        %v5507 = vunpack.c.l.b16 %v5456
        %v5508 = vunpack.c.l.b16 %v5419
        %v5509 = vunpack.c.l.b16 %v5365
        %v5510 = vunpack.c.l.b16 %v5417
        %v5511 = vunpack.c.l.b16 %v5435
        %v5512 = vunpack.c.l.b16 %v5459
        %v5513 = vunpack.c.l.b16 %v5421
        %v5514 = vunpack.c.l.b16 %v5366
        %v5515 = vunpack.c.l.b16 %v5438
        %v5516 = vunpack.c.l.b16 %v5462
        %v5517 = vunpack.c.l.b16 %v5423
        %v5518 = vunpack.c.l.b16 %v5367
        %v5519 = vunpack.c.l.b16 %v5441
        %v5520 = vunpack.c.l.b16 %v5465
        %v5521 = vunpack.c.l.b16 %v5425
        %v5522 = vunpack.c.l.b16 %v5368
        %v5523 = vunpack.c.l.b16 %v5444
        %v5524 = vunpack.c.l.b16 %v5468
        %v5525 = vunpack.c.l.b16 %v5427
        %v5526 = vunpack.c.l.b16 %v5369
        %v5527 = vunpack.c.l.b16 %v5447
        %v5528 = vunpack.c.l.b16 %v5471
        %v5529 = vunpack.c.l.b16 %v5429
        %v5530 = vunpack.c.l.b16 %v5370
        %v5531 = vunpack.c.l.b16 %v5450
        %v5532 = vunpack.c.l.b16 %v5474
        %v5533 = vunpack.c.l.b16 %v5479
        %v5534 = vunpack.c.l.b16 %v5395
        %v5535 = vunpack.c.l.b16 %v5453
        %v5536 = vunpack.c.l.b16 %v5477
        %v5537 = vunpack.c.l.b16 %v958
        %v5538 = vld [vmem:[#allocation6] sm:$0xf]
        %v5539 = vld [vmem:[#allocation6 + $0x4] sm:$0xf]
        %v5540 = vld [vmem:[#allocation6 + $0x8] sm:$0xf]
        %v5541 = vld [vmem:[#allocation6 + $0xc] sm:$0xf]
        %v5542 = vld [vmem:[#allocation6 + $0x10] sm:$0xf]
        %v5543 = vld [vmem:[#allocation6 + $0x14] sm:$0xf]
        %v5544 = vld [vmem:[#allocation6 + $0x18] sm:$0xf]
        %v5545 = vld [vmem:[#allocation6 + $0x1c] sm:$0xf]
        %v5546 = vld [vmem:[#allocation6 + $0x20] sm:$0xf]
        %v5547 = vld [vmem:[#allocation6 + $0x24] sm:$0xf]
        %v5548 = vld [vmem:[#allocation6 + $0x28] sm:$0xf]
        %v5549 = vld [vmem:[#allocation6 + $0x2c] sm:$0xf]
        %v5550 = vld [vmem:[#allocation6 + $0x30] sm:$0xf]
        %v5551 = vld [vmem:[#allocation6 + $0x34] sm:$0xf]
        %v5552 = vld [vmem:[#allocation6 + $0x38] sm:$0xf]
        %v5553 = vld [vmem:[#allocation6 + $0x3c] sm:$0xf]
        %v5554 = vld [vmem:[#allocation6 + $0x40] sm:$0xf]
        %v5555 = vld [vmem:[#allocation6 + $0x44] sm:$0xf]
        %v5556 = vld [vmem:[#allocation6 + $0x48] sm:$0xf]
        %v5557 = vld [vmem:[#allocation6 + $0x4c] sm:$0xf]
        %v5558 = vld [vmem:[#allocation6 + $0x50] sm:$0xf]
        %v5559 = vld [vmem:[#allocation6 + $0x54] sm:$0xf]
        %v5560 = vld [vmem:[#allocation6 + $0x58] sm:$0xf]
        %v5561 = vld [vmem:[#allocation6 + $0x5c] sm:$0xf]
        %v5562 = vld [vmem:[#allocation6 + $0x60] sm:$0xf]
        %v5563 = vld [vmem:[#allocation6 + $0x64] sm:$0xf]
        %v5564 = vld [vmem:[#allocation6 + $0x68] sm:$0xf]
        %v5565 = vld [vmem:[#allocation6 + $0x6c] sm:$0xf]
        %v5566 = vld [vmem:[#allocation6 + $0x70] sm:$0xf]
        %v5567 = vld [vmem:[#allocation6 + $0x74] sm:$0xf]
        %v5568 = vld [vmem:[#allocation6 + $0x78] sm:$0xf]
        %v5569 = vld [vmem:[#allocation6 + $0x7c] sm:$0xf]
        %v5570 = vld [vmem:[#allocation6 + $0x80] sm:$0xf]
        %v5571 = vld [vmem:[#allocation6 + $0x84] sm:$0xf]
        %v5572 = vld [vmem:[#allocation6 + $0x88] sm:$0xf]
        %v5573 = vld [vmem:[#allocation6 + $0x8c] sm:$0xf]
        %v5574 = vld [vmem:[#allocation6 + $0x90] sm:$0xf]
        %v5575 = vld [vmem:[#allocation6 + $0x94] sm:$0xf]
        %v5576 = vld [vmem:[#allocation6 + $0x98] sm:$0xf]
        %v5577 = vld [vmem:[#allocation6 + $0x9c] sm:$0xf]
        %v5578 = vld [vmem:[#allocation6 + $0xa0] sm:$0xf]
        %v5579 = vld [vmem:[#allocation6 + $0xa4] sm:$0xf]
        %v5580 = vld [vmem:[#allocation6 + $0xa8] sm:$0xf]
        %v5581 = vld [vmem:[#allocation6 + $0xac] sm:$0xf]
        %v5582 = vld [vmem:[#allocation6 + $0xb0] sm:$0xf]
        %v5583 = vld [vmem:[#allocation6 + $0xb4] sm:$0xf]
        %v5584 = vld [vmem:[#allocation6 + $0xb8] sm:$0xf]
        %v5585 = vld [vmem:[#allocation6 + $0xbc] sm:$0xf]
        %v5586 = vld [vmem:[#allocation6 + $0xc0] sm:$0xf]
        %v5587 = vld [vmem:[#allocation6 + $0xc4] sm:$0xf]
        %v5588 = vld [vmem:[#allocation6 + $0xc8] sm:$0xf]
        %v5589 = vld [vmem:[#allocation6 + $0xcc] sm:$0xf]
        %v5590 = vld [vmem:[#allocation6 + $0xd0] sm:$0xf]
        %v5591 = vld [vmem:[#allocation6 + $0xd4] sm:$0xf]
        %v5592 = vld [vmem:[#allocation6 + $0xd8] sm:$0xf]
        %v5593 = vld [vmem:[#allocation6 + $0xdc] sm:$0xf]
        %v5594 = vld [vmem:[#allocation6 + $0xe0] sm:$0xf]
        %v5595 = vld [vmem:[#allocation6 + $0xe4] sm:$0xf]
        %v5596 = vld [vmem:[#allocation6 + $0xe8] sm:$0xf]
        %v5597 = vld [vmem:[#allocation6 + $0xec] sm:$0xf]
        %v5598 = vld [vmem:[#allocation6 + $0xf0] sm:$0xf]
        %v5599 = vld [vmem:[#allocation6 + $0xf4] sm:$0xf]
        %v5600 = vld [vmem:[#allocation6 + $0xf8] sm:$0xf]
        %v5601 = vld [vmem:[#allocation6 + $0xfc] sm:$0xf]
        %v5602 = vld [vmem:[#allocation6 + $0x100] sm:$0xf]
        %v5603 = vld [vmem:[#allocation6 + $0x104] sm:$0xf]
        %v5604 = vld [vmem:[#allocation6 + $0x108] sm:$0xf]
        %v5605 = vld [vmem:[#allocation6 + $0x10c] sm:$0xf]
        %v5606 = vld [vmem:[#allocation6 + $0x110] sm:$0xf]
        %v5607 = vld [vmem:[#allocation6 + $0x114] sm:$0xf]
        %v5608 = vld [vmem:[#allocation6 + $0x118] sm:$0xf]
        %v5609 = vld [vmem:[#allocation6 + $0x11c] sm:$0xf]
        %v5610 = vld [vmem:[#allocation7] sm:$0x1]
        %v5612 = vlaneseq
        %v5613 = vshrl.u32 %v5612, 7
        %v5614 = vsub.s32 0, %v5613
        %v5615 = vrot.slane %v5610, %v5614
        %v5617 = vpack.c.b16 %v5510, %v5505
        %v5618 = vpack.c.b16 %v5511, %v5506
        %v5619 = vpack.c.b16 %v5512, %v5507
        %v5620 = vpack.c.b16 %v5513, %v5508
        %v5621 = vpack.c.b16 %v5514, %v5509
        %v5622 = vpack.c.b16 %v5519, %v5515
        %v5623 = vpack.c.b16 %v5520, %v5516
        %v5624 = vpack.c.b16 %v5521, %v5517
        %v5625 = vpack.c.b16 %v5522, %v5518
        %v5626 = vpack.c.b16 %v5527, %v5523
        %v5627 = vpack.c.b16 %v5528, %v5524
        %v5628 = vpack.c.b16 %v5529, %v5525
        %v5629 = vpack.c.b16 %v5530, %v5526
        %v5630 = vpack.c.b16 %v5535, %v5531
        %v5631 = vpack.c.b16 %v5536, %v5532
        %v5632 = vpack.c.b16 %v5505, %v5533
        %v5633 = vpack.c.b16 %v5537, %v5534
        %v5719 = vunpack.c.l.b16 %v5538
        %v5720 = vunpack.c.l.b16 %v5539
        %v5721 = vunpack.c.l.b16 %v5540
        %v5722 = vunpack.c.l.b16 %v5541
        %v5723 = vunpack.c.l.b16 %v5542
        %v5724 = vunpack.c.l.b16 %v5543
        %v5725 = vunpack.c.l.b16 %v5544
        %v5726 = vunpack.c.l.b16 %v5545
        %v5727 = vunpack.c.l.b16 %v5546
        %v5728 = vunpack.c.l.b16 %v5547
        %v5729 = vunpack.c.l.b16 %v5548
        %v5730 = vunpack.c.l.b16 %v5549
        %v5731 = vunpack.c.l.b16 %v5550
        %v5732 = vunpack.c.l.b16 %v5551
        %v5733 = vunpack.c.l.b16 %v5552
        %v5734 = vunpack.c.l.b16 %v5553
        %v5735 = vunpack.c.l.b16 %v5554
        %v5736 = vunpack.c.l.b16 %v5555
        %v5737 = vunpack.c.l.b16 %v5556
        %v5738 = vunpack.c.l.b16 %v5557
        %v5739 = vunpack.c.l.b16 %v5558
        %v5740 = vunpack.c.l.b16 %v5559
        %v5741 = vunpack.c.l.b16 %v5560
        %v5742 = vunpack.c.l.b16 %v5561
        %v5743 = vunpack.c.l.b16 %v5562
        %v5744 = vunpack.c.l.b16 %v5563
        %v5745 = vunpack.c.l.b16 %v5564
        %v5746 = vunpack.c.l.b16 %v5565
        %v5747 = vunpack.c.l.b16 %v5566
        %v5748 = vunpack.c.l.b16 %v5567
        %v5749 = vunpack.c.l.b16 %v5568
        %v5750 = vunpack.c.l.b16 %v5569
        %v5751 = vunpack.c.l.b16 %v5570
        %v5752 = vunpack.c.l.b16 %v5571
        %v5753 = vunpack.c.l.b16 %v5572
        %v5754 = vunpack.c.l.b16 %v5573
        %v5755 = vunpack.c.l.b16 %v5574
        %v5756 = vunpack.c.l.b16 %v5575
        %v5757 = vunpack.c.l.b16 %v5576
        %v5758 = vunpack.c.l.b16 %v5577
        %v5759 = vunpack.c.l.b16 %v5578
        %v5760 = vunpack.c.l.b16 %v5579
        %v5761 = vunpack.c.l.b16 %v5580
        %v5762 = vunpack.c.l.b16 %v5581
        %v5763 = vunpack.c.l.b16 %v5582
        %v5764 = vunpack.c.l.b16 %v5583
        %v5765 = vunpack.c.l.b16 %v5584
        %v5766 = vunpack.c.l.b16 %v5585
        %v5767 = vunpack.c.l.b16 %v5586
        %v5768 = vunpack.c.l.b16 %v5587
        %v5769 = vunpack.c.l.b16 %v5588
        %v5770 = vunpack.c.l.b16 %v5589
        %v5771 = vunpack.c.l.b16 %v5590
        %v5772 = vunpack.c.l.b16 %v5591
        %v5773 = vunpack.c.l.b16 %v5592
        %v5774 = vunpack.c.l.b16 %v5593
        %v5775 = vunpack.c.l.b16 %v5594
        %v5776 = vunpack.c.l.b16 %v5595
        %v5777 = vunpack.c.l.b16 %v5596
        %v5778 = vunpack.c.l.b16 %v5597
        %v5779 = vunpack.c.l.b16 %v5598
        %v5780 = vunpack.c.l.b16 %v5599
        %v5781 = vunpack.c.l.b16 %v5600
        %v5782 = vunpack.c.l.b16 %v5601
        %v5783 = vunpack.c.l.b16 %v5602
        %v5784 = vunpack.c.l.b16 %v5603
        %v5785 = vunpack.c.l.b16 %v5604
        %v5786 = vunpack.c.l.b16 %v5605
        %v5787 = vunpack.c.l.b16 %v5606
        %v5788 = vunpack.c.l.b16 %v5607
        %v5789 = vunpack.c.l.b16 %v5608
        %v5790 = vunpack.c.l.b16 %v5609
        %v5791 = vpack.c.b16 %v5720, %v5719
        %v5792 = vpack.c.b16 %v5722, %v5721
        %v5793 = vpack.c.b16 %v5724, %v5723
        %v5794 = vpack.c.b16 %v5726, %v5725
        %v5795 = vpack.c.b16 %v5728, %v5727
        %v5796 = vpack.c.b16 %v5730, %v5729
        %v5797 = vpack.c.b16 %v5732, %v5731
        %v5798 = vpack.c.b16 %v5734, %v5733
        %v5799 = vpack.c.b16 %v5736, %v5735
        %v5800 = vpack.c.b16 %v5738, %v5737
        %v5801 = vpack.c.b16 %v5740, %v5739
        %v5802 = vpack.c.b16 %v5742, %v5741
        %v5803 = vpack.c.b16 %v5744, %v5743
        %v5804 = vpack.c.b16 %v5746, %v5745
        %v5805 = vpack.c.b16 %v5748, %v5747
        %v5806 = vpack.c.b16 %v5750, %v5749
        %v5807 = vpack.c.b16 %v5752, %v5751
        %v5808 = vpack.c.b16 %v5754, %v5753
        %v5809 = vpack.c.b16 %v5756, %v5755
        %v5810 = vpack.c.b16 %v5758, %v5757
        %v5811 = vpack.c.b16 %v5760, %v5759
        %v5812 = vpack.c.b16 %v5762, %v5761
        %v5813 = vpack.c.b16 %v5764, %v5763
        %v5814 = vpack.c.b16 %v5766, %v5765
        %v5815 = vpack.c.b16 %v5768, %v5767
        %v5816 = vpack.c.b16 %v5770, %v5769
        %v5817 = vpack.c.b16 %v5772, %v5771
        %v5818 = vpack.c.b16 %v5774, %v5773
        %v5819 = vpack.c.b16 %v5776, %v5775
        %v5820 = vpack.c.b16 %v5778, %v5777
        %v5821 = vpack.c.b16 %v5780, %v5779
        %v5822 = vpack.c.b16 %v5782, %v5781
        %v5823 = vpack.c.b16 %v5784, %v5783
        %v5824 = vpack.c.b16 %v5786, %v5785
        %v5825 = vpack.c.b16 %v5788, %v5787
        %v5826 = vpack.c.b16 %v5790, %v5789
        %v5864 = vsel %vm2455, %v5621, 0
        %v5867 = vsel %vm2455, %v5625, 0
        %v5870 = vsel %vm2455, %v5629, 0
        %v5873 = vsel %vm2455, %v5633, 0
        %5875 = vmatprep.subr.bf16.mxu0 0
        %5876 = vmatpush1.bf16.msra.mxu0 %v5791
        %5877 = vmatprep.subr.bf16.mxu0 0
        %5878 = vmatpush1.bf16.msra.mxu0 %v5792
        %5879 = vmatprep.subr.bf16.mxu0 0
        %5880 = vmatpush1.bf16.msra.mxu0 %v5793
        %5881 = vmatprep.subr.bf16.mxu0 0
        %5882 = vmatpush1.bf16.msra.mxu0 %v5794
        %5883 = vmatprep.subr.bf16.mxu0 0
        %5884 = vmatpush1.bf16.msra.mxu0 %v5795
        %5885 = vmatprep.subr.bf16.mxu0 0
        %5886 = vmatpush1.bf16.msra.mxu0 %v5796
        %5887 = vmatprep.subr.bf16.mxu0 0
        %5888 = vmatpush1.bf16.msra.mxu0 %v5797
        %5889 = vmatprep.subr.bf16.mxu0 0
        %5890 = vmatpush1.bf16.msra.mxu0 %v5798
        %5891 = vmatprep.subr.bf16.mxu0 0
        %5892 = vmatpush1.bf16.msra.mxu0 %v5799
        %5893 = vmatprep.subr.bf16.mxu0 0
        %5894 = vmatpush1.bf16.msra.mxu0 %v5800
        %5895 = vmatprep.subr.bf16.mxu0 0
        %5896 = vmatpush1.bf16.msra.mxu0 %v5801
        %5897 = vmatprep.subr.bf16.mxu0 0
        %5898 = vmatpush1.bf16.msra.mxu0 %v5802
        %5899 = vmatprep.subr.bf16.mxu0 0
        %5900 = vmatpush1.bf16.msra.mxu0 %v5803
        %5901 = vmatprep.subr.bf16.mxu0 0
        %5902 = vmatpush1.bf16.msra.mxu0 %v5804
        %5903 = vmatprep.subr.bf16.mxu0 0
        %5904 = vmatpush1.bf16.msra.mxu0 %v5805
        %5905 = vmatprep.subr.bf16.mxu0 0
        %5906 = vmatpush1.bf16.msra.mxu0 %v5806
        %5907 = vmatprep.mubr.bf16.mxu0 %v5618
        %5908 = vmatmul.mubr.bf16.gmra.mrb[0].mxu0 %v5617
        %v5909 = vpop.f32.mrb[0].mxu0
        %v5910 = vadd.f32 %v5615, %v5909
        %v5911 = vpop.f32.mrb[0].mxu0
        %v5912 = vpop.f32.mrb[0].mxu0
        %v5913 = vadd.f32 %v5615, %v5912
        %v5914 = vpop.f32.mrb[0].mxu0
        %5915 = vmatprep.mubr.bf16.mxu0 %v5622
        %5916 = vmatmul.mubr.bf16.gmra.mrb[0].mxu0 %v5620
        %v5917 = vpop.f32.mrb[0].mxu0
        %v5918 = vadd.f32 %v5615, %v5917
        %v5919 = vpop.f32.mrb[0].mxu0
        %v5920 = vpop.f32.mrb[0].mxu0
        %v5921 = vadd.f32 %v5615, %v5920
        %v5922 = vpop.f32.mrb[0].mxu0
        %5923 = vmatprep.mubr.bf16.mxu0 %v5626
        %5924 = vmatmul.mubr.bf16.gmra.mrb[0].mxu0 %v5624
        %v5925 = vpop.f32.mrb[0].mxu0
        %v5926 = vadd.f32 %v5615, %v5925
        %v5927 = vpop.f32.mrb[0].mxu0
        %v5928 = vpop.f32.mrb[0].mxu0
        %v5929 = vadd.f32 %v5615, %v5928
        %v5930 = vpop.f32.mrb[0].mxu0
        %5931 = vmatprep.mubr.bf16.mxu0 %v5630
        %5932 = vmatmul.mubr.bf16.gmra.mrb[0].mxu0 %v5628
        %v5933 = vpop.f32.mrb[0].mxu0
        %v5934 = vadd.f32 %v5615, %v5933
        %v5935 = vpop.f32.mrb[0].mxu0
        %v5936 = vpop.f32.mrb[0].mxu0
        %v5937 = vadd.f32 %v5615, %v5936
        %v5938 = vpop.f32.mrb[0].mxu0
        %5939 = vdwg.mxu0
        %5940 = vmatprep.subr.bf16.mxu0 0
        %5941 = vmatpush1.bf16.msra.mxu0 %v5807
        %5942 = vmatprep.subr.bf16.mxu0 0
        %5943 = vmatpush1.bf16.msra.mxu0 %v5808
        %5944 = vmatprep.subr.bf16.mxu0 0
        %5945 = vmatpush1.bf16.msra.mxu0 %v5809
        %5946 = vmatprep.subr.bf16.mxu0 0
        %5947 = vmatpush1.bf16.msra.mxu0 %v5810
        %5948 = vmatprep.subr.bf16.mxu0 0
        %5949 = vmatpush1.bf16.msra.mxu0 %v5811
        %5950 = vmatprep.subr.bf16.mxu0 0
        %5951 = vmatpush1.bf16.msra.mxu0 %v5812
        %5952 = vmatprep.subr.bf16.mxu0 0
        %5953 = vmatpush1.bf16.msra.mxu0 %v5813
        %5954 = vmatprep.subr.bf16.mxu0 0
        %5955 = vmatpush1.bf16.msra.mxu0 %v5814
        %5956 = vmatprep.subr.bf16.mxu0 0
        %5957 = vmatpush1.bf16.msra.mxu0 %v5815
        %5958 = vmatprep.subr.bf16.mxu0 0
        %5959 = vmatpush1.bf16.msra.mxu0 %v5816
        %5960 = vmatprep.subr.bf16.mxu0 0
        %5961 = vmatpush1.bf16.msra.mxu0 %v5817
        %5962 = vmatprep.subr.bf16.mxu0 0
        %5963 = vmatpush1.bf16.msra.mxu0 %v5818
        %5964 = vmatprep.subr.bf16.mxu0 0
        %5965 = vmatpush1.bf16.msra.mxu0 %v5819
        %5966 = vmatprep.subr.bf16.mxu0 0
        %5967 = vmatpush1.bf16.msra.mxu0 %v5820
        %5968 = vmatprep.subr.bf16.mxu0 0
        %5969 = vmatpush1.bf16.msra.mxu0 %v5821
        %5970 = vmatprep.subr.bf16.mxu0 0
        %5971 = vmatpush1.bf16.msra.mxu0 %v5822
        %5972 = vmatprep.mubr.bf16.mxu0 %v5620
        %5973 = vmatmul.mubr.bf16.gmra.mrb[0].mxu0 %v5619
        %v5974 = vpop.f32.mrb[0].mxu0
        %v5975 = vadd.f32 %v5910, %v5974
        %v5976 = vpop.f32.mrb[0].mxu0
        %v5977 = vpop.f32.mrb[0].mxu0
        %v5978 = vadd.f32 %v5913, %v5977
        %v5979 = vpop.f32.mrb[0].mxu0
        %5980 = vmatprep.mubr.bf16.mxu0 %v5624
        %5981 = vmatmul.mubr.bf16.gmra.mrb[0].mxu0 %v5623
        %v5982 = vpop.f32.mrb[0].mxu0
        %v5983 = vadd.f32 %v5918, %v5982
        %v5984 = vpop.f32.mrb[0].mxu0
        %v5985 = vpop.f32.mrb[0].mxu0
        %v5986 = vadd.f32 %v5921, %v5985
        %v5987 = vpop.f32.mrb[0].mxu0
        %5988 = vmatprep.mubr.bf16.mxu0 %v5628
        %5989 = vmatmul.mubr.bf16.gmra.mrb[0].mxu0 %v5627
        %v5990 = vpop.f32.mrb[0].mxu0
        %v5991 = vadd.f32 %v5926, %v5990
        %v5992 = vpop.f32.mrb[0].mxu0
        %v5993 = vpop.f32.mrb[0].mxu0
        %v5994 = vadd.f32 %v5929, %v5993
        %v5995 = vpop.f32.mrb[0].mxu0
        %5996 = vmatprep.mubr.bf16.mxu0 %v5632
        %5997 = vmatmul.mubr.bf16.gmra.mrb[0].mxu0 %v5631
        %v5998 = vpop.f32.mrb[0].mxu0
        %v5999 = vadd.f32 %v5934, %v5998
        %v6000 = vpop.f32.mrb[0].mxu0
        %v6001 = vpop.f32.mrb[0].mxu0
        %v6002 = vadd.f32 %v5937, %v6001
        %v6003 = vpop.f32.mrb[0].mxu0
        %6004 = vdwg.mxu0
        %6005 = vmatprep.subr.bf16.mxu0 0
        %6006 = vmatpush1.bf16.msra.mxu0 %v5823
        %6007 = vmatprep.subr.bf16.mxu0 0
        %6008 = vmatpush1.bf16.msra.mxu0 %v5824
        %6009 = vmatprep.subr.bf16.mxu0 0
        %6010 = vmatpush1.bf16.msra.mxu0 %v5825
        %6011 = vmatprep.subr.bf16.mxu0 0
        %6012 = vmatpush1.bf16.msra.mxu0 %v5826
        %6013 = vmatprep.subr.bf16.mxu0 0
        %6014 = vmatpush1.bf16.msra.mxu0 0
        %6015 = vmatprep.subr.bf16.mxu0 0
        %6016 = vmatpush1.bf16.msra.mxu0 0
        %6017 = vmatprep.subr.bf16.mxu0 0
        %6018 = vmatpush1.bf16.msra.mxu0 0
        %6019 = vmatprep.subr.bf16.mxu0 0
        %6020 = vmatpush1.bf16.msra.mxu0 0
        %6021 = vmatprep.subr.bf16.mxu0 0
        %6022 = vmatpush1.bf16.msra.mxu0 0
        %6023 = vmatprep.subr.bf16.mxu0 0
        %6024 = vmatpush1.bf16.msra.mxu0 0
        %6025 = vmatprep.subr.bf16.mxu0 0
        %6026 = vmatpush1.bf16.msra.mxu0 0
        %6027 = vmatprep.subr.bf16.mxu0 0
        %6028 = vmatpush1.bf16.msra.mxu0 0
        %6029 = vmatprep.subr.bf16.mxu0 0
        %6030 = vmatpush1.bf16.msra.mxu0 0
        %6031 = vmatprep.subr.bf16.mxu0 0
        %6032 = vmatpush1.bf16.msra.mxu0 0
        %6033 = vmatprep.subr.bf16.mxu0 0
        %6034 = vmatpush1.bf16.msra.mxu0 0
        %6035 = vmatprep.subr.bf16.mxu0 0
        %6036 = vmatpush1.bf16.msra.mxu0 0
        %6037 = vmatprep.mubr.bf16.mxu0 0
        %6038 = vmatmul.mubr.bf16.gmra.mrb[0].mxu0 %v5864
        %v6039 = vpop.f32.mrb[0].mxu0
        %v6040 = vadd.f32 %v5975, %v6039
        %v6041 = vpop.f32.mrb[0].mxu0
        %v6042 = vpop.f32.mrb[0].mxu0
        %v6043 = vadd.f32 %v5978, %v6042
        %v6044 = vpop.f32.mrb[0].mxu0
        %6045 = vmatprep.mubr.bf16.mxu0 0
        %6046 = vmatmul.mubr.bf16.gmra.mrb[0].mxu0 %v5867
        %v6047 = vpop.f32.mrb[0].mxu0
        %v6048 = vadd.f32 %v5983, %v6047
        %v6049 = vpop.f32.mrb[0].mxu0
        %v6050 = vpop.f32.mrb[0].mxu0
        %v6051 = vadd.f32 %v5986, %v6050
        %v6052 = vpop.f32.mrb[0].mxu0
        %6053 = vmatprep.mubr.bf16.mxu0 0
        %6054 = vmatmul.mubr.bf16.gmra.mrb[0].mxu0 %v5870
        %v6055 = vpop.f32.mrb[0].mxu0
        %v6056 = vadd.f32 %v5991, %v6055
        %v6057 = vpop.f32.mrb[0].mxu0
        %v6058 = vpop.f32.mrb[0].mxu0
        %v6059 = vadd.f32 %v5994, %v6058
        %v6060 = vpop.f32.mrb[0].mxu0
        %6061 = vmatprep.mubr.bf16.mxu0 0
        %6062 = vmatmul.mubr.bf16.gmra.mrb[0].mxu0 %v5873
        %v6063 = vpop.f32.mrb[0].mxu0
        %v6064 = vadd.f32 %v5999, %v6063
        %v6065 = vpop.f32.mrb[0].mxu0
        %v6066 = vpop.f32.mrb[0].mxu0
        %v6067 = vadd.f32 %v6002, %v6066
        %v6068 = vpop.f32.mrb[0].mxu0
        %6069 = vdwg.mxu0
        %v6070 = vmax.f32 %v6040, 0.0
        %v6071 = vmax.f32 %v6043, 0.0
        %v6072 = vmax.f32 %v6048, 0.0
        %v6073 = vmax.f32 %v6051, 0.0
        %v6074 = vmax.f32 %v6056, 0.0
        %v6075 = vmax.f32 %v6059, 0.0
        %v6076 = vmax.f32 %v6064, 0.0
        %v6077 = vmax.f32 %v6067, 0.0
        %v6078 = vpack.c.bf16 %v6070, %v6070
        %v6079 = vpack.c.bf16 %v6071, %v6071
        %v6080 = vpack.c.bf16 %v6072, %v6072
        %v6081 = vpack.c.bf16 %v6073, %v6073
        %v6082 = vpack.c.bf16 %v6074, %v6074
        %v6083 = vpack.c.bf16 %v6075, %v6075
        %v6084 = vpack.c.bf16 %v6076, %v6076
        %v6085 = vpack.c.bf16 %v6077, %v6077
        %v6087 = vshrl.u32 %v6078, 16
        %v6089 = vrot.slane %v6087, 7
        %v6090 = vshll.u32 %v6078, 16
        %v6092 = vor.u32 %v6089, %v6090
        %v6094 = vshrl.u32 %v6079, 16
        %v6096 = vrot.slane %v6094, 7
        %v6097 = vshll.u32 %v6079, 16
        %v6099 = vor.u32 %v6096, %v6097
        %v6101 = vshrl.u32 %v6080, 16
        %v6103 = vrot.slane %v6101, 7
        %v6104 = vshll.u32 %v6080, 16
        %v6106 = vor.u32 %v6103, %v6104
        %v6108 = vshrl.u32 %v6081, 16
        %v6110 = vrot.slane %v6108, 7
        %v6111 = vshll.u32 %v6081, 16
        %v6113 = vor.u32 %v6110, %v6111
        %v6115 = vshrl.u32 %v6082, 16
        %v6117 = vrot.slane %v6115, 7
        %v6118 = vshll.u32 %v6082, 16
        %v6120 = vor.u32 %v6117, %v6118
        %v6122 = vshrl.u32 %v6083, 16
        %v6124 = vrot.slane %v6122, 7
        %v6125 = vshll.u32 %v6083, 16
        %v6127 = vor.u32 %v6124, %v6125
        %v6129 = vshrl.u32 %v6084, 16
        %v6131 = vrot.slane %v6129, 7
        %v6132 = vshll.u32 %v6084, 16
        %v6134 = vor.u32 %v6131, %v6132
        %v6136 = vshrl.u32 %v6085, 16
        %v6138 = vrot.slane %v6136, 7
        %v6139 = vshll.u32 %v6085, 16
        %v6141 = vor.u32 %v6138, %v6139
        %v6150 = vsel %vm672, 0, %v6092
        %v6151 = vsel %vm672, 0, %v6099
        %v6152 = vsel %vm672, 0, %v6106
        %v6153 = vsel %vm672, 0, %v6113
        %v6154 = vsel %vm672, 0, %v6120
        %v6155 = vsel %vm672, 0, %v6127
        %v6156 = vsel %vm672, 0, %v6134
        %v6157 = vsel %vm672, 0, %v6141
        %v6158 = vsel %vm5283, %v6150, 0
        %v6159 = vsel %vm5283, %v6151, 0
        %v6160 = vsel %vm5283, %v6152, 0
        %v6161 = vsel %vm5283, %v6153, 0
        %v6162 = vsel %vm5283, %v6154, 0
        %v6163 = vsel %vm5283, %v6155, 0
        %v6164 = vsel %vm5283, %v6156, 0
        %v6165 = vsel %vm5283, %v6157, 0
        %v6167 = vshrl.u32 %v6158, 16
        %v6169 = vshll.u32 %v6158, 16
        %v6171 = vrot.slane %v6169, 1
        %v6172 = vor.u32 %v6167, %v6171
        %v6174 = vshrl.u32 %v6159, 16
        %v6176 = vshll.u32 %v6159, 16
        %v6178 = vrot.slane %v6176, 1
        %v6179 = vor.u32 %v6174, %v6178
        %v6181 = vshrl.u32 %v6160, 16
        %v6183 = vshll.u32 %v6160, 16
        %v6185 = vrot.slane %v6183, 1
        %v6186 = vor.u32 %v6181, %v6185
        %v6188 = vshrl.u32 %v6161, 16
        %v6190 = vshll.u32 %v6161, 16
        %v6192 = vrot.slane %v6190, 1
        %v6193 = vor.u32 %v6188, %v6192
        %v6195 = vshrl.u32 %v6162, 16
        %v6197 = vshll.u32 %v6162, 16
        %v6199 = vrot.slane %v6197, 1
        %v6200 = vor.u32 %v6195, %v6199
        %v6202 = vshrl.u32 %v6163, 16
        %v6204 = vshll.u32 %v6163, 16
        %v6206 = vrot.slane %v6204, 1
        %v6207 = vor.u32 %v6202, %v6206
        %v6209 = vshrl.u32 %v6164, 16
        %v6211 = vshll.u32 %v6164, 16
        %v6213 = vrot.slane %v6211, 1
        %v6214 = vor.u32 %v6209, %v6213
        %v6222 = vrot.slane %v6158, 1
        %v6223 = vrot.slane %v6159, 1
        %v6224 = vrot.slane %v6160, 1
        %v6225 = vrot.slane %v6161, 1
        %v6226 = vrot.slane %v6162, 1
        %v6227 = vrot.slane %v6163, 1
        %v6228 = vrot.slane %v6164, 1
        %v6230 = vshrl.u32 %v6165, 16
        %v6232 = vshll.u32 %v6165, 16
        %v6234 = vrot.slane %v6232, 1
        %v6235 = vor.u32 %v6230, %v6234
        %v6237 = vrot.slane %v6165, 1
        %v6238 = vunpack.c.l.b16 0
        %v6239 = vunpack.c.l.b16 %v712
        %v6240 = vunpack.c.l.b16 %v6158
        %v6241 = vunpack.c.l.b16 %v6172
        %v6242 = vunpack.c.l.b16 %v6222
        %v6243 = vunpack.c.l.b16 %v6159
        %v6244 = vunpack.c.l.b16 %v6179
        %v6245 = vunpack.c.l.b16 %v6223
        %v6246 = vunpack.c.l.b16 %v6160
        %v6247 = vunpack.c.l.b16 %v6186
        %v6248 = vunpack.c.l.b16 %v6224
        %v6249 = vunpack.c.l.b16 %v6161
        %v6250 = vunpack.c.l.b16 %v6193
        %v6251 = vunpack.c.l.b16 %v6225
        %v6252 = vunpack.c.l.b16 %v6162
        %v6253 = vunpack.c.l.b16 %v6200
        %v6254 = vunpack.c.l.b16 %v6226
        %v6255 = vunpack.c.l.b16 %v6163
        %v6256 = vunpack.c.l.b16 %v6207
        %v6257 = vunpack.c.l.b16 %v6227
        %v6258 = vunpack.c.l.b16 %v6164
        %v6259 = vunpack.c.l.b16 %v6214
        %v6260 = vunpack.c.l.b16 %v6228
        %v6261 = vunpack.c.l.b16 %v6165
        %v6262 = vunpack.c.l.b16 %v6235
        %v6263 = vunpack.c.l.b16 %v6237
        %v6264 = vld [vmem:[#allocation9] sm:$0xf]
        %v6265 = vld [vmem:[#allocation9 + $0x4] sm:$0xf]
        %v6266 = vld [vmem:[#allocation9 + $0x8] sm:$0xf]
        %v6267 = vld [vmem:[#allocation9 + $0xc] sm:$0xf]
        %v6268 = vld [vmem:[#allocation9 + $0x10] sm:$0xf]
        %v6269 = vld [vmem:[#allocation9 + $0x14] sm:$0xf]
        %v6270 = vld [vmem:[#allocation9 + $0x18] sm:$0xf]
        %v6271 = vld [vmem:[#allocation9 + $0x1c] sm:$0xf]
        %v6272 = vld [vmem:[#allocation9 + $0x20] sm:$0xf]
        %v6273 = vld [vmem:[#allocation9 + $0x24] sm:$0xf]
        %v6274 = vld [vmem:[#allocation9 + $0x28] sm:$0xf]
        %v6275 = vld [vmem:[#allocation9 + $0x2c] sm:$0xf]
        %v6276 = vld [vmem:[#allocation9 + $0x30] sm:$0xf]
        %v6277 = vld [vmem:[#allocation9 + $0x34] sm:$0xf]
        %v6278 = vld [vmem:[#allocation9 + $0x38] sm:$0xf]
        %v6279 = vld [vmem:[#allocation9 + $0x3c] sm:$0xf]
        %v6280 = vld [vmem:[#allocation9 + $0x40] sm:$0xf]
        %v6281 = vld [vmem:[#allocation9 + $0x44] sm:$0xf]
        %v6282 = vld [vmem:[#allocation9 + $0x48] sm:$0xf]
        %v6283 = vld [vmem:[#allocation9 + $0x4c] sm:$0xf]
        %v6284 = vld [vmem:[#allocation9 + $0x50] sm:$0xf]
        %v6285 = vld [vmem:[#allocation9 + $0x54] sm:$0xf]
        %v6286 = vld [vmem:[#allocation9 + $0x58] sm:$0xf]
        %v6287 = vld [vmem:[#allocation9 + $0x5c] sm:$0xf]
        %v6288 = vld [vmem:[#allocation9 + $0x60] sm:$0xf]
        %v6289 = vld [vmem:[#allocation9 + $0x64] sm:$0xf]
        %v6290 = vld [vmem:[#allocation9 + $0x68] sm:$0xf]
        %v6291 = vld [vmem:[#allocation9 + $0x6c] sm:$0xf]
        %v6292 = vld [vmem:[#allocation9 + $0x70] sm:$0xf]
        %v6293 = vld [vmem:[#allocation9 + $0x74] sm:$0xf]
        %v6294 = vld [vmem:[#allocation9 + $0x78] sm:$0xf]
        %v6295 = vld [vmem:[#allocation9 + $0x7c] sm:$0xf]
        %v6296 = vld [vmem:[#allocation9 + $0x80] sm:$0xf]
        %v6297 = vld [vmem:[#allocation9 + $0x84] sm:$0xf]
        %v6298 = vld [vmem:[#allocation9 + $0x88] sm:$0xf]
        %v6299 = vld [vmem:[#allocation9 + $0x8c] sm:$0xf]
        %v6300 = vld [vmem:[#allocation9 + $0x90] sm:$0xf]
        %v6301 = vld [vmem:[#allocation9 + $0x94] sm:$0xf]
        %v6302 = vld [vmem:[#allocation9 + $0x98] sm:$0xf]
        %v6303 = vld [vmem:[#allocation9 + $0x9c] sm:$0xf]
        %v6304 = vld [vmem:[#allocation9 + $0xa0] sm:$0xf]
        %v6305 = vld [vmem:[#allocation9 + $0xa4] sm:$0xf]
        %v6306 = vld [vmem:[#allocation9 + $0xa8] sm:$0xf]
        %v6307 = vld [vmem:[#allocation9 + $0xac] sm:$0xf]
        %v6308 = vld [vmem:[#allocation9 + $0xb0] sm:$0xf]
        %v6309 = vld [vmem:[#allocation9 + $0xb4] sm:$0xf]
        %v6310 = vld [vmem:[#allocation9 + $0xb8] sm:$0xf]
        %v6311 = vld [vmem:[#allocation9 + $0xbc] sm:$0xf]
        %v6312 = vld [vmem:[#allocation9 + $0xc0] sm:$0xf]
        %v6313 = vld [vmem:[#allocation9 + $0xc4] sm:$0xf]
        %v6314 = vld [vmem:[#allocation9 + $0xc8] sm:$0xf]
        %v6315 = vld [vmem:[#allocation9 + $0xcc] sm:$0xf]
        %v6316 = vld [vmem:[#allocation9 + $0xd0] sm:$0xf]
        %v6317 = vld [vmem:[#allocation9 + $0xd4] sm:$0xf]
        %v6318 = vld [vmem:[#allocation9 + $0xd8] sm:$0xf]
        %v6319 = vld [vmem:[#allocation9 + $0xdc] sm:$0xf]
        %v6320 = vld [vmem:[#allocation9 + $0xe0] sm:$0xf]
        %v6321 = vld [vmem:[#allocation9 + $0xe4] sm:$0xf]
        %v6322 = vld [vmem:[#allocation9 + $0xe8] sm:$0xf]
        %v6323 = vld [vmem:[#allocation9 + $0xec] sm:$0xf]
        %v6324 = vld [vmem:[#allocation9 + $0xf0] sm:$0xf]
        %v6325 = vld [vmem:[#allocation9 + $0xf4] sm:$0xf]
        %v6326 = vld [vmem:[#allocation9 + $0xf8] sm:$0xf]
        %v6327 = vld [vmem:[#allocation9 + $0xfc] sm:$0xf]
        %v6328 = vld [vmem:[#allocation9 + $0x100] sm:$0xf]
        %v6329 = vld [vmem:[#allocation9 + $0x104] sm:$0xf]
        %v6330 = vld [vmem:[#allocation9 + $0x108] sm:$0xf]
        %v6331 = vld [vmem:[#allocation9 + $0x10c] sm:$0xf]
        %v6332 = vld [vmem:[#allocation9 + $0x110] sm:$0xf]
        %v6333 = vld [vmem:[#allocation9 + $0x114] sm:$0xf]
        %v6334 = vld [vmem:[#allocation9 + $0x118] sm:$0xf]
        %v6335 = vld [vmem:[#allocation9 + $0x11c] sm:$0xf]
        %v6336 = vld [vmem:[#allocation9 + $0x120] sm:$0xf]
        %v6337 = vld [vmem:[#allocation9 + $0x124] sm:$0xf]
        %v6338 = vld [vmem:[#allocation9 + $0x128] sm:$0xf]
        %v6339 = vld [vmem:[#allocation9 + $0x12c] sm:$0xf]
        %v6340 = vld [vmem:[#allocation9 + $0x130] sm:$0xf]
        %v6341 = vld [vmem:[#allocation9 + $0x134] sm:$0xf]
        %v6342 = vld [vmem:[#allocation9 + $0x138] sm:$0xf]
        %v6343 = vld [vmem:[#allocation9 + $0x13c] sm:$0xf]
        %v6344 = vld [vmem:[#allocation9 + $0x140] sm:$0xf]
        %v6345 = vld [vmem:[#allocation9 + $0x144] sm:$0xf]
        %v6346 = vld [vmem:[#allocation9 + $0x148] sm:$0xf]
        %v6347 = vld [vmem:[#allocation9 + $0x14c] sm:$0xf]
        %v6348 = vld [vmem:[#allocation9 + $0x150] sm:$0xf]
        %v6349 = vld [vmem:[#allocation9 + $0x154] sm:$0xf]
        %v6350 = vld [vmem:[#allocation9 + $0x158] sm:$0xf]
        %v6351 = vld [vmem:[#allocation9 + $0x15c] sm:$0xf]
        %v6352 = vld [vmem:[#allocation9 + $0x160] sm:$0xf]
        %v6353 = vld [vmem:[#allocation9 + $0x164] sm:$0xf]
        %v6354 = vld [vmem:[#allocation9 + $0x168] sm:$0xf]
        %v6355 = vld [vmem:[#allocation9 + $0x16c] sm:$0xf]
        %v6356 = vld [vmem:[#allocation9 + $0x170] sm:$0xf]
        %v6357 = vld [vmem:[#allocation9 + $0x174] sm:$0xf]
        %v6358 = vld [vmem:[#allocation9 + $0x178] sm:$0xf]
        %v6359 = vld [vmem:[#allocation9 + $0x17c] sm:$0xf]
        %v6360 = vld [vmem:[#allocation9 + $0x180] sm:$0xf]
        %v6361 = vld [vmem:[#allocation9 + $0x184] sm:$0xf]
        %v6362 = vld [vmem:[#allocation9 + $0x188] sm:$0xf]
        %v6363 = vld [vmem:[#allocation9 + $0x18c] sm:$0xf]
        %v6364 = vld [vmem:[#allocation9 + $0x190] sm:$0xf]
        %v6365 = vld [vmem:[#allocation9 + $0x194] sm:$0xf]
        %v6366 = vld [vmem:[#allocation9 + $0x198] sm:$0xf]
        %v6367 = vld [vmem:[#allocation9 + $0x19c] sm:$0xf]
        %v6368 = vld [vmem:[#allocation9 + $0x1a0] sm:$0xf]
        %v6369 = vld [vmem:[#allocation9 + $0x1a4] sm:$0xf]
        %v6370 = vld [vmem:[#allocation9 + $0x1a8] sm:$0xf]
        %v6371 = vld [vmem:[#allocation9 + $0x1ac] sm:$0xf]
        %v6372 = vld [vmem:[#allocation9 + $0x1b0] sm:$0xf]
        %v6373 = vld [vmem:[#allocation9 + $0x1b4] sm:$0xf]
        %v6374 = vld [vmem:[#allocation9 + $0x1b8] sm:$0xf]
        %v6375 = vld [vmem:[#allocation9 + $0x1bc] sm:$0xf]
        %v6376 = vld [vmem:[#allocation9 + $0x1c0] sm:$0xf]
        %v6377 = vld [vmem:[#allocation9 + $0x1c4] sm:$0xf]
        %v6378 = vld [vmem:[#allocation9 + $0x1c8] sm:$0xf]
        %v6379 = vld [vmem:[#allocation9 + $0x1cc] sm:$0xf]
        %v6380 = vld [vmem:[#allocation9 + $0x1d0] sm:$0xf]
        %v6381 = vld [vmem:[#allocation9 + $0x1d4] sm:$0xf]
        %v6382 = vld [vmem:[#allocation9 + $0x1d8] sm:$0xf]
        %v6383 = vld [vmem:[#allocation9 + $0x1dc] sm:$0xf]
        %v6384 = vld [vmem:[#allocation9 + $0x1e0] sm:$0xf]
        %v6385 = vld [vmem:[#allocation9 + $0x1e4] sm:$0xf]
        %v6386 = vld [vmem:[#allocation9 + $0x1e8] sm:$0xf]
        %v6387 = vld [vmem:[#allocation9 + $0x1ec] sm:$0xf]
        %v6388 = vld [vmem:[#allocation9 + $0x1f0] sm:$0xf]
        %v6389 = vld [vmem:[#allocation9 + $0x1f4] sm:$0xf]
        %v6390 = vld [vmem:[#allocation9 + $0x1f8] sm:$0xf]
        %v6391 = vld [vmem:[#allocation9 + $0x1fc] sm:$0xf]
        %v6392 = vld [vmem:[#allocation9 + $0x200] sm:$0xf]
        %v6393 = vld [vmem:[#allocation9 + $0x204] sm:$0xf]
        %v6394 = vld [vmem:[#allocation9 + $0x208] sm:$0xf]
        %v6395 = vld [vmem:[#allocation9 + $0x20c] sm:$0xf]
        %v6396 = vld [vmem:[#allocation9 + $0x210] sm:$0xf]
        %v6397 = vld [vmem:[#allocation9 + $0x214] sm:$0xf]
        %v6398 = vld [vmem:[#allocation9 + $0x218] sm:$0xf]
        %v6399 = vld [vmem:[#allocation9 + $0x21c] sm:$0xf]
        %v6400 = vld [vmem:[#allocation9 + $0x220] sm:$0xf]
        %v6401 = vld [vmem:[#allocation9 + $0x224] sm:$0xf]
        %v6402 = vld [vmem:[#allocation9 + $0x228] sm:$0xf]
        %v6403 = vld [vmem:[#allocation9 + $0x22c] sm:$0xf]
        %v6404 = vld [vmem:[#allocation9 + $0x230] sm:$0xf]
        %v6405 = vld [vmem:[#allocation9 + $0x234] sm:$0xf]
        %v6406 = vld [vmem:[#allocation9 + $0x238] sm:$0xf]
        %v6407 = vld [vmem:[#allocation9 + $0x23c] sm:$0xf]
        %v6408 = vld [vmem:[#allocation10] sm:$0x1]
        %v6410 = vlaneseq
        %v6411 = vshrl.u32 %v6410, 7
        %v6412 = vsub.s32 0, %v6411
        %v6413 = vrot.slane %v6408, %v6412
        %v6415 = vpack.c.b16 %v6240, %v6238
        %v6416 = vpack.c.b16 %v6241, %v6239
        %v6417 = vpack.c.b16 %v6242, %v5537
        %v6418 = vpack.c.b16 %v6243, %v6240
        %v6419 = vpack.c.b16 %v6244, %v6241
        %v6420 = vpack.c.b16 %v6245, %v6242
        %v6421 = vpack.c.b16 %v6246, %v6243
        %v6422 = vpack.c.b16 %v6247, %v6244
        %v6423 = vpack.c.b16 %v6248, %v6245
        %v6424 = vpack.c.b16 %v6249, %v6246
        %v6425 = vpack.c.b16 %v6250, %v6247
        %v6426 = vpack.c.b16 %v6251, %v6248
        %v6427 = vpack.c.b16 %v6252, %v6249
        %v6428 = vpack.c.b16 %v6253, %v6250
        %v6429 = vpack.c.b16 %v6254, %v6251
        %v6430 = vpack.c.b16 %v6255, %v6252
        %v6431 = vpack.c.b16 %v6256, %v6253
        %v6432 = vpack.c.b16 %v6257, %v6254
        %v6433 = vpack.c.b16 %v6258, %v6255
        %v6434 = vpack.c.b16 %v6259, %v6256
        %v6435 = vpack.c.b16 %v6260, %v6257
        %v6436 = vpack.c.b16 %v6261, %v6258
        %v6437 = vpack.c.b16 %v6262, %v6259
        %v6438 = vpack.c.b16 %v6263, %v6260
        %v6439 = vpack.c.b16 %v6238, %v6261
        %v6440 = vpack.c.b16 %v6239, %v6262
        %v6441 = vpack.c.b16 %v5537, %v6263
        %v6613 = vunpack.c.l.b16 %v6264
        %v6614 = vunpack.c.l.b16 %v6265
        %v6615 = vunpack.c.l.b16 %v6266
        %v6616 = vunpack.c.l.b16 %v6267
        %v6617 = vunpack.c.l.b16 %v6268
        %v6618 = vunpack.c.l.b16 %v6269
        %v6619 = vunpack.c.l.b16 %v6270
        %v6620 = vunpack.c.l.b16 %v6271
        %v6621 = vunpack.c.l.b16 %v6272
        %v6622 = vunpack.c.l.b16 %v6273
        %v6623 = vunpack.c.l.b16 %v6274
        %v6624 = vunpack.c.l.b16 %v6275
        %v6625 = vunpack.c.l.b16 %v6276
        %v6626 = vunpack.c.l.b16 %v6277
        %v6627 = vunpack.c.l.b16 %v6278
        %v6628 = vunpack.c.l.b16 %v6279
        %v6629 = vunpack.c.l.b16 %v6280
        %v6630 = vunpack.c.l.b16 %v6281
        %v6631 = vunpack.c.l.b16 %v6282
        %v6632 = vunpack.c.l.b16 %v6283
        %v6633 = vunpack.c.l.b16 %v6284
        %v6634 = vunpack.c.l.b16 %v6285
        %v6635 = vunpack.c.l.b16 %v6286
        %v6636 = vunpack.c.l.b16 %v6287
        %v6637 = vunpack.c.l.b16 %v6288
        %v6638 = vunpack.c.l.b16 %v6289
        %v6639 = vunpack.c.l.b16 %v6290
        %v6640 = vunpack.c.l.b16 %v6291
        %v6641 = vunpack.c.l.b16 %v6292
        %v6642 = vunpack.c.l.b16 %v6293
        %v6643 = vunpack.c.l.b16 %v6294
        %v6644 = vunpack.c.l.b16 %v6295
        %v6645 = vunpack.c.l.b16 %v6296
        %v6646 = vunpack.c.l.b16 %v6297
        %v6647 = vunpack.c.l.b16 %v6298
        %v6648 = vunpack.c.l.b16 %v6299
        %v6649 = vunpack.c.l.b16 %v6300
        %v6650 = vunpack.c.l.b16 %v6301
        %v6651 = vunpack.c.l.b16 %v6302
        %v6652 = vunpack.c.l.b16 %v6303
        %v6653 = vunpack.c.l.b16 %v6304
        %v6654 = vunpack.c.l.b16 %v6305
        %v6655 = vunpack.c.l.b16 %v6306
        %v6656 = vunpack.c.l.b16 %v6307
        %v6657 = vunpack.c.l.b16 %v6308
        %v6658 = vunpack.c.l.b16 %v6309
        %v6659 = vunpack.c.l.b16 %v6310
        %v6660 = vunpack.c.l.b16 %v6311
        %v6661 = vunpack.c.l.b16 %v6312
        %v6662 = vunpack.c.l.b16 %v6313
        %v6663 = vunpack.c.l.b16 %v6314
        %v6664 = vunpack.c.l.b16 %v6315
        %v6665 = vunpack.c.l.b16 %v6316
        %v6666 = vunpack.c.l.b16 %v6317
        %v6667 = vunpack.c.l.b16 %v6318
        %v6668 = vunpack.c.l.b16 %v6319
        %v6669 = vunpack.c.l.b16 %v6320
        %v6670 = vunpack.c.l.b16 %v6321
        %v6671 = vunpack.c.l.b16 %v6322
        %v6672 = vunpack.c.l.b16 %v6323
        %v6673 = vunpack.c.l.b16 %v6324
        %v6674 = vunpack.c.l.b16 %v6325
        %v6675 = vunpack.c.l.b16 %v6326
        %v6676 = vunpack.c.l.b16 %v6327
        %v6677 = vunpack.c.l.b16 %v6328
        %v6678 = vunpack.c.l.b16 %v6329
        %v6679 = vunpack.c.l.b16 %v6330
        %v6680 = vunpack.c.l.b16 %v6331
        %v6681 = vunpack.c.l.b16 %v6332
        %v6682 = vunpack.c.l.b16 %v6333
        %v6683 = vunpack.c.l.b16 %v6334
        %v6684 = vunpack.c.l.b16 %v6335
        %v6685 = vunpack.c.l.b16 %v6336
        %v6686 = vunpack.c.l.b16 %v6337
        %v6687 = vunpack.c.l.b16 %v6338
        %v6688 = vunpack.c.l.b16 %v6339
        %v6689 = vunpack.c.l.b16 %v6340
        %v6690 = vunpack.c.l.b16 %v6341
        %v6691 = vunpack.c.l.b16 %v6342
        %v6692 = vunpack.c.l.b16 %v6343
        %v6693 = vunpack.c.l.b16 %v6344
        %v6694 = vunpack.c.l.b16 %v6345
        %v6695 = vunpack.c.l.b16 %v6346
        %v6696 = vunpack.c.l.b16 %v6347
        %v6697 = vunpack.c.l.b16 %v6348
        %v6698 = vunpack.c.l.b16 %v6349
        %v6699 = vunpack.c.l.b16 %v6350
        %v6700 = vunpack.c.l.b16 %v6351
        %v6701 = vunpack.c.l.b16 %v6352
        %v6702 = vunpack.c.l.b16 %v6353
        %v6703 = vunpack.c.l.b16 %v6354
        %v6704 = vunpack.c.l.b16 %v6355
        %v6705 = vunpack.c.l.b16 %v6356
        %v6706 = vunpack.c.l.b16 %v6357
        %v6707 = vunpack.c.l.b16 %v6358
        %v6708 = vunpack.c.l.b16 %v6359
        %v6709 = vunpack.c.l.b16 %v6360
        %v6710 = vunpack.c.l.b16 %v6361
        %v6711 = vunpack.c.l.b16 %v6362
        %v6712 = vunpack.c.l.b16 %v6363
        %v6713 = vunpack.c.l.b16 %v6364
        %v6714 = vunpack.c.l.b16 %v6365
        %v6715 = vunpack.c.l.b16 %v6366
        %v6716 = vunpack.c.l.b16 %v6367
        %v6717 = vunpack.c.l.b16 %v6368
        %v6718 = vunpack.c.l.b16 %v6369
        %v6719 = vunpack.c.l.b16 %v6370
        %v6720 = vunpack.c.l.b16 %v6371
        %v6721 = vunpack.c.l.b16 %v6372
        %v6722 = vunpack.c.l.b16 %v6373
        %v6723 = vunpack.c.l.b16 %v6374
        %v6724 = vunpack.c.l.b16 %v6375
        %v6725 = vunpack.c.l.b16 %v6376
        %v6726 = vunpack.c.l.b16 %v6377
        %v6727 = vunpack.c.l.b16 %v6378
        %v6728 = vunpack.c.l.b16 %v6379
        %v6729 = vunpack.c.l.b16 %v6380
        %v6730 = vunpack.c.l.b16 %v6381
        %v6731 = vunpack.c.l.b16 %v6382
        %v6732 = vunpack.c.l.b16 %v6383
        %v6733 = vunpack.c.l.b16 %v6384
        %v6734 = vunpack.c.l.b16 %v6385
        %v6735 = vunpack.c.l.b16 %v6386
        %v6736 = vunpack.c.l.b16 %v6387
        %v6737 = vunpack.c.l.b16 %v6388
        %v6738 = vunpack.c.l.b16 %v6389
        %v6739 = vunpack.c.l.b16 %v6390
        %v6740 = vunpack.c.l.b16 %v6391
        %v6741 = vunpack.c.l.b16 %v6392
        %v6742 = vunpack.c.l.b16 %v6393
        %v6743 = vunpack.c.l.b16 %v6394
        %v6744 = vunpack.c.l.b16 %v6395
        %v6745 = vunpack.c.l.b16 %v6396
        %v6746 = vunpack.c.l.b16 %v6397
        %v6747 = vunpack.c.l.b16 %v6398
        %v6748 = vunpack.c.l.b16 %v6399
        %v6749 = vunpack.c.l.b16 %v6400
        %v6750 = vunpack.c.l.b16 %v6401
        %v6751 = vunpack.c.l.b16 %v6402
        %v6752 = vunpack.c.l.b16 %v6403
        %v6753 = vunpack.c.l.b16 %v6404
        %v6754 = vunpack.c.l.b16 %v6405
        %v6755 = vunpack.c.l.b16 %v6406
        %v6756 = vunpack.c.l.b16 %v6407
        %v6757 = vpack.c.b16 %v6614, %v6613
        %v6758 = vpack.c.b16 %v6616, %v6615
        %v6759 = vpack.c.b16 %v6618, %v6617
        %v6760 = vpack.c.b16 %v6620, %v6619
        %v6761 = vpack.c.b16 %v6622, %v6621
        %v6762 = vpack.c.b16 %v6624, %v6623
        %v6763 = vpack.c.b16 %v6626, %v6625
        %v6764 = vpack.c.b16 %v6628, %v6627
        %v6765 = vpack.c.b16 %v6630, %v6629
        %v6766 = vpack.c.b16 %v6632, %v6631
        %v6767 = vpack.c.b16 %v6634, %v6633
        %v6768 = vpack.c.b16 %v6636, %v6635
        %v6769 = vpack.c.b16 %v6638, %v6637
        %v6770 = vpack.c.b16 %v6640, %v6639
        %v6771 = vpack.c.b16 %v6642, %v6641
        %v6772 = vpack.c.b16 %v6644, %v6643
        %v6773 = vpack.c.b16 %v6646, %v6645
        %v6774 = vpack.c.b16 %v6648, %v6647
        %v6775 = vpack.c.b16 %v6650, %v6649
        %v6776 = vpack.c.b16 %v6652, %v6651
        %v6777 = vpack.c.b16 %v6654, %v6653
        %v6778 = vpack.c.b16 %v6656, %v6655
        %v6779 = vpack.c.b16 %v6658, %v6657
        %v6780 = vpack.c.b16 %v6660, %v6659
        %v6781 = vpack.c.b16 %v6662, %v6661
        %v6782 = vpack.c.b16 %v6664, %v6663
        %v6783 = vpack.c.b16 %v6666, %v6665
        %v6784 = vpack.c.b16 %v6668, %v6667
        %v6785 = vpack.c.b16 %v6670, %v6669
        %v6786 = vpack.c.b16 %v6672, %v6671
        %v6787 = vpack.c.b16 %v6674, %v6673
        %v6788 = vpack.c.b16 %v6676, %v6675
        %v6789 = vpack.c.b16 %v6678, %v6677
        %v6790 = vpack.c.b16 %v6680, %v6679
        %v6791 = vpack.c.b16 %v6682, %v6681
        %v6792 = vpack.c.b16 %v6684, %v6683
        %v6793 = vpack.c.b16 %v6686, %v6685
        %v6794 = vpack.c.b16 %v6688, %v6687
        %v6795 = vpack.c.b16 %v6690, %v6689
        %v6796 = vpack.c.b16 %v6692, %v6691
        %v6797 = vpack.c.b16 %v6694, %v6693
        %v6798 = vpack.c.b16 %v6696, %v6695
        %v6799 = vpack.c.b16 %v6698, %v6697
        %v6800 = vpack.c.b16 %v6700, %v6699
        %v6801 = vpack.c.b16 %v6702, %v6701
        %v6802 = vpack.c.b16 %v6704, %v6703
        %v6803 = vpack.c.b16 %v6706, %v6705
        %v6804 = vpack.c.b16 %v6708, %v6707
        %v6805 = vpack.c.b16 %v6710, %v6709
        %v6806 = vpack.c.b16 %v6712, %v6711
        %v6807 = vpack.c.b16 %v6714, %v6713
        %v6808 = vpack.c.b16 %v6716, %v6715
        %v6809 = vpack.c.b16 %v6718, %v6717
        %v6810 = vpack.c.b16 %v6720, %v6719
        %v6811 = vpack.c.b16 %v6722, %v6721
        %v6812 = vpack.c.b16 %v6724, %v6723
        %v6813 = vpack.c.b16 %v6726, %v6725
        %v6814 = vpack.c.b16 %v6728, %v6727
        %v6815 = vpack.c.b16 %v6730, %v6729
        %v6816 = vpack.c.b16 %v6732, %v6731
        %v6817 = vpack.c.b16 %v6734, %v6733
        %v6818 = vpack.c.b16 %v6736, %v6735
        %v6819 = vpack.c.b16 %v6738, %v6737
        %v6820 = vpack.c.b16 %v6740, %v6739
        %v6821 = vpack.c.b16 %v6742, %v6741
        %v6822 = vpack.c.b16 %v6744, %v6743
        %v6823 = vpack.c.b16 %v6746, %v6745
        %v6824 = vpack.c.b16 %v6748, %v6747
        %v6825 = vpack.c.b16 %v6750, %v6749
        %v6826 = vpack.c.b16 %v6752, %v6751
        %v6827 = vpack.c.b16 %v6754, %v6753
        %v6828 = vpack.c.b16 %v6756, %v6755
        %6901 = vmatprep.subr.bf16.mxu0 0
        %6902 = vmatpush1.bf16.msra.mxu0 %v6757
        %6903 = vmatprep.subr.bf16.mxu0 0
        %6904 = vmatpush1.bf16.msra.mxu0 %v6758
        %6905 = vmatprep.subr.bf16.mxu0 0
        %6906 = vmatpush1.bf16.msra.mxu0 %v6759
        %6907 = vmatprep.subr.bf16.mxu0 0
        %6908 = vmatpush1.bf16.msra.mxu0 %v6760
        %6909 = vmatprep.subr.bf16.mxu0 0
        %6910 = vmatpush1.bf16.msra.mxu0 %v6761
        %6911 = vmatprep.subr.bf16.mxu0 0
        %6912 = vmatpush1.bf16.msra.mxu0 %v6762
        %6913 = vmatprep.subr.bf16.mxu0 0
        %6914 = vmatpush1.bf16.msra.mxu0 %v6763
        %6915 = vmatprep.subr.bf16.mxu0 0
        %6916 = vmatpush1.bf16.msra.mxu0 %v6764
        %6917 = vmatprep.subr.bf16.mxu0 0
        %6918 = vmatpush1.bf16.msra.mxu0 %v6765
        %6919 = vmatprep.subr.bf16.mxu0 0
        %6920 = vmatpush1.bf16.msra.mxu0 %v6766
        %6921 = vmatprep.subr.bf16.mxu0 0
        %6922 = vmatpush1.bf16.msra.mxu0 %v6767
        %6923 = vmatprep.subr.bf16.mxu0 0
        %6924 = vmatpush1.bf16.msra.mxu0 %v6768
        %6925 = vmatprep.subr.bf16.mxu0 0
        %6926 = vmatpush1.bf16.msra.mxu0 %v6769
        %6927 = vmatprep.subr.bf16.mxu0 0
        %6928 = vmatpush1.bf16.msra.mxu0 %v6770
        %6929 = vmatprep.subr.bf16.mxu0 0
        %6930 = vmatpush1.bf16.msra.mxu0 %v6771
        %6931 = vmatprep.subr.bf16.mxu0 0
        %6932 = vmatpush1.bf16.msra.mxu0 %v6772
        %6933 = vmatprep.mubr.bf16.mxu0 %v6416
        %6934 = vmatmul.mubr.bf16.gmra.mrb[0].mxu0 %v6415
        %v6935 = vpop.f32.mrb[0].mxu0
        %v6936 = vadd.f32 %v6413, %v6935
        %v6937 = vpop.f32.mrb[0].mxu0
        %v6938 = vpop.f32.mrb[0].mxu0
        %v6939 = vadd.f32 %v6413, %v6938
        %v6940 = vpop.f32.mrb[0].mxu0
        %6941 = vmatprep.mubr.bf16.mxu0 %v6422
        %6942 = vmatmul.mubr.bf16.gmra.mrb[0].mxu0 %v6421
        %v6943 = vpop.f32.mrb[0].mxu0
        %v6944 = vadd.f32 %v6413, %v6943
        %v6945 = vpop.f32.mrb[0].mxu0
        %v6946 = vpop.f32.mrb[0].mxu0
        %v6947 = vadd.f32 %v6413, %v6946
        %v6948 = vpop.f32.mrb[0].mxu0
        %6949 = vmatprep.mubr.bf16.mxu0 %v6428
        %6950 = vmatmul.mubr.bf16.gmra.mrb[0].mxu0 %v6427
        %v6951 = vpop.f32.mrb[0].mxu0
        %v6952 = vadd.f32 %v6413, %v6951
        %v6953 = vpop.f32.mrb[0].mxu0
        %v6954 = vpop.f32.mrb[0].mxu0
        %v6955 = vadd.f32 %v6413, %v6954
        %v6956 = vpop.f32.mrb[0].mxu0
        %6957 = vmatprep.mubr.bf16.mxu0 %v6434
        %6958 = vmatmul.mubr.bf16.gmra.mrb[0].mxu0 %v6433
        %v6959 = vpop.f32.mrb[0].mxu0
        %v6960 = vadd.f32 %v6413, %v6959
        %v6961 = vpop.f32.mrb[0].mxu0
        %v6962 = vpop.f32.mrb[0].mxu0
        %v6963 = vadd.f32 %v6413, %v6962
        %v6964 = vpop.f32.mrb[0].mxu0
        %6965 = vdwg.mxu0
        %6966 = vmatprep.subr.bf16.mxu0 0
        %6967 = vmatpush1.bf16.msra.mxu0 %v6773
        %6968 = vmatprep.subr.bf16.mxu0 0
        %6969 = vmatpush1.bf16.msra.mxu0 %v6774
        %6970 = vmatprep.subr.bf16.mxu0 0
        %6971 = vmatpush1.bf16.msra.mxu0 %v6775
        %6972 = vmatprep.subr.bf16.mxu0 0
        %6973 = vmatpush1.bf16.msra.mxu0 %v6776
        %6974 = vmatprep.subr.bf16.mxu0 0
        %6975 = vmatpush1.bf16.msra.mxu0 %v6777
        %6976 = vmatprep.subr.bf16.mxu0 0
        %6977 = vmatpush1.bf16.msra.mxu0 %v6778
        %6978 = vmatprep.subr.bf16.mxu0 0
        %6979 = vmatpush1.bf16.msra.mxu0 %v6779
        %6980 = vmatprep.subr.bf16.mxu0 0
        %6981 = vmatpush1.bf16.msra.mxu0 %v6780
        %6982 = vmatprep.subr.bf16.mxu0 0
        %6983 = vmatpush1.bf16.msra.mxu0 %v6781
        %6984 = vmatprep.subr.bf16.mxu0 0
        %6985 = vmatpush1.bf16.msra.mxu0 %v6782
        %6986 = vmatprep.subr.bf16.mxu0 0
        %6987 = vmatpush1.bf16.msra.mxu0 %v6783
        %6988 = vmatprep.subr.bf16.mxu0 0
        %6989 = vmatpush1.bf16.msra.mxu0 %v6784
        %6990 = vmatprep.subr.bf16.mxu0 0
        %6991 = vmatpush1.bf16.msra.mxu0 %v6785
        %6992 = vmatprep.subr.bf16.mxu0 0
        %6993 = vmatpush1.bf16.msra.mxu0 %v6786
        %6994 = vmatprep.subr.bf16.mxu0 0
        %6995 = vmatpush1.bf16.msra.mxu0 %v6787
        %6996 = vmatprep.subr.bf16.mxu0 0
        %6997 = vmatpush1.bf16.msra.mxu0 %v6788
        %6998 = vmatprep.mubr.bf16.mxu0 %v6418
        %6999 = vmatmul.mubr.bf16.gmra.mrb[0].mxu0 %v6417
        %v7000 = vpop.f32.mrb[0].mxu0
        %v7001 = vadd.f32 %v6936, %v7000
        %v7002 = vpop.f32.mrb[0].mxu0
        %v7003 = vpop.f32.mrb[0].mxu0
        %v7004 = vadd.f32 %v6939, %v7003
        %v7005 = vpop.f32.mrb[0].mxu0
        %7006 = vmatprep.mubr.bf16.mxu0 %v6424
        %7007 = vmatmul.mubr.bf16.gmra.mrb[0].mxu0 %v6423
        %v7008 = vpop.f32.mrb[0].mxu0
        %v7009 = vadd.f32 %v6944, %v7008
        %v7010 = vpop.f32.mrb[0].mxu0
        %v7011 = vpop.f32.mrb[0].mxu0
        %v7012 = vadd.f32 %v6947, %v7011
        %v7013 = vpop.f32.mrb[0].mxu0
        %7014 = vmatprep.mubr.bf16.mxu0 %v6430
        %7015 = vmatmul.mubr.bf16.gmra.mrb[0].mxu0 %v6429
        %v7016 = vpop.f32.mrb[0].mxu0
        %v7017 = vadd.f32 %v6952, %v7016
        %v7018 = vpop.f32.mrb[0].mxu0
        %v7019 = vpop.f32.mrb[0].mxu0
        %v7020 = vadd.f32 %v6955, %v7019
        %v7021 = vpop.f32.mrb[0].mxu0
        %7022 = vmatprep.mubr.bf16.mxu0 %v6436
        %7023 = vmatmul.mubr.bf16.gmra.mrb[0].mxu0 %v6435
        %v7024 = vpop.f32.mrb[0].mxu0
        %v7025 = vadd.f32 %v6960, %v7024
        %v7026 = vpop.f32.mrb[0].mxu0
        %v7027 = vpop.f32.mrb[0].mxu0
        %v7028 = vadd.f32 %v6963, %v7027
        %v7029 = vpop.f32.mrb[0].mxu0
        %7030 = vdwg.mxu0
        %7031 = vmatprep.subr.bf16.mxu0 0
        %7032 = vmatpush1.bf16.msra.mxu0 %v6789
        %7033 = vmatprep.subr.bf16.mxu0 0
        %7034 = vmatpush1.bf16.msra.mxu0 %v6790
        %7035 = vmatprep.subr.bf16.mxu0 0
        %7036 = vmatpush1.bf16.msra.mxu0 %v6791
        %7037 = vmatprep.subr.bf16.mxu0 0
        %7038 = vmatpush1.bf16.msra.mxu0 %v6792
        %7039 = vmatprep.subr.bf16.mxu0 0
        %7040 = vmatpush1.bf16.msra.mxu0 %v6793
        %7041 = vmatprep.subr.bf16.mxu0 0
        %7042 = vmatpush1.bf16.msra.mxu0 %v6794
        %7043 = vmatprep.subr.bf16.mxu0 0
        %7044 = vmatpush1.bf16.msra.mxu0 %v6795
        %7045 = vmatprep.subr.bf16.mxu0 0
        %7046 = vmatpush1.bf16.msra.mxu0 %v6796
        %7047 = vmatprep.subr.bf16.mxu0 0
        %7048 = vmatpush1.bf16.msra.mxu0 %v6797
        %7049 = vmatprep.subr.bf16.mxu0 0
        %7050 = vmatpush1.bf16.msra.mxu0 %v6798
        %7051 = vmatprep.subr.bf16.mxu0 0
        %7052 = vmatpush1.bf16.msra.mxu0 %v6799
        %7053 = vmatprep.subr.bf16.mxu0 0
        %7054 = vmatpush1.bf16.msra.mxu0 %v6800
        %7055 = vmatprep.subr.bf16.mxu0 0
        %7056 = vmatpush1.bf16.msra.mxu0 %v6801
        %7057 = vmatprep.subr.bf16.mxu0 0
        %7058 = vmatpush1.bf16.msra.mxu0 %v6802
        %7059 = vmatprep.subr.bf16.mxu0 0
        %7060 = vmatpush1.bf16.msra.mxu0 %v6803
        %7061 = vmatprep.subr.bf16.mxu0 0
        %7062 = vmatpush1.bf16.msra.mxu0 %v6804
        %7063 = vmatprep.mubr.bf16.mxu0 %v6420
        %7064 = vmatmul.mubr.bf16.gmra.mrb[0].mxu0 %v6419
        %v7065 = vpop.f32.mrb[0].mxu0
        %v7066 = vadd.f32 %v7001, %v7065
        %v7067 = vpop.f32.mrb[0].mxu0
        %v7068 = vpop.f32.mrb[0].mxu0
        %v7069 = vadd.f32 %v7004, %v7068
        %v7070 = vpop.f32.mrb[0].mxu0
        %7071 = vmatprep.mubr.bf16.mxu0 %v6426
        %7072 = vmatmul.mubr.bf16.gmra.mrb[0].mxu0 %v6425
        %v7073 = vpop.f32.mrb[0].mxu0
        %v7074 = vadd.f32 %v7009, %v7073
        %v7075 = vpop.f32.mrb[0].mxu0
        %v7076 = vpop.f32.mrb[0].mxu0
        %v7077 = vadd.f32 %v7012, %v7076
        %v7078 = vpop.f32.mrb[0].mxu0
        %7079 = vmatprep.mubr.bf16.mxu0 %v6432
        %7080 = vmatmul.mubr.bf16.gmra.mrb[0].mxu0 %v6431
        %v7081 = vpop.f32.mrb[0].mxu0
        %v7082 = vadd.f32 %v7017, %v7081
        %v7083 = vpop.f32.mrb[0].mxu0
        %v7084 = vpop.f32.mrb[0].mxu0
        %v7085 = vadd.f32 %v7020, %v7084
        %v7086 = vpop.f32.mrb[0].mxu0
        %7087 = vmatprep.mubr.bf16.mxu0 %v6438
        %7088 = vmatmul.mubr.bf16.gmra.mrb[0].mxu0 %v6437
        %v7089 = vpop.f32.mrb[0].mxu0
        %v7090 = vadd.f32 %v7025, %v7089
        %v7091 = vpop.f32.mrb[0].mxu0
        %v7092 = vpop.f32.mrb[0].mxu0
        %v7093 = vadd.f32 %v7028, %v7092
        %v7094 = vpop.f32.mrb[0].mxu0
        %7095 = vdwg.mxu0
        %7096 = vmatprep.subr.bf16.mxu0 0
        %7097 = vmatpush1.bf16.msra.mxu0 %v6805
        %7098 = vmatprep.subr.bf16.mxu0 0
        %7099 = vmatpush1.bf16.msra.mxu0 %v6806
        %7100 = vmatprep.subr.bf16.mxu0 0
        %7101 = vmatpush1.bf16.msra.mxu0 %v6807
        %7102 = vmatprep.subr.bf16.mxu0 0
        %7103 = vmatpush1.bf16.msra.mxu0 %v6808
        %7104 = vmatprep.subr.bf16.mxu0 0
        %7105 = vmatpush1.bf16.msra.mxu0 %v6809
        %7106 = vmatprep.subr.bf16.mxu0 0
        %7107 = vmatpush1.bf16.msra.mxu0 %v6810
        %7108 = vmatprep.subr.bf16.mxu0 0
        %7109 = vmatpush1.bf16.msra.mxu0 %v6811
        %7110 = vmatprep.subr.bf16.mxu0 0
        %7111 = vmatpush1.bf16.msra.mxu0 %v6812
        %7112 = vmatprep.subr.bf16.mxu0 0
        %7113 = vmatpush1.bf16.msra.mxu0 %v6813
        %7114 = vmatprep.subr.bf16.mxu0 0
        %7115 = vmatpush1.bf16.msra.mxu0 %v6814
        %7116 = vmatprep.subr.bf16.mxu0 0
        %7117 = vmatpush1.bf16.msra.mxu0 %v6815
        %7118 = vmatprep.subr.bf16.mxu0 0
        %7119 = vmatpush1.bf16.msra.mxu0 %v6816
        %7120 = vmatprep.subr.bf16.mxu0 0
        %7121 = vmatpush1.bf16.msra.mxu0 %v6817
        %7122 = vmatprep.subr.bf16.mxu0 0
        %7123 = vmatpush1.bf16.msra.mxu0 %v6818
        %7124 = vmatprep.subr.bf16.mxu0 0
        %7125 = vmatpush1.bf16.msra.mxu0 %v6819
        %7126 = vmatprep.subr.bf16.mxu0 0
        %7127 = vmatpush1.bf16.msra.mxu0 %v6820
        %7128 = vmatprep.mubr.bf16.mxu0 %v6422
        %7129 = vmatmul.mubr.bf16.gmra.mrb[0].mxu0 %v6421
        %v7130 = vpop.f32.mrb[0].mxu0
        %v7131 = vadd.f32 %v7066, %v7130
        %v7132 = vpop.f32.mrb[0].mxu0
        %v7133 = vpop.f32.mrb[0].mxu0
        %v7134 = vadd.f32 %v7069, %v7133
        %v7135 = vpop.f32.mrb[0].mxu0
        %7136 = vmatprep.mubr.bf16.mxu0 %v6428
        %7137 = vmatmul.mubr.bf16.gmra.mrb[0].mxu0 %v6427
        %v7138 = vpop.f32.mrb[0].mxu0
        %v7139 = vadd.f32 %v7074, %v7138
        %v7140 = vpop.f32.mrb[0].mxu0
        %v7141 = vpop.f32.mrb[0].mxu0
        %v7142 = vadd.f32 %v7077, %v7141
        %v7143 = vpop.f32.mrb[0].mxu0
        %7144 = vmatprep.mubr.bf16.mxu0 %v6434
        %7145 = vmatmul.mubr.bf16.gmra.mrb[0].mxu0 %v6433
        %v7146 = vpop.f32.mrb[0].mxu0
        %v7147 = vadd.f32 %v7082, %v7146
        %v7148 = vpop.f32.mrb[0].mxu0
        %v7149 = vpop.f32.mrb[0].mxu0
        %v7150 = vadd.f32 %v7085, %v7149
        %v7151 = vpop.f32.mrb[0].mxu0
        %7152 = vmatprep.mubr.bf16.mxu0 %v6440
        %7153 = vmatmul.mubr.bf16.gmra.mrb[0].mxu0 %v6439
        %v7154 = vpop.f32.mrb[0].mxu0
        %v7155 = vadd.f32 %v7090, %v7154
        %v7156 = vpop.f32.mrb[0].mxu0
        %v7157 = vpop.f32.mrb[0].mxu0
        %v7158 = vadd.f32 %v7093, %v7157
        %v7159 = vpop.f32.mrb[0].mxu0
        %7160 = vdwg.mxu0
        %7161 = vmatprep.subr.bf16.mxu0 0
        %7162 = vmatpush1.bf16.msra.mxu0 %v6821
        %7163 = vmatprep.subr.bf16.mxu0 0
        %7164 = vmatpush1.bf16.msra.mxu0 %v6822
        %7165 = vmatprep.subr.bf16.mxu0 0
        %7166 = vmatpush1.bf16.msra.mxu0 %v6823
        %7167 = vmatprep.subr.bf16.mxu0 0
        %7168 = vmatpush1.bf16.msra.mxu0 %v6824
        %7169 = vmatprep.subr.bf16.mxu0 0
        %7170 = vmatpush1.bf16.msra.mxu0 %v6825
        %7171 = vmatprep.subr.bf16.mxu0 0
        %7172 = vmatpush1.bf16.msra.mxu0 %v6826
        %7173 = vmatprep.subr.bf16.mxu0 0
        %7174 = vmatpush1.bf16.msra.mxu0 %v6827
        %7175 = vmatprep.subr.bf16.mxu0 0
        %7176 = vmatpush1.bf16.msra.mxu0 %v6828
        %7177 = vmatprep.subr.bf16.mxu0 0
        %7178 = vmatpush1.bf16.msra.mxu0 0
        %7179 = vmatprep.subr.bf16.mxu0 0
        %7180 = vmatpush1.bf16.msra.mxu0 0
        %7181 = vmatprep.subr.bf16.mxu0 0
        %7182 = vmatpush1.bf16.msra.mxu0 0
        %7183 = vmatprep.subr.bf16.mxu0 0
        %7184 = vmatpush1.bf16.msra.mxu0 0
        %7185 = vmatprep.subr.bf16.mxu0 0
        %7186 = vmatpush1.bf16.msra.mxu0 0
        %7187 = vmatprep.subr.bf16.mxu0 0
        %7188 = vmatpush1.bf16.msra.mxu0 0
        %7189 = vmatprep.subr.bf16.mxu0 0
        %7190 = vmatpush1.bf16.msra.mxu0 0
        %7191 = vmatprep.subr.bf16.mxu0 0
        %7192 = vmatpush1.bf16.msra.mxu0 0
        %7193 = vmatprep.mubr.bf16.mxu0 0
        %7194 = vmatmul.mubr.bf16.gmra.mrb[0].mxu0 %v6423
        %v7195 = vpop.f32.mrb[0].mxu0
        %v7196 = vadd.f32 %v7131, %v7195
        %v7197 = vpop.f32.mrb[0].mxu0
        %v7198 = vpop.f32.mrb[0].mxu0
        %v7199 = vadd.f32 %v7134, %v7198
        %v7200 = vpop.f32.mrb[0].mxu0
        %7201 = vmatprep.mubr.bf16.mxu0 0
        %7202 = vmatmul.mubr.bf16.gmra.mrb[0].mxu0 %v6429
        %v7203 = vpop.f32.mrb[0].mxu0
        %v7204 = vadd.f32 %v7139, %v7203
        %v7205 = vpop.f32.mrb[0].mxu0
        %v7206 = vpop.f32.mrb[0].mxu0
        %v7207 = vadd.f32 %v7142, %v7206
        %v7208 = vpop.f32.mrb[0].mxu0
        %7209 = vmatprep.mubr.bf16.mxu0 0
        %7210 = vmatmul.mubr.bf16.gmra.mrb[0].mxu0 %v6435
        %v7211 = vpop.f32.mrb[0].mxu0
        %v7212 = vadd.f32 %v7147, %v7211
        %v7213 = vpop.f32.mrb[0].mxu0
        %v7214 = vpop.f32.mrb[0].mxu0
        %v7215 = vadd.f32 %v7150, %v7214
        %v7216 = vpop.f32.mrb[0].mxu0
        %7217 = vmatprep.mubr.bf16.mxu0 0
        %7218 = vmatmul.mubr.bf16.gmra.mrb[0].mxu0 %v6441
        %v7219 = vpop.f32.mrb[0].mxu0
        %v7220 = vadd.f32 %v7155, %v7219
        %v7221 = vpop.f32.mrb[0].mxu0
        %v7222 = vpop.f32.mrb[0].mxu0
        %v7223 = vadd.f32 %v7158, %v7222
        %v7224 = vpop.f32.mrb[0].mxu0
        %7225 = vdwg.mxu0
        %v7226 = vmax.f32 %v7196, 0.0
        %v7227 = vmax.f32 %v7199, 0.0
        %v7228 = vmax.f32 %v7204, 0.0
        %v7229 = vmax.f32 %v7207, 0.0
        %v7230 = vmax.f32 %v7212, 0.0
        %v7231 = vmax.f32 %v7215, 0.0
        %v7232 = vmax.f32 %v7220, 0.0
        %v7233 = vmax.f32 %v7223, 0.0
        %v7242 = vcombine.high %v7226, %v7226
        %v7244 = vunpack.c.l.s4 1983009808
        %v7245 = vunpack.c.0.s8 %v7244
        %v7246 = vlaneseq
        %v7247 = vshrl.u32 %v7246, 7
        %v7248 = vsub.s32 %v7245, %v7247
        %v7249 = vrot.slane %v7226, %v7248
        %v7251 = vunpack.c.l.s4 1983009808
        %v7252 = vunpack.c.0.s8 %v7251
        %v7253 = vlaneseq
        %v7254 = vshrl.u32 %v7253, 7
        %v7255 = vsub.s32 %v7252, %v7254
        %v7256 = vrot.slane %v7242, %v7255
        %v7257 = vcombine.high %v7249, %v7249
        %v7258 = vcombine.high %v7256, %v7256
        %v7259 = vcombine.high %v7227, %v7227
        %v7261 = vunpack.c.l.s4 1983009808
        %v7262 = vunpack.c.0.s8 %v7261
        %v7263 = vlaneseq
        %v7264 = vshrl.u32 %v7263, 7
        %v7265 = vsub.s32 %v7262, %v7264
        %v7266 = vrot.slane %v7227, %v7265
        %v7268 = vunpack.c.l.s4 1983009808
        %v7269 = vunpack.c.0.s8 %v7268
        %v7270 = vlaneseq
        %v7271 = vshrl.u32 %v7270, 7
        %v7272 = vsub.s32 %v7269, %v7271
        %v7273 = vrot.slane %v7259, %v7272
        %v7274 = vcombine.high %v7266, %v7266
        %v7275 = vcombine.high %v7273, %v7273
        %v7276 = vcombine.high %v7228, %v7228
        %v7278 = vunpack.c.l.s4 1983009808
        %v7279 = vunpack.c.0.s8 %v7278
        %v7280 = vlaneseq
        %v7281 = vshrl.u32 %v7280, 7
        %v7282 = vsub.s32 %v7279, %v7281
        %v7283 = vrot.slane %v7228, %v7282
        %v7285 = vunpack.c.l.s4 1983009808
        %v7286 = vunpack.c.0.s8 %v7285
        %v7287 = vlaneseq
        %v7288 = vshrl.u32 %v7287, 7
        %v7289 = vsub.s32 %v7286, %v7288
        %v7290 = vrot.slane %v7276, %v7289
        %v7291 = vcombine.high %v7283, %v7283
        %v7292 = vcombine.high %v7290, %v7290
        %v7293 = vcombine.high %v7229, %v7229
        %v7295 = vunpack.c.l.s4 1983009808
        %v7296 = vunpack.c.0.s8 %v7295
        %v7297 = vlaneseq
        %v7298 = vshrl.u32 %v7297, 7
        %v7299 = vsub.s32 %v7296, %v7298
        %v7300 = vrot.slane %v7229, %v7299
        %v7302 = vunpack.c.l.s4 1983009808
        %v7303 = vunpack.c.0.s8 %v7302
        %v7304 = vlaneseq
        %v7305 = vshrl.u32 %v7304, 7
        %v7306 = vsub.s32 %v7303, %v7305
        %v7307 = vrot.slane %v7293, %v7306
        %v7308 = vcombine.high %v7300, %v7300
        %v7309 = vcombine.high %v7307, %v7307
        %v7310 = vcombine.high %v7230, %v7230
        %v7312 = vunpack.c.l.s4 1983009808
        %v7313 = vunpack.c.0.s8 %v7312
        %v7314 = vlaneseq
        %v7315 = vshrl.u32 %v7314, 7
        %v7316 = vsub.s32 %v7313, %v7315
        %v7317 = vrot.slane %v7230, %v7316
        %v7319 = vunpack.c.l.s4 1983009808
        %v7320 = vunpack.c.0.s8 %v7319
        %v7321 = vlaneseq
        %v7322 = vshrl.u32 %v7321, 7
        %v7323 = vsub.s32 %v7320, %v7322
        %v7324 = vrot.slane %v7310, %v7323
        %v7325 = vcombine.high %v7317, %v7317
        %v7326 = vcombine.high %v7324, %v7324
        %v7327 = vcombine.high %v7231, %v7231
        %v7329 = vunpack.c.l.s4 1983009808
        %v7330 = vunpack.c.0.s8 %v7329
        %v7331 = vlaneseq
        %v7332 = vshrl.u32 %v7331, 7
        %v7333 = vsub.s32 %v7330, %v7332
        %v7334 = vrot.slane %v7231, %v7333
        %v7336 = vunpack.c.l.s4 1983009808
        %v7337 = vunpack.c.0.s8 %v7336
        %v7338 = vlaneseq
        %v7339 = vshrl.u32 %v7338, 7
        %v7340 = vsub.s32 %v7337, %v7339
        %v7341 = vrot.slane %v7327, %v7340
        %v7342 = vcombine.high %v7334, %v7334
        %v7343 = vcombine.high %v7341, %v7341
        %v7344 = vcombine.high %v7232, %v7232
        %v7346 = vunpack.c.l.s4 1983009808
        %v7347 = vunpack.c.0.s8 %v7346
        %v7348 = vlaneseq
        %v7349 = vshrl.u32 %v7348, 7
        %v7350 = vsub.s32 %v7347, %v7349
        %v7351 = vrot.slane %v7232, %v7350
        %v7353 = vunpack.c.l.s4 1983009808
        %v7354 = vunpack.c.0.s8 %v7353
        %v7355 = vlaneseq
        %v7356 = vshrl.u32 %v7355, 7
        %v7357 = vsub.s32 %v7354, %v7356
        %v7358 = vrot.slane %v7344, %v7357
        %v7359 = vcombine.high %v7351, %v7351
        %v7360 = vcombine.high %v7358, %v7358
        %v7361 = vcombine.high %v7233, %v7233
        %v7363 = vunpack.c.l.s4 1983009808
        %v7364 = vunpack.c.0.s8 %v7363
        %v7365 = vlaneseq
        %v7366 = vshrl.u32 %v7365, 7
        %v7367 = vsub.s32 %v7364, %v7366
        %v7368 = vrot.slane %v7233, %v7367
        %v7370 = vunpack.c.l.s4 1983009808
        %v7371 = vunpack.c.0.s8 %v7370
        %v7372 = vlaneseq
        %v7373 = vshrl.u32 %v7372, 7
        %v7374 = vsub.s32 %v7371, %v7373
        %v7375 = vrot.slane %v7361, %v7374
        %v7376 = vcombine.high %v7368, %v7368
        %v7377 = vcombine.high %v7375, %v7375
        %v7410 = vsel %vm1570, %v7249, -inf
        %v7411 = vrot.slane %v7410, 4
        %v7412 = vmax.f32 %v7410, %v7411
        %v7413 = vrot.slane %v7412, 2
        %v7414 = vmax.f32 %v7412, %v7413
        %v7415 = vrot.slane %v7414, 1
        %v7416 = vmax.f32 %v7414, %v7415
        %v7417 = vsel %vm1570, %v7257, -inf
        %v7418 = vrot.slane %v7417, 4
        %v7419 = vmax.f32 %v7417, %v7418
        %v7420 = vrot.slane %v7419, 2
        %v7421 = vmax.f32 %v7419, %v7420
        %v7422 = vrot.slane %v7421, 1
        %v7423 = vmax.f32 %v7421, %v7422
        %v7424 = vsel %vm1570, %v7256, -inf
        %v7425 = vrot.slane %v7424, 4
        %v7426 = vmax.f32 %v7424, %v7425
        %v7427 = vrot.slane %v7426, 2
        %v7428 = vmax.f32 %v7426, %v7427
        %v7429 = vrot.slane %v7428, 1
        %v7430 = vmax.f32 %v7428, %v7429
        %v7431 = vsel %vm1570, %v7258, -inf
        %v7432 = vrot.slane %v7431, 4
        %v7433 = vmax.f32 %v7431, %v7432
        %v7434 = vrot.slane %v7433, 2
        %v7435 = vmax.f32 %v7433, %v7434
        %v7436 = vrot.slane %v7435, 1
        %v7437 = vmax.f32 %v7435, %v7436
        %v7438 = vsel %vm1570, %v7266, -inf
        %v7439 = vrot.slane %v7438, 4
        %v7440 = vmax.f32 %v7438, %v7439
        %v7441 = vrot.slane %v7440, 2
        %v7442 = vmax.f32 %v7440, %v7441
        %v7443 = vrot.slane %v7442, 1
        %v7444 = vmax.f32 %v7442, %v7443
        %v7445 = vsel %vm1570, %v7274, -inf
        %v7446 = vrot.slane %v7445, 4
        %v7447 = vmax.f32 %v7445, %v7446
        %v7448 = vrot.slane %v7447, 2
        %v7449 = vmax.f32 %v7447, %v7448
        %v7450 = vrot.slane %v7449, 1
        %v7451 = vmax.f32 %v7449, %v7450
        %v7452 = vsel %vm1570, %v7273, -inf
        %v7453 = vrot.slane %v7452, 4
        %v7454 = vmax.f32 %v7452, %v7453
        %v7455 = vrot.slane %v7454, 2
        %v7456 = vmax.f32 %v7454, %v7455
        %v7457 = vrot.slane %v7456, 1
        %v7458 = vmax.f32 %v7456, %v7457
        %v7459 = vsel %vm1570, %v7275, -inf
        %v7460 = vrot.slane %v7459, 4
        %v7461 = vmax.f32 %v7459, %v7460
        %v7462 = vrot.slane %v7461, 2
        %v7463 = vmax.f32 %v7461, %v7462
        %v7464 = vrot.slane %v7463, 1
        %v7465 = vmax.f32 %v7463, %v7464
        %v7466 = vsel %vm1570, %v7283, -inf
        %v7467 = vrot.slane %v7466, 4
        %v7468 = vmax.f32 %v7466, %v7467
        %v7469 = vrot.slane %v7468, 2
        %v7470 = vmax.f32 %v7468, %v7469
        %v7471 = vrot.slane %v7470, 1
        %v7472 = vmax.f32 %v7470, %v7471
        %v7473 = vsel %vm1570, %v7291, -inf
        %v7474 = vrot.slane %v7473, 4
        %v7475 = vmax.f32 %v7473, %v7474
        %v7476 = vrot.slane %v7475, 2
        %v7477 = vmax.f32 %v7475, %v7476
        %v7478 = vrot.slane %v7477, 1
        %v7479 = vmax.f32 %v7477, %v7478
        %v7480 = vsel %vm1570, %v7290, -inf
        %v7481 = vrot.slane %v7480, 4
        %v7482 = vmax.f32 %v7480, %v7481
        %v7483 = vrot.slane %v7482, 2
        %v7484 = vmax.f32 %v7482, %v7483
        %v7485 = vrot.slane %v7484, 1
        %v7486 = vmax.f32 %v7484, %v7485
        %v7487 = vsel %vm1570, %v7292, -inf
        %v7488 = vrot.slane %v7487, 4
        %v7489 = vmax.f32 %v7487, %v7488
        %v7490 = vrot.slane %v7489, 2
        %v7491 = vmax.f32 %v7489, %v7490
        %v7492 = vrot.slane %v7491, 1
        %v7493 = vmax.f32 %v7491, %v7492
        %v7494 = vsel %vm1570, %v7300, -inf
        %v7495 = vrot.slane %v7494, 4
        %v7496 = vmax.f32 %v7494, %v7495
        %v7497 = vrot.slane %v7496, 2
        %v7498 = vmax.f32 %v7496, %v7497
        %v7499 = vrot.slane %v7498, 1
        %v7500 = vmax.f32 %v7498, %v7499
        %v7501 = vsel %vm1570, %v7308, -inf
        %v7502 = vrot.slane %v7501, 4
        %v7503 = vmax.f32 %v7501, %v7502
        %v7504 = vrot.slane %v7503, 2
        %v7505 = vmax.f32 %v7503, %v7504
        %v7506 = vrot.slane %v7505, 1
        %v7507 = vmax.f32 %v7505, %v7506
        %v7508 = vsel %vm1570, %v7307, -inf
        %v7509 = vrot.slane %v7508, 4
        %v7510 = vmax.f32 %v7508, %v7509
        %v7511 = vrot.slane %v7510, 2
        %v7512 = vmax.f32 %v7510, %v7511
        %v7513 = vrot.slane %v7512, 1
        %v7514 = vmax.f32 %v7512, %v7513
        %v7515 = vsel %vm1570, %v7309, -inf
        %v7516 = vrot.slane %v7515, 4
        %v7517 = vmax.f32 %v7515, %v7516
        %v7518 = vrot.slane %v7517, 2
        %v7519 = vmax.f32 %v7517, %v7518
        %v7520 = vrot.slane %v7519, 1
        %v7521 = vmax.f32 %v7519, %v7520
        %v7522 = vsel %vm1570, %v7317, -inf
        %v7523 = vrot.slane %v7522, 4
        %v7524 = vmax.f32 %v7522, %v7523
        %v7525 = vrot.slane %v7524, 2
        %v7526 = vmax.f32 %v7524, %v7525
        %v7527 = vrot.slane %v7526, 1
        %v7528 = vmax.f32 %v7526, %v7527
        %v7529 = vsel %vm1570, %v7325, -inf
        %v7530 = vrot.slane %v7529, 4
        %v7531 = vmax.f32 %v7529, %v7530
        %v7532 = vrot.slane %v7531, 2
        %v7533 = vmax.f32 %v7531, %v7532
        %v7534 = vrot.slane %v7533, 1
        %v7535 = vmax.f32 %v7533, %v7534
        %v7536 = vsel %vm1570, %v7324, -inf
        %v7537 = vrot.slane %v7536, 4
        %v7538 = vmax.f32 %v7536, %v7537
        %v7539 = vrot.slane %v7538, 2
        %v7540 = vmax.f32 %v7538, %v7539
        %v7541 = vrot.slane %v7540, 1
        %v7542 = vmax.f32 %v7540, %v7541
        %v7543 = vsel %vm1570, %v7326, -inf
        %v7544 = vrot.slane %v7543, 4
        %v7545 = vmax.f32 %v7543, %v7544
        %v7546 = vrot.slane %v7545, 2
        %v7547 = vmax.f32 %v7545, %v7546
        %v7548 = vrot.slane %v7547, 1
        %v7549 = vmax.f32 %v7547, %v7548
        %v7550 = vsel %vm1570, %v7334, -inf
        %v7551 = vrot.slane %v7550, 4
        %v7552 = vmax.f32 %v7550, %v7551
        %v7553 = vrot.slane %v7552, 2
        %v7554 = vmax.f32 %v7552, %v7553
        %v7555 = vrot.slane %v7554, 1
        %v7556 = vmax.f32 %v7554, %v7555
        %v7557 = vsel %vm1570, %v7342, -inf
        %v7558 = vrot.slane %v7557, 4
        %v7559 = vmax.f32 %v7557, %v7558
        %v7560 = vrot.slane %v7559, 2
        %v7561 = vmax.f32 %v7559, %v7560
        %v7562 = vrot.slane %v7561, 1
        %v7563 = vmax.f32 %v7561, %v7562
        %v7564 = vsel %vm1570, %v7341, -inf
        %v7565 = vrot.slane %v7564, 4
        %v7566 = vmax.f32 %v7564, %v7565
        %v7567 = vrot.slane %v7566, 2
        %v7568 = vmax.f32 %v7566, %v7567
        %v7569 = vrot.slane %v7568, 1
        %v7570 = vmax.f32 %v7568, %v7569
        %v7571 = vsel %vm1570, %v7343, -inf
        %v7572 = vrot.slane %v7571, 4
        %v7573 = vmax.f32 %v7571, %v7572
        %v7574 = vrot.slane %v7573, 2
        %v7575 = vmax.f32 %v7573, %v7574
        %v7576 = vrot.slane %v7575, 1
        %v7577 = vmax.f32 %v7575, %v7576
        %v7578 = vsel %vm1570, %v7351, -inf
        %v7579 = vrot.slane %v7578, 4
        %v7580 = vmax.f32 %v7578, %v7579
        %v7581 = vrot.slane %v7580, 2
        %v7582 = vmax.f32 %v7580, %v7581
        %v7583 = vrot.slane %v7582, 1
        %v7584 = vmax.f32 %v7582, %v7583
        %v7585 = vsel %vm1570, %v7359, -inf
        %v7586 = vrot.slane %v7585, 4
        %v7587 = vmax.f32 %v7585, %v7586
        %v7588 = vrot.slane %v7587, 2
        %v7589 = vmax.f32 %v7587, %v7588
        %v7590 = vrot.slane %v7589, 1
        %v7591 = vmax.f32 %v7589, %v7590
        %v7592 = vsel %vm1570, %v7358, -inf
        %v7593 = vrot.slane %v7592, 4
        %v7594 = vmax.f32 %v7592, %v7593
        %v7595 = vrot.slane %v7594, 2
        %v7596 = vmax.f32 %v7594, %v7595
        %v7597 = vrot.slane %v7596, 1
        %v7598 = vmax.f32 %v7596, %v7597
        %v7599 = vsel %vm1570, %v7360, -inf
        %v7600 = vrot.slane %v7599, 4
        %v7601 = vmax.f32 %v7599, %v7600
        %v7602 = vrot.slane %v7601, 2
        %v7603 = vmax.f32 %v7601, %v7602
        %v7604 = vrot.slane %v7603, 1
        %v7605 = vmax.f32 %v7603, %v7604
        %v7606 = vsel %vm1570, %v7368, -inf
        %v7607 = vrot.slane %v7606, 4
        %v7608 = vmax.f32 %v7606, %v7607
        %v7609 = vrot.slane %v7608, 2
        %v7610 = vmax.f32 %v7608, %v7609
        %v7611 = vrot.slane %v7610, 1
        %v7612 = vmax.f32 %v7610, %v7611
        %v7613 = vsel %vm1570, %v7376, -inf
        %v7614 = vrot.slane %v7613, 4
        %v7615 = vmax.f32 %v7613, %v7614
        %v7616 = vrot.slane %v7615, 2
        %v7617 = vmax.f32 %v7615, %v7616
        %v7618 = vrot.slane %v7617, 1
        %v7619 = vmax.f32 %v7617, %v7618
        %v7620 = vsel %vm1570, %v7375, -inf
        %v7621 = vrot.slane %v7620, 4
        %v7622 = vmax.f32 %v7620, %v7621
        %v7623 = vrot.slane %v7622, 2
        %v7624 = vmax.f32 %v7622, %v7623
        %v7625 = vrot.slane %v7624, 1
        %v7626 = vmax.f32 %v7624, %v7625
        %v7627 = vsel %vm1570, %v7377, -inf
        %v7628 = vrot.slane %v7627, 4
        %v7629 = vmax.f32 %v7627, %v7628
        %v7630 = vrot.slane %v7629, 2
        %v7631 = vmax.f32 %v7629, %v7630
        %v7632 = vrot.slane %v7631, 1
        %v7633 = vmax.f32 %v7631, %v7632
        %v7634 = vmax.f32 %v7416, %v7444
        %v7635 = vmax.f32 %v7423, %v7451
        %v7636 = vmax.f32 %v7430, %v7458
        %v7637 = vmax.f32 %v7437, %v7465
        %v7638 = vmax.f32 %v7472, %v7500
        %v7639 = vmax.f32 %v7479, %v7507
        %v7640 = vmax.f32 %v7486, %v7514
        %v7641 = vmax.f32 %v7493, %v7521
        %v7642 = vmax.f32 %v7528, %v7556
        %v7643 = vmax.f32 %v7535, %v7563
        %v7644 = vmax.f32 %v7542, %v7570
        %v7645 = vmax.f32 %v7549, %v7577
        %v7646 = vmax.f32 %v7584, %v7612
        %v7647 = vmax.f32 %v7591, %v7619
        %v7648 = vmax.f32 %v7598, %v7626
        %v7649 = vmax.f32 %v7605, %v7633
        %v7650 = vpack.c.bf16 %v7634, %v7634
        %v7651 = vpack.c.bf16 %v7635, %v7635
        %v7652 = vpack.c.bf16 %v7636, %v7636
        %v7653 = vpack.c.bf16 %v7637, %v7637
        %v7654 = vpack.c.bf16 %v7638, %v7638
        %v7655 = vpack.c.bf16 %v7639, %v7639
        %v7656 = vpack.c.bf16 %v7640, %v7640
        %v7657 = vpack.c.bf16 %v7641, %v7641
        %v7658 = vpack.c.bf16 %v7642, %v7642
        %v7659 = vpack.c.bf16 %v7643, %v7643
        %v7660 = vpack.c.bf16 %v7644, %v7644
        %v7661 = vpack.c.bf16 %v7645, %v7645
        %v7662 = vpack.c.bf16 %v7646, %v7646
        %v7663 = vpack.c.bf16 %v7647, %v7647
        %v7664 = vpack.c.bf16 %v7648, %v7648
        %v7665 = vpack.c.bf16 %v7649, %v7649
        %v7683 = vunpack.c.l.s4 1983009808
        %v7684 = vunpack.c.0.s8 %v7683
        %v7685 = vlaneseq
        %v7686 = vshrl.u32 %v7685, 7
        %v7687 = vsub.s32 %v7684, %v7686
        %v7688 = vrot.slane %v7650, %v7687
        %v7690 = vunpack.c.l.s4 1983009808
        %v7691 = vunpack.c.0.s8 %v7690
        %v7692 = vlaneseq
        %v7693 = vshrl.u32 %v7692, 7
        %v7694 = vsub.s32 %v7691, %v7693
        %v7695 = vrot.slane %v7651, %v7694
        %v7697 = vunpack.c.l.s4 1983009808
        %v7698 = vunpack.c.0.s8 %v7697
        %v7699 = vlaneseq
        %v7700 = vshrl.u32 %v7699, 7
        %v7701 = vsub.s32 %v7698, %v7700
        %v7702 = vrot.slane %v7652, %v7701
        %v7704 = vunpack.c.l.s4 1983009808
        %v7705 = vunpack.c.0.s8 %v7704
        %v7706 = vlaneseq
        %v7707 = vshrl.u32 %v7706, 7
        %v7708 = vsub.s32 %v7705, %v7707
        %v7709 = vrot.slane %v7653, %v7708
        %v7711 = vunpack.c.l.s4 1983009808
        %v7712 = vunpack.c.0.s8 %v7711
        %v7713 = vlaneseq
        %v7714 = vshrl.u32 %v7713, 7
        %v7715 = vsub.s32 %v7712, %v7714
        %v7716 = vrot.slane %v7654, %v7715
        %v7718 = vunpack.c.l.s4 1983009808
        %v7719 = vunpack.c.0.s8 %v7718
        %v7720 = vlaneseq
        %v7721 = vshrl.u32 %v7720, 7
        %v7722 = vsub.s32 %v7719, %v7721
        %v7723 = vrot.slane %v7655, %v7722
        %v7725 = vunpack.c.l.s4 1983009808
        %v7726 = vunpack.c.0.s8 %v7725
        %v7727 = vlaneseq
        %v7728 = vshrl.u32 %v7727, 7
        %v7729 = vsub.s32 %v7726, %v7728
        %v7730 = vrot.slane %v7656, %v7729
        %v7732 = vunpack.c.l.s4 1983009808
        %v7733 = vunpack.c.0.s8 %v7732
        %v7734 = vlaneseq
        %v7735 = vshrl.u32 %v7734, 7
        %v7736 = vsub.s32 %v7733, %v7735
        %v7737 = vrot.slane %v7657, %v7736
        %v7739 = vunpack.c.l.s4 1983009808
        %v7740 = vunpack.c.0.s8 %v7739
        %v7741 = vlaneseq
        %v7742 = vshrl.u32 %v7741, 7
        %v7743 = vsub.s32 %v7740, %v7742
        %v7744 = vrot.slane %v7658, %v7743
        %v7746 = vunpack.c.l.s4 1983009808
        %v7747 = vunpack.c.0.s8 %v7746
        %v7748 = vlaneseq
        %v7749 = vshrl.u32 %v7748, 7
        %v7750 = vsub.s32 %v7747, %v7749
        %v7751 = vrot.slane %v7659, %v7750
        %v7753 = vunpack.c.l.s4 1983009808
        %v7754 = vunpack.c.0.s8 %v7753
        %v7755 = vlaneseq
        %v7756 = vshrl.u32 %v7755, 7
        %v7757 = vsub.s32 %v7754, %v7756
        %v7758 = vrot.slane %v7660, %v7757
        %v7760 = vunpack.c.l.s4 1983009808
        %v7761 = vunpack.c.0.s8 %v7760
        %v7762 = vlaneseq
        %v7763 = vshrl.u32 %v7762, 7
        %v7764 = vsub.s32 %v7761, %v7763
        %v7765 = vrot.slane %v7661, %v7764
        %v7767 = vunpack.c.l.s4 1983009808
        %v7768 = vunpack.c.0.s8 %v7767
        %v7769 = vlaneseq
        %v7770 = vshrl.u32 %v7769, 7
        %v7771 = vsub.s32 %v7768, %v7770
        %v7772 = vrot.slane %v7662, %v7771
        %v7774 = vunpack.c.l.s4 1983009808
        %v7775 = vunpack.c.0.s8 %v7774
        %v7776 = vlaneseq
        %v7777 = vshrl.u32 %v7776, 7
        %v7778 = vsub.s32 %v7775, %v7777
        %v7779 = vrot.slane %v7663, %v7778
        %v7781 = vunpack.c.l.s4 1983009808
        %v7782 = vunpack.c.0.s8 %v7781
        %v7783 = vlaneseq
        %v7784 = vshrl.u32 %v7783, 7
        %v7785 = vsub.s32 %v7782, %v7784
        %v7786 = vrot.slane %v7664, %v7785
        %v7788 = vunpack.c.l.s4 1983009808
        %v7789 = vunpack.c.0.s8 %v7788
        %v7790 = vlaneseq
        %v7791 = vshrl.u32 %v7790, 7
        %v7792 = vsub.s32 %v7789, %v7791
        %v7793 = vrot.slane %v7665, %v7792
        %v7795 = vunpack.c.l.s4 1983009808
        %v7796 = vunpack.c.0.s8 %v7795
        %v7797 = vlaneseq
        %v7798 = vshrl.u32 %v7797, 7
        %v7799 = vsub.s32 %v7796, %v7798
        %v7800 = vrot.slane %v7688, %v7799
        %v7802 = vunpack.c.l.s4 1983009808
        %v7803 = vunpack.c.0.s8 %v7802
        %v7804 = vlaneseq
        %v7805 = vshrl.u32 %v7804, 7
        %v7806 = vsub.s32 %v7803, %v7805
        %v7807 = vrot.slane %v7695, %v7806
        %v7809 = vunpack.c.l.s4 1983009808
        %v7810 = vunpack.c.0.s8 %v7809
        %v7811 = vlaneseq
        %v7812 = vshrl.u32 %v7811, 7
        %v7813 = vsub.s32 %v7810, %v7812
        %v7814 = vrot.slane %v7702, %v7813
        %v7816 = vunpack.c.l.s4 1983009808
        %v7817 = vunpack.c.0.s8 %v7816
        %v7818 = vlaneseq
        %v7819 = vshrl.u32 %v7818, 7
        %v7820 = vsub.s32 %v7817, %v7819
        %v7821 = vrot.slane %v7709, %v7820
        %v7823 = vunpack.c.l.s4 1983009808
        %v7824 = vunpack.c.0.s8 %v7823
        %v7825 = vlaneseq
        %v7826 = vshrl.u32 %v7825, 7
        %v7827 = vsub.s32 %v7824, %v7826
        %v7828 = vrot.slane %v7716, %v7827
        %v7830 = vunpack.c.l.s4 1983009808
        %v7831 = vunpack.c.0.s8 %v7830
        %v7832 = vlaneseq
        %v7833 = vshrl.u32 %v7832, 7
        %v7834 = vsub.s32 %v7831, %v7833
        %v7835 = vrot.slane %v7723, %v7834
        %v7837 = vunpack.c.l.s4 1983009808
        %v7838 = vunpack.c.0.s8 %v7837
        %v7839 = vlaneseq
        %v7840 = vshrl.u32 %v7839, 7
        %v7841 = vsub.s32 %v7838, %v7840
        %v7842 = vrot.slane %v7730, %v7841
        %v7844 = vunpack.c.l.s4 1983009808
        %v7845 = vunpack.c.0.s8 %v7844
        %v7846 = vlaneseq
        %v7847 = vshrl.u32 %v7846, 7
        %v7848 = vsub.s32 %v7845, %v7847
        %v7849 = vrot.slane %v7737, %v7848
        %v7851 = vunpack.c.l.s4 1983009808
        %v7852 = vunpack.c.0.s8 %v7851
        %v7853 = vlaneseq
        %v7854 = vshrl.u32 %v7853, 7
        %v7855 = vsub.s32 %v7852, %v7854
        %v7856 = vrot.slane %v7744, %v7855
        %v7858 = vunpack.c.l.s4 1983009808
        %v7859 = vunpack.c.0.s8 %v7858
        %v7860 = vlaneseq
        %v7861 = vshrl.u32 %v7860, 7
        %v7862 = vsub.s32 %v7859, %v7861
        %v7863 = vrot.slane %v7751, %v7862
        %v7865 = vunpack.c.l.s4 1983009808
        %v7866 = vunpack.c.0.s8 %v7865
        %v7867 = vlaneseq
        %v7868 = vshrl.u32 %v7867, 7
        %v7869 = vsub.s32 %v7866, %v7868
        %v7870 = vrot.slane %v7758, %v7869
        %v7872 = vunpack.c.l.s4 1983009808
        %v7873 = vunpack.c.0.s8 %v7872
        %v7874 = vlaneseq
        %v7875 = vshrl.u32 %v7874, 7
        %v7876 = vsub.s32 %v7873, %v7875
        %v7877 = vrot.slane %v7765, %v7876
        %v7879 = vunpack.c.l.s4 1983009808
        %v7880 = vunpack.c.0.s8 %v7879
        %v7881 = vlaneseq
        %v7882 = vshrl.u32 %v7881, 7
        %v7883 = vsub.s32 %v7880, %v7882
        %v7884 = vrot.slane %v7772, %v7883
        %v7886 = vunpack.c.l.s4 1983009808
        %v7887 = vunpack.c.0.s8 %v7886
        %v7888 = vlaneseq
        %v7889 = vshrl.u32 %v7888, 7
        %v7890 = vsub.s32 %v7887, %v7889
        %v7891 = vrot.slane %v7779, %v7890
        %v7893 = vunpack.c.l.s4 1983009808
        %v7894 = vunpack.c.0.s8 %v7893
        %v7895 = vlaneseq
        %v7896 = vshrl.u32 %v7895, 7
        %v7897 = vsub.s32 %v7894, %v7896
        %v7898 = vrot.slane %v7786, %v7897
        %v7900 = vunpack.c.l.s4 1983009808
        %v7901 = vunpack.c.0.s8 %v7900
        %v7902 = vlaneseq
        %v7903 = vshrl.u32 %v7902, 7
        %v7904 = vsub.s32 %v7901, %v7903
        %v7905 = vrot.slane %v7793, %v7904
        %v7906 = vunpack.c.l.b16 %v7800
        %v7907 = vunpack.c.l.b16 %v7807
        %v7908 = vunpack.c.l.b16 %v7814
        %v7909 = vunpack.c.l.b16 %v7821
        %v7910 = vunpack.c.l.b16 %v7828
        %v7911 = vunpack.c.l.b16 %v7835
        %v7912 = vunpack.c.l.b16 %v7842
        %v7913 = vunpack.c.l.b16 %v7849
        %v7914 = vunpack.c.l.b16 %v7856
        %v7915 = vunpack.c.l.b16 %v7863
        %v7916 = vunpack.c.l.b16 %v7870
        %v7917 = vunpack.c.l.b16 %v7877
        %v7918 = vunpack.c.l.b16 %v7884
        %v7919 = vunpack.c.l.b16 %v7891
        %v7920 = vunpack.c.l.b16 %v7898
        %v7921 = vunpack.c.l.b16 %v7905
        %v7922 = vrot.slane %v7907, 7
        %vm7923 = vcmask 1041409
        %v7924 = vsel %vm7923, %v7922, %v7906
        %v7925 = vrot.slane %v7908, 6
        %v7926 = vsel %vm5203, %v7925, %v7924
        %v7927 = vrot.slane %v7909, 5
        %v7928 = vsel %vm5205, %v7927, %v7926
        %v7929 = vrot.slane %v7911, 7
        %v7930 = vsel %vm7923, %v7929, %v7910
        %v7931 = vrot.slane %v7912, 6
        %v7932 = vsel %vm5203, %v7931, %v7930
        %v7933 = vrot.slane %v7913, 5
        %v7934 = vsel %vm5205, %v7933, %v7932
        %v7935 = vrot.slane %v7915, 7
        %v7936 = vsel %vm7923, %v7935, %v7914
        %v7937 = vrot.slane %v7916, 6
        %v7938 = vsel %vm5203, %v7937, %v7936
        %v7939 = vrot.slane %v7917, 5
        %v7940 = vsel %vm5205, %v7939, %v7938
        %v7941 = vrot.slane %v7919, 7
        %v7942 = vsel %vm7923, %v7941, %v7918
        %v7943 = vrot.slane %v7920, 6
        %v7944 = vsel %vm5203, %v7943, %v7942
        %v7945 = vrot.slane %v7921, 5
        %v7946 = vsel %vm5205, %v7945, %v7944
        %v7947 = vpack.c.b16 %v7928, %v7928
        %v7948 = vpack.c.b16 %v7934, %v7934
        %v7949 = vpack.c.b16 %v7940, %v7940
        %v7950 = vpack.c.b16 %v7946, %v7946
        %v7952 = vunpack.c.l.s4 1983009808
        %v7953 = vunpack.c.0.s8 %v7952
        %v7954 = vlaneseq
        %v7955 = vshrl.u32 %v7954, 7
        %v7956 = vsub.s32 %v7953, %v7955
        %v7957 = vrot.slane %v7947, %v7956
        %v7959 = vunpack.c.l.s4 1983009808
        %v7960 = vunpack.c.0.s8 %v7959
        %v7961 = vlaneseq
        %v7962 = vshrl.u32 %v7961, 7
        %v7963 = vsub.s32 %v7960, %v7962
        %v7964 = vrot.slane %v7948, %v7963
        %v7966 = vunpack.c.l.s4 1983009808
        %v7967 = vunpack.c.0.s8 %v7966
        %v7968 = vlaneseq
        %v7969 = vshrl.u32 %v7968, 7
        %v7970 = vsub.s32 %v7967, %v7969
        %v7971 = vrot.slane %v7949, %v7970
        %v7973 = vunpack.c.l.s4 1983009808
        %v7974 = vunpack.c.0.s8 %v7973
        %v7975 = vlaneseq
        %v7976 = vshrl.u32 %v7975, 7
        %v7977 = vsub.s32 %v7974, %v7976
        %v7978 = vrot.slane %v7950, %v7977
        %7983 = vst [vmem:[%s412] sm:$0x3] %v7957
        %7984 = vst [vmem:[%s412 + $0x2] sm:$0x3] %v7964
        %7985 = vst [vmem:[%s412 + $0x4] sm:$0x3] %v7971
        %7986 = vst [vmem:[%s412 + $0x6] sm:$0x3] %v7978
        %p7987 = scmp.lt.s32.totalorder %s24, 1
        %s7988 = scalar_select %p7987, %s24, 1
        %s7989 = smul.addr %s7988, 4
        %s7990 = smul.addr %s7989, 2
        %s7991 = scalar_lea.vmem %s9, %s7990
        // Predicated region
        $region81: #{cnn_classification_forward.2} parent=55 // pred_check
          %p7992 = pneg %p236
        $region82: #{cnn_classification_forward.2} parent=55 // pred_check_branch
          %7994 = sbr.rel (%p7992) target = $region84
        $region83: #{cnn_classification_forward.2} parent=55 // pred_region
          _
        $region84: #{cnn_classification_forward.2} parent=55 // pred_fallthru
          _
      $region56: #{cnn_classification_forward.2} parent=5 // pred_fallthru
        _
      %p7995 = scmp.le.s32.totalorder 2, %s19
      // Predicated region
      $region85: #{cnn_classification_forward.2} parent=5 // pred_check
        %p7996 = pneg %p7995
      $region86: #{cnn_classification_forward.2} parent=5 // pred_check_branch
        %7998 = sbr.rel (%p7996) target = $region88
      $region87: #{cnn_classification_forward.2} parent=5 // pred_region
        %s7999 = ssub.s32 %s19, 2
        // Predicated region
        $region89: #{cnn_classification_forward.2} parent=87 // pred_check
          %p8000 = pneg %p242
        $region90: #{cnn_classification_forward.2} parent=87 // pred_check_branch
          %8002 = sbr.rel (%p8000) target = $region92
        $region91: #{cnn_classification_forward.2} parent=87 // pred_region
          %p8003 = scmp.lt.s32.totalorder %s25, 1
          %s8004 = scalar_select %p8003, %s25, 1
          %s8005 = smul.addr %s8004, 4
          %s8006 = smul.addr %s8005, 2
          %s8007 = scalar_lea.vmem %s9, %s8006
        $region92: #{cnn_classification_forward.2} parent=87 // pred_fallthru
          _
      $region88: #{cnn_classification_forward.2} parent=5 // pred_fallthru
        _
    $region6: #{cnn_classification_forward.2} parent=1 // loop_footer
      %s23 = sadd.s32 1, %s19
    $region7: #{cnn_classification_forward.2} parent=1 // loop_footer_branch
      %18 = sbr.rel target = $region3
    $region8: #{cnn_classification_forward.2} parent=1 // loop_exit
      _
    %8008 = vsyncpa [#allocation3], 1
    %s8009 = scalar_lea.sflag [#allocation3], 1
    %8010 = vsyncpa %s8009, 1
    %8011 = vsyncpa [#allocation5], 1
    %8012 = vsyncpa [#allocation8], 1
    %8013 = vsyncpa [#allocation11], 1

</llo_original>
